<compile_context>
chip_gen: v7x
topology: tpu7x:2x2x1
jax: 0.10.0
libtpu: 0.0.40
codegen_flags: <defaults>
</compile_context>

<pallas_src>
import jax
import jax.numpy as jnp
from jax.experimental import pallas as pl
from jax.experimental.pallas import tpu as pltpu

BN_EPS = 1e-5
LANE = 128
SUB = 8


# ------------------------------- small helpers ------------------------------ #

def _round_up(n, m):
    return ((n + m - 1) // m) * m


def _pad_last(a, n):
    pad = n - a.shape[-1]
    if pad == 0:
        return a
    return jnp.pad(a, [(0, 0)] * (a.ndim - 1) + [(0, pad)])


def _vmem_limit_bytes():
    # v5e/v6e: 128 MiB physical -> ~112 MiB usable; v7x: 64 MiB -> ~48 MiB.
    try:
        cap = int(pltpu.get_tpu_info().vmem_capacity_bytes)
    except Exception:
        cap = 64 * 1024 * 1024
    return max(min(cap - 16 * 1024 * 1024, 112 * 1024 * 1024), 32 * 1024 * 1024)


def _conv_vmem_estimate(tile_h, WP, cin_p, cout_p):
    io = 2 * (tile_h * WP * cin_p * 2)            # main input slab (bf16, dbl-buffered)
    io += 2 * (2 * WP * cin_p * 2)                # halo rows
    io += 2 * (9 * cin_p * cout_p * 2)            # packed weights (bf16)
    io += 2 * (tile_h * WP * cout_p * 2)          # output slab (bf16)
    tmp = (tile_h + 2) * WP * cin_p * 16          # act f32 + window/shift/packed bf16
    tmp += tile_h * WP * cout_p * 4               # f32 accumulator
    return int(1.3 * (io + tmp))


def _up_vmem_estimate(tile_h, WP, cout_p, two_cup):
    io = 2 * 2 * (tile_h * WP * cout_p * 2)       # y0, y2 (bf16, dbl-buffered)
    io += 2 * (2 * tile_h * WP * two_cup * 4)     # f32 output block
    io += 2 * (2 * cout_p * two_cup * 2)          # weights
    tmp = tile_h * WP * (2 * cout_p * 4 + cout_p * 2 + 2 * two_cup * 4)
    return int(1.3 * (io + tmp))


def _pick_tile_h(B, H, WP, cin_p, cout_p, cup_p, budget):
    divs = [d for d in range(1, H + 1) if H % d == 0]
    # keep a >=2 "parallel" grid axis available for 2-TC chips when B == 1
    cap = H if (B > 1 or H == 1) else max(H // 2, 1)
    best = divs[0]
    for d in divs:
        if d > cap:
            continue
        ok = (_conv_vmem_estimate(d, WP, cin_p, cout_p) <= budget and
              _up_vmem_estimate(d, WP, cout_p, 2 * cup_p) <= budget)
        if ok:
            best = max(best, d)
    return best


# -------------------- conv3x3 (+ fused prev-BN/ReLU) kernel ----------------- #

def _make_conv_kernel(apply_act, tile_h, W, WP, cin_p, cout_p, nt):
    """3x3 pad-1 conv over a tile_h-row slab: 3 GEMMs with K = 3*cin_p.

    Stored activation layout: (rows, WP, C) bf16 with valid data in columns
    [1, W+1) and zeros elsewhere (column 0 / >= W+1 act as the spatial pad).
    If apply_act, the previous layer's BN affine + ReLU is applied on the fly.
    Emits per-tile BN partials (sum, sum-of-squares) of this layer's raw conv
    output over the valid columns only.
    """
    M = tile_h * WP
    NF = (tile_h + 2) * WP

    def kernel(*refs):
        if apply_act:
            top_ref, mid_ref, bot_ref, w_ref, aff_ref, y_ref, part_ref = refs
        else:
            top_ref, mid_ref, bot_ref, w_ref, y_ref, part_ref = refs

        t = pl.program_id(1)
        col = jax.lax.broadcasted_iota(jnp.int32, (1, WP, 1), 1)
        colmask = ((col >= 1) & (col <= W)).astype(jnp.float32)

        def piece(ref):
            v = ref[0]                                      # (rows, WP, cin_p) bf16
            if apply_act:
                scale = aff_ref[0].reshape(1, 1, cin_p)
                shift = aff_ref[1].reshape(1, 1, cin_p)
                v = jnp.maximum(v.astype(jnp.float32) * scale + shift, 0.0)
                v = (v * colmask).astype(jnp.bfloat16)      # re-zero spatial pad cols
            return v

        top = piece(top_ref)                                # (1, WP, cin)
        mid = piece(mid_ref)                                # (tile_h, WP, cin)
        bot = piece(bot_ref)                                # (1, WP, cin)
        # halo rows outside the image must be zero (spatial row padding)
        top = jnp.where(t > 0, top, jnp.zeros_like(top))
        bot = jnp.where(t < nt - 1, bot, jnp.zeros_like(bot))

        # flattened, zero-guarded window; all concat offsets are sublane-aligned
        zpad = jnp.zeros((SUB, cin_p), jnp.bfloat16)
        xfp = jnp.concatenate(
            [zpad,
             top.reshape(WP, cin_p),
             mid.reshape(M, cin_p),
             bot.reshape(WP, cin_p),
             zpad], axis=0)                                 # (NF + 16, cin)
        xf = xfp[SUB:SUB + NF]                              # row i  = x[i]
        xm = xfp[SUB - 1:SUB - 1 + NF]                      # row i  = x[i-1]  (kx=0)
        xp = xfp[SUB + 1:SUB + 1 + NF]                      # row i  = x[i+1]  (kx=2)
        xc = jnp.concatenate([xm, xf, xp], axis=-1)         # (NF, 3*cin), lane-aligned

        acc = jnp.zeros((M, cout_p), jnp.float32)
        for ky in range(3):                                 # 3 GEMMs, K = 3*cin
            acc = acc + jnp.dot(xc[ky * WP:ky * WP + M], w_ref[ky],
                                preferred_element_type=jnp.float32)

        acc = acc.reshape(tile_h, WP, cout_p) * colmask     # zero invalid columns
        acc2 = acc.reshape(M, cout_p)
        s = jnp.sum(acc2, axis=0, keepdims=True)
        ss = jnp.sum(acc2 * acc2, axis=0, keepdims=True)
        part_ref[0, 0] = jnp.concatenate([s, ss], axis=0)   # (2, cout_p)
        y_ref[0] = acc.astype(jnp.bfloat16)

    return kernel


def conv3x3_layer(x, wcat, aff, *, W, tile_h, vmem_limit):
    """x: (B, H, WP, cin_p) bf16 stored layout -> (y bf16, BN partials f32)."""
    B, H, WP, cin_p = x.shape
    cout_p = wcat.shape[-1]
    nt = H // tile_h
    apply_act = aff is not None
    kernel = _make_conv_kernel(apply_act, tile_h, W, WP, cin_p, cout_p, nt)

    top_spec = pl.BlockSpec(
        (1, 1, WP, cin_p), lambda b, t: (b, jnp.maximum(t * tile_h - 1, 0), 0, 0))
    mid_spec = pl.BlockSpec((1, tile_h, WP, cin_p), lambda b, t: (b, t, 0, 0))
    bot_spec = pl.BlockSpec(
        (1, 1, WP, cin_p), lambda b, t: (b, jnp.minimum((t + 1) * tile_h, H - 1), 0, 0))
    w_spec = pl.BlockSpec((3, 3 * cin_p, cout_p), lambda b, t: (0, 0, 0))

    in_specs = [top_spec, mid_spec, bot_spec, w_spec]
    args = [x, x, x, wcat]
    if apply_act:
        in_specs.append(pl.BlockSpec((2, cin_p), lambda b, t: (0, 0)))
        args.append(aff)

    y, parts = pl.pallas_call(
        kernel,
        grid=(B, nt),
        in_specs=in_specs,
        out_specs=(
            pl.BlockSpec((1, tile_h, WP, cout_p), lambda b, t: (b, t, 0, 0)),
            pl.BlockSpec((1, 1, 2, cout_p), lambda b, t: (b, t, 0, 0)),
        ),
        out_shape=(
            jax.ShapeDtypeStruct((B, H, WP, cout_p), jnp.bfloat16),
            jax.ShapeDtypeStruct((B, nt, 2, cout_p), jnp.float32),
        ),
        compiler_params=pltpu.CompilerParams(
            dimension_semantics=("parallel", "parallel"),
            vmem_limit_bytes=vmem_limit,
        ),
    )(*args)
    return y, parts


def _bn_scale_shift(parts, gamma, beta, n, cpad):
    """Finalize BN: per-channel scale/shift (training-mode batch stats, biased var).

    The conv bias cancels exactly under batch-norm (it only shifts the batch
    mean), so it is intentionally dropped (fixes the previous bias-folding bug).
    TODO(synk): single-pass E[x^2]-E[x]^2 in f32 can lose precision for very
    large, high-mean batches; switch to centered per-tile partials if needed.
    """
    tot = jnp.sum(parts, axis=(0, 1))                       # (2, cpad) f32
    mean = tot[0] / n
    var = jnp.maximum(tot[1] / n - mean * mean, 0.0)
    scale = _pad_last(gamma, cpad) * jax.lax.rsqrt(var + BN_EPS)
    shift = _pad_last(beta, cpad) - mean * scale
    return jnp.stack([scale, shift], axis=0).astype(jnp.float32)


# -------- fused (BN-apply + residual add + ConvTranspose2d + interleave) ----- #

def _make_up_kernel(tile_h, WP, cout_p, two_cup):
    M = tile_h * WP

    def kernel(y0_ref, y2_ref, aff_ref, w0_ref, w1_ref, b_ref, out_ref):
        s0 = aff_ref[0].reshape(1, 1, cout_p)
        t0 = aff_ref[1].reshape(1, 1, cout_p)
        s2 = aff_ref[2].reshape(1, 1, cout_p)
        t2 = aff_ref[3].reshape(1, 1, cout_p)
        x1 = jnp.maximum(y0_ref[0].astype(jnp.float32) * s0 + t0, 0.0)   # BN+ReLU(conv)
        xr = jnp.maximum(y2_ref[0].astype(jnp.float32) * s2 + t2, 0.0)   # BN+ReLU(up_conv)
        s = (x1 + xr).astype(jnp.bfloat16).reshape(M, cout_p)            # residual add
        # ConvTranspose2d(k=2, s=2): two 1x1 GEMMs (di = 0/1), dj packed on lanes
        o0 = jnp.dot(s, w0_ref[...], preferred_element_type=jnp.float32)
        o1 = jnp.dot(s, w1_ref[...], preferred_element_type=jnp.float32)
        o0 = o0 + b_ref[0].reshape(1, two_cup)
        o1 = o1 + b_ref[1].reshape(1, two_cup)
        out_ref[0, 0] = o0.reshape(tile_h, WP, two_cup)
        out_ref[0, 1] = o1.reshape(tile_h, WP, two_cup)

    return kernel


def residual_convtranspose_up(y0, y2, aff04, w0, w1, bup, *, tile_h, vmem_limit):
    B, H, WP, cout_p = y0.shape
    two_cup = w0.shape[-1]
    nt = H // tile_h
    kernel = _make_up_kernel(tile_h, WP, cout_p, two_cup)
    return pl.pallas_call(
        kernel,
        grid=(B, nt),
        in_specs=[
            pl.BlockSpec((1, tile_h, WP, cout_p), lambda b, t: (b, t, 0, 0)),
            pl.BlockSpec((1, tile_h, WP, cout_p), lambda b, t: (b, t, 0, 0)),
            pl.BlockSpec((4, cout_p), lambda b, t: (0, 0)),
            pl.BlockSpec((cout_p, two_cup), lambda b, t: (0, 0)),
            pl.BlockSpec((cout_p, two_cup), lambda b, t: (0, 0)),
            pl.BlockSpec((2, two_cup), lambda b, t: (0, 0)),
        ],
        out_specs=pl.BlockSpec((1, 2, tile_h, WP, two_cup),
                               lambda b, t: (b, 0, t, 0, 0)),
        out_shape=jax.ShapeDtypeStruct((B, 2, H, WP, two_cup), jnp.float32),
        compiler_params=pltpu.CompilerParams(
            dimension_semantics=("parallel", "parallel"),
            vmem_limit_bytes=vmem_limit,
        ),
    )(y0, y2, aff04, w0, w1, bup)


# --------------------------------- forward ---------------------------------- #

def residual_up_block_forward(x_nchw, skip_nchw, params):
    """Matches residual_up_block.forward(x, skip_connect); returns NCHW output."""
    in_c = params["conv"]["w"].shape[2]
    out_c = params["conv"]["w"].shape[3]
    up_c = params["up"]["w"].shape[1]

    x = jnp.transpose(x_nchw, (0, 2, 3, 1)).astype(jnp.float32)     # NCHW -> NHWC
    skip = jnp.transpose(skip_nchw, (0, 2, 3, 1)).astype(jnp.float32)
    xin = jnp.concatenate([x, skip], axis=-1)                       # torch.cat(dim=1)
    B, H, W, _ = xin.shape

    cin_p = _round_up(in_c, LANE)
    cout_p = _round_up(out_c, LANE)
    cup_p = _round_up(up_c, LANE)
    WP = _round_up(W + 2, SUB)                  # sublane-aligned padded width
    n = float(B * H * W)

    vmem_limit = _vmem_limit_bytes()
    tile_h = _pick_tile_h(B, H, WP, max(cin_p, cout_p), cout_p, cup_p,
                          int(0.55 * vmem_limit))

    # stored activation layout: (B, H, WP, Cpad) bf16, valid data in cols [1, W+1)
    x0 = jnp.pad(xin, ((0, 0), (0, 0), (1, WP - W - 1), (0, cin_p - in_c)))
    x0 = x0.astype(jnp.bfloat16)

    def prep_wcat(w, ci_p, co_p):               # (3,3,ci,co) HWIO -> (3, 3*ci_p, co_p)
        ci, co = w.shape[2], w.shape[3]
        wc = jnp.zeros((3, 3 * ci_p, co_p), jnp.float32)
        for kx in range(3):
            wc = wc.at[:, kx * ci_p:kx * ci_p + ci, :co].set(w[:, kx])
        return wc.astype(jnp.bfloat16)

    kw = dict(W=W, tile_h=tile_h, vmem_limit=vmem_limit)

    # ---- self.conv : Conv3x3 -> BN -> ReLU (BN/ReLU applied lazily downstream)
    p0 = params["conv"]
    y0, parts0 = conv3x3_layer(x0, prep_wcat(p0["w"], cin_p, cout_p), None, **kw)
    aff0 = _bn_scale_shift(parts0, p0["gamma"], p0["beta"], n, cout_p)

    # ---- self.up_conv, conv #1
    p1 = params["up1"]
    y1, parts1 = conv3x3_layer(y0, prep_wcat(p1["w"], cout_p, cout_p), aff0, **kw)
    aff1 = _bn_scale_shift(parts1, p1["gamma"], p1["beta"], n, cout_p)

    # ---- self.up_conv, conv #2
    p2 = params["up2"]
    y2, parts2 = conv3x3_layer(y1, prep_wcat(p2["w"], cout_p, cout_p), aff1, **kw)
    aff2 = _bn_scale_shift(parts2, p2["gamma"], p2["beta"], n, cout_p)

    # ---- x = x1 + up_conv(x1); self.up(x): ConvTranspose2d(out_c -> out_c//2, 2, 2)
    pu = params["up"]
    w_up0 = jnp.zeros((cout_p, 2 * cup_p), jnp.float32)     # di = 0, dj packed on lanes
    w_up1 = jnp.zeros((cout_p, 2 * cup_p), jnp.float32)     # di = 1
    b_up = jnp.zeros((2, 2 * cup_p), jnp.float32)
    for dj in range(2):
        sl = slice(dj * cup_p, dj * cup_p + up_c)
        w_up0 = w_up0.at[:out_c, sl].set(pu["w"][:, :, 0, dj])
        w_up1 = w_up1.at[:out_c, sl].set(pu["w"][:, :, 1, dj])
        b_up = b_up.at[0, sl].set(pu["b"])
        b_up = b_up.at[1, sl].set(pu["b"])
    aff04 = jnp.concatenate([aff0, aff2], axis=0)           # (4, cout_p)

    up_raw = residual_convtranspose_up(
        y0, y2, aff04, w_up0.astype(jnp.bfloat16), w_up1.astype(jnp.bfloat16),
        b_up, tile_h=tile_h, vmem_limit=vmem_limit)

    # (B, 2, H, WP, 2*cup_p) -> NCHW (B, up_c, 2H, 2W): single fused slice+transpose
    up = up_raw.reshape(B, 2, H, WP, 2, cup_p)[:, :, :, 1:W + 1, :, :up_c]
    up = jnp.transpose(up, (0, 5, 2, 1, 3, 4)).reshape(B, up_c, 2 * H, 2 * W)
    return up


# ------------------------------ parameter init ------------------------------ #

def init_params(key, in_c, out_c):
    def conv_block(k, ci, co):
        kw, kb, kg, kbt = jax.random.split(k, 4)
        return {
            "w": 0.05 * jax.random.normal(kw, (3, 3, ci, co), jnp.float32),  # HWIO
            "b": 0.05 * jax.random.normal(kb, (co,), jnp.float32),
            "gamma": 1.0 + 0.1 * jax.random.normal(kg, (co,), jnp.float32),
            "beta": 0.1 * jax.random.normal(kbt, (co,), jnp.float32),
        }

    k0, k1, k2, ku, kub = jax.random.split(key, 5)
    up_c = out_c // 2
    return {
        "conv": conv_block(k0, in_c, out_c),
        "up1": conv_block(k1, out_c, out_c),
        "up2": conv_block(k2, out_c, out_c),
        "up": {   # nn.ConvTranspose2d(out_c, out_c//2, 2, 2): weight (in, out, kH, kW)
            "w": 0.1 * jax.random.normal(ku, (out_c, up_c, 2, 2), jnp.float32),
            "b": 0.05 * jax.random.normal(kub, (up_c,), jnp.float32),
        },
    }
    # NOTE: the unused parent UpSample.conv2 branch never runs in
    # residual_up_block.forward, so its parameters are not materialized.


# --------------------------- pure-JAX f32 reference -------------------------- #

def _reference_forward(x_nchw, skip_nchw, params):
    x = jnp.concatenate([x_nchw, skip_nchw], axis=1)        # NCHW

    def conv_bn_relu(v, p):
        y = jax.lax.conv_general_dilated(
            v, p["w"], window_strides=(1, 1), padding=((1, 1), (1, 1)),
            dimension_numbers=("NCHW", "HWIO", "NCHW"))
        y = y + p["b"].reshape(1, -1, 1, 1)
        mean = jnp.mean(y, axis=(0, 2, 3), keepdims=True)
        var = jnp.mean((y - mean) ** 2, axis=(0, 2, 3), keepdims=True)
        y = (y - mean) * jax.lax.rsqrt(var + BN_EPS)
        y = y * p["gamma"].reshape(1, -1, 1, 1) + p["beta"].reshape(1, -1, 1, 1)
        return jnp.maximum(y, 0.0)

    x1 = conv_bn_relu(x, params["conv"])
    h = conv_bn_relu(x1, params["up1"])
    h = conv_bn_relu(h, params["up2"])
    s = x1 + h
    o = jnp.einsum("bihw,iodj->bohdwj", s, params["up"]["w"])
    o = o + params["up"]["b"].reshape(1, -1, 1, 1, 1, 1)
    Bn, oc, Hn, _, Wn, _ = o.shape
    return o.reshape(Bn, oc, 2 * Hn, 2 * Wn)


# ----------------------------------- main ----------------------------------- #

if __name__ == "__main__":
    B, H, W = 2, 16, 16
    in_c, out_c = 4, 8                     # cat(x, skip_connect) has in_c channels
    cx = in_c // 2
    cs = in_c - cx

    key = jax.random.PRNGKey(0)
    kx, ks, kp = jax.random.split(key, 3)
    x = jax.random.normal(kx, (B, cx, H, W), jnp.float32)          # NCHW like PyTorch
    skip = jax.random.normal(ks, (B, cs, H, W), jnp.float32)
    params = init_params(kp, in_c, out_c)

    fwd = jax.jit(residual_up_block_forward)
    out = fwd(x, skip, params)
    jax.block_until_ready(out)

    assert out.shape == (B, out_c // 2, 2 * H, 2 * W), out.shape
    assert bool(jnp.all(jnp.isfinite(out)))

    # loose tolerance: inter-layer activations are intentionally stored in bf16
    ref = _reference_forward(x, skip, params)
    err = float(jnp.max(jnp.abs(out - ref)))
    tol = 0.1 + 0.1 * float(jnp.max(jnp.abs(ref)))
    assert err <= tol, (err, tol)
    print("KERNEL_OK")
</pallas_src>

<mosaic_0001>
module attributes {stable_mosaic.version = 11 : i64} {
  func.func @kernel(%arg0: i32, %arg1: i32, %arg2: memref<1x1x24x128xbf16, #tpu.memory_space<vmem>>, %arg3: memref<1x16x24x128xbf16, #tpu.memory_space<vmem>>, %arg4: memref<1x1x24x128xbf16, #tpu.memory_space<vmem>>, %arg5: memref<3x384x128xbf16, #tpu.memory_space<vmem>>, %arg6: memref<1x16x24x128xbf16, #tpu.memory_space<vmem>>, %arg7: memref<1x1x2x128xf32, #tpu.memory_space<vmem>>) attributes {dimension_semantics = [#tpu.dimension_semantics<parallel>, #tpu.dimension_semantics<parallel>], iteration_bounds = array<i64: 2, 1>, scalar_prefetch = 0 : i64, scratch_operands = 0 : i64, tpu.core_type = #tpu.core_type<tc>, window_params = [{transform_indices = @transform_0, window_bounds = array<i64: 1, 1, 24, 128>}, {transform_indices = @transform_1, window_bounds = array<i64: 1, 16, 24, 128>}, {transform_indices = @transform_2, window_bounds = array<i64: 1, 1, 24, 128>}, {pipeline_mode = #tpu.pipeline_mode<synchronous>, transform_indices = @transform_3, window_bounds = array<i64: 3, 384, 128>}, {transform_indices = @transform_4, window_bounds = array<i64: 1, 16, 24, 128>}, {transform_indices = @transform_5, window_bounds = array<i64: 1, 1, 2, 128>}]} {
    %0 = tpu.iota {dimensions = array<i32: 1>} : vector<1x24x1xi32>
    %c1_i32 = arith.constant 1 : i32
    %1 = vector.broadcast %c1_i32 : i32 to vector<1x24x1xi32>
    %2 = arith.cmpi sge, %0, %1 : vector<1x24x1xi32>
    %c16_i32 = arith.constant 16 : i32
    %3 = vector.broadcast %c16_i32 : i32 to vector<1x24x1xi32>
    %4 = arith.cmpi sle, %0, %3 : vector<1x24x1xi32>
    %5 = arith.andi %2, %4 : vector<1x24x1xi1>
    %6 = arith.extui %5 : vector<1x24x1xi1> to vector<1x24x1xi32>
    %7 = arith.sitofp %6 : vector<1x24x1xi32> to vector<1x24x1xf32>
    %c0 = arith.constant 0 : index
    %c0_0 = arith.constant 0 : index
    %c0_1 = arith.constant 0 : index
    %c0_2 = arith.constant 0 : index
    %8 = vector.load %arg2[%c0, %c0_0, %c0_1, %c0_2] : memref<1x1x24x128xbf16, #tpu.memory_space<vmem>>, vector<1x1x24x128xbf16>
    %9 = vector.shape_cast %8 : vector<1x1x24x128xbf16> to vector<1x24x128xbf16>
    %c0_3 = arith.constant 0 : index
    %c0_4 = arith.constant 0 : index
    %c0_5 = arith.constant 0 : index
    %c0_6 = arith.constant 0 : index
    %10 = vector.load %arg3[%c0_3, %c0_4, %c0_5, %c0_6] : memref<1x16x24x128xbf16, #tpu.memory_space<vmem>>, vector<1x16x24x128xbf16>
    %11 = vector.shape_cast %10 : vector<1x16x24x128xbf16> to vector<16x24x128xbf16>
    %c0_7 = arith.constant 0 : index
    %c0_8 = arith.constant 0 : index
    %c0_9 = arith.constant 0 : index
    %c0_10 = arith.constant 0 : index
    %12 = vector.load %arg4[%c0_7, %c0_8, %c0_9, %c0_10] : memref<1x1x24x128xbf16, #tpu.memory_space<vmem>>, vector<1x1x24x128xbf16>
    %13 = vector.shape_cast %12 : vector<1x1x24x128xbf16> to vector<1x24x128xbf16>
    %c0_i32 = arith.constant 0 : i32
    %14 = arith.cmpi sgt, %arg1, %c0_i32 : i32
    %cst = arith.constant 0.000000e+00 : bf16
    %15 = vector.broadcast %cst : bf16 to vector<1x24x128xbf16>
    %16 = arith.select %14, %9, %15 : vector<1x24x128xbf16>
    %c0_i32_11 = arith.constant 0 : i32
    %17 = arith.cmpi slt, %arg1, %c0_i32_11 : i32
    %cst_12 = arith.constant 0.000000e+00 : bf16
    %18 = vector.broadcast %cst_12 : bf16 to vector<1x24x128xbf16>
    %19 = arith.select %17, %13, %18 : vector<1x24x128xbf16>
    %cst_13 = arith.constant 0.000000e+00 : bf16
    %20 = vector.broadcast %cst_13 : bf16 to vector<8x128xbf16>
    %21 = vector.shape_cast %16 : vector<1x24x128xbf16> to vector<24x128xbf16>
    %22 = vector.shape_cast %11 : vector<16x24x128xbf16> to vector<384x128xbf16>
    %23 = vector.shape_cast %19 : vector<1x24x128xbf16> to vector<24x128xbf16>
    %24 = tpu.concatenate %20, %21, %22, %23, %20 in 0 : vector<8x128xbf16>, vector<24x128xbf16>, vector<384x128xbf16>, vector<24x128xbf16>, vector<8x128xbf16> -> vector<448x128xbf16>
    %25 = vector.extract_strided_slice %24 {offsets = [8, 0], sizes = [432, 128], strides = [1, 1]} : vector<448x128xbf16> to vector<432x128xbf16>
    %26 = vector.extract_strided_slice %24 {offsets = [7, 0], sizes = [432, 128], strides = [1, 1]} : vector<448x128xbf16> to vector<432x128xbf16>
    %27 = vector.extract_strided_slice %24 {offsets = [9, 0], sizes = [432, 128], strides = [1, 1]} : vector<448x128xbf16> to vector<432x128xbf16>
    %28 = tpu.concatenate %26, %25, %27 in 1 : vector<432x128xbf16>, vector<432x128xbf16>, vector<432x128xbf16> -> vector<432x384xbf16>
    %cst_14 = arith.constant 0.000000e+00 : f32
    %29 = vector.broadcast %cst_14 : f32 to vector<384x128xf32>
    %30 = vector.extract_strided_slice %28 {offsets = [0, 0], sizes = [384, 384], strides = [1, 1]} : vector<432x384xbf16> to vector<384x384xbf16>
    %c0_15 = arith.constant 0 : index
    %c0_16 = arith.constant 0 : index
    %c0_17 = arith.constant 0 : index
    %31 = vector.load %arg5[%c0_15, %c0_16, %c0_17] : memref<3x384x128xbf16, #tpu.memory_space<vmem>>, vector<1x384x128xbf16>
    %32 = vector.shape_cast %31 : vector<1x384x128xbf16> to vector<384x128xbf16>
    %cst_18 = arith.constant dense<0.000000e+00> : vector<384x128xf32>
    %33 = tpu.matmul %30, %32, %cst_18 {dimension_numbers = #tpu.dot_dimension_numbers<[1], [0], [0], [1], [0, 0, 1, 1], [], []>} : vector<384x384xbf16>, vector<384x128xbf16>, vector<384x128xf32> -> vector<384x128xf32>
    %34 = arith.addf %29, %33 : vector<384x128xf32>
    %35 = vector.extract_strided_slice %28 {offsets = [24, 0], sizes = [384, 384], strides = [1, 1]} : vector<432x384xbf16> to vector<384x384xbf16>
    %c1 = arith.constant 1 : index
    %c0_19 = arith.constant 0 : index
    %c0_20 = arith.constant 0 : index
    %36 = vector.load %arg5[%c1, %c0_19, %c0_20] : memref<3x384x128xbf16, #tpu.memory_space<vmem>>, vector<1x384x128xbf16>
    %37 = vector.shape_cast %36 : vector<1x384x128xbf16> to vector<384x128xbf16>
    %cst_21 = arith.constant dense<0.000000e+00> : vector<384x128xf32>
    %38 = tpu.matmul %35, %37, %cst_21 {dimension_numbers = #tpu.dot_dimension_numbers<[1], [0], [0], [1], [0, 0, 1, 1], [], []>} : vector<384x384xbf16>, vector<384x128xbf16>, vector<384x128xf32> -> vector<384x128xf32>
    %39 = arith.addf %34, %38 : vector<384x128xf32>
    %40 = vector.extract_strided_slice %28 {offsets = [48, 0], sizes = [384, 384], strides = [1, 1]} : vector<432x384xbf16> to vector<384x384xbf16>
    %c2 = arith.constant 2 : index
    %c0_22 = arith.constant 0 : index
    %c0_23 = arith.constant 0 : index
    %41 = vector.load %arg5[%c2, %c0_22, %c0_23] : memref<3x384x128xbf16, #tpu.memory_space<vmem>>, vector<1x384x128xbf16>
    %42 = vector.shape_cast %41 : vector<1x384x128xbf16> to vector<384x128xbf16>
    %cst_24 = arith.constant dense<0.000000e+00> : vector<384x128xf32>
    %43 = tpu.matmul %40, %42, %cst_24 {dimension_numbers = #tpu.dot_dimension_numbers<[1], [0], [0], [1], [0, 0, 1, 1], [], []>} : vector<384x384xbf16>, vector<384x128xbf16>, vector<384x128xf32> -> vector<384x128xf32>
    %44 = arith.addf %39, %43 : vector<384x128xf32>
    %45 = vector.shape_cast %44 : vector<384x128xf32> to vector<16x24x128xf32>
    %46 = vector.broadcast %7 : vector<1x24x1xf32> to vector<16x24x128xf32>
    %47 = arith.mulf %45, %46 : vector<16x24x128xf32>
    %48 = vector.shape_cast %47 : vector<16x24x128xf32> to vector<384x128xf32>
    %cst_25 = arith.constant dense<0.000000e+00> : vector<128xf32>
    %49 = vector.multi_reduction <add>, %48, %cst_25 [0] : vector<384x128xf32> to vector<128xf32>
    %50 = vector.shape_cast %49 : vector<128xf32> to vector<1x128xf32>
    %51 = arith.mulf %48, %48 : vector<384x128xf32>
    %cst_26 = arith.constant dense<0.000000e+00> : vector<128xf32>
    %52 = vector.multi_reduction <add>, %51, %cst_26 [0] : vector<384x128xf32> to vector<128xf32>
    %53 = vector.shape_cast %52 : vector<128xf32> to vector<1x128xf32>
    %54 = tpu.concatenate %50, %53 in 0 : vector<1x128xf32>, vector<1x128xf32> -> vector<2x128xf32>
    %c0_27 = arith.constant 0 : index
    %c0_28 = arith.constant 0 : index
    %c0_29 = arith.constant 0 : index
    %c0_30 = arith.constant 0 : index
    %55 = vector.load %arg7[%c0_27, %c0_28, %c0_29, %c0_30] : memref<1x1x2x128xf32, #tpu.memory_space<vmem>>, vector<1x1x2x128xf32>
    %56 = vector.shape_cast %55 : vector<1x1x2x128xf32> to vector<2x128xf32>
    %57 = vector.shape_cast %54 : vector<2x128xf32> to vector<1x1x2x128xf32>
    tpu.vector_store %arg7[%c0_27, %c0_28, %c0_29, %c0_30], %57 {strides = array<i32>} : memref<1x1x2x128xf32, #tpu.memory_space<vmem>>, vector<1x1x2x128xf32>,
    %58 = arith.truncf %47 : vector<16x24x128xf32> to vector<16x24x128xbf16>
    %c0_31 = arith.constant 0 : index
    %c0_32 = arith.constant 0 : index
    %c0_33 = arith.constant 0 : index
    %c0_34 = arith.constant 0 : index
    %59 = vector.load %arg6[%c0_31, %c0_32, %c0_33, %c0_34] : memref<1x16x24x128xbf16, #tpu.memory_space<vmem>>, vector<1x16x24x128xbf16>
    %60 = vector.shape_cast %59 : vector<1x16x24x128xbf16> to vector<16x24x128xbf16>
    %61 = vector.shape_cast %58 : vector<16x24x128xbf16> to vector<1x16x24x128xbf16>
    tpu.vector_store %arg6[%c0_31, %c0_32, %c0_33, %c0_34], %61 {strides = array<i32>} : memref<1x16x24x128xbf16, #tpu.memory_space<vmem>>, vector<1x16x24x128xbf16>,
    return
  }
  func.func @transform_0(%arg0: i32, %arg1: i32) -> (i32, i32, i32, i32) {
    %c16_i32 = arith.constant 16 : i32
    %0 = arith.muli %arg1, %c16_i32 : i32
    %c1_i32 = arith.constant 1 : i32
    %1 = arith.subi %0, %c1_i32 : i32
    %c0_i32 = arith.constant 0 : i32
    %2 = arith.maxsi %1, %c0_i32 : i32
    %c0_i32_0 = arith.constant 0 : i32
    %c0_i32_1 = arith.constant 0 : i32
    %c0_i32_2 = arith.constant 0 : i32
    return %arg0, %2, %c0_i32_0, %c0_i32_1 : i32, i32, i32, i32
  }
  func.func @transform_1(%arg0: i32, %arg1: i32) -> (i32, i32, i32, i32) {
    %c0_i32 = arith.constant 0 : i32
    %c0_i32_0 = arith.constant 0 : i32
    %c0_i32_1 = arith.constant 0 : i32
    return %arg0, %arg1, %c0_i32, %c0_i32_0 : i32, i32, i32, i32
  }
  func.func @transform_2(%arg0: i32, %arg1: i32) -> (i32, i32, i32, i32) {
    %c1_i32 = arith.constant 1 : i32
    %0 = arith.addi %arg1, %c1_i32 : i32
    %c16_i32 = arith.constant 16 : i32
    %1 = arith.muli %0, %c16_i32 : i32
    %c15_i32 = arith.constant 15 : i32
    %2 = arith.minsi %1, %c15_i32 : i32
    %c0_i32 = arith.constant 0 : i32
    %c0_i32_0 = arith.constant 0 : i32
    %c0_i32_1 = arith.constant 0 : i32
    return %arg0, %2, %c0_i32, %c0_i32_0 : i32, i32, i32, i32
  }
  func.func @transform_3(%arg0: i32, %arg1: i32) -> (i32, i32, i32) {
    %c0_i32 = arith.constant 0 : i32
    %c0_i32_0 = arith.constant 0 : i32
    %c0_i32_1 = arith.constant 0 : i32
    %c0_i32_2 = arith.constant 0 : i32
    return %c0_i32, %c0_i32_0, %c0_i32_1 : i32, i32, i32
  }
  func.func @transform_4(%arg0: i32, %arg1: i32) -> (i32, i32, i32, i32) {
    %c0_i32 = arith.constant 0 : i32
    %c0_i32_0 = arith.constant 0 : i32
    %c0_i32_1 = arith.constant 0 : i32
    return %arg0, %arg1, %c0_i32, %c0_i32_0 : i32, i32, i32, i32
  }
  func.func @transform_5(%arg0: i32, %arg1: i32) -> (i32, i32, i32, i32) {
    %c0_i32 = arith.constant 0 : i32
    %c0_i32_0 = arith.constant 0 : i32
    %c0_i32_1 = arith.constant 0 : i32
    return %arg0, %arg1, %c0_i32, %c0_i32_0 : i32, i32, i32, i32
  }
}

module attributes {stable_mosaic.version = 11 : i64} {
  func.func @kernel(%arg0: i32, %arg1: i32, %arg2: memref<1x1x24x128xbf16, #tpu.memory_space<vmem>>, %arg3: memref<1x16x24x128xbf16, #tpu.memory_space<vmem>>, %arg4: memref<1x1x24x128xbf16, #tpu.memory_space<vmem>>, %arg5: memref<3x384x128xbf16, #tpu.memory_space<vmem>>, %arg6: memref<2x128xf32, #tpu.memory_space<vmem>>, %arg7: memref<1x16x24x128xbf16, #tpu.memory_space<vmem>>, %arg8: memref<1x1x2x128xf32, #tpu.memory_space<vmem>>) attributes {dimension_semantics = [#tpu.dimension_semantics<parallel>, #tpu.dimension_semantics<parallel>], iteration_bounds = array<i64: 2, 1>, scalar_prefetch = 0 : i64, scratch_operands = 0 : i64, tpu.core_type = #tpu.core_type<tc>, window_params = [{transform_indices = @transform_0, window_bounds = array<i64: 1, 1, 24, 128>}, {transform_indices = @transform_1, window_bounds = array<i64: 1, 16, 24, 128>}, {transform_indices = @transform_2, window_bounds = array<i64: 1, 1, 24, 128>}, {pipeline_mode = #tpu.pipeline_mode<synchronous>, transform_indices = @transform_3, window_bounds = array<i64: 3, 384, 128>}, {pipeline_mode = #tpu.pipeline_mode<synchronous>, transform_indices = @transform_4, window_bounds = array<i64: 2, 128>}, {transform_indices = @transform_5, window_bounds = array<i64: 1, 16, 24, 128>}, {transform_indices = @transform_6, window_bounds = array<i64: 1, 1, 2, 128>}]} {
    %0 = tpu.iota {dimensions = array<i32: 1>} : vector<1x24x1xi32>
    %c1_i32 = arith.constant 1 : i32
    %1 = vector.broadcast %c1_i32 : i32 to vector<1x24x1xi32>
    %2 = arith.cmpi sge, %0, %1 : vector<1x24x1xi32>
    %c16_i32 = arith.constant 16 : i32
    %3 = vector.broadcast %c16_i32 : i32 to vector<1x24x1xi32>
    %4 = arith.cmpi sle, %0, %3 : vector<1x24x1xi32>
    %5 = arith.andi %2, %4 : vector<1x24x1xi1>
    %6 = arith.extui %5 : vector<1x24x1xi1> to vector<1x24x1xi32>
    %7 = arith.sitofp %6 : vector<1x24x1xi32> to vector<1x24x1xf32>
    %c0 = arith.constant 0 : index
    %c0_0 = arith.constant 0 : index
    %c0_1 = arith.constant 0 : index
    %c0_2 = arith.constant 0 : index
    %8 = vector.load %arg2[%c0, %c0_0, %c0_1, %c0_2] : memref<1x1x24x128xbf16, #tpu.memory_space<vmem>>, vector<1x1x24x128xbf16>
    %9 = vector.shape_cast %8 : vector<1x1x24x128xbf16> to vector<1x24x128xbf16>
    %c0_3 = arith.constant 0 : index
    %c0_4 = arith.constant 0 : index
    %10 = vector.load %arg6[%c0_3, %c0_4] : memref<2x128xf32, #tpu.memory_space<vmem>>, vector<1x128xf32>
    %11 = vector.shape_cast %10 : vector<1x128xf32> to vector<128xf32>
    %12 = vector.shape_cast %11 : vector<128xf32> to vector<1x1x128xf32>
    %c1 = arith.constant 1 : index
    %c0_5 = arith.constant 0 : index
    %13 = vector.load %arg6[%c1, %c0_5] : memref<2x128xf32, #tpu.memory_space<vmem>>, vector<1x128xf32>
    %14 = vector.shape_cast %13 : vector<1x128xf32> to vector<128xf32>
    %15 = vector.shape_cast %14 : vector<128xf32> to vector<1x1x128xf32>
    %16 = arith.extf %9 : vector<1x24x128xbf16> to vector<1x24x128xf32>
    %17 = vector.broadcast %12 : vector<1x1x128xf32> to vector<1x24x128xf32>
    %18 = arith.mulf %16, %17 : vector<1x24x128xf32>
    %19 = vector.broadcast %15 : vector<1x1x128xf32> to vector<1x24x128xf32>
    %20 = arith.addf %18, %19 : vector<1x24x128xf32>
    %cst = arith.constant 0.000000e+00 : f32
    %21 = vector.broadcast %cst : f32 to vector<1x24x128xf32>
    %22 = arith.maximumf %20, %21 : vector<1x24x128xf32>
    %23 = vector.broadcast %7 : vector<1x24x1xf32> to vector<1x24x128xf32>
    %24 = arith.mulf %22, %23 : vector<1x24x128xf32>
    %25 = arith.truncf %24 : vector<1x24x128xf32> to vector<1x24x128xbf16>
    %c0_6 = arith.constant 0 : index
    %c0_7 = arith.constant 0 : index
    %c0_8 = arith.constant 0 : index
    %c0_9 = arith.constant 0 : index
    %26 = vector.load %arg3[%c0_6, %c0_7, %c0_8, %c0_9] : memref<1x16x24x128xbf16, #tpu.memory_space<vmem>>, vector<1x16x24x128xbf16>
    %27 = vector.shape_cast %26 : vector<1x16x24x128xbf16> to vector<16x24x128xbf16>
    %c0_10 = arith.constant 0 : index
    %c0_11 = arith.constant 0 : index
    %28 = vector.load %arg6[%c0_10, %c0_11] : memref<2x128xf32, #tpu.memory_space<vmem>>, vector<1x128xf32>
    %29 = vector.shape_cast %28 : vector<1x128xf32> to vector<128xf32>
    %30 = vector.shape_cast %29 : vector<128xf32> to vector<1x1x128xf32>
    %c1_12 = arith.constant 1 : index
    %c0_13 = arith.constant 0 : index
    %31 = vector.load %arg6[%c1_12, %c0_13] : memref<2x128xf32, #tpu.memory_space<vmem>>, vector<1x128xf32>
    %32 = vector.shape_cast %31 : vector<1x128xf32> to vector<128xf32>
    %33 = vector.shape_cast %32 : vector<128xf32> to vector<1x1x128xf32>
    %34 = arith.extf %27 : vector<16x24x128xbf16> to vector<16x24x128xf32>
    %35 = vector.broadcast %30 : vector<1x1x128xf32> to vector<16x24x128xf32>
    %36 = arith.mulf %34, %35 : vector<16x24x128xf32>
    %37 = vector.broadcast %33 : vector<1x1x128xf32> to vector<16x24x128xf32>
    %38 = arith.addf %36, %37 : vector<16x24x128xf32>
    %cst_14 = arith.constant 0.000000e+00 : f32
    %39 = vector.broadcast %cst_14 : f32 to vector<16x24x128xf32>
    %40 = arith.maximumf %38, %39 : vector<16x24x128xf32>
    %41 = vector.broadcast %7 : vector<1x24x1xf32> to vector<16x24x128xf32>
    %42 = arith.mulf %40, %41 : vector<16x24x128xf32>
    %43 = arith.truncf %42 : vector<16x24x128xf32> to vector<16x24x128xbf16>
    %c0_15 = arith.constant 0 : index
    %c0_16 = arith.constant 0 : index
    %c0_17 = arith.constant 0 : index
    %c0_18 = arith.constant 0 : index
    %44 = vector.load %arg4[%c0_15, %c0_16, %c0_17, %c0_18] : memref<1x1x24x128xbf16, #tpu.memory_space<vmem>>, vector<1x1x24x128xbf16>
    %45 = vector.shape_cast %44 : vector<1x1x24x128xbf16> to vector<1x24x128xbf16>
    %c0_19 = arith.constant 0 : index
    %c0_20 = arith.constant 0 : index
    %46 = vector.load %arg6[%c0_19, %c0_20] : memref<2x128xf32, #tpu.memory_space<vmem>>, vector<1x128xf32>
    %47 = vector.shape_cast %46 : vector<1x128xf32> to vector<128xf32>
    %48 = vector.shape_cast %47 : vector<128xf32> to vector<1x1x128xf32>
    %c1_21 = arith.constant 1 : index
    %c0_22 = arith.constant 0 : index
    %49 = vector.load %arg6[%c1_21, %c0_22] : memref<2x128xf32, #tpu.memory_space<vmem>>, vector<1x128xf32>
    %50 = vector.shape_cast %49 : vector<1x128xf32> to vector<128xf32>
    %51 = vector.shape_cast %50 : vector<128xf32> to vector<1x1x128xf32>
    %52 = arith.extf %45 : vector<1x24x128xbf16> to vector<1x24x128xf32>
    %53 = vector.broadcast %48 : vector<1x1x128xf32> to vector<1x24x128xf32>
    %54 = arith.mulf %52, %53 : vector<1x24x128xf32>
    %55 = vector.broadcast %51 : vector<1x1x128xf32> to vector<1x24x128xf32>
    %56 = arith.addf %54, %55 : vector<1x24x128xf32>
    %cst_23 = arith.constant 0.000000e+00 : f32
    %57 = vector.broadcast %cst_23 : f32 to vector<1x24x128xf32>
    %58 = arith.maximumf %56, %57 : vector<1x24x128xf32>
    %59 = vector.broadcast %7 : vector<1x24x1xf32> to vector<1x24x128xf32>
    %60 = arith.mulf %58, %59 : vector<1x24x128xf32>
    %61 = arith.truncf %60 : vector<1x24x128xf32> to vector<1x24x128xbf16>
    %c0_i32 = arith.constant 0 : i32
    %62 = arith.cmpi sgt, %arg1, %c0_i32 : i32
    %cst_24 = arith.constant 0.000000e+00 : bf16
    %63 = vector.broadcast %cst_24 : bf16 to vector<1x24x128xbf16>
    %64 = arith.select %62, %25, %63 : vector<1x24x128xbf16>
    %c0_i32_25 = arith.constant 0 : i32
    %65 = arith.cmpi slt, %arg1, %c0_i32_25 : i32
    %cst_26 = arith.constant 0.000000e+00 : bf16
    %66 = vector.broadcast %cst_26 : bf16 to vector<1x24x128xbf16>
    %67 = arith.select %65, %61, %66 : vector<1x24x128xbf16>
    %cst_27 = arith.constant 0.000000e+00 : bf16
    %68 = vector.broadcast %cst_27 : bf16 to vector<8x128xbf16>
    %69 = vector.shape_cast %64 : vector<1x24x128xbf16> to vector<24x128xbf16>
    %70 = vector.shape_cast %43 : vector<16x24x128xbf16> to vector<384x128xbf16>
    %71 = vector.shape_cast %67 : vector<1x24x128xbf16> to vector<24x128xbf16>
    %72 = tpu.concatenate %68, %69, %70, %71, %68 in 0 : vector<8x128xbf16>, vector<24x128xbf16>, vector<384x128xbf16>, vector<24x128xbf16>, vector<8x128xbf16> -> vector<448x128xbf16>
    %73 = vector.extract_strided_slice %72 {offsets = [8, 0], sizes = [432, 128], strides = [1, 1]} : vector<448x128xbf16> to vector<432x128xbf16>
    %74 = vector.extract_strided_slice %72 {offsets = [7, 0], sizes = [432, 128], strides = [1, 1]} : vector<448x128xbf16> to vector<432x128xbf16>
    %75 = vector.extract_strided_slice %72 {offsets = [9, 0], sizes = [432, 128], strides = [1, 1]} : vector<448x128xbf16> to vector<432x128xbf16>
    %76 = tpu.concatenate %74, %73, %75 in 1 : vector<432x128xbf16>, vector<432x128xbf16>, vector<432x128xbf16> -> vector<432x384xbf16>
    %cst_28 = arith.constant 0.000000e+00 : f32
    %77 = vector.broadcast %cst_28 : f32 to vector<384x128xf32>
    %78 = vector.extract_strided_slice %76 {offsets = [0, 0], sizes = [384, 384], strides = [1, 1]} : vector<432x384xbf16> to vector<384x384xbf16>
    %c0_29 = arith.constant 0 : index
    %c0_30 = arith.constant 0 : index
    %c0_31 = arith.constant 0 : index
    %79 = vector.load %arg5[%c0_29, %c0_30, %c0_31] : memref<3x384x128xbf16, #tpu.memory_space<vmem>>, vector<1x384x128xbf16>
    %80 = vector.shape_cast %79 : vector<1x384x128xbf16> to vector<384x128xbf16>
    %cst_32 = arith.constant dense<0.000000e+00> : vector<384x128xf32>
    %81 = tpu.matmul %78, %80, %cst_32 {dimension_numbers = #tpu.dot_dimension_numbers<[1], [0], [0], [1], [0, 0, 1, 1], [], []>} : vector<384x384xbf16>, vector<384x128xbf16>, vector<384x128xf32> -> vector<384x128xf32>
    %82 = arith.addf %77, %81 : vector<384x128xf32>
    %83 = vector.extract_strided_slice %76 {offsets = [24, 0], sizes = [384, 384], strides = [1, 1]} : vector<432x384xbf16> to vector<384x384xbf16>
    %c1_33 = arith.constant 1 : index
    %c0_34 = arith.constant 0 : index
    %c0_35 = arith.constant 0 : index
    %84 = vector.load %arg5[%c1_33, %c0_34, %c0_35] : memref<3x384x128xbf16, #tpu.memory_space<vmem>>, vector<1x384x128xbf16>
    %85 = vector.shape_cast %84 : vector<1x384x128xbf16> to vector<384x128xbf16>
    %cst_36 = arith.constant dense<0.000000e+00> : vector<384x128xf32>
    %86 = tpu.matmul %83, %85, %cst_36 {dimension_numbers = #tpu.dot_dimension_numbers<[1], [0], [0], [1], [0, 0, 1, 1], [], []>} : vector<384x384xbf16>, vector<384x128xbf16>, vector<384x128xf32> -> vector<384x128xf32>
    %87 = arith.addf %82, %86 : vector<384x128xf32>
    %88 = vector.extract_strided_slice %76 {offsets = [48, 0], sizes = [384, 384], strides = [1, 1]} : vector<432x384xbf16> to vector<384x384xbf16>
    %c2 = arith.constant 2 : index
    %c0_37 = arith.constant 0 : index
    %c0_38 = arith.constant 0 : index
    %89 = vector.load %arg5[%c2, %c0_37, %c0_38] : memref<3x384x128xbf16, #tpu.memory_space<vmem>>, vector<1x384x128xbf16>
    %90 = vector.shape_cast %89 : vector<1x384x128xbf16> to vector<384x128xbf16>
    %cst_39 = arith.constant dense<0.000000e+00> : vector<384x128xf32>
    %91 = tpu.matmul %88, %90, %cst_39 {dimension_numbers = #tpu.dot_dimension_numbers<[1], [0], [0], [1], [0, 0, 1, 1], [], []>} : vector<384x384xbf16>, vector<384x128xbf16>, vector<384x128xf32> -> vector<384x128xf32>
    %92 = arith.addf %87, %91 : vector<384x128xf32>
    %93 = vector.shape_cast %92 : vector<384x128xf32> to vector<16x24x128xf32>
    %94 = vector.broadcast %7 : vector<1x24x1xf32> to vector<16x24x128xf32>
    %95 = arith.mulf %93, %94 : vector<16x24x128xf32>
    %96 = vector.shape_cast %95 : vector<16x24x128xf32> to vector<384x128xf32>
    %cst_40 = arith.constant dense<0.000000e+00> : vector<128xf32>
    %97 = vector.multi_reduction <add>, %96, %cst_40 [0] : vector<384x128xf32> to vector<128xf32>
    %98 = vector.shape_cast %97 : vector<128xf32> to vector<1x128xf32>
    %99 = arith.mulf %96, %96 : vector<384x128xf32>
    %cst_41 = arith.constant dense<0.000000e+00> : vector<128xf32>
    %100 = vector.multi_reduction <add>, %99, %cst_41 [0] : vector<384x128xf32> to vector<128xf32>
    %101 = vector.shape_cast %100 : vector<128xf32> to vector<1x128xf32>
    %102 = tpu.concatenate %98, %101 in 0 : vector<1x128xf32>, vector<1x128xf32> -> vector<2x128xf32>
    %c0_42 = arith.constant 0 : index
    %c0_43 = arith.constant 0 : index
    %c0_44 = arith.constant 0 : index
    %c0_45 = arith.constant 0 : index
    %103 = vector.load %arg8[%c0_42, %c0_43, %c0_44, %c0_45] : memref<1x1x2x128xf32, #tpu.memory_space<vmem>>, vector<1x1x2x128xf32>
    %104 = vector.shape_cast %103 : vector<1x1x2x128xf32> to vector<2x128xf32>
    %105 = vector.shape_cast %102 : vector<2x128xf32> to vector<1x1x2x128xf32>
    tpu.vector_store %arg8[%c0_42, %c0_43, %c0_44, %c0_45], %105 {strides = array<i32>} : memref<1x1x2x128xf32, #tpu.memory_space<vmem>>, vector<1x1x2x128xf32>,
    %106 = arith.truncf %95 : vector<16x24x128xf32> to vector<16x24x128xbf16>
    %c0_46 = arith.constant 0 : index
    %c0_47 = arith.constant 0 : index
    %c0_48 = arith.constant 0 : index
    %c0_49 = arith.constant 0 : index
    %107 = vector.load %arg7[%c0_46, %c0_47, %c0_48, %c0_49] : memref<1x16x24x128xbf16, #tpu.memory_space<vmem>>, vector<1x16x24x128xbf16>
    %108 = vector.shape_cast %107 : vector<1x16x24x128xbf16> to vector<16x24x128xbf16>
    %109 = vector.shape_cast %106 : vector<16x24x128xbf16> to vector<1x16x24x128xbf16>
    tpu.vector_store %arg7[%c0_46, %c0_47, %c0_48, %c0_49], %109 {strides = array<i32>} : memref<1x16x24x128xbf16, #tpu.memory_space<vmem>>, vector<1x16x24x128xbf16>,
    return
  }
  func.func @transform_0(%arg0: i32, %arg1: i32) -> (i32, i32, i32, i32) {
    %c16_i32 = arith.constant 16 : i32
    %0 = arith.muli %arg1, %c16_i32 : i32
    %c1_i32 = arith.constant 1 : i32
    %1 = arith.subi %0, %c1_i32 : i32
    %c0_i32 = arith.constant 0 : i32
    %2 = arith.maxsi %1, %c0_i32 : i32
    %c0_i32_0 = arith.constant 0 : i32
    %c0_i32_1 = arith.constant 0 : i32
    %c0_i32_2 = arith.constant 0 : i32
    return %arg0, %2, %c0_i32_0, %c0_i32_1 : i32, i32, i32, i32
  }
  func.func @transform_1(%arg0: i32, %arg1: i32) -> (i32, i32, i32, i32) {
    %c0_i32 = arith.constant 0 : i32
    %c0_i32_0 = arith.constant 0 : i32
    %c0_i32_1 = arith.constant 0 : i32
    return %arg0, %arg1, %c0_i32, %c0_i32_0 : i32, i32, i32, i32
  }
  func.func @transform_2(%arg0: i32, %arg1: i32) -> (i32, i32, i32, i32) {
    %c1_i32 = arith.constant 1 : i32
    %0 = arith.addi %arg1, %c1_i32 : i32
    %c16_i32 = arith.constant 16 : i32
    %1 = arith.muli %0, %c16_i32 : i32
    %c15_i32 = arith.constant 15 : i32
    %2 = arith.minsi %1, %c15_i32 : i32
    %c0_i32 = arith.constant 0 : i32
    %c0_i32_0 = arith.constant 0 : i32
    %c0_i32_1 = arith.constant 0 : i32
    return %arg0, %2, %c0_i32, %c0_i32_0 : i32, i32, i32, i32
  }
  func.func @transform_3(%arg0: i32, %arg1: i32) -> (i32, i32, i32) {
    %c0_i32 = arith.constant 0 : i32
    %c0_i32_0 = arith.constant 0 : i32
    %c0_i32_1 = arith.constant 0 : i32
    %c0_i32_2 = arith.constant 0 : i32
    return %c0_i32, %c0_i32_0, %c0_i32_1 : i32, i32, i32
  }
  func.func @transform_4(%arg0: i32, %arg1: i32) -> (i32, i32) {
    %c0_i32 = arith.constant 0 : i32
    %c0_i32_0 = arith.constant 0 : i32
    %c0_i32_1 = arith.constant 0 : i32
    return %c0_i32, %c0_i32_0 : i32, i32
  }
  func.func @transform_5(%arg0: i32, %arg1: i32) -> (i32, i32, i32, i32) {
    %c0_i32 = arith.constant 0 : i32
    %c0_i32_0 = arith.constant 0 : i32
    %c0_i32_1 = arith.constant 0 : i32
    return %arg0, %arg1, %c0_i32, %c0_i32_0 : i32, i32, i32, i32
  }
  func.func @transform_6(%arg0: i32, %arg1: i32) -> (i32, i32, i32, i32) {
    %c0_i32 = arith.constant 0 : i32
    %c0_i32_0 = arith.constant 0 : i32
    %c0_i32_1 = arith.constant 0 : i32
    return %arg0, %arg1, %c0_i32, %c0_i32_0 : i32, i32, i32, i32
  }
}

module attributes {stable_mosaic.version = 11 : i64} {
  func.func @kernel(%arg0: i32, %arg1: i32, %arg2: memref<1x16x24x128xbf16, #tpu.memory_space<vmem>>, %arg3: memref<1x16x24x128xbf16, #tpu.memory_space<vmem>>, %arg4: memref<4x128xf32, #tpu.memory_space<vmem>>, %arg5: memref<128x256xbf16, #tpu.memory_space<vmem>>, %arg6: memref<128x256xbf16, #tpu.memory_space<vmem>>, %arg7: memref<2x256xf32, #tpu.memory_space<vmem>>, %arg8: memref<1x2x16x24x256xf32, #tpu.memory_space<vmem>>) attributes {dimension_semantics = [#tpu.dimension_semantics<parallel>, #tpu.dimension_semantics<parallel>], iteration_bounds = array<i64: 2, 1>, scalar_prefetch = 0 : i64, scratch_operands = 0 : i64, tpu.core_type = #tpu.core_type<tc>, window_params = [{transform_indices = @transform_0, window_bounds = array<i64: 1, 16, 24, 128>}, {transform_indices = @transform_1, window_bounds = array<i64: 1, 16, 24, 128>}, {pipeline_mode = #tpu.pipeline_mode<synchronous>, transform_indices = @transform_2, window_bounds = array<i64: 4, 128>}, {pipeline_mode = #tpu.pipeline_mode<synchronous>, transform_indices = @transform_3, window_bounds = array<i64: 128, 256>}, {pipeline_mode = #tpu.pipeline_mode<synchronous>, transform_indices = @transform_4, window_bounds = array<i64: 128, 256>}, {pipeline_mode = #tpu.pipeline_mode<synchronous>, transform_indices = @transform_5, window_bounds = array<i64: 2, 256>}, {transform_indices = @transform_6, window_bounds = array<i64: 1, 2, 16, 24, 256>}]} {
    %c0 = arith.constant 0 : index
    %c0_0 = arith.constant 0 : index
    %0 = vector.load %arg4[%c0, %c0_0] : memref<4x128xf32, #tpu.memory_space<vmem>>, vector<1x128xf32>
    %1 = vector.shape_cast %0 : vector<1x128xf32> to vector<128xf32>
    %2 = vector.shape_cast %1 : vector<128xf32> to vector<1x1x128xf32>
    %c1 = arith.constant 1 : index
    %c0_1 = arith.constant 0 : index
    %3 = vector.load %arg4[%c1, %c0_1] : memref<4x128xf32, #tpu.memory_space<vmem>>, vector<1x128xf32>
    %4 = vector.shape_cast %3 : vector<1x128xf32> to vector<128xf32>
    %5 = vector.shape_cast %4 : vector<128xf32> to vector<1x1x128xf32>
    %c2 = arith.constant 2 : index
    %c0_2 = arith.constant 0 : index
    %6 = vector.load %arg4[%c2, %c0_2] : memref<4x128xf32, #tpu.memory_space<vmem>>, vector<1x128xf32>
    %7 = vector.shape_cast %6 : vector<1x128xf32> to vector<128xf32>
    %8 = vector.shape_cast %7 : vector<128xf32> to vector<1x1x128xf32>
    %c3 = arith.constant 3 : index
    %c0_3 = arith.constant 0 : index
    %9 = vector.load %arg4[%c3, %c0_3] : memref<4x128xf32, #tpu.memory_space<vmem>>, vector<1x128xf32>
    %10 = vector.shape_cast %9 : vector<1x128xf32> to vector<128xf32>
    %11 = vector.shape_cast %10 : vector<128xf32> to vector<1x1x128xf32>
    %c0_4 = arith.constant 0 : index
    %c0_5 = arith.constant 0 : index
    %c0_6 = arith.constant 0 : index
    %c0_7 = arith.constant 0 : index
    %12 = vector.load %arg2[%c0_4, %c0_5, %c0_6, %c0_7] : memref<1x16x24x128xbf16, #tpu.memory_space<vmem>>, vector<1x16x24x128xbf16>
    %13 = vector.shape_cast %12 : vector<1x16x24x128xbf16> to vector<16x24x128xbf16>
    %14 = arith.extf %13 : vector<16x24x128xbf16> to vector<16x24x128xf32>
    %15 = vector.broadcast %2 : vector<1x1x128xf32> to vector<16x24x128xf32>
    %16 = arith.mulf %14, %15 : vector<16x24x128xf32>
    %17 = vector.broadcast %5 : vector<1x1x128xf32> to vector<16x24x128xf32>
    %18 = arith.addf %16, %17 : vector<16x24x128xf32>
    %cst = arith.constant 0.000000e+00 : f32
    %19 = vector.broadcast %cst : f32 to vector<16x24x128xf32>
    %20 = arith.maximumf %18, %19 : vector<16x24x128xf32>
    %c0_8 = arith.constant 0 : index
    %c0_9 = arith.constant 0 : index
    %c0_10 = arith.constant 0 : index
    %c0_11 = arith.constant 0 : index
    %21 = vector.load %arg3[%c0_8, %c0_9, %c0_10, %c0_11] : memref<1x16x24x128xbf16, #tpu.memory_space<vmem>>, vector<1x16x24x128xbf16>
    %22 = vector.shape_cast %21 : vector<1x16x24x128xbf16> to vector<16x24x128xbf16>
    %23 = arith.extf %22 : vector<16x24x128xbf16> to vector<16x24x128xf32>
    %24 = vector.broadcast %8 : vector<1x1x128xf32> to vector<16x24x128xf32>
    %25 = arith.mulf %23, %24 : vector<16x24x128xf32>
    %26 = vector.broadcast %11 : vector<1x1x128xf32> to vector<16x24x128xf32>
    %27 = arith.addf %25, %26 : vector<16x24x128xf32>
    %cst_12 = arith.constant 0.000000e+00 : f32
    %28 = vector.broadcast %cst_12 : f32 to vector<16x24x128xf32>
    %29 = arith.maximumf %27, %28 : vector<16x24x128xf32>
    %30 = arith.addf %20, %29 : vector<16x24x128xf32>
    %31 = arith.truncf %30 : vector<16x24x128xf32> to vector<16x24x128xbf16>
    %32 = vector.shape_cast %31 : vector<16x24x128xbf16> to vector<384x128xbf16>
    %c0_13 = arith.constant 0 : index
    %c0_14 = arith.constant 0 : index
    %33 = vector.load %arg5[%c0_13, %c0_14] : memref<128x256xbf16, #tpu.memory_space<vmem>>, vector<128x256xbf16>
    %cst_15 = arith.constant dense<0.000000e+00> : vector<384x256xf32>
    %34 = tpu.matmul %32, %33, %cst_15 {dimension_numbers = #tpu.dot_dimension_numbers<[1], [0], [0], [1], [0, 0, 1, 1], [], []>} : vector<384x128xbf16>, vector<128x256xbf16>, vector<384x256xf32> -> vector<384x256xf32>
    %c0_16 = arith.constant 0 : index
    %c0_17 = arith.constant 0 : index
    %35 = vector.load %arg6[%c0_16, %c0_17] : memref<128x256xbf16, #tpu.memory_space<vmem>>, vector<128x256xbf16>
    %cst_18 = arith.constant dense<0.000000e+00> : vector<384x256xf32>
    %36 = tpu.matmul %32, %35, %cst_18 {dimension_numbers = #tpu.dot_dimension_numbers<[1], [0], [0], [1], [0, 0, 1, 1], [], []>} : vector<384x128xbf16>, vector<128x256xbf16>, vector<384x256xf32> -> vector<384x256xf32>
    %c0_19 = arith.constant 0 : index
    %c0_20 = arith.constant 0 : index
    %37 = vector.load %arg7[%c0_19, %c0_20] : memref<2x256xf32, #tpu.memory_space<vmem>>, vector<1x256xf32>
    %38 = vector.shape_cast %37 : vector<1x256xf32> to vector<256xf32>
    %39 = vector.shape_cast %38 : vector<256xf32> to vector<1x256xf32>
    %40 = vector.broadcast %39 : vector<1x256xf32> to vector<384x256xf32>
    %41 = arith.addf %34, %40 : vector<384x256xf32>
    %c1_21 = arith.constant 1 : index
    %c0_22 = arith.constant 0 : index
    %42 = vector.load %arg7[%c1_21, %c0_22] : memref<2x256xf32, #tpu.memory_space<vmem>>, vector<1x256xf32>
    %43 = vector.shape_cast %42 : vector<1x256xf32> to vector<256xf32>
    %44 = vector.shape_cast %43 : vector<256xf32> to vector<1x256xf32>
    %45 = vector.broadcast %44 : vector<1x256xf32> to vector<384x256xf32>
    %46 = arith.addf %36, %45 : vector<384x256xf32>
    %47 = vector.shape_cast %41 : vector<384x256xf32> to vector<16x24x256xf32>
    %c0_23 = arith.constant 0 : index
    %c0_24 = arith.constant 0 : index
    %c0_25 = arith.constant 0 : index
    %c0_26 = arith.constant 0 : index
    %c0_27 = arith.constant 0 : index
    %48 = vector.load %arg8[%c0_23, %c0_24, %c0_25, %c0_26, %c0_27] : memref<1x2x16x24x256xf32, #tpu.memory_space<vmem>>, vector<1x1x16x24x256xf32>
    %49 = vector.shape_cast %48 : vector<1x1x16x24x256xf32> to vector<16x24x256xf32>
    %50 = vector.shape_cast %47 : vector<16x24x256xf32> to vector<1x1x16x24x256xf32>
    tpu.vector_store %arg8[%c0_23, %c0_24, %c0_25, %c0_26, %c0_27], %50 {strides = array<i32>} : memref<1x2x16x24x256xf32, #tpu.memory_space<vmem>>, vector<1x1x16x24x256xf32>,
    %51 = vector.shape_cast %46 : vector<384x256xf32> to vector<16x24x256xf32>
    %c0_28 = arith.constant 0 : index
    %c1_29 = arith.constant 1 : index
    %c0_30 = arith.constant 0 : index
    %c0_31 = arith.constant 0 : index
    %c0_32 = arith.constant 0 : index
    %52 = vector.load %arg8[%c0_28, %c1_29, %c0_30, %c0_31, %c0_32] : memref<1x2x16x24x256xf32, #tpu.memory_space<vmem>>, vector<1x1x16x24x256xf32>
    %53 = vector.shape_cast %52 : vector<1x1x16x24x256xf32> to vector<16x24x256xf32>
    %54 = vector.shape_cast %51 : vector<16x24x256xf32> to vector<1x1x16x24x256xf32>
    tpu.vector_store %arg8[%c0_28, %c1_29, %c0_30, %c0_31, %c0_32], %54 {strides = array<i32>} : memref<1x2x16x24x256xf32, #tpu.memory_space<vmem>>, vector<1x1x16x24x256xf32>,
    return
  }
  func.func @transform_0(%arg0: i32, %arg1: i32) -> (i32, i32, i32, i32) {
    %c0_i32 = arith.constant 0 : i32
    %c0_i32_0 = arith.constant 0 : i32
    %c0_i32_1 = arith.constant 0 : i32
    return %arg0, %arg1, %c0_i32, %c0_i32_0 : i32, i32, i32, i32
  }
  func.func @transform_1(%arg0: i32, %arg1: i32) -> (i32, i32, i32, i32) {
    %c0_i32 = arith.constant 0 : i32
    %c0_i32_0 = arith.constant 0 : i32
    %c0_i32_1 = arith.constant 0 : i32
    return %arg0, %arg1, %c0_i32, %c0_i32_0 : i32, i32, i32, i32
  }
  func.func @transform_2(%arg0: i32, %arg1: i32) -> (i32, i32) {
    %c0_i32 = arith.constant 0 : i32
    %c0_i32_0 = arith.constant 0 : i32
    %c0_i32_1 = arith.constant 0 : i32
    return %c0_i32, %c0_i32_0 : i32, i32
  }
  func.func @transform_3(%arg0: i32, %arg1: i32) -> (i32, i32) {
    %c0_i32 = arith.constant 0 : i32
    %c0_i32_0 = arith.constant 0 : i32
    %c0_i32_1 = arith.constant 0 : i32
    return %c0_i32, %c0_i32_0 : i32, i32
  }
  func.func @transform_4(%arg0: i32, %arg1: i32) -> (i32, i32) {
    %c0_i32 = arith.constant 0 : i32
    %c0_i32_0 = arith.constant 0 : i32
    %c0_i32_1 = arith.constant 0 : i32
    return %c0_i32, %c0_i32_0 : i32, i32
  }
  func.func @transform_5(%arg0: i32, %arg1: i32) -> (i32, i32) {
    %c0_i32 = arith.constant 0 : i32
    %c0_i32_0 = arith.constant 0 : i32
    %c0_i32_1 = arith.constant 0 : i32
    return %c0_i32, %c0_i32_0 : i32, i32
  }
  func.func @transform_6(%arg0: i32, %arg1: i32) -> (i32, i32, i32, i32, i32) {
    %c0_i32 = arith.constant 0 : i32
    %c0_i32_0 = arith.constant 0 : i32
    %c0_i32_1 = arith.constant 0 : i32
    %c0_i32_2 = arith.constant 0 : i32
    return %arg0, %c0_i32, %arg1, %c0_i32_0, %c0_i32_1 : i32, i32, i32, i32, i32
  }
}

</mosaic_0001>

<llo_original>
// kernel: residual_up_block_forward.7
$region0: #{residual_up_block_forward.7}
  #allocation0 [shape = 'u32[]', space=smem, size = 0x4, offset = 0x4, fixed_abs, tag = 'smem constant byte address 0x4 - core index']
  #allocation1 [shape = 'u32[144,128]{1,0:T(1,128)}', space=vmem, size = 0x12000, scoped, tag = 'internal scratch']
  %s0 = inlined_call_operand.vmem [shape: bf16[2,16,24,128], index: 0, kind: input, shape index: {}]
  %s1 = inlined_call_operand.vmem [shape: bf16[2,16,24,128], index: 1, kind: input, shape index: {}]
  %s2 = inlined_call_operand.vmem [shape: f32[4,128], index: 2, kind: input, shape index: {}]
  %s3 = inlined_call_operand.vmem [shape: bf16[128,256], index: 3, kind: input, shape index: {}]
  %s4 = inlined_call_operand.vmem [shape: bf16[128,256], index: 4, kind: input, shape index: {}]
  %s5 = inlined_call_operand.vmem [shape: f32[2,256], index: 5, kind: input, shape index: {}]
  %s6 = inlined_call_operand.vmem [shape: f32[2,2,16,24,256], index: 6, kind: output, shape index: {}]
  %s7 = sld [smem:[#allocation0]]
  $region57: #{residual_up_block_forward.7} parent=0
    _
  %s9 = ssub.s32 1, %s7
  %s10 = scalar_select 0, %s9, %s7
  loop: start=0, step=1, limit=4
  $region2: #{residual_up_block_forward.7} parent=0 // loop_pre_header
    _
  $region3: #{residual_up_block_forward.7} parent=0 // loop_header
    %s12 = sphi 0, %s16
    %p13 = scmp.ge.s32.totalorder %s12, 4
    %s19 = sphi 0, %s31
    %s20 = sphi 0, %s27
    %s21 = sphi 0, %s19
    %s22 = sphi 0, %s20
    %s23 = sphi 0, %s21
    %s24 = sphi 0, %s22
    %s36 = sphi 0, %s38
    %s39 = sphi 0, %s36
    %s40 = sphi 0, %s39
    %s56 = sphi 0, %s40
    %s64 = sphi 0, %s66
    %s67 = sphi 0, %s64
    %s68 = sphi 0, %s67
    %s84 = sphi 0, %s68
    %s88 = sphi 0, %s88
    %s90 = sphi 0, %s88
    %s91 = sphi 0, %s90
    %s105 = sphi 0, %s91
    %s109 = sphi 0, %s109
    %s111 = sphi 0, %s109
    %s112 = sphi 0, %s111
    %s126 = sphi 0, %s112
    %s130 = sphi 0, %s130
    %s132 = sphi 0, %s130
    %s133 = sphi 0, %s132
    %s147 = sphi 0, %s133
    %s151 = sphi 0, %s151
    %s153 = sphi 0, %s151
    %s154 = sphi 0, %s153
    %s168 = sphi 0, %s154
    %s176 = sphi 0, %s178
    %s179 = sphi 0, %s176
    %s180 = sphi 0, %s179
    %s196 = sphi 0, %s180
  $region4: #{residual_up_block_forward.7} parent=0 // loop_header_branch
    %15 = sbr.rel (%p13) target = $region8
  $region5: #{residual_up_block_forward.7} parent=0 // loop_body
    %s17 = ssub.s32 %s12, 1
    %s18 = ssub.s32 %s12, 2
    %s25 = sadd.s32 1, %s20
    %p26 = scmp.ge.s32.totalorder %s25, 1
    %s27 = scalar_select %p26, 0, %s25
    %s28 = sadd.s32 1, %s19
    %s29 = scalar_select %p26, %s28, %s19
    %p30 = scmp.ge.s32.totalorder %s29, 2
    %s31 = scalar_select %p30, 0, %s29
    %s32 = ssub.s32 %s19, %s31
    %s33 = ssub.s32 %s20, %s27
    %s34 = sor.u32 %s32, %s33
    %p35 = scmp.eq.s32.totalorder %s34, 0
    %s37 = sadd.s32 %s36, 1
    %s38 = scalar_select %p35, %s36, %s37
    %p41 = pneg %p35
    %p42 = scmp.eq.s32.totalorder %s12, 1
    %p43 = por %p41, %p42
    %p44 = scmp.ne.s32.totalorder %s36, %s39
    %p45 = scmp.eq.s32.totalorder %s12, 0
    %p46 = por %p44, %p45
    %p47 = scmp.ne.s32.totalorder %s36, %s39
    %p48 = scmp.eq.s32.totalorder %s17, 1
    %p49 = por %p47, %p48
    %p50 = scmp.ne.s32.totalorder %s39, %s40
    %p51 = scmp.eq.s32.totalorder %s17, 0
    %p52 = por %p50, %p51
    %p53 = scmp.ne.s32.totalorder %s39, %s40
    %p54 = scmp.eq.s32.totalorder %s18, 1
    %p55 = por %p53, %p54
    %p57 = scmp.ne.s32.totalorder %s40, %s56
    %p58 = scmp.eq.s32.totalorder %s18, 0
    %p59 = por %p57, %p58
    %s60 = ssub.s32 %s19, %s31
    %s61 = ssub.s32 %s20, %s27
    %s62 = sor.u32 %s60, %s61
    %p63 = scmp.eq.s32.totalorder %s62, 0
    %s65 = sadd.s32 %s64, 1
    %s66 = scalar_select %p63, %s64, %s65
    %p69 = pneg %p63
    %p70 = scmp.eq.s32.totalorder %s12, 1
    %p71 = por %p69, %p70
    %p72 = scmp.ne.s32.totalorder %s64, %s67
    %p73 = scmp.eq.s32.totalorder %s12, 0
    %p74 = por %p72, %p73
    %p75 = scmp.ne.s32.totalorder %s64, %s67
    %p76 = scmp.eq.s32.totalorder %s17, 1
    %p77 = por %p75, %p76
    %p78 = scmp.ne.s32.totalorder %s67, %s68
    %p79 = scmp.eq.s32.totalorder %s17, 0
    %p80 = por %p78, %p79
    %p81 = scmp.ne.s32.totalorder %s67, %s68
    %p82 = scmp.eq.s32.totalorder %s18, 1
    %p83 = por %p81, %p82
    %p85 = scmp.ne.s32.totalorder %s68, %s84
    %p86 = scmp.eq.s32.totalorder %s18, 0
    %p87 = por %p85, %p86
    %s89 = sadd.s32 %s88, 1
    %p92 = scmp.eq.s32.totalorder %s12, 1
    %p93 = scmp.ne.s32.totalorder %s88, %s90
    %p94 = scmp.eq.s32.totalorder %s12, 0
    %p95 = por %p93, %p94
    %p96 = scmp.ne.s32.totalorder %s88, %s90
    %p97 = scmp.eq.s32.totalorder %s17, 1
    %p98 = por %p96, %p97
    %p99 = scmp.ne.s32.totalorder %s90, %s91
    %p100 = scmp.eq.s32.totalorder %s17, 0
    %p101 = por %p99, %p100
    %p102 = scmp.ne.s32.totalorder %s90, %s91
    %p103 = scmp.eq.s32.totalorder %s18, 1
    %p104 = por %p102, %p103
    %p106 = scmp.ne.s32.totalorder %s91, %s105
    %p107 = scmp.eq.s32.totalorder %s18, 0
    %p108 = por %p106, %p107
    %s110 = sadd.s32 %s109, 1
    %p113 = scmp.eq.s32.totalorder %s12, 1
    %p114 = scmp.ne.s32.totalorder %s109, %s111
    %p115 = scmp.eq.s32.totalorder %s12, 0
    %p116 = por %p114, %p115
    %p117 = scmp.ne.s32.totalorder %s109, %s111
    %p118 = scmp.eq.s32.totalorder %s17, 1
    %p119 = por %p117, %p118
    %p120 = scmp.ne.s32.totalorder %s111, %s112
    %p121 = scmp.eq.s32.totalorder %s17, 0
    %p122 = por %p120, %p121
    %p123 = scmp.ne.s32.totalorder %s111, %s112
    %p124 = scmp.eq.s32.totalorder %s18, 1
    %p125 = por %p123, %p124
    %p127 = scmp.ne.s32.totalorder %s112, %s126
    %p128 = scmp.eq.s32.totalorder %s18, 0
    %p129 = por %p127, %p128
    %s131 = sadd.s32 %s130, 1
    %p134 = scmp.eq.s32.totalorder %s12, 1
    %p135 = scmp.ne.s32.totalorder %s130, %s132
    %p136 = scmp.eq.s32.totalorder %s12, 0
    %p137 = por %p135, %p136
    %p138 = scmp.ne.s32.totalorder %s130, %s132
    %p139 = scmp.eq.s32.totalorder %s17, 1
    %p140 = por %p138, %p139
    %p141 = scmp.ne.s32.totalorder %s132, %s133
    %p142 = scmp.eq.s32.totalorder %s17, 0
    %p143 = por %p141, %p142
    %p144 = scmp.ne.s32.totalorder %s132, %s133
    %p145 = scmp.eq.s32.totalorder %s18, 1
    %p146 = por %p144, %p145
    %p148 = scmp.ne.s32.totalorder %s133, %s147
    %p149 = scmp.eq.s32.totalorder %s18, 0
    %p150 = por %p148, %p149
    %s152 = sadd.s32 %s151, 1
    %p155 = scmp.eq.s32.totalorder %s12, 1
    %p156 = scmp.ne.s32.totalorder %s151, %s153
    %p157 = scmp.eq.s32.totalorder %s12, 0
    %p158 = por %p156, %p157
    %p159 = scmp.ne.s32.totalorder %s151, %s153
    %p160 = scmp.eq.s32.totalorder %s17, 1
    %p161 = por %p159, %p160
    %p162 = scmp.ne.s32.totalorder %s153, %s154
    %p163 = scmp.eq.s32.totalorder %s17, 0
    %p164 = por %p162, %p163
    %p165 = scmp.ne.s32.totalorder %s153, %s154
    %p166 = scmp.eq.s32.totalorder %s18, 1
    %p167 = por %p165, %p166
    %p169 = scmp.ne.s32.totalorder %s154, %s168
    %p170 = scmp.eq.s32.totalorder %s18, 0
    %p171 = por %p169, %p170
    %s172 = ssub.s32 %s19, %s31
    %s173 = ssub.s32 %s20, %s27
    %s174 = sor.u32 %s172, %s173
    %p175 = scmp.eq.s32.totalorder %s174, 0
    %s177 = sadd.s32 %s176, 1
    %s178 = scalar_select %p175, %s176, %s177
    %p181 = pneg %p175
    %p182 = scmp.eq.s32.totalorder %s12, 1
    %p183 = por %p181, %p182
    %p184 = scmp.ne.s32.totalorder %s176, %s179
    %p185 = scmp.eq.s32.totalorder %s12, 0
    %p186 = por %p184, %p185
    %p187 = scmp.ne.s32.totalorder %s176, %s179
    %p188 = scmp.eq.s32.totalorder %s17, 1
    %p189 = por %p187, %p188
    %p190 = scmp.ne.s32.totalorder %s179, %s180
    %p191 = scmp.eq.s32.totalorder %s17, 0
    %p192 = por %p190, %p191
    %p193 = scmp.ne.s32.totalorder %s179, %s180
    %p194 = scmp.eq.s32.totalorder %s18, 1
    %p195 = por %p193, %p194
    %p197 = scmp.ne.s32.totalorder %s180, %s196
    %p198 = scmp.eq.s32.totalorder %s18, 0
    %p199 = por %p197, %p198
    %p200 = scmp.le.s32.totalorder 1, %s12
    %p201 = scmp.lt.s32.totalorder %s12, 3
    %p202 = pnand %p200, %p201
    %p203 = pneg %p202
    // Predicated region
    $region9: #{residual_up_block_forward.7} parent=5 // pred_check
      _
    $region10: #{residual_up_block_forward.7} parent=5 // pred_check_branch
      %205 = sbr.rel (%p202) target = $region12
    $region11: #{residual_up_block_forward.7} parent=5 // pred_region
      %s206 = ssub.s32 %s12, 1
      // Predicated region
      $region13: #{residual_up_block_forward.7} parent=11 // pred_check
        %p207 = pneg %p101
      $region14: #{residual_up_block_forward.7} parent=11 // pred_check_branch
        %209 = sbr.rel (%p207) target = $region16
      $region15: #{residual_up_block_forward.7} parent=11 // pred_region
        _
      $region16: #{residual_up_block_forward.7} parent=11 // pred_fallthru
        _
      // Predicated region
      $region17: #{residual_up_block_forward.7} parent=11 // pred_check
        %p210 = pneg %p122
      $region18: #{residual_up_block_forward.7} parent=11 // pred_check_branch
        %212 = sbr.rel (%p210) target = $region20
      $region19: #{residual_up_block_forward.7} parent=11 // pred_region
        _
      $region20: #{residual_up_block_forward.7} parent=11 // pred_fallthru
        _
      // Predicated region
      $region21: #{residual_up_block_forward.7} parent=11 // pred_check
        %p213 = pneg %p143
      $region22: #{residual_up_block_forward.7} parent=11 // pred_check_branch
        %215 = sbr.rel (%p213) target = $region24
      $region23: #{residual_up_block_forward.7} parent=11 // pred_region
        _
      $region24: #{residual_up_block_forward.7} parent=11 // pred_fallthru
        _
      // Predicated region
      $region25: #{residual_up_block_forward.7} parent=11 // pred_check
        %p216 = pneg %p164
      $region26: #{residual_up_block_forward.7} parent=11 // pred_check_branch
        %218 = sbr.rel (%p216) target = $region28
      $region27: #{residual_up_block_forward.7} parent=11 // pred_region
        _
      $region28: #{residual_up_block_forward.7} parent=11 // pred_fallthru
        _
    $region12: #{residual_up_block_forward.7} parent=5 // pred_fallthru
      _
    %p219 = scmp.lt.s32.totalorder %s12, 2
    // Predicated region
    $region29: #{residual_up_block_forward.7} parent=5 // pred_check
      %p220 = pneg %p219
    $region30: #{residual_up_block_forward.7} parent=5 // pred_check_branch
      %222 = sbr.rel (%p220) target = $region32
    $region31: #{residual_up_block_forward.7} parent=5 // pred_region
      // Predicated region
      $region33: #{residual_up_block_forward.7} parent=31 // pred_check
        %p223 = pneg %p46
      $region34: #{residual_up_block_forward.7} parent=31 // pred_check_branch
        %225 = sbr.rel (%p223) target = $region36
      $region35: #{residual_up_block_forward.7} parent=31 // pred_region
        %s226 = smul.u32 16, %s20
        %p227 = scmp.lt.s32.totalorder %s19, 1
        %s228 = scalar_select %p227, %s19, 1
        %p229 = scmp.lt.s32.totalorder %s226, 15
        %s230 = scalar_select %p229, %s226, 15
        %s231 = smul.addr %s230, 3
        %s232 = smul.addr %s228, 48
        %s233 = sadd.s32 %s231, %s232
        %s234 = smul.addr %s233, 4
        %s235 = scalar_lea.vmem %s0, %s234
        %s236 = smul.u32 16, %s20
      $region36: #{residual_up_block_forward.7} parent=31 // pred_fallthru
        _
      // Predicated region
      $region37: #{residual_up_block_forward.7} parent=31 // pred_check
        %p237 = pneg %p74
      $region38: #{residual_up_block_forward.7} parent=31 // pred_check_branch
        %239 = sbr.rel (%p237) target = $region40
      $region39: #{residual_up_block_forward.7} parent=31 // pred_region
        %s240 = smul.u32 16, %s20
        %p241 = scmp.lt.s32.totalorder %s19, 1
        %s242 = scalar_select %p241, %s19, 1
        %p243 = scmp.lt.s32.totalorder %s240, 15
        %s244 = scalar_select %p243, %s240, 15
        %s245 = smul.addr %s244, 3
        %s246 = smul.addr %s242, 48
        %s247 = sadd.s32 %s245, %s246
        %s248 = smul.addr %s247, 4
        %s249 = scalar_lea.vmem %s1, %s248
        %s250 = smul.u32 16, %s20
      $region40: #{residual_up_block_forward.7} parent=31 // pred_fallthru
        _
    $region32: #{residual_up_block_forward.7} parent=5 // pred_fallthru
      _
    %p251 = scmp.le.s32.totalorder 1, %s12
    %p252 = scmp.lt.s32.totalorder %s12, 3
    %p253 = pnand %p251, %p252
    %p254 = pneg %p253
    // Predicated region
    $region41: #{residual_up_block_forward.7} parent=5 // pred_check
      _
    $region42: #{residual_up_block_forward.7} parent=5 // pred_check_branch
      %256 = sbr.rel (%p253) target = $region44
    $region43: #{residual_up_block_forward.7} parent=5 // pred_region
      %s257 = ssub.s32 %s12, 1
      %s258 = smul.u32 16, %s22
      %p259 = scmp.lt.s32.totalorder %s21, 1
      %s260 = scalar_select %p259, %s21, 1
      %p261 = scmp.lt.s32.totalorder %s258, 15
      %s262 = scalar_select %p261, %s258, 15
      %s263 = smul.addr %s262, 3
      %s264 = smul.addr %s260, 48
      %s265 = sadd.s32 %s263, %s264
      %s266 = smul.addr %s265, 4
      %s267 = scalar_lea.vmem %s0, %s266
      %p268 = pneg %p52
      %p269 = pneg %p49
      %s270 = smul.u32 16, %s22
      %p271 = scmp.lt.s32.totalorder %s21, 1
      %s272 = scalar_select %p271, %s21, 1
      %p273 = scmp.lt.s32.totalorder %s270, 15
      %s274 = scalar_select %p273, %s270, 15
      %s275 = smul.addr %s274, 3
      %s276 = smul.addr %s272, 48
      %s277 = sadd.s32 %s275, %s276
      %s278 = smul.addr %s277, 4
      %s279 = scalar_lea.vmem %s1, %s278
      %p280 = pneg %p80
      %p281 = pneg %p77
      %p282 = pneg %p101
      %p283 = pneg %p98
      %p284 = pneg %p122
      %p285 = pneg %p119
      %p286 = pneg %p143
      %p287 = pneg %p140
      %p288 = pneg %p164
      %p289 = pneg %p161
      %p290 = pneg %p192
      %p291 = pneg %p189
      %s292 = smul.u32 16, %s22
      %p293 = scmp.lt.s32.totalorder %s21, 1
      %s294 = scalar_select %p293, %s21, 1
      %p295 = scmp.lt.s32.totalorder %s292, 15
      %s296 = scalar_select %p295, %s292, 15
      %s297 = smul.addr %s296, 6
      %s298 = smul.addr %s294, 192
      %s299 = sadd.s32 %s297, %s298
      %s300 = smul.addr %s299, 8
      %s301 = scalar_lea.vmem %s6, %s300
      %s302 = smul.u32 16, %s22
      %p303 = scmp.lt.s32.totalorder %s21, 1
      %s304 = scalar_select %p303, %s21, 1
      %p305 = scmp.lt.s32.totalorder %s302, 15
      %s306 = scalar_select %p305, %s302, 15
      %s307 = smul.addr %s306, 3
      %s308 = smul.addr %s304, 48
      %s309 = sadd.s32 %s307, %s308
      %s310 = smul.addr %s309, 4
      %s311 = scalar_lea.vmem %s0, %s310
      %s312 = smul.u32 16, %s22
      %s313 = smul.u32 16, %s22
      %p314 = scmp.lt.s32.totalorder %s21, 1
      %s315 = scalar_select %p314, %s21, 1
      %p316 = scmp.lt.s32.totalorder %s313, 15
      %s317 = scalar_select %p316, %s313, 15
      %s318 = smul.addr %s317, 3
      %s319 = smul.addr %s315, 48
      %s320 = sadd.s32 %s318, %s319
      %s321 = smul.addr %s320, 4
      %s322 = scalar_lea.vmem %s1, %s321
      %s323 = smul.u32 16, %s22
      %s324 = smul.u32 16, %s22
      %p325 = scmp.lt.s32.totalorder %s21, 1
      %s326 = scalar_select %p325, %s21, 1
      %p327 = scmp.lt.s32.totalorder %s324, 15
      %s328 = scalar_select %p327, %s324, 15
      %s329 = smul.addr %s328, 6
      %s330 = smul.addr %s326, 192
      %s331 = sadd.s32 %s329, %s330
      %s332 = smul.addr %s331, 8
      %s333 = scalar_lea.vmem %s6, %s332
      %s334 = smul.u32 16, %s22
      %v336 = vld [vmem:[%s2] sm:$0x1]
      %v337 = vld [vmem:[%s2 + $0x1] sm:$0x1]
      %v338 = vld [vmem:[%s2 + $0x2] sm:$0x1]
      %v339 = vld [vmem:[%s2 + $0x3] sm:$0x1]
      %v340 = vld [vmem:[%s311] sm:$0xf]
      %v341 = vld [vmem:[%s311 + $0x4] sm:$0xf]
      %v342 = vld [vmem:[%s311 + $0x8] sm:$0xf]
      %v343 = vld [vmem:[%s311 + $0xc] sm:$0xf]
      %v344 = vld [vmem:[%s311 + $0x10] sm:$0xf]
      %v345 = vld [vmem:[%s311 + $0x14] sm:$0xf]
      %v346 = vld [vmem:[%s311 + $0x18] sm:$0xf]
      %v347 = vld [vmem:[%s311 + $0x1c] sm:$0xf]
      %v348 = vld [vmem:[%s311 + $0x20] sm:$0xf]
      %v349 = vld [vmem:[%s311 + $0x24] sm:$0xf]
      %v350 = vld [vmem:[%s311 + $0x28] sm:$0xf]
      %v351 = vld [vmem:[%s311 + $0x2c] sm:$0xf]
      %v352 = vld [vmem:[%s311 + $0x30] sm:$0xf]
      %v353 = vld [vmem:[%s311 + $0x34] sm:$0xf]
      %v354 = vld [vmem:[%s311 + $0x38] sm:$0xf]
      %v355 = vld [vmem:[%s311 + $0x3c] sm:$0xf]
      %v356 = vld [vmem:[%s311 + $0x40] sm:$0xf]
      %v357 = vld [vmem:[%s311 + $0x44] sm:$0xf]
      %v358 = vld [vmem:[%s311 + $0x48] sm:$0xf]
      %v359 = vld [vmem:[%s311 + $0x4c] sm:$0xf]
      %v360 = vld [vmem:[%s311 + $0x50] sm:$0xf]
      %v361 = vld [vmem:[%s311 + $0x54] sm:$0xf]
      %v362 = vld [vmem:[%s311 + $0x58] sm:$0xf]
      %v363 = vld [vmem:[%s311 + $0x5c] sm:$0xf]
      %v364 = vld [vmem:[%s311 + $0x60] sm:$0xf]
      %v365 = vld [vmem:[%s311 + $0x64] sm:$0xf]
      %v366 = vld [vmem:[%s311 + $0x68] sm:$0xf]
      %v367 = vld [vmem:[%s311 + $0x6c] sm:$0xf]
      %v368 = vld [vmem:[%s311 + $0x70] sm:$0xf]
      %v369 = vld [vmem:[%s311 + $0x74] sm:$0xf]
      %v370 = vld [vmem:[%s311 + $0x78] sm:$0xf]
      %v371 = vld [vmem:[%s311 + $0x7c] sm:$0xf]
      %v372 = vld [vmem:[%s311 + $0x80] sm:$0xf]
      %v373 = vld [vmem:[%s311 + $0x84] sm:$0xf]
      %v374 = vld [vmem:[%s311 + $0x88] sm:$0xf]
      %v375 = vld [vmem:[%s311 + $0x8c] sm:$0xf]
      %v376 = vld [vmem:[%s311 + $0x90] sm:$0xf]
      %v377 = vld [vmem:[%s311 + $0x94] sm:$0xf]
      %v378 = vld [vmem:[%s311 + $0x98] sm:$0xf]
      %v379 = vld [vmem:[%s311 + $0x9c] sm:$0xf]
      %v380 = vld [vmem:[%s311 + $0xa0] sm:$0xf]
      %v381 = vld [vmem:[%s311 + $0xa4] sm:$0xf]
      %v382 = vld [vmem:[%s311 + $0xa8] sm:$0xf]
      %v383 = vld [vmem:[%s311 + $0xac] sm:$0xf]
      %v384 = vld [vmem:[%s311 + $0xb0] sm:$0xf]
      %v385 = vld [vmem:[%s311 + $0xb4] sm:$0xf]
      %v386 = vld [vmem:[%s311 + $0xb8] sm:$0xf]
      %v387 = vld [vmem:[%s311 + $0xbc] sm:$0xf]
      %v388 = vunpack.c.l.bf16 %v340
      %v389 = vunpack.c.l.bf16 %v341
      %v390 = vunpack.c.l.bf16 %v342
      %v391 = vunpack.c.l.bf16 %v343
      %v392 = vunpack.c.l.bf16 %v344
      %v393 = vunpack.c.l.bf16 %v345
      %v394 = vunpack.c.l.bf16 %v346
      %v395 = vunpack.c.l.bf16 %v347
      %v396 = vunpack.c.l.bf16 %v348
      %v397 = vunpack.c.l.bf16 %v349
      %v398 = vunpack.c.l.bf16 %v350
      %v399 = vunpack.c.l.bf16 %v351
      %v400 = vunpack.c.l.bf16 %v352
      %v401 = vunpack.c.l.bf16 %v353
      %v402 = vunpack.c.l.bf16 %v354
      %v403 = vunpack.c.l.bf16 %v355
      %v404 = vunpack.c.l.bf16 %v356
      %v405 = vunpack.c.l.bf16 %v357
      %v406 = vunpack.c.l.bf16 %v358
      %v407 = vunpack.c.l.bf16 %v359
      %v408 = vunpack.c.l.bf16 %v360
      %v409 = vunpack.c.l.bf16 %v361
      %v410 = vunpack.c.l.bf16 %v362
      %v411 = vunpack.c.l.bf16 %v363
      %v412 = vunpack.c.l.bf16 %v364
      %v413 = vunpack.c.l.bf16 %v365
      %v414 = vunpack.c.l.bf16 %v366
      %v415 = vunpack.c.l.bf16 %v367
      %v416 = vunpack.c.l.bf16 %v368
      %v417 = vunpack.c.l.bf16 %v369
      %v418 = vunpack.c.l.bf16 %v370
      %v419 = vunpack.c.l.bf16 %v371
      %v420 = vunpack.c.l.bf16 %v372
      %v421 = vunpack.c.l.bf16 %v373
      %v422 = vunpack.c.l.bf16 %v374
      %v423 = vunpack.c.l.bf16 %v375
      %v424 = vunpack.c.l.bf16 %v376
      %v425 = vunpack.c.l.bf16 %v377
      %v426 = vunpack.c.l.bf16 %v378
      %v427 = vunpack.c.l.bf16 %v379
      %v428 = vunpack.c.l.bf16 %v380
      %v429 = vunpack.c.l.bf16 %v381
      %v430 = vunpack.c.l.bf16 %v382
      %v431 = vunpack.c.l.bf16 %v383
      %v432 = vunpack.c.l.bf16 %v384
      %v433 = vunpack.c.l.bf16 %v385
      %v434 = vunpack.c.l.bf16 %v386
      %v435 = vunpack.c.l.bf16 %v387
      %v436 = vlaneseq
      %v437 = vshrl.u32 %v436, 7
      %v438 = vsub.s32 0, %v437
      %v439 = vrot.slane %v336, %v438
      %v440 = vmul.f32 %v388, %v439
      %v441 = vmul.f32 %v389, %v439
      %v442 = vmul.f32 %v390, %v439
      %v443 = vmul.f32 %v391, %v439
      %v444 = vmul.f32 %v392, %v439
      %v445 = vmul.f32 %v393, %v439
      %v446 = vmul.f32 %v394, %v439
      %v447 = vmul.f32 %v395, %v439
      %v448 = vmul.f32 %v396, %v439
      %v449 = vmul.f32 %v397, %v439
      %v450 = vmul.f32 %v398, %v439
      %v451 = vmul.f32 %v399, %v439
      %v452 = vmul.f32 %v400, %v439
      %v453 = vmul.f32 %v401, %v439
      %v454 = vmul.f32 %v402, %v439
      %v455 = vmul.f32 %v403, %v439
      %v456 = vmul.f32 %v404, %v439
      %v457 = vmul.f32 %v405, %v439
      %v458 = vmul.f32 %v406, %v439
      %v459 = vmul.f32 %v407, %v439
      %v460 = vmul.f32 %v408, %v439
      %v461 = vmul.f32 %v409, %v439
      %v462 = vmul.f32 %v410, %v439
      %v463 = vmul.f32 %v411, %v439
      %v464 = vmul.f32 %v412, %v439
      %v465 = vmul.f32 %v413, %v439
      %v466 = vmul.f32 %v414, %v439
      %v467 = vmul.f32 %v415, %v439
      %v468 = vmul.f32 %v416, %v439
      %v469 = vmul.f32 %v417, %v439
      %v470 = vmul.f32 %v418, %v439
      %v471 = vmul.f32 %v419, %v439
      %v472 = vmul.f32 %v420, %v439
      %v473 = vmul.f32 %v421, %v439
      %v474 = vmul.f32 %v422, %v439
      %v475 = vmul.f32 %v423, %v439
      %v476 = vmul.f32 %v424, %v439
      %v477 = vmul.f32 %v425, %v439
      %v478 = vmul.f32 %v426, %v439
      %v479 = vmul.f32 %v427, %v439
      %v480 = vmul.f32 %v428, %v439
      %v481 = vmul.f32 %v429, %v439
      %v482 = vmul.f32 %v430, %v439
      %v483 = vmul.f32 %v431, %v439
      %v484 = vmul.f32 %v432, %v439
      %v485 = vmul.f32 %v433, %v439
      %v486 = vmul.f32 %v434, %v439
      %v487 = vmul.f32 %v435, %v439
      %v488 = vlaneseq
      %v489 = vshrl.u32 %v488, 7
      %v490 = vsub.s32 0, %v489
      %v491 = vrot.slane %v337, %v490
      %v492 = vadd.f32 %v440, %v491
      %v493 = vadd.f32 %v441, %v491
      %v494 = vadd.f32 %v442, %v491
      %v495 = vadd.f32 %v443, %v491
      %v496 = vadd.f32 %v444, %v491
      %v497 = vadd.f32 %v445, %v491
      %v498 = vadd.f32 %v446, %v491
      %v499 = vadd.f32 %v447, %v491
      %v500 = vadd.f32 %v448, %v491
      %v501 = vadd.f32 %v449, %v491
      %v502 = vadd.f32 %v450, %v491
      %v503 = vadd.f32 %v451, %v491
      %v504 = vadd.f32 %v452, %v491
      %v505 = vadd.f32 %v453, %v491
      %v506 = vadd.f32 %v454, %v491
      %v507 = vadd.f32 %v455, %v491
      %v508 = vadd.f32 %v456, %v491
      %v509 = vadd.f32 %v457, %v491
      %v510 = vadd.f32 %v458, %v491
      %v511 = vadd.f32 %v459, %v491
      %v512 = vadd.f32 %v460, %v491
      %v513 = vadd.f32 %v461, %v491
      %v514 = vadd.f32 %v462, %v491
      %v515 = vadd.f32 %v463, %v491
      %v516 = vadd.f32 %v464, %v491
      %v517 = vadd.f32 %v465, %v491
      %v518 = vadd.f32 %v466, %v491
      %v519 = vadd.f32 %v467, %v491
      %v520 = vadd.f32 %v468, %v491
      %v521 = vadd.f32 %v469, %v491
      %v522 = vadd.f32 %v470, %v491
      %v523 = vadd.f32 %v471, %v491
      %v524 = vadd.f32 %v472, %v491
      %v525 = vadd.f32 %v473, %v491
      %v526 = vadd.f32 %v474, %v491
      %v527 = vadd.f32 %v475, %v491
      %v528 = vadd.f32 %v476, %v491
      %v529 = vadd.f32 %v477, %v491
      %v530 = vadd.f32 %v478, %v491
      %v531 = vadd.f32 %v479, %v491
      %v532 = vadd.f32 %v480, %v491
      %v533 = vadd.f32 %v481, %v491
      %v534 = vadd.f32 %v482, %v491
      %v535 = vadd.f32 %v483, %v491
      %v536 = vadd.f32 %v484, %v491
      %v537 = vadd.f32 %v485, %v491
      %v538 = vadd.f32 %v486, %v491
      %v539 = vadd.f32 %v487, %v491
      %v540 = vmax.f32 %v492, 0.0
      %v541 = vmax.f32 %v493, 0.0
      %v542 = vmax.f32 %v494, 0.0
      %v543 = vmax.f32 %v495, 0.0
      %v544 = vmax.f32 %v496, 0.0
      %v545 = vmax.f32 %v497, 0.0
      %v546 = vmax.f32 %v498, 0.0
      %v547 = vmax.f32 %v499, 0.0
      %v548 = vmax.f32 %v500, 0.0
      %v549 = vmax.f32 %v501, 0.0
      %v550 = vmax.f32 %v502, 0.0
      %v551 = vmax.f32 %v503, 0.0
      %v552 = vmax.f32 %v504, 0.0
      %v553 = vmax.f32 %v505, 0.0
      %v554 = vmax.f32 %v506, 0.0
      %v555 = vmax.f32 %v507, 0.0
      %v556 = vmax.f32 %v508, 0.0
      %v557 = vmax.f32 %v509, 0.0
      %v558 = vmax.f32 %v510, 0.0
      %v559 = vmax.f32 %v511, 0.0
      %v560 = vmax.f32 %v512, 0.0
      %v561 = vmax.f32 %v513, 0.0
      %v562 = vmax.f32 %v514, 0.0
      %v563 = vmax.f32 %v515, 0.0
      %v564 = vmax.f32 %v516, 0.0
      %v565 = vmax.f32 %v517, 0.0
      %v566 = vmax.f32 %v518, 0.0
      %v567 = vmax.f32 %v519, 0.0
      %v568 = vmax.f32 %v520, 0.0
      %v569 = vmax.f32 %v521, 0.0
      %v570 = vmax.f32 %v522, 0.0
      %v571 = vmax.f32 %v523, 0.0
      %v572 = vmax.f32 %v524, 0.0
      %v573 = vmax.f32 %v525, 0.0
      %v574 = vmax.f32 %v526, 0.0
      %v575 = vmax.f32 %v527, 0.0
      %v576 = vmax.f32 %v528, 0.0
      %v577 = vmax.f32 %v529, 0.0
      %v578 = vmax.f32 %v530, 0.0
      %v579 = vmax.f32 %v531, 0.0
      %v580 = vmax.f32 %v532, 0.0
      %v581 = vmax.f32 %v533, 0.0
      %v582 = vmax.f32 %v534, 0.0
      %v583 = vmax.f32 %v535, 0.0
      %v584 = vmax.f32 %v536, 0.0
      %v585 = vmax.f32 %v537, 0.0
      %v586 = vmax.f32 %v538, 0.0
      %v587 = vmax.f32 %v539, 0.0
      %v588 = vld [vmem:[%s322] sm:$0xf]
      %v589 = vld [vmem:[%s322 + $0x4] sm:$0xf]
      %v590 = vld [vmem:[%s322 + $0x8] sm:$0xf]
      %v591 = vld [vmem:[%s322 + $0xc] sm:$0xf]
      %v592 = vld [vmem:[%s322 + $0x10] sm:$0xf]
      %v593 = vld [vmem:[%s322 + $0x14] sm:$0xf]
      %v594 = vld [vmem:[%s322 + $0x18] sm:$0xf]
      %v595 = vld [vmem:[%s322 + $0x1c] sm:$0xf]
      %v596 = vld [vmem:[%s322 + $0x20] sm:$0xf]
      %v597 = vld [vmem:[%s322 + $0x24] sm:$0xf]
      %v598 = vld [vmem:[%s322 + $0x28] sm:$0xf]
      %v599 = vld [vmem:[%s322 + $0x2c] sm:$0xf]
      %v600 = vld [vmem:[%s322 + $0x30] sm:$0xf]
      %v601 = vld [vmem:[%s322 + $0x34] sm:$0xf]
      %v602 = vld [vmem:[%s322 + $0x38] sm:$0xf]
      %v603 = vld [vmem:[%s322 + $0x3c] sm:$0xf]
      %v604 = vld [vmem:[%s322 + $0x40] sm:$0xf]
      %v605 = vld [vmem:[%s322 + $0x44] sm:$0xf]
      %v606 = vld [vmem:[%s322 + $0x48] sm:$0xf]
      %v607 = vld [vmem:[%s322 + $0x4c] sm:$0xf]
      %v608 = vld [vmem:[%s322 + $0x50] sm:$0xf]
      %v609 = vld [vmem:[%s322 + $0x54] sm:$0xf]
      %v610 = vld [vmem:[%s322 + $0x58] sm:$0xf]
      %v611 = vld [vmem:[%s322 + $0x5c] sm:$0xf]
      %v612 = vld [vmem:[%s322 + $0x60] sm:$0xf]
      %v613 = vld [vmem:[%s322 + $0x64] sm:$0xf]
      %v614 = vld [vmem:[%s322 + $0x68] sm:$0xf]
      %v615 = vld [vmem:[%s322 + $0x6c] sm:$0xf]
      %v616 = vld [vmem:[%s322 + $0x70] sm:$0xf]
      %v617 = vld [vmem:[%s322 + $0x74] sm:$0xf]
      %v618 = vld [vmem:[%s322 + $0x78] sm:$0xf]
      %v619 = vld [vmem:[%s322 + $0x7c] sm:$0xf]
      %v620 = vld [vmem:[%s322 + $0x80] sm:$0xf]
      %v621 = vld [vmem:[%s322 + $0x84] sm:$0xf]
      %v622 = vld [vmem:[%s322 + $0x88] sm:$0xf]
      %v623 = vld [vmem:[%s322 + $0x8c] sm:$0xf]
      %v624 = vld [vmem:[%s322 + $0x90] sm:$0xf]
      %v625 = vld [vmem:[%s322 + $0x94] sm:$0xf]
      %v626 = vld [vmem:[%s322 + $0x98] sm:$0xf]
      %v627 = vld [vmem:[%s322 + $0x9c] sm:$0xf]
      %v628 = vld [vmem:[%s322 + $0xa0] sm:$0xf]
      %v629 = vld [vmem:[%s322 + $0xa4] sm:$0xf]
      %v630 = vld [vmem:[%s322 + $0xa8] sm:$0xf]
      %v631 = vld [vmem:[%s322 + $0xac] sm:$0xf]
      %v632 = vld [vmem:[%s322 + $0xb0] sm:$0xf]
      %v633 = vld [vmem:[%s322 + $0xb4] sm:$0xf]
      %v634 = vld [vmem:[%s322 + $0xb8] sm:$0xf]
      %v635 = vld [vmem:[%s322 + $0xbc] sm:$0xf]
      %v636 = vunpack.c.l.bf16 %v588
      %v637 = vunpack.c.l.bf16 %v589
      %v638 = vunpack.c.l.bf16 %v590
      %v639 = vunpack.c.l.bf16 %v591
      %v640 = vunpack.c.l.bf16 %v592
      %v641 = vunpack.c.l.bf16 %v593
      %v642 = vunpack.c.l.bf16 %v594
      %v643 = vunpack.c.l.bf16 %v595
      %v644 = vunpack.c.l.bf16 %v596
      %v645 = vunpack.c.l.bf16 %v597
      %v646 = vunpack.c.l.bf16 %v598
      %v647 = vunpack.c.l.bf16 %v599
      %v648 = vunpack.c.l.bf16 %v600
      %v649 = vunpack.c.l.bf16 %v601
      %v650 = vunpack.c.l.bf16 %v602
      %v651 = vunpack.c.l.bf16 %v603
      %v652 = vunpack.c.l.bf16 %v604
      %v653 = vunpack.c.l.bf16 %v605
      %v654 = vunpack.c.l.bf16 %v606
      %v655 = vunpack.c.l.bf16 %v607
      %v656 = vunpack.c.l.bf16 %v608
      %v657 = vunpack.c.l.bf16 %v609
      %v658 = vunpack.c.l.bf16 %v610
      %v659 = vunpack.c.l.bf16 %v611
      %v660 = vunpack.c.l.bf16 %v612
      %v661 = vunpack.c.l.bf16 %v613
      %v662 = vunpack.c.l.bf16 %v614
      %v663 = vunpack.c.l.bf16 %v615
      %v664 = vunpack.c.l.bf16 %v616
      %v665 = vunpack.c.l.bf16 %v617
      %v666 = vunpack.c.l.bf16 %v618
      %v667 = vunpack.c.l.bf16 %v619
      %v668 = vunpack.c.l.bf16 %v620
      %v669 = vunpack.c.l.bf16 %v621
      %v670 = vunpack.c.l.bf16 %v622
      %v671 = vunpack.c.l.bf16 %v623
      %v672 = vunpack.c.l.bf16 %v624
      %v673 = vunpack.c.l.bf16 %v625
      %v674 = vunpack.c.l.bf16 %v626
      %v675 = vunpack.c.l.bf16 %v627
      %v676 = vunpack.c.l.bf16 %v628
      %v677 = vunpack.c.l.bf16 %v629
      %v678 = vunpack.c.l.bf16 %v630
      %v679 = vunpack.c.l.bf16 %v631
      %v680 = vunpack.c.l.bf16 %v632
      %v681 = vunpack.c.l.bf16 %v633
      %v682 = vunpack.c.l.bf16 %v634
      %v683 = vunpack.c.l.bf16 %v635
      %v684 = vlaneseq
      %v685 = vshrl.u32 %v684, 7
      %v686 = vsub.s32 0, %v685
      %v687 = vrot.slane %v338, %v686
      %v688 = vmul.f32 %v636, %v687
      %v689 = vmul.f32 %v637, %v687
      %v690 = vmul.f32 %v638, %v687
      %v691 = vmul.f32 %v639, %v687
      %v692 = vmul.f32 %v640, %v687
      %v693 = vmul.f32 %v641, %v687
      %v694 = vmul.f32 %v642, %v687
      %v695 = vmul.f32 %v643, %v687
      %v696 = vmul.f32 %v644, %v687
      %v697 = vmul.f32 %v645, %v687
      %v698 = vmul.f32 %v646, %v687
      %v699 = vmul.f32 %v647, %v687
      %v700 = vmul.f32 %v648, %v687
      %v701 = vmul.f32 %v649, %v687
      %v702 = vmul.f32 %v650, %v687
      %v703 = vmul.f32 %v651, %v687
      %v704 = vmul.f32 %v652, %v687
      %v705 = vmul.f32 %v653, %v687
      %v706 = vmul.f32 %v654, %v687
      %v707 = vmul.f32 %v655, %v687
      %v708 = vmul.f32 %v656, %v687
      %v709 = vmul.f32 %v657, %v687
      %v710 = vmul.f32 %v658, %v687
      %v711 = vmul.f32 %v659, %v687
      %v712 = vmul.f32 %v660, %v687
      %v713 = vmul.f32 %v661, %v687
      %v714 = vmul.f32 %v662, %v687
      %v715 = vmul.f32 %v663, %v687
      %v716 = vmul.f32 %v664, %v687
      %v717 = vmul.f32 %v665, %v687
      %v718 = vmul.f32 %v666, %v687
      %v719 = vmul.f32 %v667, %v687
      %v720 = vmul.f32 %v668, %v687
      %v721 = vmul.f32 %v669, %v687
      %v722 = vmul.f32 %v670, %v687
      %v723 = vmul.f32 %v671, %v687
      %v724 = vmul.f32 %v672, %v687
      %v725 = vmul.f32 %v673, %v687
      %v726 = vmul.f32 %v674, %v687
      %v727 = vmul.f32 %v675, %v687
      %v728 = vmul.f32 %v676, %v687
      %v729 = vmul.f32 %v677, %v687
      %v730 = vmul.f32 %v678, %v687
      %v731 = vmul.f32 %v679, %v687
      %v732 = vmul.f32 %v680, %v687
      %v733 = vmul.f32 %v681, %v687
      %v734 = vmul.f32 %v682, %v687
      %v735 = vmul.f32 %v683, %v687
      %v736 = vlaneseq
      %v737 = vshrl.u32 %v736, 7
      %v738 = vsub.s32 0, %v737
      %v739 = vrot.slane %v339, %v738
      %v740 = vadd.f32 %v688, %v739
      %v741 = vadd.f32 %v689, %v739
      %v742 = vadd.f32 %v690, %v739
      %v743 = vadd.f32 %v691, %v739
      %v744 = vadd.f32 %v692, %v739
      %v745 = vadd.f32 %v693, %v739
      %v746 = vadd.f32 %v694, %v739
      %v747 = vadd.f32 %v695, %v739
      %v748 = vadd.f32 %v696, %v739
      %v749 = vadd.f32 %v697, %v739
      %v750 = vadd.f32 %v698, %v739
      %v751 = vadd.f32 %v699, %v739
      %v752 = vadd.f32 %v700, %v739
      %v753 = vadd.f32 %v701, %v739
      %v754 = vadd.f32 %v702, %v739
      %v755 = vadd.f32 %v703, %v739
      %v756 = vadd.f32 %v704, %v739
      %v757 = vadd.f32 %v705, %v739
      %v758 = vadd.f32 %v706, %v739
      %v759 = vadd.f32 %v707, %v739
      %v760 = vadd.f32 %v708, %v739
      %v761 = vadd.f32 %v709, %v739
      %v762 = vadd.f32 %v710, %v739
      %v763 = vadd.f32 %v711, %v739
      %v764 = vadd.f32 %v712, %v739
      %v765 = vadd.f32 %v713, %v739
      %v766 = vadd.f32 %v714, %v739
      %v767 = vadd.f32 %v715, %v739
      %v768 = vadd.f32 %v716, %v739
      %v769 = vadd.f32 %v717, %v739
      %v770 = vadd.f32 %v718, %v739
      %v771 = vadd.f32 %v719, %v739
      %v772 = vadd.f32 %v720, %v739
      %v773 = vadd.f32 %v721, %v739
      %v774 = vadd.f32 %v722, %v739
      %v775 = vadd.f32 %v723, %v739
      %v776 = vadd.f32 %v724, %v739
      %v777 = vadd.f32 %v725, %v739
      %v778 = vadd.f32 %v726, %v739
      %v779 = vadd.f32 %v727, %v739
      %v780 = vadd.f32 %v728, %v739
      %v781 = vadd.f32 %v729, %v739
      %v782 = vadd.f32 %v730, %v739
      %v783 = vadd.f32 %v731, %v739
      %v784 = vadd.f32 %v732, %v739
      %v785 = vadd.f32 %v733, %v739
      %v786 = vadd.f32 %v734, %v739
      %v787 = vadd.f32 %v735, %v739
      %v788 = vmax.f32 %v740, 0.0
      %v789 = vmax.f32 %v741, 0.0
      %v790 = vmax.f32 %v742, 0.0
      %v791 = vmax.f32 %v743, 0.0
      %v792 = vmax.f32 %v744, 0.0
      %v793 = vmax.f32 %v745, 0.0
      %v794 = vmax.f32 %v746, 0.0
      %v795 = vmax.f32 %v747, 0.0
      %v796 = vmax.f32 %v748, 0.0
      %v797 = vmax.f32 %v749, 0.0
      %v798 = vmax.f32 %v750, 0.0
      %v799 = vmax.f32 %v751, 0.0
      %v800 = vmax.f32 %v752, 0.0
      %v801 = vmax.f32 %v753, 0.0
      %v802 = vmax.f32 %v754, 0.0
      %v803 = vmax.f32 %v755, 0.0
      %v804 = vmax.f32 %v756, 0.0
      %v805 = vmax.f32 %v757, 0.0
      %v806 = vmax.f32 %v758, 0.0
      %v807 = vmax.f32 %v759, 0.0
      %v808 = vmax.f32 %v760, 0.0
      %v809 = vmax.f32 %v761, 0.0
      %v810 = vmax.f32 %v762, 0.0
      %v811 = vmax.f32 %v763, 0.0
      %v812 = vmax.f32 %v764, 0.0
      %v813 = vmax.f32 %v765, 0.0
      %v814 = vmax.f32 %v766, 0.0
      %v815 = vmax.f32 %v767, 0.0
      %v816 = vmax.f32 %v768, 0.0
      %v817 = vmax.f32 %v769, 0.0
      %v818 = vmax.f32 %v770, 0.0
      %v819 = vmax.f32 %v771, 0.0
      %v820 = vmax.f32 %v772, 0.0
      %v821 = vmax.f32 %v773, 0.0
      %v822 = vmax.f32 %v774, 0.0
      %v823 = vmax.f32 %v775, 0.0
      %v824 = vmax.f32 %v776, 0.0
      %v825 = vmax.f32 %v777, 0.0
      %v826 = vmax.f32 %v778, 0.0
      %v827 = vmax.f32 %v779, 0.0
      %v828 = vmax.f32 %v780, 0.0
      %v829 = vmax.f32 %v781, 0.0
      %v830 = vmax.f32 %v782, 0.0
      %v831 = vmax.f32 %v783, 0.0
      %v832 = vmax.f32 %v784, 0.0
      %v833 = vmax.f32 %v785, 0.0
      %v834 = vmax.f32 %v786, 0.0
      %v835 = vmax.f32 %v787, 0.0
      %v836 = vadd.f32 %v540, %v788
      %v837 = vadd.f32 %v541, %v789
      %v838 = vadd.f32 %v542, %v790
      %v839 = vadd.f32 %v543, %v791
      %v840 = vadd.f32 %v544, %v792
      %v841 = vadd.f32 %v545, %v793
      %v842 = vadd.f32 %v546, %v794
      %v843 = vadd.f32 %v547, %v795
      %v844 = vadd.f32 %v548, %v796
      %v845 = vadd.f32 %v549, %v797
      %v846 = vadd.f32 %v550, %v798
      %v847 = vadd.f32 %v551, %v799
      %v848 = vadd.f32 %v552, %v800
      %v849 = vadd.f32 %v553, %v801
      %v850 = vadd.f32 %v554, %v802
      %v851 = vadd.f32 %v555, %v803
      %v852 = vadd.f32 %v556, %v804
      %v853 = vadd.f32 %v557, %v805
      %v854 = vadd.f32 %v558, %v806
      %v855 = vadd.f32 %v559, %v807
      %v856 = vadd.f32 %v560, %v808
      %v857 = vadd.f32 %v561, %v809
      %v858 = vadd.f32 %v562, %v810
      %v859 = vadd.f32 %v563, %v811
      %v860 = vadd.f32 %v564, %v812
      %v861 = vadd.f32 %v565, %v813
      %v862 = vadd.f32 %v566, %v814
      %v863 = vadd.f32 %v567, %v815
      %v864 = vadd.f32 %v568, %v816
      %v865 = vadd.f32 %v569, %v817
      %v866 = vadd.f32 %v570, %v818
      %v867 = vadd.f32 %v571, %v819
      %v868 = vadd.f32 %v572, %v820
      %v869 = vadd.f32 %v573, %v821
      %v870 = vadd.f32 %v574, %v822
      %v871 = vadd.f32 %v575, %v823
      %v872 = vadd.f32 %v576, %v824
      %v873 = vadd.f32 %v577, %v825
      %v874 = vadd.f32 %v578, %v826
      %v875 = vadd.f32 %v579, %v827
      %v876 = vadd.f32 %v580, %v828
      %v877 = vadd.f32 %v581, %v829
      %v878 = vadd.f32 %v582, %v830
      %v879 = vadd.f32 %v583, %v831
      %v880 = vadd.f32 %v584, %v832
      %v881 = vadd.f32 %v585, %v833
      %v882 = vadd.f32 %v586, %v834
      %v883 = vadd.f32 %v587, %v835
      %v884 = vpack.c.bf16 %v837, %v836
      %v885 = vpack.c.bf16 %v838, %v838
      %v886 = vpack.c.bf16 %v840, %v839
      %v887 = vpack.c.bf16 %v841, %v841
      %v888 = vpack.c.bf16 %v843, %v842
      %v889 = vpack.c.bf16 %v844, %v844
      %v890 = vpack.c.bf16 %v846, %v845
      %v891 = vpack.c.bf16 %v847, %v847
      %v892 = vpack.c.bf16 %v849, %v848
      %v893 = vpack.c.bf16 %v850, %v850
      %v894 = vpack.c.bf16 %v852, %v851
      %v895 = vpack.c.bf16 %v853, %v853
      %v896 = vpack.c.bf16 %v855, %v854
      %v897 = vpack.c.bf16 %v856, %v856
      %v898 = vpack.c.bf16 %v858, %v857
      %v899 = vpack.c.bf16 %v859, %v859
      %v900 = vpack.c.bf16 %v861, %v860
      %v901 = vpack.c.bf16 %v862, %v862
      %v902 = vpack.c.bf16 %v864, %v863
      %v903 = vpack.c.bf16 %v865, %v865
      %v904 = vpack.c.bf16 %v867, %v866
      %v905 = vpack.c.bf16 %v868, %v868
      %v906 = vpack.c.bf16 %v870, %v869
      %v907 = vpack.c.bf16 %v871, %v871
      %v908 = vpack.c.bf16 %v873, %v872
      %v909 = vpack.c.bf16 %v874, %v874
      %v910 = vpack.c.bf16 %v876, %v875
      %v911 = vpack.c.bf16 %v877, %v877
      %v912 = vpack.c.bf16 %v879, %v878
      %v913 = vpack.c.bf16 %v880, %v880
      %v914 = vpack.c.bf16 %v882, %v881
      %v915 = vpack.c.bf16 %v883, %v883
      %v948 = vunpack.c.l.b16 %v884
      %v949 = vunpack.c.h.b16 %v884
      %v950 = vunpack.c.l.b16 %v885
      %v951 = vunpack.c.l.b16 %v886
      %v952 = vunpack.c.h.b16 %v886
      %v953 = vunpack.c.l.b16 %v887
      %v954 = vunpack.c.l.b16 %v888
      %v955 = vunpack.c.h.b16 %v888
      %v956 = vunpack.c.l.b16 %v889
      %v957 = vunpack.c.l.b16 %v890
      %v958 = vunpack.c.h.b16 %v890
      %v959 = vunpack.c.l.b16 %v891
      %v960 = vunpack.c.l.b16 %v892
      %v961 = vunpack.c.h.b16 %v892
      %v962 = vunpack.c.l.b16 %v893
      %v963 = vunpack.c.l.b16 %v894
      %v964 = vunpack.c.h.b16 %v894
      %v965 = vunpack.c.l.b16 %v895
      %v966 = vunpack.c.l.b16 %v896
      %v967 = vunpack.c.h.b16 %v896
      %v968 = vunpack.c.l.b16 %v897
      %v969 = vunpack.c.l.b16 %v898
      %v970 = vunpack.c.h.b16 %v898
      %v971 = vunpack.c.l.b16 %v899
      %v972 = vunpack.c.l.b16 %v900
      %v973 = vunpack.c.h.b16 %v900
      %v974 = vunpack.c.l.b16 %v901
      %v975 = vunpack.c.l.b16 %v902
      %v976 = vunpack.c.h.b16 %v902
      %v977 = vunpack.c.l.b16 %v903
      %v978 = vunpack.c.l.b16 %v904
      %v979 = vunpack.c.h.b16 %v904
      %v980 = vunpack.c.l.b16 %v905
      %v981 = vunpack.c.l.b16 %v906
      %v982 = vunpack.c.h.b16 %v906
      %v983 = vunpack.c.l.b16 %v907
      %v984 = vunpack.c.l.b16 %v908
      %v985 = vunpack.c.h.b16 %v908
      %v986 = vunpack.c.l.b16 %v909
      %v987 = vunpack.c.l.b16 %v910
      %v988 = vunpack.c.h.b16 %v910
      %v989 = vunpack.c.l.b16 %v911
      %v990 = vunpack.c.l.b16 %v912
      %v991 = vunpack.c.h.b16 %v912
      %v992 = vunpack.c.l.b16 %v913
      %v993 = vunpack.c.l.b16 %v914
      %v994 = vunpack.c.h.b16 %v914
      %v995 = vunpack.c.l.b16 %v915
      %v996 = vld [vmem:[%s3] sm:$0xff]
      %v997 = vld [vmem:[%s3 + $0x8] sm:$0xff]
      %v998 = vld [vmem:[%s3 + $0x10] sm:$0xff]
      %v999 = vld [vmem:[%s3 + $0x18] sm:$0xff]
      %v1000 = vld [vmem:[%s3 + $0x20] sm:$0xff]
      %v1001 = vld [vmem:[%s3 + $0x28] sm:$0xff]
      %v1002 = vld [vmem:[%s3 + $0x30] sm:$0xff]
      %v1003 = vld [vmem:[%s3 + $0x38] sm:$0xff]
      %v1004 = vld [vmem:[%s3 + $0x40] sm:$0xff]
      %v1005 = vld [vmem:[%s3 + $0x48] sm:$0xff]
      %v1006 = vld [vmem:[%s3 + $0x50] sm:$0xff]
      %v1007 = vld [vmem:[%s3 + $0x58] sm:$0xff]
      %v1008 = vld [vmem:[%s3 + $0x60] sm:$0xff]
      %v1009 = vld [vmem:[%s3 + $0x68] sm:$0xff]
      %v1010 = vld [vmem:[%s3 + $0x70] sm:$0xff]
      %v1011 = vld [vmem:[%s3 + $0x78] sm:$0xff]
      %v1012 = vld [vmem:[%s4] sm:$0xff]
      %v1013 = vld [vmem:[%s4 + $0x8] sm:$0xff]
      %v1014 = vld [vmem:[%s4 + $0x10] sm:$0xff]
      %v1015 = vld [vmem:[%s4 + $0x18] sm:$0xff]
      %v1016 = vld [vmem:[%s4 + $0x20] sm:$0xff]
      %v1017 = vld [vmem:[%s4 + $0x28] sm:$0xff]
      %v1018 = vld [vmem:[%s4 + $0x30] sm:$0xff]
      %v1019 = vld [vmem:[%s4 + $0x38] sm:$0xff]
      %v1020 = vld [vmem:[%s4 + $0x40] sm:$0xff]
      %v1021 = vld [vmem:[%s4 + $0x48] sm:$0xff]
      %v1022 = vld [vmem:[%s4 + $0x50] sm:$0xff]
      %v1023 = vld [vmem:[%s4 + $0x58] sm:$0xff]
      %v1024 = vld [vmem:[%s4 + $0x60] sm:$0xff]
      %v1025 = vld [vmem:[%s4 + $0x68] sm:$0xff]
      %v1026 = vld [vmem:[%s4 + $0x70] sm:$0xff]
      %v1027 = vld [vmem:[%s4 + $0x78] sm:$0xff]
      %v1028 = vld [vmem:[%s5] ss:$2 sm:$0x3]
      %v1030 = vlaneseq
      %v1031 = vshrl.u32 %v1030, 7
      %v1032 = vsub.s32 0, %v1031
      %v1033 = vrot.slane %v1028, %v1032
      %v1034 = vlaneseq
      %v1035 = vshrl.u32 %v1034, 7
      %v1036 = vsub.s32 1, %v1035
      %v1037 = vrot.slane %v1028, %v1036
      %v1040 = vpack.c.b16 %v949, %v948
      %v1041 = vpack.c.b16 %v951, %v950
      %v1042 = vpack.c.b16 %v953, %v952
      %v1043 = vpack.c.b16 %v955, %v954
      %v1044 = vpack.c.b16 %v957, %v956
      %v1045 = vpack.c.b16 %v959, %v958
      %v1046 = vpack.c.b16 %v961, %v960
      %v1047 = vpack.c.b16 %v963, %v962
      %v1048 = vpack.c.b16 %v965, %v964
      %v1049 = vpack.c.b16 %v967, %v966
      %v1050 = vpack.c.b16 %v969, %v968
      %v1051 = vpack.c.b16 %v971, %v970
      %v1052 = vpack.c.b16 %v973, %v972
      %v1053 = vpack.c.b16 %v975, %v974
      %v1054 = vpack.c.b16 %v977, %v976
      %v1055 = vpack.c.b16 %v979, %v978
      %v1056 = vpack.c.b16 %v981, %v980
      %v1057 = vpack.c.b16 %v983, %v982
      %v1058 = vpack.c.b16 %v985, %v984
      %v1059 = vpack.c.b16 %v987, %v986
      %v1060 = vpack.c.b16 %v989, %v988
      %v1061 = vpack.c.b16 %v991, %v990
      %v1062 = vpack.c.b16 %v993, %v992
      %v1063 = vpack.c.b16 %v995, %v994
      %v1104 = vunpack.c.l.b16 %v996
      %v1105 = vunpack.c.h.b16 %v996
      %v1106 = vunpack.c.l.b16 %v997
      %v1107 = vunpack.c.h.b16 %v997
      %v1108 = vunpack.c.l.b16 %v998
      %v1109 = vunpack.c.h.b16 %v998
      %v1110 = vunpack.c.l.b16 %v999
      %v1111 = vunpack.c.h.b16 %v999
      %v1112 = vunpack.c.l.b16 %v1000
      %v1113 = vunpack.c.h.b16 %v1000
      %v1114 = vunpack.c.l.b16 %v1001
      %v1115 = vunpack.c.h.b16 %v1001
      %v1116 = vunpack.c.l.b16 %v1002
      %v1117 = vunpack.c.h.b16 %v1002
      %v1118 = vunpack.c.l.b16 %v1003
      %v1119 = vunpack.c.h.b16 %v1003
      %v1120 = vunpack.c.l.b16 %v1004
      %v1121 = vunpack.c.h.b16 %v1004
      %v1122 = vunpack.c.l.b16 %v1005
      %v1123 = vunpack.c.h.b16 %v1005
      %v1124 = vunpack.c.l.b16 %v1006
      %v1125 = vunpack.c.h.b16 %v1006
      %v1126 = vunpack.c.l.b16 %v1007
      %v1127 = vunpack.c.h.b16 %v1007
      %v1128 = vunpack.c.l.b16 %v1008
      %v1129 = vunpack.c.h.b16 %v1008
      %v1130 = vunpack.c.l.b16 %v1009
      %v1131 = vunpack.c.h.b16 %v1009
      %v1132 = vunpack.c.l.b16 %v1010
      %v1133 = vunpack.c.h.b16 %v1010
      %v1134 = vunpack.c.l.b16 %v1011
      %v1135 = vunpack.c.h.b16 %v1011
      %v1136 = vpack.c.b16 %v1106, %v1104
      %v1137 = vpack.c.b16 %v1107, %v1105
      %v1138 = vpack.c.b16 %v1110, %v1108
      %v1139 = vpack.c.b16 %v1111, %v1109
      %v1140 = vpack.c.b16 %v1114, %v1112
      %v1141 = vpack.c.b16 %v1115, %v1113
      %v1142 = vpack.c.b16 %v1118, %v1116
      %v1143 = vpack.c.b16 %v1119, %v1117
      %v1144 = vpack.c.b16 %v1122, %v1120
      %v1145 = vpack.c.b16 %v1123, %v1121
      %v1146 = vpack.c.b16 %v1126, %v1124
      %v1147 = vpack.c.b16 %v1127, %v1125
      %v1148 = vpack.c.b16 %v1130, %v1128
      %v1149 = vpack.c.b16 %v1131, %v1129
      %v1150 = vpack.c.b16 %v1134, %v1132
      %v1151 = vpack.c.b16 %v1135, %v1133
      %1168 = vmatprep.subr.bf16.mxu0 %v1137
      %1169 = vmatpush1.bf16.msra.mxu0 %v1136
      %1170 = vmatprep.subr.bf16.mxu0 %v1139
      %1171 = vmatpush1.bf16.msra.mxu0 %v1138
      %1172 = vmatprep.subr.bf16.mxu0 %v1141
      %1173 = vmatpush1.bf16.msra.mxu0 %v1140
      %1174 = vmatprep.subr.bf16.mxu0 %v1143
      %1175 = vmatpush1.bf16.msra.mxu0 %v1142
      %1176 = vmatprep.subr.bf16.mxu0 %v1145
      %1177 = vmatpush1.bf16.msra.mxu0 %v1144
      %1178 = vmatprep.subr.bf16.mxu0 %v1147
      %1179 = vmatpush1.bf16.msra.mxu0 %v1146
      %1180 = vmatprep.subr.bf16.mxu0 %v1149
      %1181 = vmatpush1.bf16.msra.mxu0 %v1148
      %1182 = vmatprep.subr.bf16.mxu0 %v1151
      %1183 = vmatpush1.bf16.msra.mxu0 %v1150
      %1184 = vmatprep.subr.bf16.mxu0 0
      %1185 = vmatpush1.bf16.msra.mxu0 0
      %1186 = vmatprep.subr.bf16.mxu0 0
      %1187 = vmatpush1.bf16.msra.mxu0 0
      %1188 = vmatprep.subr.bf16.mxu0 0
      %1189 = vmatpush1.bf16.msra.mxu0 0
      %1190 = vmatprep.subr.bf16.mxu0 0
      %1191 = vmatpush1.bf16.msra.mxu0 0
      %1192 = vmatprep.subr.bf16.mxu0 0
      %1193 = vmatpush1.bf16.msra.mxu0 0
      %1194 = vmatprep.subr.bf16.mxu0 0
      %1195 = vmatpush1.bf16.msra.mxu0 0
      %1196 = vmatprep.subr.bf16.mxu0 0
      %1197 = vmatpush1.bf16.msra.mxu0 0
      %1198 = vmatprep.subr.bf16.mxu0 0
      %1199 = vmatpush1.bf16.msra.mxu0 0
      %1200 = vmatprep.mubr.bf16.mxu0 0
      %1201 = vmatmul.mubr.bf16.gmra.mrb[0].mxu0 %v1040
      %v1202 = vpop.f32.mrb[0].mxu0
      %v1203 = vadd.f32 %v1033, %v1202
      %v1204 = vpop.f32.mrb[0].mxu0
      %v1205 = vadd.f32 %v1037, %v1204
      %v1206 = vpop.f32.mrb[0].mxu0
      %v1207 = vadd.f32 %v1033, %v1206
      %v1208 = vpop.f32.mrb[0].mxu0
      %v1209 = vadd.f32 %v1037, %v1208
      %1210 = vmatprep.mubr.bf16.mxu0 0
      %1211 = vmatmul.mubr.bf16.gmra.mrb[0].mxu0 %v1041
      %v1212 = vpop.f32.mrb[0].mxu0
      %v1213 = vadd.f32 %v1033, %v1212
      %v1214 = vpop.f32.mrb[0].mxu0
      %v1215 = vadd.f32 %v1037, %v1214
      %v1216 = vpop.f32.mrb[0].mxu0
      %v1217 = vadd.f32 %v1033, %v1216
      %v1218 = vpop.f32.mrb[0].mxu0
      %v1219 = vadd.f32 %v1037, %v1218
      %1220 = vmatprep.mubr.bf16.mxu0 0
      %1221 = vmatmul.mubr.bf16.gmra.mrb[0].mxu0 %v1042
      %v1222 = vpop.f32.mrb[0].mxu0
      %v1223 = vadd.f32 %v1033, %v1222
      %v1224 = vpop.f32.mrb[0].mxu0
      %v1225 = vadd.f32 %v1037, %v1224
      %v1226 = vpop.f32.mrb[0].mxu0
      %v1227 = vadd.f32 %v1033, %v1226
      %v1228 = vpop.f32.mrb[0].mxu0
      %v1229 = vadd.f32 %v1037, %v1228
      %1230 = vmatprep.mubr.bf16.mxu0 0
      %1231 = vmatmul.mubr.bf16.gmra.mrb[0].mxu0 %v1043
      %v1232 = vpop.f32.mrb[0].mxu0
      %v1233 = vadd.f32 %v1033, %v1232
      %v1234 = vpop.f32.mrb[0].mxu0
      %v1235 = vadd.f32 %v1037, %v1234
      %v1236 = vpop.f32.mrb[0].mxu0
      %v1237 = vadd.f32 %v1033, %v1236
      %v1238 = vpop.f32.mrb[0].mxu0
      %v1239 = vadd.f32 %v1037, %v1238
      %1240 = vmatprep.mubr.bf16.mxu0 0
      %1241 = vmatmul.mubr.bf16.gmra.mrb[0].mxu0 %v1044
      %v1242 = vpop.f32.mrb[0].mxu0
      %v1243 = vadd.f32 %v1033, %v1242
      %v1244 = vpop.f32.mrb[0].mxu0
      %v1245 = vadd.f32 %v1037, %v1244
      %v1246 = vpop.f32.mrb[0].mxu0
      %v1247 = vadd.f32 %v1033, %v1246
      %v1248 = vpop.f32.mrb[0].mxu0
      %v1249 = vadd.f32 %v1037, %v1248
      %1250 = vmatprep.mubr.bf16.mxu0 0
      %1251 = vmatmul.mubr.bf16.gmra.mrb[0].mxu0 %v1045
      %v1252 = vpop.f32.mrb[0].mxu0
      %v1253 = vadd.f32 %v1033, %v1252
      %v1254 = vpop.f32.mrb[0].mxu0
      %v1255 = vadd.f32 %v1037, %v1254
      %v1256 = vpop.f32.mrb[0].mxu0
      %v1257 = vadd.f32 %v1033, %v1256
      %v1258 = vpop.f32.mrb[0].mxu0
      %v1259 = vadd.f32 %v1037, %v1258
      %1260 = vmatprep.mubr.bf16.mxu0 0
      %1261 = vmatmul.mubr.bf16.gmra.mrb[0].mxu0 %v1046
      %v1262 = vpop.f32.mrb[0].mxu0
      %v1263 = vadd.f32 %v1033, %v1262
      %v1264 = vpop.f32.mrb[0].mxu0
      %v1265 = vadd.f32 %v1037, %v1264
      %v1266 = vpop.f32.mrb[0].mxu0
      %v1267 = vadd.f32 %v1033, %v1266
      %v1268 = vpop.f32.mrb[0].mxu0
      %v1269 = vadd.f32 %v1037, %v1268
      %1270 = vmatprep.mubr.bf16.mxu0 0
      %1271 = vmatmul.mubr.bf16.gmra.mrb[0].mxu0 %v1047
      %v1272 = vpop.f32.mrb[0].mxu0
      %v1273 = vadd.f32 %v1033, %v1272
      %v1274 = vpop.f32.mrb[0].mxu0
      %v1275 = vadd.f32 %v1037, %v1274
      %v1276 = vpop.f32.mrb[0].mxu0
      %v1277 = vadd.f32 %v1033, %v1276
      %v1278 = vpop.f32.mrb[0].mxu0
      %v1279 = vadd.f32 %v1037, %v1278
      %1280 = vmatprep.mubr.bf16.mxu0 0
      %1281 = vmatmul.mubr.bf16.gmra.mrb[0].mxu0 %v1048
      %v1282 = vpop.f32.mrb[0].mxu0
      %v1283 = vadd.f32 %v1033, %v1282
      %v1284 = vpop.f32.mrb[0].mxu0
      %v1285 = vadd.f32 %v1037, %v1284
      %v1286 = vpop.f32.mrb[0].mxu0
      %v1287 = vadd.f32 %v1033, %v1286
      %v1288 = vpop.f32.mrb[0].mxu0
      %v1289 = vadd.f32 %v1037, %v1288
      %1290 = vmatprep.mubr.bf16.mxu0 0
      %1291 = vmatmul.mubr.bf16.gmra.mrb[0].mxu0 %v1049
      %v1292 = vpop.f32.mrb[0].mxu0
      %v1293 = vadd.f32 %v1033, %v1292
      %v1294 = vpop.f32.mrb[0].mxu0
      %v1295 = vadd.f32 %v1037, %v1294
      %v1296 = vpop.f32.mrb[0].mxu0
      %v1297 = vadd.f32 %v1033, %v1296
      %v1298 = vpop.f32.mrb[0].mxu0
      %v1299 = vadd.f32 %v1037, %v1298
      %1300 = vmatprep.mubr.bf16.mxu0 0
      %1301 = vmatmul.mubr.bf16.gmra.mrb[0].mxu0 %v1050
      %v1302 = vpop.f32.mrb[0].mxu0
      %v1303 = vadd.f32 %v1033, %v1302
      %v1304 = vpop.f32.mrb[0].mxu0
      %v1305 = vadd.f32 %v1037, %v1304
      %v1306 = vpop.f32.mrb[0].mxu0
      %v1307 = vadd.f32 %v1033, %v1306
      %v1308 = vpop.f32.mrb[0].mxu0
      %v1309 = vadd.f32 %v1037, %v1308
      %1310 = vmatprep.mubr.bf16.mxu0 0
      %1311 = vmatmul.mubr.bf16.gmra.mrb[0].mxu0 %v1051
      %v1312 = vpop.f32.mrb[0].mxu0
      %v1313 = vadd.f32 %v1033, %v1312
      %v1314 = vpop.f32.mrb[0].mxu0
      %v1315 = vadd.f32 %v1037, %v1314
      %v1316 = vpop.f32.mrb[0].mxu0
      %v1317 = vadd.f32 %v1033, %v1316
      %v1318 = vpop.f32.mrb[0].mxu0
      %v1319 = vadd.f32 %v1037, %v1318
      %1320 = vmatprep.mubr.bf16.mxu0 0
      %1321 = vmatmul.mubr.bf16.gmra.mrb[0].mxu0 %v1052
      %v1322 = vpop.f32.mrb[0].mxu0
      %v1323 = vadd.f32 %v1033, %v1322
      %v1324 = vpop.f32.mrb[0].mxu0
      %v1325 = vadd.f32 %v1037, %v1324
      %v1326 = vpop.f32.mrb[0].mxu0
      %v1327 = vadd.f32 %v1033, %v1326
      %v1328 = vpop.f32.mrb[0].mxu0
      %v1329 = vadd.f32 %v1037, %v1328
      %1330 = vmatprep.mubr.bf16.mxu0 0
      %1331 = vmatmul.mubr.bf16.gmra.mrb[0].mxu0 %v1053
      %v1332 = vpop.f32.mrb[0].mxu0
      %v1333 = vadd.f32 %v1033, %v1332
      %v1334 = vpop.f32.mrb[0].mxu0
      %v1335 = vadd.f32 %v1037, %v1334
      %v1336 = vpop.f32.mrb[0].mxu0
      %v1337 = vadd.f32 %v1033, %v1336
      %v1338 = vpop.f32.mrb[0].mxu0
      %v1339 = vadd.f32 %v1037, %v1338
      %1340 = vmatprep.mubr.bf16.mxu0 0
      %1341 = vmatmul.mubr.bf16.gmra.mrb[0].mxu0 %v1054
      %v1342 = vpop.f32.mrb[0].mxu0
      %v1343 = vadd.f32 %v1033, %v1342
      %v1344 = vpop.f32.mrb[0].mxu0
      %v1345 = vadd.f32 %v1037, %v1344
      %v1346 = vpop.f32.mrb[0].mxu0
      %v1347 = vadd.f32 %v1033, %v1346
      %v1348 = vpop.f32.mrb[0].mxu0
      %v1349 = vadd.f32 %v1037, %v1348
      %1350 = vmatprep.mubr.bf16.mxu0 0
      %1351 = vmatmul.mubr.bf16.gmra.mrb[0].mxu0 %v1055
      %v1352 = vpop.f32.mrb[0].mxu0
      %v1353 = vadd.f32 %v1033, %v1352
      %v1354 = vpop.f32.mrb[0].mxu0
      %v1355 = vadd.f32 %v1037, %v1354
      %v1356 = vpop.f32.mrb[0].mxu0
      %v1357 = vadd.f32 %v1033, %v1356
      %v1358 = vpop.f32.mrb[0].mxu0
      %v1359 = vadd.f32 %v1037, %v1358
      %1360 = vmatprep.mubr.bf16.mxu0 0
      %1361 = vmatmul.mubr.bf16.gmra.mrb[0].mxu0 %v1056
      %v1362 = vpop.f32.mrb[0].mxu0
      %v1363 = vadd.f32 %v1033, %v1362
      %v1364 = vpop.f32.mrb[0].mxu0
      %v1365 = vadd.f32 %v1037, %v1364
      %v1366 = vpop.f32.mrb[0].mxu0
      %v1367 = vadd.f32 %v1033, %v1366
      %v1368 = vpop.f32.mrb[0].mxu0
      %v1369 = vadd.f32 %v1037, %v1368
      %1370 = vmatprep.mubr.bf16.mxu0 0
      %1371 = vmatmul.mubr.bf16.gmra.mrb[0].mxu0 %v1057
      %v1372 = vpop.f32.mrb[0].mxu0
      %v1373 = vadd.f32 %v1033, %v1372
      %v1374 = vpop.f32.mrb[0].mxu0
      %v1375 = vadd.f32 %v1037, %v1374
      %v1376 = vpop.f32.mrb[0].mxu0
      %v1377 = vadd.f32 %v1033, %v1376
      %v1378 = vpop.f32.mrb[0].mxu0
      %v1379 = vadd.f32 %v1037, %v1378
      %1380 = vmatprep.mubr.bf16.mxu0 0
      %1381 = vmatmul.mubr.bf16.gmra.mrb[0].mxu0 %v1058
      %v1382 = vpop.f32.mrb[0].mxu0
      %v1383 = vadd.f32 %v1033, %v1382
      %v1384 = vpop.f32.mrb[0].mxu0
      %v1385 = vadd.f32 %v1037, %v1384
      %v1386 = vpop.f32.mrb[0].mxu0
      %v1387 = vadd.f32 %v1033, %v1386
      %v1388 = vpop.f32.mrb[0].mxu0
      %v1389 = vadd.f32 %v1037, %v1388
      %1390 = vmatprep.mubr.bf16.mxu0 0
      %1391 = vmatmul.mubr.bf16.gmra.mrb[0].mxu0 %v1059
      %v1392 = vpop.f32.mrb[0].mxu0
      %v1393 = vadd.f32 %v1033, %v1392
      %v1394 = vpop.f32.mrb[0].mxu0
      %v1395 = vadd.f32 %v1037, %v1394
      %v1396 = vpop.f32.mrb[0].mxu0
      %v1397 = vadd.f32 %v1033, %v1396
      %v1398 = vpop.f32.mrb[0].mxu0
      %v1399 = vadd.f32 %v1037, %v1398
      %1400 = vmatprep.mubr.bf16.mxu0 0
      %1401 = vmatmul.mubr.bf16.gmra.mrb[0].mxu0 %v1060
      %v1402 = vpop.f32.mrb[0].mxu0
      %v1403 = vadd.f32 %v1033, %v1402
      %v1404 = vpop.f32.mrb[0].mxu0
      %v1405 = vadd.f32 %v1037, %v1404
      %v1406 = vpop.f32.mrb[0].mxu0
      %v1407 = vadd.f32 %v1033, %v1406
      %v1408 = vpop.f32.mrb[0].mxu0
      %v1409 = vadd.f32 %v1037, %v1408
      %1410 = vmatprep.mubr.bf16.mxu0 0
      %1411 = vmatmul.mubr.bf16.gmra.mrb[0].mxu0 %v1061
      %v1412 = vpop.f32.mrb[0].mxu0
      %v1413 = vadd.f32 %v1033, %v1412
      %v1414 = vpop.f32.mrb[0].mxu0
      %v1415 = vadd.f32 %v1037, %v1414
      %v1416 = vpop.f32.mrb[0].mxu0
      %v1417 = vadd.f32 %v1033, %v1416
      %v1418 = vpop.f32.mrb[0].mxu0
      %v1419 = vadd.f32 %v1037, %v1418
      %1420 = vmatprep.mubr.bf16.mxu0 0
      %1421 = vmatmul.mubr.bf16.gmra.mrb[0].mxu0 %v1062
      %v1422 = vpop.f32.mrb[0].mxu0
      %v1423 = vadd.f32 %v1033, %v1422
      %v1424 = vpop.f32.mrb[0].mxu0
      %v1425 = vadd.f32 %v1037, %v1424
      %v1426 = vpop.f32.mrb[0].mxu0
      %v1427 = vadd.f32 %v1033, %v1426
      %v1428 = vpop.f32.mrb[0].mxu0
      %v1429 = vadd.f32 %v1037, %v1428
      %1430 = vmatprep.mubr.bf16.mxu0 0
      %1431 = vmatmul.mubr.bf16.gmra.mrb[0].mxu0 %v1063
      %v1432 = vpop.f32.mrb[0].mxu0
      %v1433 = vadd.f32 %v1033, %v1432
      %v1434 = vpop.f32.mrb[0].mxu0
      %v1435 = vadd.f32 %v1037, %v1434
      %v1436 = vpop.f32.mrb[0].mxu0
      %v1437 = vadd.f32 %v1033, %v1436
      %v1438 = vpop.f32.mrb[0].mxu0
      %v1439 = vadd.f32 %v1037, %v1438
      %1440 = vdwg.mxu0
      %s1441 = scalar_lea.vmem %s5, 1
      %v1442 = vld [vmem:[%s1441] ss:$2 sm:$0x3]
      %v1444 = vlaneseq
      %v1445 = vshrl.u32 %v1444, 7
      %v1446 = vsub.s32 0, %v1445
      %v1447 = vrot.slane %v1442, %v1446
      %v1448 = vlaneseq
      %v1449 = vshrl.u32 %v1448, 7
      %v1450 = vsub.s32 1, %v1449
      %v1451 = vrot.slane %v1442, %v1450
      %v1470 = vunpack.c.l.b16 %v1012
      %v1471 = vunpack.c.h.b16 %v1012
      %v1472 = vunpack.c.l.b16 %v1013
      %v1473 = vunpack.c.h.b16 %v1013
      %v1474 = vunpack.c.l.b16 %v1014
      %v1475 = vunpack.c.h.b16 %v1014
      %v1476 = vunpack.c.l.b16 %v1015
      %v1477 = vunpack.c.h.b16 %v1015
      %v1478 = vunpack.c.l.b16 %v1016
      %v1479 = vunpack.c.h.b16 %v1016
      %v1480 = vunpack.c.l.b16 %v1017
      %v1481 = vunpack.c.h.b16 %v1017
      %v1482 = vunpack.c.l.b16 %v1018
      %v1483 = vunpack.c.h.b16 %v1018
      %v1484 = vunpack.c.l.b16 %v1019
      %v1485 = vunpack.c.h.b16 %v1019
      %v1486 = vunpack.c.l.b16 %v1020
      %v1487 = vunpack.c.h.b16 %v1020
      %v1488 = vunpack.c.l.b16 %v1021
      %v1489 = vunpack.c.h.b16 %v1021
      %v1490 = vunpack.c.l.b16 %v1022
      %v1491 = vunpack.c.h.b16 %v1022
      %v1492 = vunpack.c.l.b16 %v1023
      %v1493 = vunpack.c.h.b16 %v1023
      %v1494 = vunpack.c.l.b16 %v1024
      %v1495 = vunpack.c.h.b16 %v1024
      %v1496 = vunpack.c.l.b16 %v1025
      %v1497 = vunpack.c.h.b16 %v1025
      %v1498 = vunpack.c.l.b16 %v1026
      %v1499 = vunpack.c.h.b16 %v1026
      %v1500 = vunpack.c.l.b16 %v1027
      %v1501 = vunpack.c.h.b16 %v1027
      %v1502 = vpack.c.b16 %v1472, %v1470
      %v1503 = vpack.c.b16 %v1473, %v1471
      %v1504 = vpack.c.b16 %v1476, %v1474
      %v1505 = vpack.c.b16 %v1477, %v1475
      %v1506 = vpack.c.b16 %v1480, %v1478
      %v1507 = vpack.c.b16 %v1481, %v1479
      %v1508 = vpack.c.b16 %v1484, %v1482
      %v1509 = vpack.c.b16 %v1485, %v1483
      %v1510 = vpack.c.b16 %v1488, %v1486
      %v1511 = vpack.c.b16 %v1489, %v1487
      %v1512 = vpack.c.b16 %v1492, %v1490
      %v1513 = vpack.c.b16 %v1493, %v1491
      %v1514 = vpack.c.b16 %v1496, %v1494
      %v1515 = vpack.c.b16 %v1497, %v1495
      %v1516 = vpack.c.b16 %v1500, %v1498
      %v1517 = vpack.c.b16 %v1501, %v1499
      %1534 = vmatprep.subr.bf16.mxu0 %v1503
      %1535 = vmatpush1.bf16.msra.mxu0 %v1502
      %1536 = vmatprep.subr.bf16.mxu0 %v1505
      %1537 = vmatpush1.bf16.msra.mxu0 %v1504
      %1538 = vmatprep.subr.bf16.mxu0 %v1507
      %1539 = vmatpush1.bf16.msra.mxu0 %v1506
      %1540 = vmatprep.subr.bf16.mxu0 %v1509
      %1541 = vmatpush1.bf16.msra.mxu0 %v1508
      %1542 = vmatprep.subr.bf16.mxu0 %v1511
      %1543 = vmatpush1.bf16.msra.mxu0 %v1510
      %1544 = vmatprep.subr.bf16.mxu0 %v1513
      %1545 = vmatpush1.bf16.msra.mxu0 %v1512
      %1546 = vmatprep.subr.bf16.mxu0 %v1515
      %1547 = vmatpush1.bf16.msra.mxu0 %v1514
      %1548 = vmatprep.subr.bf16.mxu0 %v1517
      %1549 = vmatpush1.bf16.msra.mxu0 %v1516
      %1550 = vmatprep.subr.bf16.mxu0 0
      %1551 = vmatpush1.bf16.msra.mxu0 0
      %1552 = vmatprep.subr.bf16.mxu0 0
      %1553 = vmatpush1.bf16.msra.mxu0 0
      %1554 = vmatprep.subr.bf16.mxu0 0
      %1555 = vmatpush1.bf16.msra.mxu0 0
      %1556 = vmatprep.subr.bf16.mxu0 0
      %1557 = vmatpush1.bf16.msra.mxu0 0
      %1558 = vmatprep.subr.bf16.mxu0 0
      %1559 = vmatpush1.bf16.msra.mxu0 0
      %1560 = vmatprep.subr.bf16.mxu0 0
      %1561 = vmatpush1.bf16.msra.mxu0 0
      %1562 = vmatprep.subr.bf16.mxu0 0
      %1563 = vmatpush1.bf16.msra.mxu0 0
      %1564 = vmatprep.subr.bf16.mxu0 0
      %1565 = vmatpush1.bf16.msra.mxu0 0
      %1566 = vmatprep.mubr.bf16.mxu0 0
      %1567 = vmatmul.mubr.bf16.gmra.mrb[0].mxu0 %v1040
      %v1568 = vpop.f32.mrb[0].mxu0
      %v1569 = vadd.f32 %v1447, %v1568
      %v1570 = vpop.f32.mrb[0].mxu0
      %v1571 = vadd.f32 %v1451, %v1570
      %v1572 = vpop.f32.mrb[0].mxu0
      %v1573 = vadd.f32 %v1447, %v1572
      %v1574 = vpop.f32.mrb[0].mxu0
      %v1575 = vadd.f32 %v1451, %v1574
      %1576 = vmatprep.mubr.bf16.mxu0 0
      %1577 = vmatmul.mubr.bf16.gmra.mrb[0].mxu0 %v1041
      %v1578 = vpop.f32.mrb[0].mxu0
      %v1579 = vadd.f32 %v1447, %v1578
      %v1580 = vpop.f32.mrb[0].mxu0
      %v1581 = vadd.f32 %v1451, %v1580
      %v1582 = vpop.f32.mrb[0].mxu0
      %v1583 = vadd.f32 %v1447, %v1582
      %v1584 = vpop.f32.mrb[0].mxu0
      %v1585 = vadd.f32 %v1451, %v1584
      %1586 = vmatprep.mubr.bf16.mxu0 0
      %1587 = vmatmul.mubr.bf16.gmra.mrb[0].mxu0 %v1042
      %v1588 = vpop.f32.mrb[0].mxu0
      %v1589 = vadd.f32 %v1447, %v1588
      %v1590 = vpop.f32.mrb[0].mxu0
      %v1591 = vadd.f32 %v1451, %v1590
      %v1592 = vpop.f32.mrb[0].mxu0
      %v1593 = vadd.f32 %v1447, %v1592
      %v1594 = vpop.f32.mrb[0].mxu0
      %v1595 = vadd.f32 %v1451, %v1594
      %1596 = vmatprep.mubr.bf16.mxu0 0
      %1597 = vmatmul.mubr.bf16.gmra.mrb[0].mxu0 %v1043
      %v1598 = vpop.f32.mrb[0].mxu0
      %v1599 = vadd.f32 %v1447, %v1598
      %v1600 = vpop.f32.mrb[0].mxu0
      %v1601 = vadd.f32 %v1451, %v1600
      %v1602 = vpop.f32.mrb[0].mxu0
      %v1603 = vadd.f32 %v1447, %v1602
      %v1604 = vpop.f32.mrb[0].mxu0
      %v1605 = vadd.f32 %v1451, %v1604
      %1606 = vmatprep.mubr.bf16.mxu0 0
      %1607 = vmatmul.mubr.bf16.gmra.mrb[0].mxu0 %v1044
      %v1608 = vpop.f32.mrb[0].mxu0
      %v1609 = vadd.f32 %v1447, %v1608
      %v1610 = vpop.f32.mrb[0].mxu0
      %v1611 = vadd.f32 %v1451, %v1610
      %v1612 = vpop.f32.mrb[0].mxu0
      %v1613 = vadd.f32 %v1447, %v1612
      %v1614 = vpop.f32.mrb[0].mxu0
      %v1615 = vadd.f32 %v1451, %v1614
      %1616 = vmatprep.mubr.bf16.mxu0 0
      %1617 = vmatmul.mubr.bf16.gmra.mrb[0].mxu0 %v1045
      %v1618 = vpop.f32.mrb[0].mxu0
      %v1619 = vadd.f32 %v1447, %v1618
      %v1620 = vpop.f32.mrb[0].mxu0
      %v1621 = vadd.f32 %v1451, %v1620
      %v1622 = vpop.f32.mrb[0].mxu0
      %v1623 = vadd.f32 %v1447, %v1622
      %v1624 = vpop.f32.mrb[0].mxu0
      %v1625 = vadd.f32 %v1451, %v1624
      %1626 = vmatprep.mubr.bf16.mxu0 0
      %1627 = vmatmul.mubr.bf16.gmra.mrb[0].mxu0 %v1046
      %v1628 = vpop.f32.mrb[0].mxu0
      %v1629 = vadd.f32 %v1447, %v1628
      %v1630 = vpop.f32.mrb[0].mxu0
      %v1631 = vadd.f32 %v1451, %v1630
      %v1632 = vpop.f32.mrb[0].mxu0
      %v1633 = vadd.f32 %v1447, %v1632
      %v1634 = vpop.f32.mrb[0].mxu0
      %v1635 = vadd.f32 %v1451, %v1634
      %1636 = vmatprep.mubr.bf16.mxu0 0
      %1637 = vmatmul.mubr.bf16.gmra.mrb[0].mxu0 %v1047
      %v1638 = vpop.f32.mrb[0].mxu0
      %v1639 = vadd.f32 %v1447, %v1638
      %v1640 = vpop.f32.mrb[0].mxu0
      %v1641 = vadd.f32 %v1451, %v1640
      %v1642 = vpop.f32.mrb[0].mxu0
      %v1643 = vadd.f32 %v1447, %v1642
      %v1644 = vpop.f32.mrb[0].mxu0
      %v1645 = vadd.f32 %v1451, %v1644
      %1646 = vmatprep.mubr.bf16.mxu0 0
      %1647 = vmatmul.mubr.bf16.gmra.mrb[0].mxu0 %v1048
      %v1648 = vpop.f32.mrb[0].mxu0
      %v1649 = vadd.f32 %v1447, %v1648
      %v1650 = vpop.f32.mrb[0].mxu0
      %v1651 = vadd.f32 %v1451, %v1650
      %v1652 = vpop.f32.mrb[0].mxu0
      %v1653 = vadd.f32 %v1447, %v1652
      %v1654 = vpop.f32.mrb[0].mxu0
      %v1655 = vadd.f32 %v1451, %v1654
      %1656 = vmatprep.mubr.bf16.mxu0 0
      %1657 = vmatmul.mubr.bf16.gmra.mrb[0].mxu0 %v1049
      %v1658 = vpop.f32.mrb[0].mxu0
      %v1659 = vadd.f32 %v1447, %v1658
      %v1660 = vpop.f32.mrb[0].mxu0
      %v1661 = vadd.f32 %v1451, %v1660
      %v1662 = vpop.f32.mrb[0].mxu0
      %v1663 = vadd.f32 %v1447, %v1662
      %v1664 = vpop.f32.mrb[0].mxu0
      %v1665 = vadd.f32 %v1451, %v1664
      %1666 = vmatprep.mubr.bf16.mxu0 0
      %1667 = vmatmul.mubr.bf16.gmra.mrb[0].mxu0 %v1050
      %v1668 = vpop.f32.mrb[0].mxu0
      %v1669 = vadd.f32 %v1447, %v1668
      %v1670 = vpop.f32.mrb[0].mxu0
      %v1671 = vadd.f32 %v1451, %v1670
      %v1672 = vpop.f32.mrb[0].mxu0
      %v1673 = vadd.f32 %v1447, %v1672
      %v1674 = vpop.f32.mrb[0].mxu0
      %v1675 = vadd.f32 %v1451, %v1674
      %1676 = vmatprep.mubr.bf16.mxu0 0
      %1677 = vmatmul.mubr.bf16.gmra.mrb[0].mxu0 %v1051
      %v1678 = vpop.f32.mrb[0].mxu0
      %v1679 = vadd.f32 %v1447, %v1678
      %v1680 = vpop.f32.mrb[0].mxu0
      %v1681 = vadd.f32 %v1451, %v1680
      %v1682 = vpop.f32.mrb[0].mxu0
      %v1683 = vadd.f32 %v1447, %v1682
      %v1684 = vpop.f32.mrb[0].mxu0
      %v1685 = vadd.f32 %v1451, %v1684
      %1686 = vmatprep.mubr.bf16.mxu0 0
      %1687 = vmatmul.mubr.bf16.gmra.mrb[0].mxu0 %v1052
      %v1688 = vpop.f32.mrb[0].mxu0
      %v1689 = vadd.f32 %v1447, %v1688
      %v1690 = vpop.f32.mrb[0].mxu0
      %v1691 = vadd.f32 %v1451, %v1690
      %v1692 = vpop.f32.mrb[0].mxu0
      %v1693 = vadd.f32 %v1447, %v1692
      %v1694 = vpop.f32.mrb[0].mxu0
      %v1695 = vadd.f32 %v1451, %v1694
      %1696 = vmatprep.mubr.bf16.mxu0 0
      %1697 = vmatmul.mubr.bf16.gmra.mrb[0].mxu0 %v1053
      %v1698 = vpop.f32.mrb[0].mxu0
      %v1699 = vadd.f32 %v1447, %v1698
      %v1700 = vpop.f32.mrb[0].mxu0
      %v1701 = vadd.f32 %v1451, %v1700
      %v1702 = vpop.f32.mrb[0].mxu0
      %v1703 = vadd.f32 %v1447, %v1702
      %v1704 = vpop.f32.mrb[0].mxu0
      %v1705 = vadd.f32 %v1451, %v1704
      %1706 = vmatprep.mubr.bf16.mxu0 0
      %1707 = vmatmul.mubr.bf16.gmra.mrb[0].mxu0 %v1054
      %v1708 = vpop.f32.mrb[0].mxu0
      %v1709 = vadd.f32 %v1447, %v1708
      %v1710 = vpop.f32.mrb[0].mxu0
      %v1711 = vadd.f32 %v1451, %v1710
      %v1712 = vpop.f32.mrb[0].mxu0
      %v1713 = vadd.f32 %v1447, %v1712
      %v1714 = vpop.f32.mrb[0].mxu0
      %v1715 = vadd.f32 %v1451, %v1714
      %1716 = vmatprep.mubr.bf16.mxu0 0
      %1717 = vmatmul.mubr.bf16.gmra.mrb[0].mxu0 %v1055
      %v1718 = vpop.f32.mrb[0].mxu0
      %v1719 = vadd.f32 %v1447, %v1718
      %v1720 = vpop.f32.mrb[0].mxu0
      %v1721 = vadd.f32 %v1451, %v1720
      %v1722 = vpop.f32.mrb[0].mxu0
      %v1723 = vadd.f32 %v1447, %v1722
      %v1724 = vpop.f32.mrb[0].mxu0
      %v1725 = vadd.f32 %v1451, %v1724
      %1726 = vmatprep.mubr.bf16.mxu0 0
      %1727 = vmatmul.mubr.bf16.gmra.mrb[0].mxu0 %v1056
      %v1728 = vpop.f32.mrb[0].mxu0
      %v1729 = vadd.f32 %v1447, %v1728
      %v1730 = vpop.f32.mrb[0].mxu0
      %v1731 = vadd.f32 %v1451, %v1730
      %v1732 = vpop.f32.mrb[0].mxu0
      %v1733 = vadd.f32 %v1447, %v1732
      %v1734 = vpop.f32.mrb[0].mxu0
      %v1735 = vadd.f32 %v1451, %v1734
      %1736 = vmatprep.mubr.bf16.mxu0 0
      %1737 = vmatmul.mubr.bf16.gmra.mrb[0].mxu0 %v1057
      %v1738 = vpop.f32.mrb[0].mxu0
      %v1739 = vadd.f32 %v1447, %v1738
      %v1740 = vpop.f32.mrb[0].mxu0
      %v1741 = vadd.f32 %v1451, %v1740
      %v1742 = vpop.f32.mrb[0].mxu0
      %v1743 = vadd.f32 %v1447, %v1742
      %v1744 = vpop.f32.mrb[0].mxu0
      %v1745 = vadd.f32 %v1451, %v1744
      %1746 = vmatprep.mubr.bf16.mxu0 0
      %1747 = vmatmul.mubr.bf16.gmra.mrb[0].mxu0 %v1058
      %v1748 = vpop.f32.mrb[0].mxu0
      %v1749 = vadd.f32 %v1447, %v1748
      %v1750 = vpop.f32.mrb[0].mxu0
      %v1751 = vadd.f32 %v1451, %v1750
      %v1752 = vpop.f32.mrb[0].mxu0
      %v1753 = vadd.f32 %v1447, %v1752
      %v1754 = vpop.f32.mrb[0].mxu0
      %v1755 = vadd.f32 %v1451, %v1754
      %1756 = vmatprep.mubr.bf16.mxu0 0
      %1757 = vmatmul.mubr.bf16.gmra.mrb[0].mxu0 %v1059
      %v1758 = vpop.f32.mrb[0].mxu0
      %v1759 = vadd.f32 %v1447, %v1758
      %v1760 = vpop.f32.mrb[0].mxu0
      %v1761 = vadd.f32 %v1451, %v1760
      %v1762 = vpop.f32.mrb[0].mxu0
      %v1763 = vadd.f32 %v1447, %v1762
      %v1764 = vpop.f32.mrb[0].mxu0
      %v1765 = vadd.f32 %v1451, %v1764
      %1766 = vmatprep.mubr.bf16.mxu0 0
      %1767 = vmatmul.mubr.bf16.gmra.mrb[0].mxu0 %v1060
      %v1768 = vpop.f32.mrb[0].mxu0
      %v1769 = vadd.f32 %v1447, %v1768
      %v1770 = vpop.f32.mrb[0].mxu0
      %v1771 = vadd.f32 %v1451, %v1770
      %v1772 = vpop.f32.mrb[0].mxu0
      %v1773 = vadd.f32 %v1447, %v1772
      %v1774 = vpop.f32.mrb[0].mxu0
      %v1775 = vadd.f32 %v1451, %v1774
      %1776 = vmatprep.mubr.bf16.mxu0 0
      %1777 = vmatmul.mubr.bf16.gmra.mrb[0].mxu0 %v1061
      %v1778 = vpop.f32.mrb[0].mxu0
      %v1779 = vadd.f32 %v1447, %v1778
      %v1780 = vpop.f32.mrb[0].mxu0
      %v1781 = vadd.f32 %v1451, %v1780
      %v1782 = vpop.f32.mrb[0].mxu0
      %v1783 = vadd.f32 %v1447, %v1782
      %v1784 = vpop.f32.mrb[0].mxu0
      %v1785 = vadd.f32 %v1451, %v1784
      %1786 = vmatprep.mubr.bf16.mxu0 0
      %1787 = vmatmul.mubr.bf16.gmra.mrb[0].mxu0 %v1062
      %v1788 = vpop.f32.mrb[0].mxu0
      %v1789 = vadd.f32 %v1447, %v1788
      %v1790 = vpop.f32.mrb[0].mxu0
      %v1791 = vadd.f32 %v1451, %v1790
      %v1792 = vpop.f32.mrb[0].mxu0
      %v1793 = vadd.f32 %v1447, %v1792
      %v1794 = vpop.f32.mrb[0].mxu0
      %v1795 = vadd.f32 %v1451, %v1794
      %1796 = vmatprep.mubr.bf16.mxu0 0
      %1797 = vmatmul.mubr.bf16.gmra.mrb[0].mxu0 %v1063
      %v1798 = vpop.f32.mrb[0].mxu0
      %v1799 = vadd.f32 %v1447, %v1798
      %v1800 = vpop.f32.mrb[0].mxu0
      %v1801 = vadd.f32 %v1451, %v1800
      %v1802 = vpop.f32.mrb[0].mxu0
      %v1803 = vadd.f32 %v1447, %v1802
      %v1804 = vpop.f32.mrb[0].mxu0
      %v1805 = vadd.f32 %v1451, %v1804
      %1806 = vdwg.mxu0
      %1807 = vst [vmem:[%s333] sm:$0xff] %v1203
      %1808 = vst [vmem:[%s333 + $0x8] sm:$0xff] %v1205
      %1809 = vst [vmem:[%s333 + $0x10] sm:$0xff] %v1207
      %1810 = vst [vmem:[%s333 + $0x18] sm:$0xff] %v1209
      %1811 = vst [vmem:[%s333 + $0x20] sm:$0xff] %v1213
      %1812 = vst [vmem:[%s333 + $0x28] sm:$0xff] %v1215
      %1813 = vst [vmem:[%s333 + $0x30] sm:$0xff] %v1217
      %1814 = vst [vmem:[%s333 + $0x38] sm:$0xff] %v1219
      %1815 = vst [vmem:[%s333 + $0x40] sm:$0xff] %v1223
      %1816 = vst [vmem:[%s333 + $0x48] sm:$0xff] %v1225
      %1817 = vst [vmem:[%s333 + $0x50] sm:$0xff] %v1227
      %1818 = vst [vmem:[%s333 + $0x58] sm:$0xff] %v1229
      %1819 = vst [vmem:[%s333 + $0x60] sm:$0xff] %v1233
      %1820 = vst [vmem:[%s333 + $0x68] sm:$0xff] %v1235
      %1821 = vst [vmem:[%s333 + $0x70] sm:$0xff] %v1237
      %1822 = vst [vmem:[%s333 + $0x78] sm:$0xff] %v1239
      %1823 = vst [vmem:[%s333 + $0x80] sm:$0xff] %v1243
      %1824 = vst [vmem:[%s333 + $0x88] sm:$0xff] %v1245
      %1825 = vst [vmem:[%s333 + $0x90] sm:$0xff] %v1247
      %1826 = vst [vmem:[%s333 + $0x98] sm:$0xff] %v1249
      %1827 = vst [vmem:[%s333 + $0xa0] sm:$0xff] %v1253
      %1828 = vst [vmem:[%s333 + $0xa8] sm:$0xff] %v1255
      %1829 = vst [vmem:[%s333 + $0xb0] sm:$0xff] %v1257
      %1830 = vst [vmem:[%s333 + $0xb8] sm:$0xff] %v1259
      %1831 = vst [vmem:[%s333 + $0xc0] sm:$0xff] %v1263
      %1832 = vst [vmem:[%s333 + $0xc8] sm:$0xff] %v1265
      %1833 = vst [vmem:[%s333 + $0xd0] sm:$0xff] %v1267
      %1834 = vst [vmem:[%s333 + $0xd8] sm:$0xff] %v1269
      %1835 = vst [vmem:[%s333 + $0xe0] sm:$0xff] %v1273
      %1836 = vst [vmem:[%s333 + $0xe8] sm:$0xff] %v1275
      %1837 = vst [vmem:[%s333 + $0xf0] sm:$0xff] %v1277
      %1838 = vst [vmem:[%s333 + $0xf8] sm:$0xff] %v1279
      %1839 = vst [vmem:[%s333 + $0x100] sm:$0xff] %v1283
      %1840 = vst [vmem:[%s333 + $0x108] sm:$0xff] %v1285
      %1841 = vst [vmem:[%s333 + $0x110] sm:$0xff] %v1287
      %1842 = vst [vmem:[%s333 + $0x118] sm:$0xff] %v1289
      %1843 = vst [vmem:[%s333 + $0x120] sm:$0xff] %v1293
      %1844 = vst [vmem:[%s333 + $0x128] sm:$0xff] %v1295
      %1845 = vst [vmem:[%s333 + $0x130] sm:$0xff] %v1297
      %1846 = vst [vmem:[%s333 + $0x138] sm:$0xff] %v1299
      %1847 = vst [vmem:[%s333 + $0x140] sm:$0xff] %v1303
      %1848 = vst [vmem:[%s333 + $0x148] sm:$0xff] %v1305
      %1849 = vst [vmem:[%s333 + $0x150] sm:$0xff] %v1307
      %1850 = vst [vmem:[%s333 + $0x158] sm:$0xff] %v1309
      %1851 = vst [vmem:[%s333 + $0x160] sm:$0xff] %v1313
      %1852 = vst [vmem:[%s333 + $0x168] sm:$0xff] %v1315
      %1853 = vst [vmem:[%s333 + $0x170] sm:$0xff] %v1317
      %1854 = vst [vmem:[%s333 + $0x178] sm:$0xff] %v1319
      %1855 = vst [vmem:[%s333 + $0x180] sm:$0xff] %v1323
      %1856 = vst [vmem:[%s333 + $0x188] sm:$0xff] %v1325
      %1857 = vst [vmem:[%s333 + $0x190] sm:$0xff] %v1327
      %1858 = vst [vmem:[%s333 + $0x198] sm:$0xff] %v1329
      %1859 = vst [vmem:[%s333 + $0x1a0] sm:$0xff] %v1333
      %1860 = vst [vmem:[%s333 + $0x1a8] sm:$0xff] %v1335
      %1861 = vst [vmem:[%s333 + $0x1b0] sm:$0xff] %v1337
      %1862 = vst [vmem:[%s333 + $0x1b8] sm:$0xff] %v1339
      %1863 = vst [vmem:[%s333 + $0x1c0] sm:$0xff] %v1343
      %1864 = vst [vmem:[%s333 + $0x1c8] sm:$0xff] %v1345
      %1865 = vst [vmem:[%s333 + $0x1d0] sm:$0xff] %v1347
      %1866 = vst [vmem:[%s333 + $0x1d8] sm:$0xff] %v1349
      %1867 = vst [vmem:[%s333 + $0x1e0] sm:$0xff] %v1353
      %1868 = vst [vmem:[%s333 + $0x1e8] sm:$0xff] %v1355
      %1869 = vst [vmem:[%s333 + $0x1f0] sm:$0xff] %v1357
      %1870 = vst [vmem:[%s333 + $0x1f8] sm:$0xff] %v1359
      %1871 = vst [vmem:[%s333 + $0x200] sm:$0xff] %v1363
      %1872 = vst [vmem:[%s333 + $0x208] sm:$0xff] %v1365
      %1873 = vst [vmem:[%s333 + $0x210] sm:$0xff] %v1367
      %1874 = vst [vmem:[%s333 + $0x218] sm:$0xff] %v1369
      %1875 = vst [vmem:[%s333 + $0x220] sm:$0xff] %v1373
      %1876 = vst [vmem:[%s333 + $0x228] sm:$0xff] %v1375
      %1877 = vst [vmem:[%s333 + $0x230] sm:$0xff] %v1377
      %1878 = vst [vmem:[%s333 + $0x238] sm:$0xff] %v1379
      %1879 = vst [vmem:[%s333 + $0x240] sm:$0xff] %v1383
      %1880 = vst [vmem:[%s333 + $0x248] sm:$0xff] %v1385
      %1881 = vst [vmem:[%s333 + $0x250] sm:$0xff] %v1387
      %1882 = vst [vmem:[%s333 + $0x258] sm:$0xff] %v1389
      %1883 = vst [vmem:[%s333 + $0x260] sm:$0xff] %v1393
      %1884 = vst [vmem:[%s333 + $0x268] sm:$0xff] %v1395
      %1885 = vst [vmem:[%s333 + $0x270] sm:$0xff] %v1397
      %1886 = vst [vmem:[%s333 + $0x278] sm:$0xff] %v1399
      %1887 = vst [vmem:[%s333 + $0x280] sm:$0xff] %v1403
      %1888 = vst [vmem:[%s333 + $0x288] sm:$0xff] %v1405
      %1889 = vst [vmem:[%s333 + $0x290] sm:$0xff] %v1407
      %1890 = vst [vmem:[%s333 + $0x298] sm:$0xff] %v1409
      %1891 = vst [vmem:[%s333 + $0x2a0] sm:$0xff] %v1413
      %1892 = vst [vmem:[%s333 + $0x2a8] sm:$0xff] %v1415
      %1893 = vst [vmem:[%s333 + $0x2b0] sm:$0xff] %v1417
      %1894 = vst [vmem:[%s333 + $0x2b8] sm:$0xff] %v1419
      %1895 = vst [vmem:[%s333 + $0x2c0] sm:$0xff] %v1423
      %1896 = vst [vmem:[%s333 + $0x2c8] sm:$0xff] %v1425
      %1897 = vst [vmem:[%s333 + $0x2d0] sm:$0xff] %v1427
      %1898 = vst [vmem:[%s333 + $0x2d8] sm:$0xff] %v1429
      %1899 = vst [vmem:[%s333 + $0x2e0] sm:$0xff] %v1433
      %1900 = vst [vmem:[%s333 + $0x2e8] sm:$0xff] %v1435
      %1901 = vst [vmem:[%s333 + $0x2f0] sm:$0xff] %v1437
      %1902 = vst [vmem:[%s333 + $0x2f8] sm:$0xff] %v1439
      %s1903 = scalar_lea.vmem %s333, 768
      %1904 = vst [vmem:[%s1903] sm:$0xff] %v1569
      %1905 = vst [vmem:[%s1903 + $0x8] sm:$0xff] %v1571
      %1906 = vst [vmem:[%s1903 + $0x10] sm:$0xff] %v1573
      %1907 = vst [vmem:[%s1903 + $0x18] sm:$0xff] %v1575
      %1908 = vst [vmem:[%s1903 + $0x20] sm:$0xff] %v1579
      %1909 = vst [vmem:[%s1903 + $0x28] sm:$0xff] %v1581
      %1910 = vst [vmem:[%s1903 + $0x30] sm:$0xff] %v1583
      %1911 = vst [vmem:[%s1903 + $0x38] sm:$0xff] %v1585
      %1912 = vst [vmem:[%s1903 + $0x40] sm:$0xff] %v1589
      %1913 = vst [vmem:[%s1903 + $0x48] sm:$0xff] %v1591
      %1914 = vst [vmem:[%s1903 + $0x50] sm:$0xff] %v1593
      %1915 = vst [vmem:[%s1903 + $0x58] sm:$0xff] %v1595
      %1916 = vst [vmem:[%s1903 + $0x60] sm:$0xff] %v1599
      %1917 = vst [vmem:[%s1903 + $0x68] sm:$0xff] %v1601
      %1918 = vst [vmem:[%s1903 + $0x70] sm:$0xff] %v1603
      %1919 = vst [vmem:[%s1903 + $0x78] sm:$0xff] %v1605
      %1920 = vst [vmem:[%s1903 + $0x80] sm:$0xff] %v1609
      %1921 = vst [vmem:[%s1903 + $0x88] sm:$0xff] %v1611
      %1922 = vst [vmem:[%s1903 + $0x90] sm:$0xff] %v1613
      %1923 = vst [vmem:[%s1903 + $0x98] sm:$0xff] %v1615
      %1924 = vst [vmem:[%s1903 + $0xa0] sm:$0xff] %v1619
      %1925 = vst [vmem:[%s1903 + $0xa8] sm:$0xff] %v1621
      %1926 = vst [vmem:[%s1903 + $0xb0] sm:$0xff] %v1623
      %1927 = vst [vmem:[%s1903 + $0xb8] sm:$0xff] %v1625
      %1928 = vst [vmem:[%s1903 + $0xc0] sm:$0xff] %v1629
      %1929 = vst [vmem:[%s1903 + $0xc8] sm:$0xff] %v1631
      %1930 = vst [vmem:[%s1903 + $0xd0] sm:$0xff] %v1633
      %1931 = vst [vmem:[%s1903 + $0xd8] sm:$0xff] %v1635
      %1932 = vst [vmem:[%s1903 + $0xe0] sm:$0xff] %v1639
      %1933 = vst [vmem:[%s1903 + $0xe8] sm:$0xff] %v1641
      %1934 = vst [vmem:[%s1903 + $0xf0] sm:$0xff] %v1643
      %1935 = vst [vmem:[%s1903 + $0xf8] sm:$0xff] %v1645
      %1936 = vst [vmem:[%s1903 + $0x100] sm:$0xff] %v1649
      %1937 = vst [vmem:[%s1903 + $0x108] sm:$0xff] %v1651
      %1938 = vst [vmem:[%s1903 + $0x110] sm:$0xff] %v1653
      %1939 = vst [vmem:[%s1903 + $0x118] sm:$0xff] %v1655
      %1940 = vst [vmem:[%s1903 + $0x120] sm:$0xff] %v1659
      %1941 = vst [vmem:[%s1903 + $0x128] sm:$0xff] %v1661
      %1942 = vst [vmem:[%s1903 + $0x130] sm:$0xff] %v1663
      %1943 = vst [vmem:[%s1903 + $0x138] sm:$0xff] %v1665
      %1944 = vst [vmem:[%s1903 + $0x140] sm:$0xff] %v1669
      %1945 = vst [vmem:[%s1903 + $0x148] sm:$0xff] %v1671
      %1946 = vst [vmem:[%s1903 + $0x150] sm:$0xff] %v1673
      %1947 = vst [vmem:[%s1903 + $0x158] sm:$0xff] %v1675
      %1948 = vst [vmem:[%s1903 + $0x160] sm:$0xff] %v1679
      %1949 = vst [vmem:[%s1903 + $0x168] sm:$0xff] %v1681
      %1950 = vst [vmem:[%s1903 + $0x170] sm:$0xff] %v1683
      %1951 = vst [vmem:[%s1903 + $0x178] sm:$0xff] %v1685
      %1952 = vst [vmem:[%s1903 + $0x180] sm:$0xff] %v1689
      %1953 = vst [vmem:[%s1903 + $0x188] sm:$0xff] %v1691
      %1954 = vst [vmem:[%s1903 + $0x190] sm:$0xff] %v1693
      %1955 = vst [vmem:[%s1903 + $0x198] sm:$0xff] %v1695
      %1956 = vst [vmem:[%s1903 + $0x1a0] sm:$0xff] %v1699
      %1957 = vst [vmem:[%s1903 + $0x1a8] sm:$0xff] %v1701
      %1958 = vst [vmem:[%s1903 + $0x1b0] sm:$0xff] %v1703
      %1959 = vst [vmem:[%s1903 + $0x1b8] sm:$0xff] %v1705
      %1960 = vst [vmem:[%s1903 + $0x1c0] sm:$0xff] %v1709
      %1961 = vst [vmem:[%s1903 + $0x1c8] sm:$0xff] %v1711
      %1962 = vst [vmem:[%s1903 + $0x1d0] sm:$0xff] %v1713
      %1963 = vst [vmem:[%s1903 + $0x1d8] sm:$0xff] %v1715
      %1964 = vst [vmem:[%s1903 + $0x1e0] sm:$0xff] %v1719
      %1965 = vst [vmem:[%s1903 + $0x1e8] sm:$0xff] %v1721
      %1966 = vst [vmem:[%s1903 + $0x1f0] sm:$0xff] %v1723
      %1967 = vst [vmem:[%s1903 + $0x1f8] sm:$0xff] %v1725
      %1968 = vst [vmem:[%s1903 + $0x200] sm:$0xff] %v1729
      %1969 = vst [vmem:[%s1903 + $0x208] sm:$0xff] %v1731
      %1970 = vst [vmem:[%s1903 + $0x210] sm:$0xff] %v1733
      %1971 = vst [vmem:[%s1903 + $0x218] sm:$0xff] %v1735
      %1972 = vst [vmem:[%s1903 + $0x220] sm:$0xff] %v1739
      %1973 = vst [vmem:[%s1903 + $0x228] sm:$0xff] %v1741
      %1974 = vst [vmem:[%s1903 + $0x230] sm:$0xff] %v1743
      %1975 = vst [vmem:[%s1903 + $0x238] sm:$0xff] %v1745
      %1976 = vst [vmem:[%s1903 + $0x240] sm:$0xff] %v1749
      %1977 = vst [vmem:[%s1903 + $0x248] sm:$0xff] %v1751
      %1978 = vst [vmem:[%s1903 + $0x250] sm:$0xff] %v1753
      %1979 = vst [vmem:[%s1903 + $0x258] sm:$0xff] %v1755
      %1980 = vst [vmem:[%s1903 + $0x260] sm:$0xff] %v1759
      %1981 = vst [vmem:[%s1903 + $0x268] sm:$0xff] %v1761
      %1982 = vst [vmem:[%s1903 + $0x270] sm:$0xff] %v1763
      %1983 = vst [vmem:[%s1903 + $0x278] sm:$0xff] %v1765
      %1984 = vst [vmem:[%s1903 + $0x280] sm:$0xff] %v1769
      %1985 = vst [vmem:[%s1903 + $0x288] sm:$0xff] %v1771
      %1986 = vst [vmem:[%s1903 + $0x290] sm:$0xff] %v1773
      %1987 = vst [vmem:[%s1903 + $0x298] sm:$0xff] %v1775
      %1988 = vst [vmem:[%s1903 + $0x2a0] sm:$0xff] %v1779
      %1989 = vst [vmem:[%s1903 + $0x2a8] sm:$0xff] %v1781
      %1990 = vst [vmem:[%s1903 + $0x2b0] sm:$0xff] %v1783
      %1991 = vst [vmem:[%s1903 + $0x2b8] sm:$0xff] %v1785
      %1992 = vst [vmem:[%s1903 + $0x2c0] sm:$0xff] %v1789
      %1993 = vst [vmem:[%s1903 + $0x2c8] sm:$0xff] %v1791
      %1994 = vst [vmem:[%s1903 + $0x2d0] sm:$0xff] %v1793
      %1995 = vst [vmem:[%s1903 + $0x2d8] sm:$0xff] %v1795
      %1996 = vst [vmem:[%s1903 + $0x2e0] sm:$0xff] %v1799
      %1997 = vst [vmem:[%s1903 + $0x2e8] sm:$0xff] %v1801
      %1998 = vst [vmem:[%s1903 + $0x2f0] sm:$0xff] %v1803
      %1999 = vst [vmem:[%s1903 + $0x2f8] sm:$0xff] %v1805
      %s2000 = smul.u32 16, %s22
      %p2001 = scmp.lt.s32.totalorder %s21, 1
      %s2002 = scalar_select %p2001, %s21, 1
      %p2003 = scmp.lt.s32.totalorder %s2000, 15
      %s2004 = scalar_select %p2003, %s2000, 15
      %s2005 = smul.addr %s2004, 6
      %s2006 = smul.addr %s2002, 192
      %s2007 = sadd.s32 %s2005, %s2006
      %s2008 = smul.addr %s2007, 8
      %s2009 = scalar_lea.vmem %s6, %s2008
      // Predicated region
      $region45: #{residual_up_block_forward.7} parent=43 // pred_check
        %p2010 = pneg %p189
      $region46: #{residual_up_block_forward.7} parent=43 // pred_check_branch
        %2012 = sbr.rel (%p2010) target = $region48
      $region47: #{residual_up_block_forward.7} parent=43 // pred_region
        %s2013 = smul.u32 16, %s22
      $region48: #{residual_up_block_forward.7} parent=43 // pred_fallthru
        _
    $region44: #{residual_up_block_forward.7} parent=5 // pred_fallthru
      _
    %p2014 = scmp.le.s32.totalorder 2, %s12
    // Predicated region
    $region49: #{residual_up_block_forward.7} parent=5 // pred_check
      %p2015 = pneg %p2014
    $region50: #{residual_up_block_forward.7} parent=5 // pred_check_branch
      %2017 = sbr.rel (%p2015) target = $region52
    $region51: #{residual_up_block_forward.7} parent=5 // pred_region
      %s2018 = ssub.s32 %s12, 2
      // Predicated region
      $region53: #{residual_up_block_forward.7} parent=51 // pred_check
        %p2019 = pneg %p195
      $region54: #{residual_up_block_forward.7} parent=51 // pred_check_branch
        %2021 = sbr.rel (%p2019) target = $region56
      $region55: #{residual_up_block_forward.7} parent=51 // pred_region
        %s2022 = smul.u32 16, %s24
        %p2023 = scmp.lt.s32.totalorder %s23, 1
        %s2024 = scalar_select %p2023, %s23, 1
        %p2025 = scmp.lt.s32.totalorder %s2022, 15
        %s2026 = scalar_select %p2025, %s2022, 15
        %s2027 = smul.addr %s2026, 6
        %s2028 = smul.addr %s2024, 192
        %s2029 = sadd.s32 %s2027, %s2028
        %s2030 = smul.addr %s2029, 8
        %s2031 = scalar_lea.vmem %s6, %s2030
      $region56: #{residual_up_block_forward.7} parent=51 // pred_fallthru
        _
    $region52: #{residual_up_block_forward.7} parent=5 // pred_fallthru
      _
  $region6: #{residual_up_block_forward.7} parent=0 // loop_footer
    %s16 = sadd.s32 1, %s12
  $region7: #{residual_up_block_forward.7} parent=0 // loop_footer_branch
    %11 = sbr.rel target = $region3
  $region8: #{residual_up_block_forward.7} parent=0 // loop_exit
    _

// kernel: residual_up_block_forward.4
$region0: #{residual_up_block_forward.4}
  #allocation0 [shape = 'u32[]', space=smem, size = 0x4, offset = 0x4, fixed_abs, tag = 'smem constant byte address 0x4 - core index']
  #allocation1 [shape = 'u32[144,128]{1,0:T(1,128)}', space=vmem, size = 0x12000, scoped, tag = 'internal scratch']
  %s0 = inlined_call_operand.vmem [shape: bf16[2,16,24,128], index: 0, kind: input, shape index: {}, may-alias: {0,1,2}]
  %s1 = inlined_call_operand.vmem [shape: bf16[2,16,24,128], index: 1, kind: input, shape index: {}, may-alias: {0,1,2}]
  %s2 = inlined_call_operand.vmem [shape: bf16[2,16,24,128], index: 2, kind: input, shape index: {}, may-alias: {0,1,2}]
  %s3 = inlined_call_operand.vmem [shape: bf16[3,384,128], index: 3, kind: input, shape index: {}]
  %s4 = inlined_call_operand.vmem [shape: bf16[2,16,24,128], index: 4, kind: output, shape index: {0}]
  %s5 = inlined_call_operand.vmem [shape: f32[2,1,2,128], index: 5, kind: output, shape index: {1}]
  %6 = xla_tuple %s4, %s5
  %s7 = sld [smem:[#allocation0]]
  $region57: #{residual_up_block_forward.4} parent=0
    _
  %s9 = ssub.s32 1, %s7
  %s10 = scalar_select 0, %s9, %s7
  loop: start=0, step=1, limit=4
  $region2: #{residual_up_block_forward.4} parent=0 // loop_pre_header
    _
  $region3: #{residual_up_block_forward.4} parent=0 // loop_header
    %s12 = sphi 0, %s16
    %p13 = scmp.ge.s32.totalorder %s12, 4
    %s19 = sphi 0, %s31
    %s20 = sphi 0, %s27
    %s21 = sphi 0, %s19
    %s22 = sphi 0, %s20
    %s23 = sphi 0, %s21
    %s24 = sphi 0, %s22
    %s44 = sphi 0, %s46
    %s47 = sphi 0, %s44
    %s48 = sphi 0, %s47
    %s64 = sphi 0, %s48
    %s72 = sphi 0, %s74
    %s75 = sphi 0, %s72
    %s76 = sphi 0, %s75
    %s92 = sphi 0, %s76
    %s108 = sphi 0, %s110
    %s111 = sphi 0, %s108
    %s112 = sphi 0, %s111
    %s128 = sphi 0, %s112
    %s132 = sphi 0, %s132
    %s134 = sphi 0, %s132
    %s135 = sphi 0, %s134
    %s149 = sphi 0, %s135
    %s157 = sphi 0, %s159
    %s160 = sphi 0, %s157
    %s161 = sphi 0, %s160
    %s177 = sphi 0, %s161
    %s185 = sphi 0, %s187
    %s188 = sphi 0, %s185
    %s189 = sphi 0, %s188
    %s205 = sphi 0, %s189
  $region4: #{residual_up_block_forward.4} parent=0 // loop_header_branch
    %15 = sbr.rel (%p13) target = $region8
  $region5: #{residual_up_block_forward.4} parent=0 // loop_body
    %s17 = ssub.s32 %s12, 1
    %s18 = ssub.s32 %s12, 2
    %s25 = sadd.s32 1, %s20
    %p26 = scmp.ge.s32.totalorder %s25, 1
    %s27 = scalar_select %p26, 0, %s25
    %s28 = sadd.s32 1, %s19
    %s29 = scalar_select %p26, %s28, %s19
    %p30 = scmp.ge.s32.totalorder %s29, 2
    %s31 = scalar_select %p30, 0, %s29
    %s32 = smul.u32 %s20, 16
    %s33 = ssub.s32 %s32, 1
    %p34 = scmp.gt.s32.totalorder %s33, 0
    %s35 = scalar_select %p34, %s33, 0
    %s36 = smul.u32 %s27, 16
    %s37 = ssub.s32 %s36, 1
    %p38 = scmp.gt.s32.totalorder %s37, 0
    %s39 = scalar_select %p38, %s37, 0
    %s40 = ssub.s32 %s19, %s31
    %s41 = ssub.s32 %s35, %s39
    %s42 = sor.u32 %s40, %s41
    %p43 = scmp.eq.s32.totalorder %s42, 0
    %s45 = sadd.s32 %s44, 1
    %s46 = scalar_select %p43, %s44, %s45
    %p49 = pneg %p43
    %p50 = scmp.eq.s32.totalorder %s12, 1
    %p51 = por %p49, %p50
    %p52 = scmp.ne.s32.totalorder %s44, %s47
    %p53 = scmp.eq.s32.totalorder %s12, 0
    %p54 = por %p52, %p53
    %p55 = scmp.ne.s32.totalorder %s44, %s47
    %p56 = scmp.eq.s32.totalorder %s17, 1
    %p57 = por %p55, %p56
    %p58 = scmp.ne.s32.totalorder %s47, %s48
    %p59 = scmp.eq.s32.totalorder %s17, 0
    %p60 = por %p58, %p59
    %p61 = scmp.ne.s32.totalorder %s47, %s48
    %p62 = scmp.eq.s32.totalorder %s18, 1
    %p63 = por %p61, %p62
    %p65 = scmp.ne.s32.totalorder %s48, %s64
    %p66 = scmp.eq.s32.totalorder %s18, 0
    %p67 = por %p65, %p66
    %s68 = ssub.s32 %s19, %s31
    %s69 = ssub.s32 %s20, %s27
    %s70 = sor.u32 %s68, %s69
    %p71 = scmp.eq.s32.totalorder %s70, 0
    %s73 = sadd.s32 %s72, 1
    %s74 = scalar_select %p71, %s72, %s73
    %p77 = pneg %p71
    %p78 = scmp.eq.s32.totalorder %s12, 1
    %p79 = por %p77, %p78
    %p80 = scmp.ne.s32.totalorder %s72, %s75
    %p81 = scmp.eq.s32.totalorder %s12, 0
    %p82 = por %p80, %p81
    %p83 = scmp.ne.s32.totalorder %s72, %s75
    %p84 = scmp.eq.s32.totalorder %s17, 1
    %p85 = por %p83, %p84
    %p86 = scmp.ne.s32.totalorder %s75, %s76
    %p87 = scmp.eq.s32.totalorder %s17, 0
    %p88 = por %p86, %p87
    %p89 = scmp.ne.s32.totalorder %s75, %s76
    %p90 = scmp.eq.s32.totalorder %s18, 1
    %p91 = por %p89, %p90
    %p93 = scmp.ne.s32.totalorder %s76, %s92
    %p94 = scmp.eq.s32.totalorder %s18, 0
    %p95 = por %p93, %p94
    %s96 = sadd.s32 %s20, 1
    %s97 = smul.u32 %s96, 16
    %p98 = scmp.lt.s32.totalorder %s97, 15
    %s99 = scalar_select %p98, %s97, 15
    %s100 = sadd.s32 %s27, 1
    %s101 = smul.u32 %s100, 16
    %p102 = scmp.lt.s32.totalorder %s101, 15
    %s103 = scalar_select %p102, %s101, 15
    %s104 = ssub.s32 %s19, %s31
    %s105 = ssub.s32 %s99, %s103
    %s106 = sor.u32 %s104, %s105
    %p107 = scmp.eq.s32.totalorder %s106, 0
    %s109 = sadd.s32 %s108, 1
    %s110 = scalar_select %p107, %s108, %s109
    %p113 = pneg %p107
    %p114 = scmp.eq.s32.totalorder %s12, 1
    %p115 = por %p113, %p114
    %p116 = scmp.ne.s32.totalorder %s108, %s111
    %p117 = scmp.eq.s32.totalorder %s12, 0
    %p118 = por %p116, %p117
    %p119 = scmp.ne.s32.totalorder %s108, %s111
    %p120 = scmp.eq.s32.totalorder %s17, 1
    %p121 = por %p119, %p120
    %p122 = scmp.ne.s32.totalorder %s111, %s112
    %p123 = scmp.eq.s32.totalorder %s17, 0
    %p124 = por %p122, %p123
    %p125 = scmp.ne.s32.totalorder %s111, %s112
    %p126 = scmp.eq.s32.totalorder %s18, 1
    %p127 = por %p125, %p126
    %p129 = scmp.ne.s32.totalorder %s112, %s128
    %p130 = scmp.eq.s32.totalorder %s18, 0
    %p131 = por %p129, %p130
    %s133 = sadd.s32 %s132, 1
    %p136 = scmp.eq.s32.totalorder %s12, 1
    %p137 = scmp.ne.s32.totalorder %s132, %s134
    %p138 = scmp.eq.s32.totalorder %s12, 0
    %p139 = por %p137, %p138
    %p140 = scmp.ne.s32.totalorder %s132, %s134
    %p141 = scmp.eq.s32.totalorder %s17, 1
    %p142 = por %p140, %p141
    %p143 = scmp.ne.s32.totalorder %s134, %s135
    %p144 = scmp.eq.s32.totalorder %s17, 0
    %p145 = por %p143, %p144
    %p146 = scmp.ne.s32.totalorder %s134, %s135
    %p147 = scmp.eq.s32.totalorder %s18, 1
    %p148 = por %p146, %p147
    %p150 = scmp.ne.s32.totalorder %s135, %s149
    %p151 = scmp.eq.s32.totalorder %s18, 0
    %p152 = por %p150, %p151
    %s153 = ssub.s32 %s19, %s31
    %s154 = ssub.s32 %s20, %s27
    %s155 = sor.u32 %s153, %s154
    %p156 = scmp.eq.s32.totalorder %s155, 0
    %s158 = sadd.s32 %s157, 1
    %s159 = scalar_select %p156, %s157, %s158
    %p162 = pneg %p156
    %p163 = scmp.eq.s32.totalorder %s12, 1
    %p164 = por %p162, %p163
    %p165 = scmp.ne.s32.totalorder %s157, %s160
    %p166 = scmp.eq.s32.totalorder %s12, 0
    %p167 = por %p165, %p166
    %p168 = scmp.ne.s32.totalorder %s157, %s160
    %p169 = scmp.eq.s32.totalorder %s17, 1
    %p170 = por %p168, %p169
    %p171 = scmp.ne.s32.totalorder %s160, %s161
    %p172 = scmp.eq.s32.totalorder %s17, 0
    %p173 = por %p171, %p172
    %p174 = scmp.ne.s32.totalorder %s160, %s161
    %p175 = scmp.eq.s32.totalorder %s18, 1
    %p176 = por %p174, %p175
    %p178 = scmp.ne.s32.totalorder %s161, %s177
    %p179 = scmp.eq.s32.totalorder %s18, 0
    %p180 = por %p178, %p179
    %s181 = ssub.s32 %s19, %s31
    %s182 = ssub.s32 %s20, %s27
    %s183 = sor.u32 %s181, %s182
    %p184 = scmp.eq.s32.totalorder %s183, 0
    %s186 = sadd.s32 %s185, 1
    %s187 = scalar_select %p184, %s185, %s186
    %p190 = pneg %p184
    %p191 = scmp.eq.s32.totalorder %s12, 1
    %p192 = por %p190, %p191
    %p193 = scmp.ne.s32.totalorder %s185, %s188
    %p194 = scmp.eq.s32.totalorder %s12, 0
    %p195 = por %p193, %p194
    %p196 = scmp.ne.s32.totalorder %s185, %s188
    %p197 = scmp.eq.s32.totalorder %s17, 1
    %p198 = por %p196, %p197
    %p199 = scmp.ne.s32.totalorder %s188, %s189
    %p200 = scmp.eq.s32.totalorder %s17, 0
    %p201 = por %p199, %p200
    %p202 = scmp.ne.s32.totalorder %s188, %s189
    %p203 = scmp.eq.s32.totalorder %s18, 1
    %p204 = por %p202, %p203
    %p206 = scmp.ne.s32.totalorder %s189, %s205
    %p207 = scmp.eq.s32.totalorder %s18, 0
    %p208 = por %p206, %p207
    %p209 = scmp.le.s32.totalorder 1, %s12
    %p210 = scmp.lt.s32.totalorder %s12, 3
    %p211 = pnand %p209, %p210
    %p212 = pneg %p211
    // Predicated region
    $region9: #{residual_up_block_forward.4} parent=5 // pred_check
      _
    $region10: #{residual_up_block_forward.4} parent=5 // pred_check_branch
      %214 = sbr.rel (%p211) target = $region12
    $region11: #{residual_up_block_forward.4} parent=5 // pred_region
      %s215 = ssub.s32 %s12, 1
      // Predicated region
      $region13: #{residual_up_block_forward.4} parent=11 // pred_check
        %p216 = pneg %p145
      $region14: #{residual_up_block_forward.4} parent=11 // pred_check_branch
        %218 = sbr.rel (%p216) target = $region16
      $region15: #{residual_up_block_forward.4} parent=11 // pred_region
        _
      $region16: #{residual_up_block_forward.4} parent=11 // pred_fallthru
        _
    $region12: #{residual_up_block_forward.4} parent=5 // pred_fallthru
      _
    %p219 = scmp.lt.s32.totalorder %s12, 2
    // Predicated region
    $region17: #{residual_up_block_forward.4} parent=5 // pred_check
      %p220 = pneg %p219
    $region18: #{residual_up_block_forward.4} parent=5 // pred_check_branch
      %222 = sbr.rel (%p220) target = $region20
    $region19: #{residual_up_block_forward.4} parent=5 // pred_region
      // Predicated region
      $region21: #{residual_up_block_forward.4} parent=19 // pred_check
        %p223 = pneg %p54
      $region22: #{residual_up_block_forward.4} parent=19 // pred_check_branch
        %225 = sbr.rel (%p223) target = $region24
      $region23: #{residual_up_block_forward.4} parent=19 // pred_region
        %s226 = smul.u32 %s20, 16
        %s227 = ssub.s32 %s226, 1
        %p228 = scmp.gt.s32.totalorder %s227, 0
        %s229 = scalar_select %p228, %s227, 0
        %p230 = scmp.lt.s32.totalorder %s19, 1
        %s231 = scalar_select %p230, %s19, 1
        %p232 = scmp.lt.s32.totalorder %s229, 15
        %s233 = scalar_select %p232, %s229, 15
        %s234 = smul.addr %s233, 3
        %s235 = smul.addr %s231, 48
        %s236 = sadd.s32 %s234, %s235
        %s237 = smul.addr %s236, 4
        %s238 = scalar_lea.vmem %s0, %s237
        %s239 = smul.u32 %s20, 16
        %s240 = ssub.s32 %s239, 1
        %p241 = scmp.gt.s32.totalorder %s240, 0
        %s242 = scalar_select %p241, %s240, 0
      $region24: #{residual_up_block_forward.4} parent=19 // pred_fallthru
        _
      // Predicated region
      $region25: #{residual_up_block_forward.4} parent=19 // pred_check
        %p243 = pneg %p82
      $region26: #{residual_up_block_forward.4} parent=19 // pred_check_branch
        %245 = sbr.rel (%p243) target = $region28
      $region27: #{residual_up_block_forward.4} parent=19 // pred_region
        %s246 = smul.u32 16, %s20
        %p247 = scmp.lt.s32.totalorder %s19, 1
        %s248 = scalar_select %p247, %s19, 1
        %p249 = scmp.lt.s32.totalorder %s246, 15
        %s250 = scalar_select %p249, %s246, 15
        %s251 = smul.addr %s250, 3
        %s252 = smul.addr %s248, 48
        %s253 = sadd.s32 %s251, %s252
        %s254 = smul.addr %s253, 4
        %s255 = scalar_lea.vmem %s1, %s254
        %s256 = smul.u32 16, %s20
      $region28: #{residual_up_block_forward.4} parent=19 // pred_fallthru
        _
      // Predicated region
      $region29: #{residual_up_block_forward.4} parent=19 // pred_check
        %p257 = pneg %p118
      $region30: #{residual_up_block_forward.4} parent=19 // pred_check_branch
        %259 = sbr.rel (%p257) target = $region32
      $region31: #{residual_up_block_forward.4} parent=19 // pred_region
        %s260 = sadd.s32 %s20, 1
        %s261 = smul.u32 %s260, 16
        %p262 = scmp.lt.s32.totalorder %s261, 15
        %s263 = scalar_select %p262, %s261, 15
        %p264 = scmp.lt.s32.totalorder %s19, 1
        %s265 = scalar_select %p264, %s19, 1
        %p266 = scmp.lt.s32.totalorder %s263, 15
        %s267 = scalar_select %p266, %s263, 15
        %s268 = smul.addr %s267, 3
        %s269 = smul.addr %s265, 48
        %s270 = sadd.s32 %s268, %s269
        %s271 = smul.addr %s270, 4
        %s272 = scalar_lea.vmem %s2, %s271
        %s273 = sadd.s32 %s20, 1
        %s274 = smul.u32 %s273, 16
        %p275 = scmp.lt.s32.totalorder %s274, 15
        %s276 = scalar_select %p275, %s274, 15
      $region32: #{residual_up_block_forward.4} parent=19 // pred_fallthru
        _
    $region20: #{residual_up_block_forward.4} parent=5 // pred_fallthru
      _
    %p277 = scmp.le.s32.totalorder 1, %s12
    %p278 = scmp.lt.s32.totalorder %s12, 3
    %p279 = pnand %p277, %p278
    %p280 = pneg %p279
    // Predicated region
    $region33: #{residual_up_block_forward.4} parent=5 // pred_check
      _
    $region34: #{residual_up_block_forward.4} parent=5 // pred_check_branch
      %282 = sbr.rel (%p279) target = $region36
    $region35: #{residual_up_block_forward.4} parent=5 // pred_region
      %s283 = ssub.s32 %s12, 1
      %s284 = smul.u32 %s22, 16
      %s285 = ssub.s32 %s284, 1
      %p286 = scmp.gt.s32.totalorder %s285, 0
      %s287 = scalar_select %p286, %s285, 0
      %p288 = scmp.lt.s32.totalorder %s21, 1
      %s289 = scalar_select %p288, %s21, 1
      %p290 = scmp.lt.s32.totalorder %s287, 15
      %s291 = scalar_select %p290, %s287, 15
      %s292 = smul.addr %s291, 3
      %s293 = smul.addr %s289, 48
      %s294 = sadd.s32 %s292, %s293
      %s295 = smul.addr %s294, 4
      %s296 = scalar_lea.vmem %s0, %s295
      %p297 = pneg %p60
      %p298 = pneg %p57
      %s299 = smul.u32 16, %s22
      %p300 = scmp.lt.s32.totalorder %s21, 1
      %s301 = scalar_select %p300, %s21, 1
      %p302 = scmp.lt.s32.totalorder %s299, 15
      %s303 = scalar_select %p302, %s299, 15
      %s304 = smul.addr %s303, 3
      %s305 = smul.addr %s301, 48
      %s306 = sadd.s32 %s304, %s305
      %s307 = smul.addr %s306, 4
      %s308 = scalar_lea.vmem %s1, %s307
      %p309 = pneg %p88
      %p310 = pneg %p85
      %s311 = sadd.s32 %s22, 1
      %s312 = smul.u32 %s311, 16
      %p313 = scmp.lt.s32.totalorder %s312, 15
      %s314 = scalar_select %p313, %s312, 15
      %p315 = scmp.lt.s32.totalorder %s21, 1
      %s316 = scalar_select %p315, %s21, 1
      %p317 = scmp.lt.s32.totalorder %s314, 15
      %s318 = scalar_select %p317, %s314, 15
      %s319 = smul.addr %s318, 3
      %s320 = smul.addr %s316, 48
      %s321 = sadd.s32 %s319, %s320
      %s322 = smul.addr %s321, 4
      %s323 = scalar_lea.vmem %s2, %s322
      %p324 = pneg %p124
      %p325 = pneg %p121
      %p326 = pneg %p145
      %p327 = pneg %p142
      %p328 = pneg %p173
      %p329 = pneg %p170
      %s330 = smul.u32 16, %s22
      %p331 = scmp.lt.s32.totalorder %s21, 1
      %s332 = scalar_select %p331, %s21, 1
      %p333 = scmp.lt.s32.totalorder %s330, 15
      %s334 = scalar_select %p333, %s330, 15
      %s335 = smul.addr %s334, 3
      %s336 = smul.addr %s332, 48
      %s337 = sadd.s32 %s335, %s336
      %s338 = smul.addr %s337, 4
      %s339 = scalar_lea.vmem %s4, %s338
      %p340 = pneg %p201
      %p341 = pneg %p198
      %p342 = scmp.lt.s32.totalorder %s21, 1
      %s343 = scalar_select %p342, %s21, 1
      %p344 = scmp.lt.s32.totalorder %s22, 0
      %s345 = scalar_select %p344, %s22, 0
      %s346 = sadd.s32 %s345, %s343
      %s347 = smul.addr %s346, 2
      %s348 = scalar_lea.vmem %s5, %s347
      %s349 = smul.u32 %s22, 16
      %s350 = ssub.s32 %s349, 1
      %p351 = scmp.gt.s32.totalorder %s350, 0
      %s352 = scalar_select %p351, %s350, 0
      %p353 = scmp.lt.s32.totalorder %s21, 1
      %s354 = scalar_select %p353, %s21, 1
      %p355 = scmp.lt.s32.totalorder %s352, 15
      %s356 = scalar_select %p355, %s352, 15
      %s357 = smul.addr %s356, 3
      %s358 = smul.addr %s354, 48
      %s359 = sadd.s32 %s357, %s358
      %s360 = smul.addr %s359, 4
      %s361 = scalar_lea.vmem %s0, %s360
      %s362 = smul.u32 %s22, 16
      %s363 = ssub.s32 %s362, 1
      %p364 = scmp.gt.s32.totalorder %s363, 0
      %s365 = scalar_select %p364, %s363, 0
      %s366 = smul.u32 16, %s22
      %p367 = scmp.lt.s32.totalorder %s21, 1
      %s368 = scalar_select %p367, %s21, 1
      %p369 = scmp.lt.s32.totalorder %s366, 15
      %s370 = scalar_select %p369, %s366, 15
      %s371 = smul.addr %s370, 3
      %s372 = smul.addr %s368, 48
      %s373 = sadd.s32 %s371, %s372
      %s374 = smul.addr %s373, 4
      %s375 = scalar_lea.vmem %s1, %s374
      %s376 = smul.u32 16, %s22
      %s377 = sadd.s32 %s22, 1
      %s378 = smul.u32 %s377, 16
      %p379 = scmp.lt.s32.totalorder %s378, 15
      %s380 = scalar_select %p379, %s378, 15
      %p381 = scmp.lt.s32.totalorder %s21, 1
      %s382 = scalar_select %p381, %s21, 1
      %p383 = scmp.lt.s32.totalorder %s380, 15
      %s384 = scalar_select %p383, %s380, 15
      %s385 = smul.addr %s384, 3
      %s386 = smul.addr %s382, 48
      %s387 = sadd.s32 %s385, %s386
      %s388 = smul.addr %s387, 4
      %s389 = scalar_lea.vmem %s2, %s388
      %s390 = sadd.s32 %s22, 1
      %s391 = smul.u32 %s390, 16
      %p392 = scmp.lt.s32.totalorder %s391, 15
      %s393 = scalar_select %p392, %s391, 15
      %s394 = smul.u32 16, %s22
      %p395 = scmp.lt.s32.totalorder %s21, 1
      %s396 = scalar_select %p395, %s21, 1
      %p397 = scmp.lt.s32.totalorder %s394, 15
      %s398 = scalar_select %p397, %s394, 15
      %s399 = smul.addr %s398, 3
      %s400 = smul.addr %s396, 48
      %s401 = sadd.s32 %s399, %s400
      %s402 = smul.addr %s401, 4
      %s403 = scalar_lea.vmem %s4, %s402
      %s404 = smul.u32 16, %s22
      %p405 = scmp.lt.s32.totalorder %s21, 1
      %s406 = scalar_select %p405, %s21, 1
      %p407 = scmp.lt.s32.totalorder %s22, 0
      %s408 = scalar_select %p407, %s22, 0
      %s409 = sadd.s32 %s408, %s406
      %s410 = smul.addr %s409, 2
      %s411 = scalar_lea.vmem %s5, %s410
      %v413 = vlaneseq
      %v414 = vshrl.u32 %v413, 7
      %v415 = vadd.s32 %v414, 8
      %v416 = vadd.s32 %v414, 16
      %vm417 = vcmp.ge.s32.totalorder %v414, 1
      %vm418 = vcmp.ge.s32.totalorder %v415, 1
      %vm419 = vcmp.ge.s32.totalorder %v416, 1
      %vm420 = vcmp.le.s32.totalorder %v414, 16
      %vm421 = vcmp.le.s32.totalorder %v415, 16
      %vm422 = vcmp.le.s32.totalorder %v416, 16
      %vm423 = vmand %vm417, %vm420
      %vm424 = vmand %vm418, %vm421
      %vm425 = vmand %vm419, %vm422
      %v426 = vsel %vm423, 1, 0
      %v427 = vsel %vm424, 1, 0
      %v428 = vsel %vm425, 1, 0
      %v429 = vcvt.s32.f32 %v426
      %v430 = vcvt.s32.f32 %v427
      %v431 = vcvt.s32.f32 %v428
      %v432 = vld [vmem:[%s361] sm:$0xf]
      %v433 = vld [vmem:[%s361 + $0x4] sm:$0xf]
      %v434 = vld [vmem:[%s361 + $0x8] sm:$0xf]
      %v435 = vld [vmem:[%s375] sm:$0xf]
      %v436 = vld [vmem:[%s375 + $0x4] sm:$0xf]
      %v437 = vld [vmem:[%s375 + $0x8] sm:$0xf]
      %v438 = vld [vmem:[%s375 + $0xc] sm:$0xf]
      %v439 = vld [vmem:[%s375 + $0x10] sm:$0xf]
      %v440 = vld [vmem:[%s375 + $0x14] sm:$0xf]
      %v441 = vld [vmem:[%s375 + $0x18] sm:$0xf]
      %v442 = vld [vmem:[%s375 + $0x1c] sm:$0xf]
      %v443 = vld [vmem:[%s375 + $0x20] sm:$0xf]
      %v444 = vld [vmem:[%s375 + $0x24] sm:$0xf]
      %v445 = vld [vmem:[%s375 + $0x28] sm:$0xf]
      %v446 = vld [vmem:[%s375 + $0x2c] sm:$0xf]
      %v447 = vld [vmem:[%s375 + $0x30] sm:$0xf]
      %v448 = vld [vmem:[%s375 + $0x34] sm:$0xf]
      %v449 = vld [vmem:[%s375 + $0x38] sm:$0xf]
      %v450 = vld [vmem:[%s375 + $0x3c] sm:$0xf]
      %v451 = vld [vmem:[%s375 + $0x40] sm:$0xf]
      %v452 = vld [vmem:[%s375 + $0x44] sm:$0xf]
      %v453 = vld [vmem:[%s375 + $0x48] sm:$0xf]
      %v454 = vld [vmem:[%s375 + $0x4c] sm:$0xf]
      %v455 = vld [vmem:[%s375 + $0x50] sm:$0xf]
      %v456 = vld [vmem:[%s375 + $0x54] sm:$0xf]
      %v457 = vld [vmem:[%s375 + $0x58] sm:$0xf]
      %v458 = vld [vmem:[%s375 + $0x5c] sm:$0xf]
      %v459 = vld [vmem:[%s375 + $0x60] sm:$0xf]
      %v460 = vld [vmem:[%s375 + $0x64] sm:$0xf]
      %v461 = vld [vmem:[%s375 + $0x68] sm:$0xf]
      %v462 = vld [vmem:[%s375 + $0x6c] sm:$0xf]
      %v463 = vld [vmem:[%s375 + $0x70] sm:$0xf]
      %v464 = vld [vmem:[%s375 + $0x74] sm:$0xf]
      %v465 = vld [vmem:[%s375 + $0x78] sm:$0xf]
      %v466 = vld [vmem:[%s375 + $0x7c] sm:$0xf]
      %v467 = vld [vmem:[%s375 + $0x80] sm:$0xf]
      %v468 = vld [vmem:[%s375 + $0x84] sm:$0xf]
      %v469 = vld [vmem:[%s375 + $0x88] sm:$0xf]
      %v470 = vld [vmem:[%s375 + $0x8c] sm:$0xf]
      %v471 = vld [vmem:[%s375 + $0x90] sm:$0xf]
      %v472 = vld [vmem:[%s375 + $0x94] sm:$0xf]
      %v473 = vld [vmem:[%s375 + $0x98] sm:$0xf]
      %v474 = vld [vmem:[%s375 + $0x9c] sm:$0xf]
      %v475 = vld [vmem:[%s375 + $0xa0] sm:$0xf]
      %v476 = vld [vmem:[%s375 + $0xa4] sm:$0xf]
      %v477 = vld [vmem:[%s375 + $0xa8] sm:$0xf]
      %v478 = vld [vmem:[%s375 + $0xac] sm:$0xf]
      %v479 = vld [vmem:[%s375 + $0xb0] sm:$0xf]
      %v480 = vld [vmem:[%s375 + $0xb4] sm:$0xf]
      %v481 = vld [vmem:[%s375 + $0xb8] sm:$0xf]
      %v482 = vld [vmem:[%s375 + $0xbc] sm:$0xf]
      %v483 = vld [vmem:[%s389] sm:$0xf]
      %v484 = vld [vmem:[%s389 + $0x4] sm:$0xf]
      %v485 = vld [vmem:[%s389 + $0x8] sm:$0xf]
      %p486 = scmp.gt.s32.totalorder %s22, 0
      %s487 = scalar_select %p486, 1, 0
      %v488 = vstv %s487
      %vm489 = vcmp.eq.s32.totalorder %v488, 1
      %v490 = vsel %vm489, %v432, 0
      %v491 = vsel %vm489, %v433, 0
      %v492 = vsel %vm489, %v434, 0
      %p493 = scmp.lt.s32.totalorder %s22, 0
      %s494 = scalar_select %p493, 1, 0
      %v495 = vstv %s494
      %vm496 = vcmp.eq.s32.totalorder %v495, 1
      %v497 = vsel %vm496, %v483, 0
      %v498 = vsel %vm496, %v484, 0
      %v499 = vsel %vm496, %v485, 0
      %v503 = vunpack.c.l.b16 %v490
      %v504 = vunpack.c.l.b16 %v491
      %v505 = vunpack.c.l.b16 %v492
      %v506 = vpack.c.b16 %v503, %v503
      %v507 = vpack.c.b16 %v505, %v504
      %v556 = vunpack.c.l.b16 %v435
      %v557 = vunpack.c.l.b16 %v436
      %v558 = vunpack.c.l.b16 %v437
      %v559 = vunpack.c.l.b16 %v438
      %v560 = vunpack.c.l.b16 %v439
      %v561 = vunpack.c.l.b16 %v440
      %v562 = vunpack.c.l.b16 %v441
      %v563 = vunpack.c.l.b16 %v442
      %v564 = vunpack.c.l.b16 %v443
      %v565 = vunpack.c.l.b16 %v444
      %v566 = vunpack.c.l.b16 %v445
      %v567 = vunpack.c.l.b16 %v446
      %v568 = vunpack.c.l.b16 %v447
      %v569 = vunpack.c.l.b16 %v448
      %v570 = vunpack.c.l.b16 %v449
      %v571 = vunpack.c.l.b16 %v450
      %v572 = vunpack.c.l.b16 %v451
      %v573 = vunpack.c.l.b16 %v452
      %v574 = vunpack.c.l.b16 %v453
      %v575 = vunpack.c.l.b16 %v454
      %v576 = vunpack.c.l.b16 %v455
      %v577 = vunpack.c.l.b16 %v456
      %v578 = vunpack.c.l.b16 %v457
      %v579 = vunpack.c.l.b16 %v458
      %v580 = vunpack.c.l.b16 %v459
      %v581 = vunpack.c.l.b16 %v460
      %v582 = vunpack.c.l.b16 %v461
      %v583 = vunpack.c.l.b16 %v462
      %v584 = vunpack.c.l.b16 %v463
      %v585 = vunpack.c.l.b16 %v464
      %v586 = vunpack.c.l.b16 %v465
      %v587 = vunpack.c.l.b16 %v466
      %v588 = vunpack.c.l.b16 %v467
      %v589 = vunpack.c.l.b16 %v468
      %v590 = vunpack.c.l.b16 %v469
      %v591 = vunpack.c.l.b16 %v470
      %v592 = vunpack.c.l.b16 %v471
      %v593 = vunpack.c.l.b16 %v472
      %v594 = vunpack.c.l.b16 %v473
      %v595 = vunpack.c.l.b16 %v474
      %v596 = vunpack.c.l.b16 %v475
      %v597 = vunpack.c.l.b16 %v476
      %v598 = vunpack.c.l.b16 %v477
      %v599 = vunpack.c.l.b16 %v478
      %v600 = vunpack.c.l.b16 %v479
      %v601 = vunpack.c.l.b16 %v480
      %v602 = vunpack.c.l.b16 %v481
      %v603 = vunpack.c.l.b16 %v482
      %v604 = vpack.c.b16 %v557, %v556
      %v605 = vpack.c.b16 %v559, %v558
      %v606 = vpack.c.b16 %v561, %v560
      %v607 = vpack.c.b16 %v563, %v562
      %v608 = vpack.c.b16 %v565, %v564
      %v609 = vpack.c.b16 %v567, %v566
      %v610 = vpack.c.b16 %v569, %v568
      %v611 = vpack.c.b16 %v571, %v570
      %v612 = vpack.c.b16 %v573, %v572
      %v613 = vpack.c.b16 %v575, %v574
      %v614 = vpack.c.b16 %v577, %v576
      %v615 = vpack.c.b16 %v579, %v578
      %v616 = vpack.c.b16 %v581, %v580
      %v617 = vpack.c.b16 %v583, %v582
      %v618 = vpack.c.b16 %v585, %v584
      %v619 = vpack.c.b16 %v587, %v586
      %v620 = vpack.c.b16 %v589, %v588
      %v621 = vpack.c.b16 %v591, %v590
      %v622 = vpack.c.b16 %v593, %v592
      %v623 = vpack.c.b16 %v595, %v594
      %v624 = vpack.c.b16 %v597, %v596
      %v625 = vpack.c.b16 %v599, %v598
      %v626 = vpack.c.b16 %v601, %v600
      %v627 = vpack.c.b16 %v603, %v602
      %v631 = vunpack.c.l.b16 %v497
      %v632 = vunpack.c.l.b16 %v498
      %v633 = vunpack.c.l.b16 %v499
      %v634 = vpack.c.b16 %v632, %v631
      %v635 = vpack.c.b16 %v633, %v633
      %vm636 = vcmask 1043456
      %v639 = vsel %vm636, 0, %v506
      %v641 = vsel %vm636, %v635, 0
      %vm642 = vsmask.f32 7424
      %v643 = vshrl.u32 %v639, 16
      %v645 = vshll.u32 %v639, 16
      %v647 = vrot.slane %v645, 1
      %v648 = vor.u32 %v643, %v647
      %v650 = vshll.u32 %v507, 16
      %v652 = vrot.slane %v650, 1
      %v653 = vsel %vm642, %v648, %v652
      %v654 = vshrl.u32 %v507, 16
      %v656 = vor.u32 %v654, %v652
      %v658 = vshll.u32 %v604, 16
      %v660 = vrot.slane %v658, 1
      %v661 = vsel %vm642, %v656, %v660
      %v662 = vshrl.u32 %v604, 16
      %v664 = vor.u32 %v662, %v660
      %v666 = vshll.u32 %v605, 16
      %v668 = vrot.slane %v666, 1
      %v669 = vsel %vm642, %v664, %v668
      %v670 = vshrl.u32 %v605, 16
      %v672 = vor.u32 %v670, %v668
      %v674 = vshll.u32 %v606, 16
      %v676 = vrot.slane %v674, 1
      %v677 = vsel %vm642, %v672, %v676
      %v678 = vshrl.u32 %v606, 16
      %v680 = vor.u32 %v678, %v676
      %v682 = vshll.u32 %v607, 16
      %v684 = vrot.slane %v682, 1
      %v685 = vsel %vm642, %v680, %v684
      %v686 = vshrl.u32 %v607, 16
      %v688 = vor.u32 %v686, %v684
      %v690 = vshll.u32 %v608, 16
      %v692 = vrot.slane %v690, 1
      %v693 = vsel %vm642, %v688, %v692
      %v694 = vshrl.u32 %v608, 16
      %v696 = vor.u32 %v694, %v692
      %v698 = vshll.u32 %v609, 16
      %v700 = vrot.slane %v698, 1
      %v701 = vsel %vm642, %v696, %v700
      %v702 = vshrl.u32 %v609, 16
      %v704 = vor.u32 %v702, %v700
      %v706 = vshll.u32 %v610, 16
      %v708 = vrot.slane %v706, 1
      %v709 = vsel %vm642, %v704, %v708
      %v710 = vshrl.u32 %v610, 16
      %v712 = vor.u32 %v710, %v708
      %v714 = vshll.u32 %v611, 16
      %v716 = vrot.slane %v714, 1
      %v717 = vsel %vm642, %v712, %v716
      %v718 = vshrl.u32 %v611, 16
      %v720 = vor.u32 %v718, %v716
      %v722 = vshll.u32 %v612, 16
      %v724 = vrot.slane %v722, 1
      %v725 = vsel %vm642, %v720, %v724
      %v726 = vshrl.u32 %v612, 16
      %v728 = vor.u32 %v726, %v724
      %v730 = vshll.u32 %v613, 16
      %v732 = vrot.slane %v730, 1
      %v733 = vsel %vm642, %v728, %v732
      %v734 = vshrl.u32 %v613, 16
      %v736 = vor.u32 %v734, %v732
      %v738 = vshll.u32 %v614, 16
      %v740 = vrot.slane %v738, 1
      %v741 = vsel %vm642, %v736, %v740
      %v742 = vshrl.u32 %v614, 16
      %v744 = vor.u32 %v742, %v740
      %v746 = vshll.u32 %v615, 16
      %v748 = vrot.slane %v746, 1
      %v749 = vsel %vm642, %v744, %v748
      %v750 = vshrl.u32 %v615, 16
      %v752 = vor.u32 %v750, %v748
      %v754 = vshll.u32 %v616, 16
      %v756 = vrot.slane %v754, 1
      %v757 = vsel %vm642, %v752, %v756
      %v758 = vshrl.u32 %v616, 16
      %v760 = vor.u32 %v758, %v756
      %v762 = vshll.u32 %v617, 16
      %v764 = vrot.slane %v762, 1
      %v765 = vsel %vm642, %v760, %v764
      %v766 = vshrl.u32 %v617, 16
      %v768 = vor.u32 %v766, %v764
      %v770 = vshll.u32 %v618, 16
      %v772 = vrot.slane %v770, 1
      %v773 = vsel %vm642, %v768, %v772
      %v774 = vshrl.u32 %v618, 16
      %v776 = vor.u32 %v774, %v772
      %v778 = vshll.u32 %v619, 16
      %v780 = vrot.slane %v778, 1
      %v781 = vsel %vm642, %v776, %v780
      %v782 = vshrl.u32 %v619, 16
      %v784 = vor.u32 %v782, %v780
      %v786 = vshll.u32 %v620, 16
      %v788 = vrot.slane %v786, 1
      %v789 = vsel %vm642, %v784, %v788
      %v790 = vshrl.u32 %v620, 16
      %v792 = vor.u32 %v790, %v788
      %v794 = vshll.u32 %v621, 16
      %v796 = vrot.slane %v794, 1
      %v797 = vsel %vm642, %v792, %v796
      %v798 = vshrl.u32 %v621, 16
      %v800 = vor.u32 %v798, %v796
      %v802 = vshll.u32 %v622, 16
      %v804 = vrot.slane %v802, 1
      %v805 = vsel %vm642, %v800, %v804
      %v806 = vshrl.u32 %v622, 16
      %v808 = vor.u32 %v806, %v804
      %v810 = vshll.u32 %v623, 16
      %v812 = vrot.slane %v810, 1
      %v813 = vsel %vm642, %v808, %v812
      %v814 = vshrl.u32 %v623, 16
      %v816 = vor.u32 %v814, %v812
      %v818 = vshll.u32 %v624, 16
      %v820 = vrot.slane %v818, 1
      %v821 = vsel %vm642, %v816, %v820
      %v822 = vshrl.u32 %v624, 16
      %v824 = vor.u32 %v822, %v820
      %v826 = vshll.u32 %v625, 16
      %v828 = vrot.slane %v826, 1
      %v829 = vsel %vm642, %v824, %v828
      %v830 = vshrl.u32 %v625, 16
      %v832 = vor.u32 %v830, %v828
      %v834 = vshll.u32 %v626, 16
      %v836 = vrot.slane %v834, 1
      %v837 = vsel %vm642, %v832, %v836
      %v838 = vshrl.u32 %v626, 16
      %v840 = vor.u32 %v838, %v836
      %v842 = vshll.u32 %v627, 16
      %v844 = vrot.slane %v842, 1
      %v845 = vsel %vm642, %v840, %v844
      %v846 = vshrl.u32 %v627, 16
      %v848 = vor.u32 %v846, %v844
      %v850 = vshll.u32 %v634, 16
      %v852 = vrot.slane %v850, 1
      %v853 = vsel %vm642, %v848, %v852
      %v854 = vshrl.u32 %v634, 16
      %v856 = vor.u32 %v854, %v852
      %v857 = vshll.u32 %v641, 16
      %v859 = vrot.slane %v857, 1
      %v860 = vsel %vm642, %v856, %v859
      %v861 = vshrl.u32 %v641, 16
      %v863 = vor.u32 %v861, %v859
      %vm866 = vcmask 1046528
      %v867 = vrot.slane %v639, 1
      %v868 = vrot.slane %v507, 1
      %v869 = vsel %vm866, %v867, %v868
      %v870 = vrot.slane %v604, 1
      %v871 = vsel %vm866, %v868, %v870
      %v872 = vrot.slane %v605, 1
      %v873 = vsel %vm866, %v870, %v872
      %v874 = vrot.slane %v606, 1
      %v875 = vsel %vm866, %v872, %v874
      %v876 = vrot.slane %v607, 1
      %v877 = vsel %vm866, %v874, %v876
      %v878 = vrot.slane %v608, 1
      %v879 = vsel %vm866, %v876, %v878
      %v880 = vrot.slane %v609, 1
      %v881 = vsel %vm866, %v878, %v880
      %v882 = vrot.slane %v610, 1
      %v883 = vsel %vm866, %v880, %v882
      %v884 = vrot.slane %v611, 1
      %v885 = vsel %vm866, %v882, %v884
      %v886 = vrot.slane %v612, 1
      %v887 = vsel %vm866, %v884, %v886
      %v888 = vrot.slane %v613, 1
      %v889 = vsel %vm866, %v886, %v888
      %v890 = vrot.slane %v614, 1
      %v891 = vsel %vm866, %v888, %v890
      %v892 = vrot.slane %v615, 1
      %v893 = vsel %vm866, %v890, %v892
      %v894 = vrot.slane %v616, 1
      %v895 = vsel %vm866, %v892, %v894
      %v896 = vrot.slane %v617, 1
      %v897 = vsel %vm866, %v894, %v896
      %v898 = vrot.slane %v618, 1
      %v899 = vsel %vm866, %v896, %v898
      %v900 = vrot.slane %v619, 1
      %v901 = vsel %vm866, %v898, %v900
      %v902 = vrot.slane %v620, 1
      %v903 = vsel %vm866, %v900, %v902
      %v904 = vrot.slane %v621, 1
      %v905 = vsel %vm866, %v902, %v904
      %v906 = vrot.slane %v622, 1
      %v907 = vsel %vm866, %v904, %v906
      %v908 = vrot.slane %v623, 1
      %v909 = vsel %vm866, %v906, %v908
      %v910 = vrot.slane %v624, 1
      %v911 = vsel %vm866, %v908, %v910
      %v912 = vrot.slane %v625, 1
      %v913 = vsel %vm866, %v910, %v912
      %v914 = vrot.slane %v626, 1
      %v915 = vsel %vm866, %v912, %v914
      %v916 = vrot.slane %v627, 1
      %v917 = vsel %vm866, %v914, %v916
      %v918 = vrot.slane %v634, 1
      %v919 = vsel %vm866, %v916, %v918
      %v920 = vrot.slane %v641, 1
      %v921 = vsel %vm866, %v918, %v920
      %v922 = vld [vmem:[%s3] sm:$0xf]
      %v923 = vld [vmem:[%s3 + $0x4] sm:$0xf]
      %v924 = vld [vmem:[%s3 + $0x8] sm:$0xf]
      %v925 = vld [vmem:[%s3 + $0xc] sm:$0xf]
      %v926 = vld [vmem:[%s3 + $0x10] sm:$0xf]
      %v927 = vld [vmem:[%s3 + $0x14] sm:$0xf]
      %v928 = vld [vmem:[%s3 + $0x18] sm:$0xf]
      %v929 = vld [vmem:[%s3 + $0x1c] sm:$0xf]
      %v930 = vld [vmem:[%s3 + $0x20] sm:$0xf]
      %v931 = vld [vmem:[%s3 + $0x24] sm:$0xf]
      %v932 = vld [vmem:[%s3 + $0x28] sm:$0xf]
      %v933 = vld [vmem:[%s3 + $0x2c] sm:$0xf]
      %v934 = vld [vmem:[%s3 + $0x30] sm:$0xf]
      %v935 = vld [vmem:[%s3 + $0x34] sm:$0xf]
      %v936 = vld [vmem:[%s3 + $0x38] sm:$0xf]
      %v937 = vld [vmem:[%s3 + $0x3c] sm:$0xf]
      %v938 = vld [vmem:[%s3 + $0x40] sm:$0xf]
      %v939 = vld [vmem:[%s3 + $0x44] sm:$0xf]
      %v940 = vld [vmem:[%s3 + $0x48] sm:$0xf]
      %v941 = vld [vmem:[%s3 + $0x4c] sm:$0xf]
      %v942 = vld [vmem:[%s3 + $0x50] sm:$0xf]
      %v943 = vld [vmem:[%s3 + $0x54] sm:$0xf]
      %v944 = vld [vmem:[%s3 + $0x58] sm:$0xf]
      %v945 = vld [vmem:[%s3 + $0x5c] sm:$0xf]
      %v946 = vld [vmem:[%s3 + $0x60] sm:$0xf]
      %v947 = vld [vmem:[%s3 + $0x64] sm:$0xf]
      %v948 = vld [vmem:[%s3 + $0x68] sm:$0xf]
      %v949 = vld [vmem:[%s3 + $0x6c] sm:$0xf]
      %v950 = vld [vmem:[%s3 + $0x70] sm:$0xf]
      %v951 = vld [vmem:[%s3 + $0x74] sm:$0xf]
      %v952 = vld [vmem:[%s3 + $0x78] sm:$0xf]
      %v953 = vld [vmem:[%s3 + $0x7c] sm:$0xf]
      %v954 = vld [vmem:[%s3 + $0x80] sm:$0xf]
      %v955 = vld [vmem:[%s3 + $0x84] sm:$0xf]
      %v956 = vld [vmem:[%s3 + $0x88] sm:$0xf]
      %v957 = vld [vmem:[%s3 + $0x8c] sm:$0xf]
      %v958 = vld [vmem:[%s3 + $0x90] sm:$0xf]
      %v959 = vld [vmem:[%s3 + $0x94] sm:$0xf]
      %v960 = vld [vmem:[%s3 + $0x98] sm:$0xf]
      %v961 = vld [vmem:[%s3 + $0x9c] sm:$0xf]
      %v962 = vld [vmem:[%s3 + $0xa0] sm:$0xf]
      %v963 = vld [vmem:[%s3 + $0xa4] sm:$0xf]
      %v964 = vld [vmem:[%s3 + $0xa8] sm:$0xf]
      %v965 = vld [vmem:[%s3 + $0xac] sm:$0xf]
      %v966 = vld [vmem:[%s3 + $0xb0] sm:$0xf]
      %v967 = vld [vmem:[%s3 + $0xb4] sm:$0xf]
      %v968 = vld [vmem:[%s3 + $0xb8] sm:$0xf]
      %v969 = vld [vmem:[%s3 + $0xbc] sm:$0xf]
      %s970 = scalar_lea.vmem %s3, 192
      %v971 = vld [vmem:[%s970] sm:$0xf]
      %v972 = vld [vmem:[%s970 + $0x4] sm:$0xf]
      %v973 = vld [vmem:[%s970 + $0x8] sm:$0xf]
      %v974 = vld [vmem:[%s970 + $0xc] sm:$0xf]
      %v975 = vld [vmem:[%s970 + $0x10] sm:$0xf]
      %v976 = vld [vmem:[%s970 + $0x14] sm:$0xf]
      %v977 = vld [vmem:[%s970 + $0x18] sm:$0xf]
      %v978 = vld [vmem:[%s970 + $0x1c] sm:$0xf]
      %v979 = vld [vmem:[%s970 + $0x20] sm:$0xf]
      %v980 = vld [vmem:[%s970 + $0x24] sm:$0xf]
      %v981 = vld [vmem:[%s970 + $0x28] sm:$0xf]
      %v982 = vld [vmem:[%s970 + $0x2c] sm:$0xf]
      %v983 = vld [vmem:[%s970 + $0x30] sm:$0xf]
      %v984 = vld [vmem:[%s970 + $0x34] sm:$0xf]
      %v985 = vld [vmem:[%s970 + $0x38] sm:$0xf]
      %v986 = vld [vmem:[%s970 + $0x3c] sm:$0xf]
      %v987 = vld [vmem:[%s970 + $0x40] sm:$0xf]
      %v988 = vld [vmem:[%s970 + $0x44] sm:$0xf]
      %v989 = vld [vmem:[%s970 + $0x48] sm:$0xf]
      %v990 = vld [vmem:[%s970 + $0x4c] sm:$0xf]
      %v991 = vld [vmem:[%s970 + $0x50] sm:$0xf]
      %v992 = vld [vmem:[%s970 + $0x54] sm:$0xf]
      %v993 = vld [vmem:[%s970 + $0x58] sm:$0xf]
      %v994 = vld [vmem:[%s970 + $0x5c] sm:$0xf]
      %v995 = vld [vmem:[%s970 + $0x60] sm:$0xf]
      %v996 = vld [vmem:[%s970 + $0x64] sm:$0xf]
      %v997 = vld [vmem:[%s970 + $0x68] sm:$0xf]
      %v998 = vld [vmem:[%s970 + $0x6c] sm:$0xf]
      %v999 = vld [vmem:[%s970 + $0x70] sm:$0xf]
      %v1000 = vld [vmem:[%s970 + $0x74] sm:$0xf]
      %v1001 = vld [vmem:[%s970 + $0x78] sm:$0xf]
      %v1002 = vld [vmem:[%s970 + $0x7c] sm:$0xf]
      %v1003 = vld [vmem:[%s970 + $0x80] sm:$0xf]
      %v1004 = vld [vmem:[%s970 + $0x84] sm:$0xf]
      %v1005 = vld [vmem:[%s970 + $0x88] sm:$0xf]
      %v1006 = vld [vmem:[%s970 + $0x8c] sm:$0xf]
      %v1007 = vld [vmem:[%s970 + $0x90] sm:$0xf]
      %v1008 = vld [vmem:[%s970 + $0x94] sm:$0xf]
      %v1009 = vld [vmem:[%s970 + $0x98] sm:$0xf]
      %v1010 = vld [vmem:[%s970 + $0x9c] sm:$0xf]
      %v1011 = vld [vmem:[%s970 + $0xa0] sm:$0xf]
      %v1012 = vld [vmem:[%s970 + $0xa4] sm:$0xf]
      %v1013 = vld [vmem:[%s970 + $0xa8] sm:$0xf]
      %v1014 = vld [vmem:[%s970 + $0xac] sm:$0xf]
      %v1015 = vld [vmem:[%s970 + $0xb0] sm:$0xf]
      %v1016 = vld [vmem:[%s970 + $0xb4] sm:$0xf]
      %v1017 = vld [vmem:[%s970 + $0xb8] sm:$0xf]
      %v1018 = vld [vmem:[%s970 + $0xbc] sm:$0xf]
      %vm1019 = vsmask.f32 256
      %v1020 = vrot.slane %v654, 7
      %v1021 = vrot.slane %v662, 7
      %v1022 = vor.u32 %v1021, %v658
      %v1023 = vsel %vm1019, %v1020, %v1022
      %v1025 = vshrl.u32 %v661, 16
      %v1027 = vrot.slane %v1025, 7
      %v1029 = vshrl.u32 %v669, 16
      %v1031 = vrot.slane %v1029, 7
      %v1032 = vshll.u32 %v669, 16
      %v1034 = vor.u32 %v1031, %v1032
      %v1035 = vsel %vm1019, %v1027, %v1034
      %v1037 = vshrl.u32 %v871, 16
      %v1039 = vrot.slane %v1037, 7
      %v1041 = vshrl.u32 %v873, 16
      %v1043 = vrot.slane %v1041, 7
      %v1044 = vshll.u32 %v873, 16
      %v1046 = vor.u32 %v1043, %v1044
      %v1047 = vsel %vm1019, %v1039, %v1046
      %v1048 = vrot.slane %v670, 7
      %v1049 = vor.u32 %v1048, %v666
      %v1050 = vsel %vm1019, %v1021, %v1049
      %v1052 = vshrl.u32 %v677, 16
      %v1054 = vrot.slane %v1052, 7
      %v1055 = vshll.u32 %v677, 16
      %v1057 = vor.u32 %v1054, %v1055
      %v1058 = vsel %vm1019, %v1031, %v1057
      %v1060 = vshrl.u32 %v875, 16
      %v1062 = vrot.slane %v1060, 7
      %v1063 = vshll.u32 %v875, 16
      %v1065 = vor.u32 %v1062, %v1063
      %v1066 = vsel %vm1019, %v1043, %v1065
      %v1067 = vrot.slane %v678, 7
      %v1068 = vor.u32 %v1067, %v674
      %v1069 = vsel %vm1019, %v1048, %v1068
      %v1071 = vshrl.u32 %v685, 16
      %v1073 = vrot.slane %v1071, 7
      %v1074 = vshll.u32 %v685, 16
      %v1076 = vor.u32 %v1073, %v1074
      %v1077 = vsel %vm1019, %v1054, %v1076
      %v1079 = vshrl.u32 %v877, 16
      %v1081 = vrot.slane %v1079, 7
      %v1082 = vshll.u32 %v877, 16
      %v1084 = vor.u32 %v1081, %v1082
      %v1085 = vsel %vm1019, %v1062, %v1084
      %v1086 = vrot.slane %v686, 7
      %v1087 = vor.u32 %v1086, %v682
      %v1088 = vsel %vm1019, %v1067, %v1087
      %v1090 = vshrl.u32 %v693, 16
      %v1092 = vrot.slane %v1090, 7
      %v1093 = vshll.u32 %v693, 16
      %v1095 = vor.u32 %v1092, %v1093
      %v1096 = vsel %vm1019, %v1073, %v1095
      %v1098 = vshrl.u32 %v879, 16
      %v1100 = vrot.slane %v1098, 7
      %v1101 = vshll.u32 %v879, 16
      %v1103 = vor.u32 %v1100, %v1101
      %v1104 = vsel %vm1019, %v1081, %v1103
      %v1105 = vrot.slane %v694, 7
      %v1106 = vor.u32 %v1105, %v690
      %v1107 = vsel %vm1019, %v1086, %v1106
      %v1109 = vshrl.u32 %v701, 16
      %v1111 = vrot.slane %v1109, 7
      %v1112 = vshll.u32 %v701, 16
      %v1114 = vor.u32 %v1111, %v1112
      %v1115 = vsel %vm1019, %v1092, %v1114
      %v1117 = vshrl.u32 %v881, 16
      %v1119 = vrot.slane %v1117, 7
      %v1120 = vshll.u32 %v881, 16
      %v1122 = vor.u32 %v1119, %v1120
      %v1123 = vsel %vm1019, %v1100, %v1122
      %v1124 = vrot.slane %v702, 7
      %v1125 = vor.u32 %v1124, %v698
      %v1126 = vsel %vm1019, %v1105, %v1125
      %v1128 = vshrl.u32 %v709, 16
      %v1130 = vrot.slane %v1128, 7
      %v1131 = vshll.u32 %v709, 16
      %v1133 = vor.u32 %v1130, %v1131
      %v1134 = vsel %vm1019, %v1111, %v1133
      %v1136 = vshrl.u32 %v883, 16
      %v1138 = vrot.slane %v1136, 7
      %v1139 = vshll.u32 %v883, 16
      %v1141 = vor.u32 %v1138, %v1139
      %v1142 = vsel %vm1019, %v1119, %v1141
      %v1143 = vrot.slane %v710, 7
      %v1144 = vor.u32 %v1143, %v706
      %v1145 = vsel %vm1019, %v1124, %v1144
      %v1147 = vshrl.u32 %v717, 16
      %v1149 = vrot.slane %v1147, 7
      %v1150 = vshll.u32 %v717, 16
      %v1152 = vor.u32 %v1149, %v1150
      %v1153 = vsel %vm1019, %v1130, %v1152
      %v1155 = vshrl.u32 %v885, 16
      %v1157 = vrot.slane %v1155, 7
      %v1158 = vshll.u32 %v885, 16
      %v1160 = vor.u32 %v1157, %v1158
      %v1161 = vsel %vm1019, %v1138, %v1160
      %v1162 = vrot.slane %v718, 7
      %v1163 = vor.u32 %v1162, %v714
      %v1164 = vsel %vm1019, %v1143, %v1163
      %v1166 = vshrl.u32 %v725, 16
      %v1168 = vrot.slane %v1166, 7
      %v1169 = vshll.u32 %v725, 16
      %v1171 = vor.u32 %v1168, %v1169
      %v1172 = vsel %vm1019, %v1149, %v1171
      %v1174 = vshrl.u32 %v887, 16
      %v1176 = vrot.slane %v1174, 7
      %v1177 = vshll.u32 %v887, 16
      %v1179 = vor.u32 %v1176, %v1177
      %v1180 = vsel %vm1019, %v1157, %v1179
      %v1181 = vrot.slane %v726, 7
      %v1182 = vor.u32 %v1181, %v722
      %v1183 = vsel %vm1019, %v1162, %v1182
      %v1185 = vshrl.u32 %v733, 16
      %v1187 = vrot.slane %v1185, 7
      %v1188 = vshll.u32 %v733, 16
      %v1190 = vor.u32 %v1187, %v1188
      %v1191 = vsel %vm1019, %v1168, %v1190
      %v1193 = vshrl.u32 %v889, 16
      %v1195 = vrot.slane %v1193, 7
      %v1196 = vshll.u32 %v889, 16
      %v1198 = vor.u32 %v1195, %v1196
      %v1199 = vsel %vm1019, %v1176, %v1198
      %v1200 = vrot.slane %v734, 7
      %v1201 = vor.u32 %v1200, %v730
      %v1202 = vsel %vm1019, %v1181, %v1201
      %v1204 = vshrl.u32 %v741, 16
      %v1206 = vrot.slane %v1204, 7
      %v1207 = vshll.u32 %v741, 16
      %v1209 = vor.u32 %v1206, %v1207
      %v1210 = vsel %vm1019, %v1187, %v1209
      %v1212 = vshrl.u32 %v891, 16
      %v1214 = vrot.slane %v1212, 7
      %v1215 = vshll.u32 %v891, 16
      %v1217 = vor.u32 %v1214, %v1215
      %v1218 = vsel %vm1019, %v1195, %v1217
      %v1219 = vrot.slane %v742, 7
      %v1220 = vor.u32 %v1219, %v738
      %v1221 = vsel %vm1019, %v1200, %v1220
      %v1223 = vshrl.u32 %v749, 16
      %v1225 = vrot.slane %v1223, 7
      %v1226 = vshll.u32 %v749, 16
      %v1228 = vor.u32 %v1225, %v1226
      %v1229 = vsel %vm1019, %v1206, %v1228
      %v1231 = vshrl.u32 %v893, 16
      %v1233 = vrot.slane %v1231, 7
      %v1234 = vshll.u32 %v893, 16
      %v1236 = vor.u32 %v1233, %v1234
      %v1237 = vsel %vm1019, %v1214, %v1236
      %v1238 = vrot.slane %v750, 7
      %v1239 = vor.u32 %v1238, %v746
      %v1240 = vsel %vm1019, %v1219, %v1239
      %v1242 = vshrl.u32 %v757, 16
      %v1244 = vrot.slane %v1242, 7
      %v1245 = vshll.u32 %v757, 16
      %v1247 = vor.u32 %v1244, %v1245
      %v1248 = vsel %vm1019, %v1225, %v1247
      %v1250 = vshrl.u32 %v895, 16
      %v1252 = vrot.slane %v1250, 7
      %v1253 = vshll.u32 %v895, 16
      %v1255 = vor.u32 %v1252, %v1253
      %v1256 = vsel %vm1019, %v1233, %v1255
      %v1257 = vrot.slane %v758, 7
      %v1258 = vor.u32 %v1257, %v754
      %v1259 = vsel %vm1019, %v1238, %v1258
      %v1261 = vshrl.u32 %v765, 16
      %v1263 = vrot.slane %v1261, 7
      %v1264 = vshll.u32 %v765, 16
      %v1266 = vor.u32 %v1263, %v1264
      %v1267 = vsel %vm1019, %v1244, %v1266
      %v1269 = vshrl.u32 %v897, 16
      %v1271 = vrot.slane %v1269, 7
      %v1272 = vshll.u32 %v897, 16
      %v1274 = vor.u32 %v1271, %v1272
      %v1275 = vsel %vm1019, %v1252, %v1274
      %v1276 = vrot.slane %v766, 7
      %v1277 = vor.u32 %v1276, %v762
      %v1278 = vsel %vm1019, %v1257, %v1277
      %v1280 = vshrl.u32 %v773, 16
      %v1282 = vrot.slane %v1280, 7
      %v1283 = vshll.u32 %v773, 16
      %v1285 = vor.u32 %v1282, %v1283
      %v1286 = vsel %vm1019, %v1263, %v1285
      %v1288 = vshrl.u32 %v899, 16
      %v1290 = vrot.slane %v1288, 7
      %v1291 = vshll.u32 %v899, 16
      %v1293 = vor.u32 %v1290, %v1291
      %v1294 = vsel %vm1019, %v1271, %v1293
      %v1295 = vrot.slane %v774, 7
      %v1296 = vor.u32 %v1295, %v770
      %v1297 = vsel %vm1019, %v1276, %v1296
      %v1299 = vshrl.u32 %v781, 16
      %v1301 = vrot.slane %v1299, 7
      %v1302 = vshll.u32 %v781, 16
      %v1304 = vor.u32 %v1301, %v1302
      %v1305 = vsel %vm1019, %v1282, %v1304
      %v1307 = vshrl.u32 %v901, 16
      %v1309 = vrot.slane %v1307, 7
      %v1310 = vshll.u32 %v901, 16
      %v1312 = vor.u32 %v1309, %v1310
      %v1313 = vsel %vm1019, %v1290, %v1312
      %v1314 = vrot.slane %v782, 7
      %v1315 = vor.u32 %v1314, %v778
      %v1316 = vsel %vm1019, %v1295, %v1315
      %v1318 = vshrl.u32 %v789, 16
      %v1320 = vrot.slane %v1318, 7
      %v1321 = vshll.u32 %v789, 16
      %v1323 = vor.u32 %v1320, %v1321
      %v1324 = vsel %vm1019, %v1301, %v1323
      %v1326 = vshrl.u32 %v903, 16
      %v1328 = vrot.slane %v1326, 7
      %v1329 = vshll.u32 %v903, 16
      %v1331 = vor.u32 %v1328, %v1329
      %v1332 = vsel %vm1019, %v1309, %v1331
      %v1333 = vrot.slane %v790, 7
      %v1334 = vor.u32 %v1333, %v786
      %v1335 = vsel %vm1019, %v1314, %v1334
      %v1337 = vshrl.u32 %v797, 16
      %v1339 = vrot.slane %v1337, 7
      %v1340 = vshll.u32 %v797, 16
      %v1342 = vor.u32 %v1339, %v1340
      %v1343 = vsel %vm1019, %v1320, %v1342
      %v1345 = vshrl.u32 %v905, 16
      %v1347 = vrot.slane %v1345, 7
      %v1348 = vshll.u32 %v905, 16
      %v1350 = vor.u32 %v1347, %v1348
      %v1351 = vsel %vm1019, %v1328, %v1350
      %v1352 = vrot.slane %v798, 7
      %v1353 = vor.u32 %v1352, %v794
      %v1354 = vsel %vm1019, %v1333, %v1353
      %v1356 = vshrl.u32 %v805, 16
      %v1358 = vrot.slane %v1356, 7
      %v1359 = vshll.u32 %v805, 16
      %v1361 = vor.u32 %v1358, %v1359
      %v1362 = vsel %vm1019, %v1339, %v1361
      %v1364 = vshrl.u32 %v907, 16
      %v1366 = vrot.slane %v1364, 7
      %v1367 = vshll.u32 %v907, 16
      %v1369 = vor.u32 %v1366, %v1367
      %v1370 = vsel %vm1019, %v1347, %v1369
      %v1371 = vrot.slane %v806, 7
      %v1372 = vor.u32 %v1371, %v802
      %v1373 = vsel %vm1019, %v1352, %v1372
      %v1375 = vshrl.u32 %v813, 16
      %v1377 = vrot.slane %v1375, 7
      %v1378 = vshll.u32 %v813, 16
      %v1380 = vor.u32 %v1377, %v1378
      %v1381 = vsel %vm1019, %v1358, %v1380
      %v1383 = vshrl.u32 %v909, 16
      %v1385 = vrot.slane %v1383, 7
      %v1386 = vshll.u32 %v909, 16
      %v1388 = vor.u32 %v1385, %v1386
      %v1389 = vsel %vm1019, %v1366, %v1388
      %v1390 = vrot.slane %v814, 7
      %v1391 = vor.u32 %v1390, %v810
      %v1392 = vsel %vm1019, %v1371, %v1391
      %v1394 = vshrl.u32 %v821, 16
      %v1396 = vrot.slane %v1394, 7
      %v1397 = vshll.u32 %v821, 16
      %v1399 = vor.u32 %v1396, %v1397
      %v1400 = vsel %vm1019, %v1377, %v1399
      %v1402 = vshrl.u32 %v911, 16
      %v1404 = vrot.slane %v1402, 7
      %v1405 = vshll.u32 %v911, 16
      %v1407 = vor.u32 %v1404, %v1405
      %v1408 = vsel %vm1019, %v1385, %v1407
      %v1409 = vrot.slane %v822, 7
      %v1410 = vor.u32 %v1409, %v818
      %v1411 = vsel %vm1019, %v1390, %v1410
      %v1413 = vshrl.u32 %v829, 16
      %v1415 = vrot.slane %v1413, 7
      %v1416 = vshll.u32 %v829, 16
      %v1418 = vor.u32 %v1415, %v1416
      %v1419 = vsel %vm1019, %v1396, %v1418
      %v1421 = vshrl.u32 %v913, 16
      %v1423 = vrot.slane %v1421, 7
      %v1424 = vshll.u32 %v913, 16
      %v1426 = vor.u32 %v1423, %v1424
      %v1427 = vsel %vm1019, %v1404, %v1426
      %v1428 = vrot.slane %v830, 7
      %v1429 = vor.u32 %v1428, %v826
      %v1430 = vsel %vm1019, %v1409, %v1429
      %v1432 = vshrl.u32 %v837, 16
      %v1434 = vrot.slane %v1432, 7
      %v1435 = vshll.u32 %v837, 16
      %v1437 = vor.u32 %v1434, %v1435
      %v1438 = vsel %vm1019, %v1415, %v1437
      %v1440 = vshrl.u32 %v915, 16
      %v1442 = vrot.slane %v1440, 7
      %v1443 = vshll.u32 %v915, 16
      %v1445 = vor.u32 %v1442, %v1443
      %v1446 = vsel %vm1019, %v1423, %v1445
      %v1447 = vrot.slane %v838, 7
      %v1448 = vor.u32 %v1447, %v834
      %v1449 = vsel %vm1019, %v1428, %v1448
      %v1451 = vshrl.u32 %v845, 16
      %v1453 = vrot.slane %v1451, 7
      %v1454 = vshll.u32 %v845, 16
      %v1456 = vor.u32 %v1453, %v1454
      %v1457 = vsel %vm1019, %v1434, %v1456
      %v1459 = vshrl.u32 %v917, 16
      %v1461 = vrot.slane %v1459, 7
      %v1462 = vshll.u32 %v917, 16
      %v1464 = vor.u32 %v1461, %v1462
      %v1465 = vsel %vm1019, %v1442, %v1464
      %v1466 = vrot.slane %v846, 7
      %v1467 = vor.u32 %v1466, %v842
      %v1468 = vsel %vm1019, %v1447, %v1467
      %v1470 = vshrl.u32 %v853, 16
      %v1472 = vrot.slane %v1470, 7
      %v1473 = vshll.u32 %v853, 16
      %v1475 = vor.u32 %v1472, %v1473
      %v1476 = vsel %vm1019, %v1453, %v1475
      %v1478 = vshrl.u32 %v919, 16
      %v1480 = vrot.slane %v1478, 7
      %v1481 = vshll.u32 %v919, 16
      %v1483 = vor.u32 %v1480, %v1481
      %v1484 = vsel %vm1019, %v1461, %v1483
      %v1605 = vunpack.c.l.b16 %v971
      %v1606 = vunpack.c.l.b16 %v972
      %v1607 = vunpack.c.l.b16 %v973
      %v1608 = vunpack.c.l.b16 %v974
      %v1609 = vunpack.c.l.b16 %v975
      %v1610 = vunpack.c.l.b16 %v976
      %v1611 = vunpack.c.l.b16 %v977
      %v1612 = vunpack.c.l.b16 %v978
      %v1613 = vunpack.c.l.b16 %v979
      %v1614 = vunpack.c.l.b16 %v980
      %v1615 = vunpack.c.l.b16 %v981
      %v1616 = vunpack.c.l.b16 %v982
      %v1617 = vunpack.c.l.b16 %v983
      %v1618 = vunpack.c.l.b16 %v984
      %v1619 = vunpack.c.l.b16 %v985
      %v1620 = vunpack.c.l.b16 %v986
      %v1621 = vunpack.c.l.b16 %v987
      %v1622 = vunpack.c.l.b16 %v988
      %v1623 = vunpack.c.l.b16 %v989
      %v1624 = vunpack.c.l.b16 %v990
      %v1625 = vunpack.c.l.b16 %v991
      %v1626 = vunpack.c.l.b16 %v992
      %v1627 = vunpack.c.l.b16 %v993
      %v1628 = vunpack.c.l.b16 %v994
      %v1629 = vunpack.c.l.b16 %v995
      %v1630 = vunpack.c.l.b16 %v996
      %v1631 = vunpack.c.l.b16 %v997
      %v1632 = vunpack.c.l.b16 %v998
      %v1633 = vunpack.c.l.b16 %v999
      %v1634 = vunpack.c.l.b16 %v1000
      %v1635 = vunpack.c.l.b16 %v1001
      %v1636 = vunpack.c.l.b16 %v1002
      %v1637 = vunpack.c.l.b16 %v1003
      %v1638 = vunpack.c.l.b16 %v1004
      %v1639 = vunpack.c.l.b16 %v1005
      %v1640 = vunpack.c.l.b16 %v1006
      %v1641 = vunpack.c.l.b16 %v1007
      %v1642 = vunpack.c.l.b16 %v1008
      %v1643 = vunpack.c.l.b16 %v1009
      %v1644 = vunpack.c.l.b16 %v1010
      %v1645 = vunpack.c.l.b16 %v1011
      %v1646 = vunpack.c.l.b16 %v1012
      %v1647 = vunpack.c.l.b16 %v1013
      %v1648 = vunpack.c.l.b16 %v1014
      %v1649 = vunpack.c.l.b16 %v1015
      %v1650 = vunpack.c.l.b16 %v1016
      %v1651 = vunpack.c.l.b16 %v1017
      %v1652 = vunpack.c.l.b16 %v1018
      %v1653 = vpack.c.b16 %v1606, %v1605
      %v1654 = vpack.c.b16 %v1608, %v1607
      %v1655 = vpack.c.b16 %v1610, %v1609
      %v1656 = vpack.c.b16 %v1612, %v1611
      %v1657 = vpack.c.b16 %v1614, %v1613
      %v1658 = vpack.c.b16 %v1616, %v1615
      %v1659 = vpack.c.b16 %v1618, %v1617
      %v1660 = vpack.c.b16 %v1620, %v1619
      %v1661 = vpack.c.b16 %v1622, %v1621
      %v1662 = vpack.c.b16 %v1624, %v1623
      %v1663 = vpack.c.b16 %v1626, %v1625
      %v1664 = vpack.c.b16 %v1628, %v1627
      %v1665 = vpack.c.b16 %v1630, %v1629
      %v1666 = vpack.c.b16 %v1632, %v1631
      %v1667 = vpack.c.b16 %v1634, %v1633
      %v1668 = vpack.c.b16 %v1636, %v1635
      %v1669 = vpack.c.b16 %v1638, %v1637
      %v1670 = vpack.c.b16 %v1640, %v1639
      %v1671 = vpack.c.b16 %v1642, %v1641
      %v1672 = vpack.c.b16 %v1644, %v1643
      %v1673 = vpack.c.b16 %v1646, %v1645
      %v1674 = vpack.c.b16 %v1648, %v1647
      %v1675 = vpack.c.b16 %v1650, %v1649
      %v1676 = vpack.c.b16 %v1652, %v1651
      %1701 = vmatprep.subr.bf16.mxu0 0
      %1702 = vmatpush1.bf16.msra.mxu0 %v1653
      %1703 = vmatprep.subr.bf16.mxu0 0
      %1704 = vmatpush1.bf16.msra.mxu0 %v1654
      %1705 = vmatprep.subr.bf16.mxu0 0
      %1706 = vmatpush1.bf16.msra.mxu0 %v1655
      %1707 = vmatprep.subr.bf16.mxu0 0
      %1708 = vmatpush1.bf16.msra.mxu0 %v1656
      %1709 = vmatprep.subr.bf16.mxu0 0
      %1710 = vmatpush1.bf16.msra.mxu0 %v1657
      %1711 = vmatprep.subr.bf16.mxu0 0
      %1712 = vmatpush1.bf16.msra.mxu0 %v1658
      %1713 = vmatprep.subr.bf16.mxu0 0
      %1714 = vmatpush1.bf16.msra.mxu0 %v1659
      %1715 = vmatprep.subr.bf16.mxu0 0
      %1716 = vmatpush1.bf16.msra.mxu0 %v1660
      %1717 = vmatprep.subr.bf16.mxu0 0
      %1718 = vmatpush1.bf16.msra.mxu0 %v1661
      %1719 = vmatprep.subr.bf16.mxu0 0
      %1720 = vmatpush1.bf16.msra.mxu0 %v1662
      %1721 = vmatprep.subr.bf16.mxu0 0
      %1722 = vmatpush1.bf16.msra.mxu0 %v1663
      %1723 = vmatprep.subr.bf16.mxu0 0
      %1724 = vmatpush1.bf16.msra.mxu0 %v1664
      %1725 = vmatprep.subr.bf16.mxu0 0
      %1726 = vmatpush1.bf16.msra.mxu0 %v1665
      %1727 = vmatprep.subr.bf16.mxu0 0
      %1728 = vmatpush1.bf16.msra.mxu0 %v1666
      %1729 = vmatprep.subr.bf16.mxu0 0
      %1730 = vmatpush1.bf16.msra.mxu0 %v1667
      %1731 = vmatprep.subr.bf16.mxu0 0
      %1732 = vmatpush1.bf16.msra.mxu0 %v1668
      %1733 = vmatprep.mubr.bf16.mxu0 %v1035
      %1734 = vmatmul.mubr.bf16.gmra.mrb[0].mxu0 %v1023
      %v1735 = vpop.f32.mrb[0].mxu0
      %v1736 = vadd.f32 0.0, %v1735
      %v1737 = vpop.f32.mrb[0].mxu0
      %v1738 = vpop.f32.mrb[0].mxu0
      %v1739 = vadd.f32 0.0, %v1738
      %v1740 = vpop.f32.mrb[0].mxu0
      %1741 = vmatprep.mubr.bf16.mxu0 %v1058
      %1742 = vmatmul.mubr.bf16.gmra.mrb[0].mxu0 %v1050
      %v1743 = vpop.f32.mrb[0].mxu0
      %v1744 = vadd.f32 0.0, %v1743
      %v1745 = vpop.f32.mrb[0].mxu0
      %v1746 = vpop.f32.mrb[0].mxu0
      %v1747 = vadd.f32 0.0, %v1746
      %v1748 = vpop.f32.mrb[0].mxu0
      %1749 = vmatprep.mubr.bf16.mxu0 %v1077
      %1750 = vmatmul.mubr.bf16.gmra.mrb[0].mxu0 %v1069
      %v1751 = vpop.f32.mrb[0].mxu0
      %v1752 = vadd.f32 0.0, %v1751
      %v1753 = vpop.f32.mrb[0].mxu0
      %v1754 = vpop.f32.mrb[0].mxu0
      %v1755 = vadd.f32 0.0, %v1754
      %v1756 = vpop.f32.mrb[0].mxu0
      %1757 = vmatprep.mubr.bf16.mxu0 %v1096
      %1758 = vmatmul.mubr.bf16.gmra.mrb[0].mxu0 %v1088
      %v1759 = vpop.f32.mrb[0].mxu0
      %v1760 = vadd.f32 0.0, %v1759
      %v1761 = vpop.f32.mrb[0].mxu0
      %v1762 = vpop.f32.mrb[0].mxu0
      %v1763 = vadd.f32 0.0, %v1762
      %v1764 = vpop.f32.mrb[0].mxu0
      %1765 = vmatprep.mubr.bf16.mxu0 %v1115
      %1766 = vmatmul.mubr.bf16.gmra.mrb[0].mxu0 %v1107
      %v1767 = vpop.f32.mrb[0].mxu0
      %v1768 = vadd.f32 0.0, %v1767
      %v1769 = vpop.f32.mrb[0].mxu0
      %v1770 = vpop.f32.mrb[0].mxu0
      %v1771 = vadd.f32 0.0, %v1770
      %v1772 = vpop.f32.mrb[0].mxu0
      %1773 = vmatprep.mubr.bf16.mxu0 %v1134
      %1774 = vmatmul.mubr.bf16.gmra.mrb[0].mxu0 %v1126
      %v1775 = vpop.f32.mrb[0].mxu0
      %v1776 = vadd.f32 0.0, %v1775
      %v1777 = vpop.f32.mrb[0].mxu0
      %v1778 = vpop.f32.mrb[0].mxu0
      %v1779 = vadd.f32 0.0, %v1778
      %v1780 = vpop.f32.mrb[0].mxu0
      %1781 = vmatprep.mubr.bf16.mxu0 %v1153
      %1782 = vmatmul.mubr.bf16.gmra.mrb[0].mxu0 %v1145
      %v1783 = vpop.f32.mrb[0].mxu0
      %v1784 = vadd.f32 0.0, %v1783
      %v1785 = vpop.f32.mrb[0].mxu0
      %v1786 = vpop.f32.mrb[0].mxu0
      %v1787 = vadd.f32 0.0, %v1786
      %v1788 = vpop.f32.mrb[0].mxu0
      %1789 = vmatprep.mubr.bf16.mxu0 %v1172
      %1790 = vmatmul.mubr.bf16.gmra.mrb[0].mxu0 %v1164
      %v1791 = vpop.f32.mrb[0].mxu0
      %v1792 = vadd.f32 0.0, %v1791
      %v1793 = vpop.f32.mrb[0].mxu0
      %v1794 = vpop.f32.mrb[0].mxu0
      %v1795 = vadd.f32 0.0, %v1794
      %v1796 = vpop.f32.mrb[0].mxu0
      %1797 = vmatprep.mubr.bf16.mxu0 %v1191
      %1798 = vmatmul.mubr.bf16.gmra.mrb[0].mxu0 %v1183
      %v1799 = vpop.f32.mrb[0].mxu0
      %v1800 = vadd.f32 0.0, %v1799
      %v1801 = vpop.f32.mrb[0].mxu0
      %v1802 = vpop.f32.mrb[0].mxu0
      %v1803 = vadd.f32 0.0, %v1802
      %v1804 = vpop.f32.mrb[0].mxu0
      %1805 = vmatprep.mubr.bf16.mxu0 %v1210
      %1806 = vmatmul.mubr.bf16.gmra.mrb[0].mxu0 %v1202
      %v1807 = vpop.f32.mrb[0].mxu0
      %v1808 = vadd.f32 0.0, %v1807
      %v1809 = vpop.f32.mrb[0].mxu0
      %v1810 = vpop.f32.mrb[0].mxu0
      %v1811 = vadd.f32 0.0, %v1810
      %v1812 = vpop.f32.mrb[0].mxu0
      %1813 = vmatprep.mubr.bf16.mxu0 %v1229
      %1814 = vmatmul.mubr.bf16.gmra.mrb[0].mxu0 %v1221
      %v1815 = vpop.f32.mrb[0].mxu0
      %v1816 = vadd.f32 0.0, %v1815
      %v1817 = vpop.f32.mrb[0].mxu0
      %v1818 = vpop.f32.mrb[0].mxu0
      %v1819 = vadd.f32 0.0, %v1818
      %v1820 = vpop.f32.mrb[0].mxu0
      %1821 = vmatprep.mubr.bf16.mxu0 %v1248
      %1822 = vmatmul.mubr.bf16.gmra.mrb[0].mxu0 %v1240
      %v1823 = vpop.f32.mrb[0].mxu0
      %v1824 = vadd.f32 0.0, %v1823
      %v1825 = vpop.f32.mrb[0].mxu0
      %v1826 = vpop.f32.mrb[0].mxu0
      %v1827 = vadd.f32 0.0, %v1826
      %v1828 = vpop.f32.mrb[0].mxu0
      %1829 = vmatprep.mubr.bf16.mxu0 %v1267
      %1830 = vmatmul.mubr.bf16.gmra.mrb[0].mxu0 %v1259
      %v1831 = vpop.f32.mrb[0].mxu0
      %v1832 = vadd.f32 0.0, %v1831
      %v1833 = vpop.f32.mrb[0].mxu0
      %v1834 = vpop.f32.mrb[0].mxu0
      %v1835 = vadd.f32 0.0, %v1834
      %v1836 = vpop.f32.mrb[0].mxu0
      %1837 = vmatprep.mubr.bf16.mxu0 %v1286
      %1838 = vmatmul.mubr.bf16.gmra.mrb[0].mxu0 %v1278
      %v1839 = vpop.f32.mrb[0].mxu0
      %v1840 = vadd.f32 0.0, %v1839
      %v1841 = vpop.f32.mrb[0].mxu0
      %v1842 = vpop.f32.mrb[0].mxu0
      %v1843 = vadd.f32 0.0, %v1842
      %v1844 = vpop.f32.mrb[0].mxu0
      %1845 = vmatprep.mubr.bf16.mxu0 %v1305
      %1846 = vmatmul.mubr.bf16.gmra.mrb[0].mxu0 %v1297
      %v1847 = vpop.f32.mrb[0].mxu0
      %v1848 = vadd.f32 0.0, %v1847
      %v1849 = vpop.f32.mrb[0].mxu0
      %v1850 = vpop.f32.mrb[0].mxu0
      %v1851 = vadd.f32 0.0, %v1850
      %v1852 = vpop.f32.mrb[0].mxu0
      %1853 = vmatprep.mubr.bf16.mxu0 %v1324
      %1854 = vmatmul.mubr.bf16.gmra.mrb[0].mxu0 %v1316
      %v1855 = vpop.f32.mrb[0].mxu0
      %v1856 = vadd.f32 0.0, %v1855
      %v1857 = vpop.f32.mrb[0].mxu0
      %v1858 = vpop.f32.mrb[0].mxu0
      %v1859 = vadd.f32 0.0, %v1858
      %v1860 = vpop.f32.mrb[0].mxu0
      %1861 = vmatprep.mubr.bf16.mxu0 %v1343
      %1862 = vmatmul.mubr.bf16.gmra.mrb[0].mxu0 %v1335
      %v1863 = vpop.f32.mrb[0].mxu0
      %v1864 = vadd.f32 0.0, %v1863
      %v1865 = vpop.f32.mrb[0].mxu0
      %v1866 = vpop.f32.mrb[0].mxu0
      %v1867 = vadd.f32 0.0, %v1866
      %v1868 = vpop.f32.mrb[0].mxu0
      %1869 = vmatprep.mubr.bf16.mxu0 %v1362
      %1870 = vmatmul.mubr.bf16.gmra.mrb[0].mxu0 %v1354
      %v1871 = vpop.f32.mrb[0].mxu0
      %v1872 = vadd.f32 0.0, %v1871
      %v1873 = vpop.f32.mrb[0].mxu0
      %v1874 = vpop.f32.mrb[0].mxu0
      %v1875 = vadd.f32 0.0, %v1874
      %v1876 = vpop.f32.mrb[0].mxu0
      %1877 = vmatprep.mubr.bf16.mxu0 %v1381
      %1878 = vmatmul.mubr.bf16.gmra.mrb[0].mxu0 %v1373
      %v1879 = vpop.f32.mrb[0].mxu0
      %v1880 = vadd.f32 0.0, %v1879
      %v1881 = vpop.f32.mrb[0].mxu0
      %v1882 = vpop.f32.mrb[0].mxu0
      %v1883 = vadd.f32 0.0, %v1882
      %v1884 = vpop.f32.mrb[0].mxu0
      %1885 = vmatprep.mubr.bf16.mxu0 %v1400
      %1886 = vmatmul.mubr.bf16.gmra.mrb[0].mxu0 %v1392
      %v1887 = vpop.f32.mrb[0].mxu0
      %v1888 = vadd.f32 0.0, %v1887
      %v1889 = vpop.f32.mrb[0].mxu0
      %v1890 = vpop.f32.mrb[0].mxu0
      %v1891 = vadd.f32 0.0, %v1890
      %v1892 = vpop.f32.mrb[0].mxu0
      %1893 = vmatprep.mubr.bf16.mxu0 %v1419
      %1894 = vmatmul.mubr.bf16.gmra.mrb[0].mxu0 %v1411
      %v1895 = vpop.f32.mrb[0].mxu0
      %v1896 = vadd.f32 0.0, %v1895
      %v1897 = vpop.f32.mrb[0].mxu0
      %v1898 = vpop.f32.mrb[0].mxu0
      %v1899 = vadd.f32 0.0, %v1898
      %v1900 = vpop.f32.mrb[0].mxu0
      %1901 = vmatprep.mubr.bf16.mxu0 %v1438
      %1902 = vmatmul.mubr.bf16.gmra.mrb[0].mxu0 %v1430
      %v1903 = vpop.f32.mrb[0].mxu0
      %v1904 = vadd.f32 0.0, %v1903
      %v1905 = vpop.f32.mrb[0].mxu0
      %v1906 = vpop.f32.mrb[0].mxu0
      %v1907 = vadd.f32 0.0, %v1906
      %v1908 = vpop.f32.mrb[0].mxu0
      %1909 = vmatprep.mubr.bf16.mxu0 %v1457
      %1910 = vmatmul.mubr.bf16.gmra.mrb[0].mxu0 %v1449
      %v1911 = vpop.f32.mrb[0].mxu0
      %v1912 = vadd.f32 0.0, %v1911
      %v1913 = vpop.f32.mrb[0].mxu0
      %v1914 = vpop.f32.mrb[0].mxu0
      %v1915 = vadd.f32 0.0, %v1914
      %v1916 = vpop.f32.mrb[0].mxu0
      %1917 = vmatprep.mubr.bf16.mxu0 %v1476
      %1918 = vmatmul.mubr.bf16.gmra.mrb[0].mxu0 %v1468
      %v1919 = vpop.f32.mrb[0].mxu0
      %v1920 = vadd.f32 0.0, %v1919
      %v1921 = vpop.f32.mrb[0].mxu0
      %v1922 = vpop.f32.mrb[0].mxu0
      %v1923 = vadd.f32 0.0, %v1922
      %v1924 = vpop.f32.mrb[0].mxu0
      %1925 = vdwg.mxu0
      %1926 = vmatprep.subr.bf16.mxu0 0
      %1927 = vmatpush1.bf16.msra.mxu0 %v1669
      %1928 = vmatprep.subr.bf16.mxu0 0
      %1929 = vmatpush1.bf16.msra.mxu0 %v1670
      %1930 = vmatprep.subr.bf16.mxu0 0
      %1931 = vmatpush1.bf16.msra.mxu0 %v1671
      %1932 = vmatprep.subr.bf16.mxu0 0
      %1933 = vmatpush1.bf16.msra.mxu0 %v1672
      %1934 = vmatprep.subr.bf16.mxu0 0
      %1935 = vmatpush1.bf16.msra.mxu0 %v1673
      %1936 = vmatprep.subr.bf16.mxu0 0
      %1937 = vmatpush1.bf16.msra.mxu0 %v1674
      %1938 = vmatprep.subr.bf16.mxu0 0
      %1939 = vmatpush1.bf16.msra.mxu0 %v1675
      %1940 = vmatprep.subr.bf16.mxu0 0
      %1941 = vmatpush1.bf16.msra.mxu0 %v1676
      %1942 = vmatprep.subr.bf16.mxu0 0
      %1943 = vmatpush1.bf16.msra.mxu0 0
      %1944 = vmatprep.subr.bf16.mxu0 0
      %1945 = vmatpush1.bf16.msra.mxu0 0
      %1946 = vmatprep.subr.bf16.mxu0 0
      %1947 = vmatpush1.bf16.msra.mxu0 0
      %1948 = vmatprep.subr.bf16.mxu0 0
      %1949 = vmatpush1.bf16.msra.mxu0 0
      %1950 = vmatprep.subr.bf16.mxu0 0
      %1951 = vmatpush1.bf16.msra.mxu0 0
      %1952 = vmatprep.subr.bf16.mxu0 0
      %1953 = vmatpush1.bf16.msra.mxu0 0
      %1954 = vmatprep.subr.bf16.mxu0 0
      %1955 = vmatpush1.bf16.msra.mxu0 0
      %1956 = vmatprep.subr.bf16.mxu0 0
      %1957 = vmatpush1.bf16.msra.mxu0 0
      %1958 = vmatprep.mubr.bf16.mxu0 0
      %1959 = vmatmul.mubr.bf16.gmra.mrb[0].mxu0 %v1047
      %v1960 = vpop.f32.mrb[0].mxu0
      %v1961 = vadd.f32 %v1736, %v1960
      %v1962 = vpop.f32.mrb[0].mxu0
      %v1963 = vpop.f32.mrb[0].mxu0
      %v1964 = vadd.f32 %v1739, %v1963
      %v1965 = vpop.f32.mrb[0].mxu0
      %1966 = vmatprep.mubr.bf16.mxu0 0
      %1967 = vmatmul.mubr.bf16.gmra.mrb[0].mxu0 %v1066
      %v1968 = vpop.f32.mrb[0].mxu0
      %v1969 = vadd.f32 %v1744, %v1968
      %v1970 = vpop.f32.mrb[0].mxu0
      %v1971 = vpop.f32.mrb[0].mxu0
      %v1972 = vadd.f32 %v1747, %v1971
      %v1973 = vpop.f32.mrb[0].mxu0
      %1974 = vmatprep.mubr.bf16.mxu0 0
      %1975 = vmatmul.mubr.bf16.gmra.mrb[0].mxu0 %v1085
      %v1976 = vpop.f32.mrb[0].mxu0
      %v1977 = vadd.f32 %v1752, %v1976
      %v1978 = vpop.f32.mrb[0].mxu0
      %v1979 = vpop.f32.mrb[0].mxu0
      %v1980 = vadd.f32 %v1755, %v1979
      %v1981 = vpop.f32.mrb[0].mxu0
      %1982 = vmatprep.mubr.bf16.mxu0 0
      %1983 = vmatmul.mubr.bf16.gmra.mrb[0].mxu0 %v1104
      %v1984 = vpop.f32.mrb[0].mxu0
      %v1985 = vadd.f32 %v1760, %v1984
      %v1986 = vpop.f32.mrb[0].mxu0
      %v1987 = vpop.f32.mrb[0].mxu0
      %v1988 = vadd.f32 %v1763, %v1987
      %v1989 = vpop.f32.mrb[0].mxu0
      %1990 = vmatprep.mubr.bf16.mxu0 0
      %1991 = vmatmul.mubr.bf16.gmra.mrb[0].mxu0 %v1123
      %v1992 = vpop.f32.mrb[0].mxu0
      %v1993 = vadd.f32 %v1768, %v1992
      %v1994 = vpop.f32.mrb[0].mxu0
      %v1995 = vpop.f32.mrb[0].mxu0
      %v1996 = vadd.f32 %v1771, %v1995
      %v1997 = vpop.f32.mrb[0].mxu0
      %1998 = vmatprep.mubr.bf16.mxu0 0
      %1999 = vmatmul.mubr.bf16.gmra.mrb[0].mxu0 %v1142
      %v2000 = vpop.f32.mrb[0].mxu0
      %v2001 = vadd.f32 %v1776, %v2000
      %v2002 = vpop.f32.mrb[0].mxu0
      %v2003 = vpop.f32.mrb[0].mxu0
      %v2004 = vadd.f32 %v1779, %v2003
      %v2005 = vpop.f32.mrb[0].mxu0
      %2006 = vmatprep.mubr.bf16.mxu0 0
      %2007 = vmatmul.mubr.bf16.gmra.mrb[0].mxu0 %v1161
      %v2008 = vpop.f32.mrb[0].mxu0
      %v2009 = vadd.f32 %v1784, %v2008
      %v2010 = vpop.f32.mrb[0].mxu0
      %v2011 = vpop.f32.mrb[0].mxu0
      %v2012 = vadd.f32 %v1787, %v2011
      %v2013 = vpop.f32.mrb[0].mxu0
      %2014 = vmatprep.mubr.bf16.mxu0 0
      %2015 = vmatmul.mubr.bf16.gmra.mrb[0].mxu0 %v1180
      %v2016 = vpop.f32.mrb[0].mxu0
      %v2017 = vadd.f32 %v1792, %v2016
      %v2018 = vpop.f32.mrb[0].mxu0
      %v2019 = vpop.f32.mrb[0].mxu0
      %v2020 = vadd.f32 %v1795, %v2019
      %v2021 = vpop.f32.mrb[0].mxu0
      %2022 = vmatprep.mubr.bf16.mxu0 0
      %2023 = vmatmul.mubr.bf16.gmra.mrb[0].mxu0 %v1199
      %v2024 = vpop.f32.mrb[0].mxu0
      %v2025 = vadd.f32 %v1800, %v2024
      %v2026 = vpop.f32.mrb[0].mxu0
      %v2027 = vpop.f32.mrb[0].mxu0
      %v2028 = vadd.f32 %v1803, %v2027
      %v2029 = vpop.f32.mrb[0].mxu0
      %2030 = vmatprep.mubr.bf16.mxu0 0
      %2031 = vmatmul.mubr.bf16.gmra.mrb[0].mxu0 %v1218
      %v2032 = vpop.f32.mrb[0].mxu0
      %v2033 = vadd.f32 %v1808, %v2032
      %v2034 = vpop.f32.mrb[0].mxu0
      %v2035 = vpop.f32.mrb[0].mxu0
      %v2036 = vadd.f32 %v1811, %v2035
      %v2037 = vpop.f32.mrb[0].mxu0
      %2038 = vmatprep.mubr.bf16.mxu0 0
      %2039 = vmatmul.mubr.bf16.gmra.mrb[0].mxu0 %v1237
      %v2040 = vpop.f32.mrb[0].mxu0
      %v2041 = vadd.f32 %v1816, %v2040
      %v2042 = vpop.f32.mrb[0].mxu0
      %v2043 = vpop.f32.mrb[0].mxu0
      %v2044 = vadd.f32 %v1819, %v2043
      %v2045 = vpop.f32.mrb[0].mxu0
      %2046 = vmatprep.mubr.bf16.mxu0 0
      %2047 = vmatmul.mubr.bf16.gmra.mrb[0].mxu0 %v1256
      %v2048 = vpop.f32.mrb[0].mxu0
      %v2049 = vadd.f32 %v1824, %v2048
      %v2050 = vpop.f32.mrb[0].mxu0
      %v2051 = vpop.f32.mrb[0].mxu0
      %v2052 = vadd.f32 %v1827, %v2051
      %v2053 = vpop.f32.mrb[0].mxu0
      %2054 = vmatprep.mubr.bf16.mxu0 0
      %2055 = vmatmul.mubr.bf16.gmra.mrb[0].mxu0 %v1275
      %v2056 = vpop.f32.mrb[0].mxu0
      %v2057 = vadd.f32 %v1832, %v2056
      %v2058 = vpop.f32.mrb[0].mxu0
      %v2059 = vpop.f32.mrb[0].mxu0
      %v2060 = vadd.f32 %v1835, %v2059
      %v2061 = vpop.f32.mrb[0].mxu0
      %2062 = vmatprep.mubr.bf16.mxu0 0
      %2063 = vmatmul.mubr.bf16.gmra.mrb[0].mxu0 %v1294
      %v2064 = vpop.f32.mrb[0].mxu0
      %v2065 = vadd.f32 %v1840, %v2064
      %v2066 = vpop.f32.mrb[0].mxu0
      %v2067 = vpop.f32.mrb[0].mxu0
      %v2068 = vadd.f32 %v1843, %v2067
      %v2069 = vpop.f32.mrb[0].mxu0
      %2070 = vmatprep.mubr.bf16.mxu0 0
      %2071 = vmatmul.mubr.bf16.gmra.mrb[0].mxu0 %v1313
      %v2072 = vpop.f32.mrb[0].mxu0
      %v2073 = vadd.f32 %v1848, %v2072
      %v2074 = vpop.f32.mrb[0].mxu0
      %v2075 = vpop.f32.mrb[0].mxu0
      %v2076 = vadd.f32 %v1851, %v2075
      %v2077 = vpop.f32.mrb[0].mxu0
      %2078 = vmatprep.mubr.bf16.mxu0 0
      %2079 = vmatmul.mubr.bf16.gmra.mrb[0].mxu0 %v1332
      %v2080 = vpop.f32.mrb[0].mxu0
      %v2081 = vadd.f32 %v1856, %v2080
      %v2082 = vpop.f32.mrb[0].mxu0
      %v2083 = vpop.f32.mrb[0].mxu0
      %v2084 = vadd.f32 %v1859, %v2083
      %v2085 = vpop.f32.mrb[0].mxu0
      %2086 = vmatprep.mubr.bf16.mxu0 0
      %2087 = vmatmul.mubr.bf16.gmra.mrb[0].mxu0 %v1351
      %v2088 = vpop.f32.mrb[0].mxu0
      %v2089 = vadd.f32 %v1864, %v2088
      %v2090 = vpop.f32.mrb[0].mxu0
      %v2091 = vpop.f32.mrb[0].mxu0
      %v2092 = vadd.f32 %v1867, %v2091
      %v2093 = vpop.f32.mrb[0].mxu0
      %2094 = vmatprep.mubr.bf16.mxu0 0
      %2095 = vmatmul.mubr.bf16.gmra.mrb[0].mxu0 %v1370
      %v2096 = vpop.f32.mrb[0].mxu0
      %v2097 = vadd.f32 %v1872, %v2096
      %v2098 = vpop.f32.mrb[0].mxu0
      %v2099 = vpop.f32.mrb[0].mxu0
      %v2100 = vadd.f32 %v1875, %v2099
      %v2101 = vpop.f32.mrb[0].mxu0
      %2102 = vmatprep.mubr.bf16.mxu0 0
      %2103 = vmatmul.mubr.bf16.gmra.mrb[0].mxu0 %v1389
      %v2104 = vpop.f32.mrb[0].mxu0
      %v2105 = vadd.f32 %v1880, %v2104
      %v2106 = vpop.f32.mrb[0].mxu0
      %v2107 = vpop.f32.mrb[0].mxu0
      %v2108 = vadd.f32 %v1883, %v2107
      %v2109 = vpop.f32.mrb[0].mxu0
      %2110 = vmatprep.mubr.bf16.mxu0 0
      %2111 = vmatmul.mubr.bf16.gmra.mrb[0].mxu0 %v1408
      %v2112 = vpop.f32.mrb[0].mxu0
      %v2113 = vadd.f32 %v1888, %v2112
      %v2114 = vpop.f32.mrb[0].mxu0
      %v2115 = vpop.f32.mrb[0].mxu0
      %v2116 = vadd.f32 %v1891, %v2115
      %v2117 = vpop.f32.mrb[0].mxu0
      %2118 = vmatprep.mubr.bf16.mxu0 0
      %2119 = vmatmul.mubr.bf16.gmra.mrb[0].mxu0 %v1427
      %v2120 = vpop.f32.mrb[0].mxu0
      %v2121 = vadd.f32 %v1896, %v2120
      %v2122 = vpop.f32.mrb[0].mxu0
      %v2123 = vpop.f32.mrb[0].mxu0
      %v2124 = vadd.f32 %v1899, %v2123
      %v2125 = vpop.f32.mrb[0].mxu0
      %2126 = vmatprep.mubr.bf16.mxu0 0
      %2127 = vmatmul.mubr.bf16.gmra.mrb[0].mxu0 %v1446
      %v2128 = vpop.f32.mrb[0].mxu0
      %v2129 = vadd.f32 %v1904, %v2128
      %v2130 = vpop.f32.mrb[0].mxu0
      %v2131 = vpop.f32.mrb[0].mxu0
      %v2132 = vadd.f32 %v1907, %v2131
      %v2133 = vpop.f32.mrb[0].mxu0
      %2134 = vmatprep.mubr.bf16.mxu0 0
      %2135 = vmatmul.mubr.bf16.gmra.mrb[0].mxu0 %v1465
      %v2136 = vpop.f32.mrb[0].mxu0
      %v2137 = vadd.f32 %v1912, %v2136
      %v2138 = vpop.f32.mrb[0].mxu0
      %v2139 = vpop.f32.mrb[0].mxu0
      %v2140 = vadd.f32 %v1915, %v2139
      %v2141 = vpop.f32.mrb[0].mxu0
      %2142 = vmatprep.mubr.bf16.mxu0 0
      %2143 = vmatmul.mubr.bf16.gmra.mrb[0].mxu0 %v1484
      %v2144 = vpop.f32.mrb[0].mxu0
      %v2145 = vadd.f32 %v1920, %v2144
      %v2146 = vpop.f32.mrb[0].mxu0
      %v2147 = vpop.f32.mrb[0].mxu0
      %v2148 = vadd.f32 %v1923, %v2147
      %v2149 = vpop.f32.mrb[0].mxu0
      %2150 = vdwg.mxu0
      %vm2151 = vsmask.f32 4352
      %v2152 = vrot.slane %v643, 3
      %v2153 = vrot.slane %v645, 4
      %v2154 = vor.u32 %v2152, %v2153
      %v2155 = vrot.slane %v654, 3
      %v2156 = vrot.slane %v650, 4
      %v2157 = vor.u32 %v2155, %v2156
      %v2158 = vsel %vm2151, %v2154, %v2157
      %v2160 = vshrl.u32 %v653, 16
      %v2162 = vrot.slane %v2160, 3
      %v2163 = vshll.u32 %v653, 16
      %v2165 = vrot.slane %v2163, 4
      %v2166 = vor.u32 %v2162, %v2165
      %v2167 = vrot.slane %v1025, 3
      %v2168 = vshll.u32 %v661, 16
      %v2170 = vrot.slane %v2168, 4
      %v2171 = vor.u32 %v2167, %v2170
      %v2172 = vsel %vm2151, %v2166, %v2171
      %v2174 = vshrl.u32 %v869, 16
      %v2176 = vrot.slane %v2174, 3
      %v2177 = vshll.u32 %v869, 16
      %v2179 = vrot.slane %v2177, 4
      %v2180 = vor.u32 %v2176, %v2179
      %v2181 = vrot.slane %v1037, 3
      %v2182 = vshll.u32 %v871, 16
      %v2184 = vrot.slane %v2182, 4
      %v2185 = vor.u32 %v2181, %v2184
      %v2186 = vsel %vm2151, %v2180, %v2185
      %v2187 = vrot.slane %v662, 3
      %v2188 = vrot.slane %v658, 4
      %v2189 = vor.u32 %v2187, %v2188
      %v2190 = vsel %vm2151, %v2157, %v2189
      %v2191 = vrot.slane %v1029, 3
      %v2192 = vrot.slane %v1032, 4
      %v2193 = vor.u32 %v2191, %v2192
      %v2194 = vsel %vm2151, %v2171, %v2193
      %v2195 = vrot.slane %v1041, 3
      %v2196 = vrot.slane %v1044, 4
      %v2197 = vor.u32 %v2195, %v2196
      %v2198 = vsel %vm2151, %v2185, %v2197
      %v2199 = vrot.slane %v670, 3
      %v2200 = vrot.slane %v666, 4
      %v2201 = vor.u32 %v2199, %v2200
      %v2202 = vsel %vm2151, %v2189, %v2201
      %v2203 = vrot.slane %v1052, 3
      %v2204 = vrot.slane %v1055, 4
      %v2205 = vor.u32 %v2203, %v2204
      %v2206 = vsel %vm2151, %v2193, %v2205
      %v2207 = vrot.slane %v1060, 3
      %v2208 = vrot.slane %v1063, 4
      %v2209 = vor.u32 %v2207, %v2208
      %v2210 = vsel %vm2151, %v2197, %v2209
      %v2211 = vrot.slane %v678, 3
      %v2212 = vrot.slane %v674, 4
      %v2213 = vor.u32 %v2211, %v2212
      %v2214 = vsel %vm2151, %v2201, %v2213
      %v2215 = vrot.slane %v1071, 3
      %v2216 = vrot.slane %v1074, 4
      %v2217 = vor.u32 %v2215, %v2216
      %v2218 = vsel %vm2151, %v2205, %v2217
      %v2219 = vrot.slane %v1079, 3
      %v2220 = vrot.slane %v1082, 4
      %v2221 = vor.u32 %v2219, %v2220
      %v2222 = vsel %vm2151, %v2209, %v2221
      %v2223 = vrot.slane %v686, 3
      %v2224 = vrot.slane %v682, 4
      %v2225 = vor.u32 %v2223, %v2224
      %v2226 = vsel %vm2151, %v2213, %v2225
      %v2227 = vrot.slane %v1090, 3
      %v2228 = vrot.slane %v1093, 4
      %v2229 = vor.u32 %v2227, %v2228
      %v2230 = vsel %vm2151, %v2217, %v2229
      %v2231 = vrot.slane %v1098, 3
      %v2232 = vrot.slane %v1101, 4
      %v2233 = vor.u32 %v2231, %v2232
      %v2234 = vsel %vm2151, %v2221, %v2233
      %v2235 = vrot.slane %v694, 3
      %v2236 = vrot.slane %v690, 4
      %v2237 = vor.u32 %v2235, %v2236
      %v2238 = vsel %vm2151, %v2225, %v2237
      %v2239 = vrot.slane %v1109, 3
      %v2240 = vrot.slane %v1112, 4
      %v2241 = vor.u32 %v2239, %v2240
      %v2242 = vsel %vm2151, %v2229, %v2241
      %v2243 = vrot.slane %v1117, 3
      %v2244 = vrot.slane %v1120, 4
      %v2245 = vor.u32 %v2243, %v2244
      %v2246 = vsel %vm2151, %v2233, %v2245
      %v2247 = vrot.slane %v702, 3
      %v2248 = vrot.slane %v698, 4
      %v2249 = vor.u32 %v2247, %v2248
      %v2250 = vsel %vm2151, %v2237, %v2249
      %v2251 = vrot.slane %v1128, 3
      %v2252 = vrot.slane %v1131, 4
      %v2253 = vor.u32 %v2251, %v2252
      %v2254 = vsel %vm2151, %v2241, %v2253
      %v2255 = vrot.slane %v1136, 3
      %v2256 = vrot.slane %v1139, 4
      %v2257 = vor.u32 %v2255, %v2256
      %v2258 = vsel %vm2151, %v2245, %v2257
      %v2259 = vrot.slane %v710, 3
      %v2260 = vrot.slane %v706, 4
      %v2261 = vor.u32 %v2259, %v2260
      %v2262 = vsel %vm2151, %v2249, %v2261
      %v2263 = vrot.slane %v1147, 3
      %v2264 = vrot.slane %v1150, 4
      %v2265 = vor.u32 %v2263, %v2264
      %v2266 = vsel %vm2151, %v2253, %v2265
      %v2267 = vrot.slane %v1155, 3
      %v2268 = vrot.slane %v1158, 4
      %v2269 = vor.u32 %v2267, %v2268
      %v2270 = vsel %vm2151, %v2257, %v2269
      %v2271 = vrot.slane %v718, 3
      %v2272 = vrot.slane %v714, 4
      %v2273 = vor.u32 %v2271, %v2272
      %v2274 = vsel %vm2151, %v2261, %v2273
      %v2275 = vrot.slane %v1166, 3
      %v2276 = vrot.slane %v1169, 4
      %v2277 = vor.u32 %v2275, %v2276
      %v2278 = vsel %vm2151, %v2265, %v2277
      %v2279 = vrot.slane %v1174, 3
      %v2280 = vrot.slane %v1177, 4
      %v2281 = vor.u32 %v2279, %v2280
      %v2282 = vsel %vm2151, %v2269, %v2281
      %v2283 = vrot.slane %v726, 3
      %v2284 = vrot.slane %v722, 4
      %v2285 = vor.u32 %v2283, %v2284
      %v2286 = vsel %vm2151, %v2273, %v2285
      %v2287 = vrot.slane %v1185, 3
      %v2288 = vrot.slane %v1188, 4
      %v2289 = vor.u32 %v2287, %v2288
      %v2290 = vsel %vm2151, %v2277, %v2289
      %v2291 = vrot.slane %v1193, 3
      %v2292 = vrot.slane %v1196, 4
      %v2293 = vor.u32 %v2291, %v2292
      %v2294 = vsel %vm2151, %v2281, %v2293
      %v2295 = vrot.slane %v734, 3
      %v2296 = vrot.slane %v730, 4
      %v2297 = vor.u32 %v2295, %v2296
      %v2298 = vsel %vm2151, %v2285, %v2297
      %v2299 = vrot.slane %v1204, 3
      %v2300 = vrot.slane %v1207, 4
      %v2301 = vor.u32 %v2299, %v2300
      %v2302 = vsel %vm2151, %v2289, %v2301
      %v2303 = vrot.slane %v1212, 3
      %v2304 = vrot.slane %v1215, 4
      %v2305 = vor.u32 %v2303, %v2304
      %v2306 = vsel %vm2151, %v2293, %v2305
      %v2307 = vrot.slane %v742, 3
      %v2308 = vrot.slane %v738, 4
      %v2309 = vor.u32 %v2307, %v2308
      %v2310 = vsel %vm2151, %v2297, %v2309
      %v2311 = vrot.slane %v1223, 3
      %v2312 = vrot.slane %v1226, 4
      %v2313 = vor.u32 %v2311, %v2312
      %v2314 = vsel %vm2151, %v2301, %v2313
      %v2315 = vrot.slane %v1231, 3
      %v2316 = vrot.slane %v1234, 4
      %v2317 = vor.u32 %v2315, %v2316
      %v2318 = vsel %vm2151, %v2305, %v2317
      %v2319 = vrot.slane %v750, 3
      %v2320 = vrot.slane %v746, 4
      %v2321 = vor.u32 %v2319, %v2320
      %v2322 = vsel %vm2151, %v2309, %v2321
      %v2323 = vrot.slane %v1242, 3
      %v2324 = vrot.slane %v1245, 4
      %v2325 = vor.u32 %v2323, %v2324
      %v2326 = vsel %vm2151, %v2313, %v2325
      %v2327 = vrot.slane %v1250, 3
      %v2328 = vrot.slane %v1253, 4
      %v2329 = vor.u32 %v2327, %v2328
      %v2330 = vsel %vm2151, %v2317, %v2329
      %v2331 = vrot.slane %v758, 3
      %v2332 = vrot.slane %v754, 4
      %v2333 = vor.u32 %v2331, %v2332
      %v2334 = vsel %vm2151, %v2321, %v2333
      %v2335 = vrot.slane %v1261, 3
      %v2336 = vrot.slane %v1264, 4
      %v2337 = vor.u32 %v2335, %v2336
      %v2338 = vsel %vm2151, %v2325, %v2337
      %v2339 = vrot.slane %v1269, 3
      %v2340 = vrot.slane %v1272, 4
      %v2341 = vor.u32 %v2339, %v2340
      %v2342 = vsel %vm2151, %v2329, %v2341
      %v2343 = vrot.slane %v766, 3
      %v2344 = vrot.slane %v762, 4
      %v2345 = vor.u32 %v2343, %v2344
      %v2346 = vsel %vm2151, %v2333, %v2345
      %v2347 = vrot.slane %v1280, 3
      %v2348 = vrot.slane %v1283, 4
      %v2349 = vor.u32 %v2347, %v2348
      %v2350 = vsel %vm2151, %v2337, %v2349
      %v2351 = vrot.slane %v1288, 3
      %v2352 = vrot.slane %v1291, 4
      %v2353 = vor.u32 %v2351, %v2352
      %v2354 = vsel %vm2151, %v2341, %v2353
      %v2355 = vrot.slane %v774, 3
      %v2356 = vrot.slane %v770, 4
      %v2357 = vor.u32 %v2355, %v2356
      %v2358 = vsel %vm2151, %v2345, %v2357
      %v2359 = vrot.slane %v1299, 3
      %v2360 = vrot.slane %v1302, 4
      %v2361 = vor.u32 %v2359, %v2360
      %v2362 = vsel %vm2151, %v2349, %v2361
      %v2363 = vrot.slane %v1307, 3
      %v2364 = vrot.slane %v1310, 4
      %v2365 = vor.u32 %v2363, %v2364
      %v2366 = vsel %vm2151, %v2353, %v2365
      %v2367 = vrot.slane %v782, 3
      %v2368 = vrot.slane %v778, 4
      %v2369 = vor.u32 %v2367, %v2368
      %v2370 = vsel %vm2151, %v2357, %v2369
      %v2371 = vrot.slane %v1318, 3
      %v2372 = vrot.slane %v1321, 4
      %v2373 = vor.u32 %v2371, %v2372
      %v2374 = vsel %vm2151, %v2361, %v2373
      %v2375 = vrot.slane %v1326, 3
      %v2376 = vrot.slane %v1329, 4
      %v2377 = vor.u32 %v2375, %v2376
      %v2378 = vsel %vm2151, %v2365, %v2377
      %v2379 = vrot.slane %v790, 3
      %v2380 = vrot.slane %v786, 4
      %v2381 = vor.u32 %v2379, %v2380
      %v2382 = vsel %vm2151, %v2369, %v2381
      %v2383 = vrot.slane %v1337, 3
      %v2384 = vrot.slane %v1340, 4
      %v2385 = vor.u32 %v2383, %v2384
      %v2386 = vsel %vm2151, %v2373, %v2385
      %v2387 = vrot.slane %v1345, 3
      %v2388 = vrot.slane %v1348, 4
      %v2389 = vor.u32 %v2387, %v2388
      %v2390 = vsel %vm2151, %v2377, %v2389
      %v2391 = vrot.slane %v798, 3
      %v2392 = vrot.slane %v794, 4
      %v2393 = vor.u32 %v2391, %v2392
      %v2394 = vsel %vm2151, %v2381, %v2393
      %v2395 = vrot.slane %v1356, 3
      %v2396 = vrot.slane %v1359, 4
      %v2397 = vor.u32 %v2395, %v2396
      %v2398 = vsel %vm2151, %v2385, %v2397
      %v2399 = vrot.slane %v1364, 3
      %v2400 = vrot.slane %v1367, 4
      %v2401 = vor.u32 %v2399, %v2400
      %v2402 = vsel %vm2151, %v2389, %v2401
      %v2403 = vrot.slane %v806, 3
      %v2404 = vrot.slane %v802, 4
      %v2405 = vor.u32 %v2403, %v2404
      %v2406 = vsel %vm2151, %v2393, %v2405
      %v2407 = vrot.slane %v1375, 3
      %v2408 = vrot.slane %v1378, 4
      %v2409 = vor.u32 %v2407, %v2408
      %v2410 = vsel %vm2151, %v2397, %v2409
      %v2411 = vrot.slane %v1383, 3
      %v2412 = vrot.slane %v1386, 4
      %v2413 = vor.u32 %v2411, %v2412
      %v2414 = vsel %vm2151, %v2401, %v2413
      %v2415 = vrot.slane %v814, 3
      %v2416 = vrot.slane %v810, 4
      %v2417 = vor.u32 %v2415, %v2416
      %v2418 = vsel %vm2151, %v2405, %v2417
      %v2419 = vrot.slane %v1394, 3
      %v2420 = vrot.slane %v1397, 4
      %v2421 = vor.u32 %v2419, %v2420
      %v2422 = vsel %vm2151, %v2409, %v2421
      %v2423 = vrot.slane %v1402, 3
      %v2424 = vrot.slane %v1405, 4
      %v2425 = vor.u32 %v2423, %v2424
      %v2426 = vsel %vm2151, %v2413, %v2425
      %v2427 = vrot.slane %v822, 3
      %v2428 = vrot.slane %v818, 4
      %v2429 = vor.u32 %v2427, %v2428
      %v2430 = vsel %vm2151, %v2417, %v2429
      %v2431 = vrot.slane %v1413, 3
      %v2432 = vrot.slane %v1416, 4
      %v2433 = vor.u32 %v2431, %v2432
      %v2434 = vsel %vm2151, %v2421, %v2433
      %v2435 = vrot.slane %v1421, 3
      %v2436 = vrot.slane %v1424, 4
      %v2437 = vor.u32 %v2435, %v2436
      %v2438 = vsel %vm2151, %v2425, %v2437
      %v2439 = vrot.slane %v830, 3
      %v2440 = vrot.slane %v826, 4
      %v2441 = vor.u32 %v2439, %v2440
      %v2442 = vsel %vm2151, %v2429, %v2441
      %v2443 = vrot.slane %v1432, 3
      %v2444 = vrot.slane %v1435, 4
      %v2445 = vor.u32 %v2443, %v2444
      %v2446 = vsel %vm2151, %v2433, %v2445
      %v2447 = vrot.slane %v1440, 3
      %v2448 = vrot.slane %v1443, 4
      %v2449 = vor.u32 %v2447, %v2448
      %v2450 = vsel %vm2151, %v2437, %v2449
      %v2451 = vrot.slane %v838, 3
      %v2452 = vrot.slane %v834, 4
      %v2453 = vor.u32 %v2451, %v2452
      %v2454 = vsel %vm2151, %v2441, %v2453
      %v2455 = vrot.slane %v1451, 3
      %v2456 = vrot.slane %v1454, 4
      %v2457 = vor.u32 %v2455, %v2456
      %v2458 = vsel %vm2151, %v2445, %v2457
      %v2459 = vrot.slane %v1459, 3
      %v2460 = vrot.slane %v1462, 4
      %v2461 = vor.u32 %v2459, %v2460
      %v2462 = vsel %vm2151, %v2449, %v2461
      %v2583 = vunpack.c.l.b16 %v922
      %v2584 = vunpack.c.l.b16 %v923
      %v2585 = vunpack.c.l.b16 %v924
      %v2586 = vunpack.c.l.b16 %v925
      %v2587 = vunpack.c.l.b16 %v926
      %v2588 = vunpack.c.l.b16 %v927
      %v2589 = vunpack.c.l.b16 %v928
      %v2590 = vunpack.c.l.b16 %v929
      %v2591 = vunpack.c.l.b16 %v930
      %v2592 = vunpack.c.l.b16 %v931
      %v2593 = vunpack.c.l.b16 %v932
      %v2594 = vunpack.c.l.b16 %v933
      %v2595 = vunpack.c.l.b16 %v934
      %v2596 = vunpack.c.l.b16 %v935
      %v2597 = vunpack.c.l.b16 %v936
      %v2598 = vunpack.c.l.b16 %v937
      %v2599 = vunpack.c.l.b16 %v938
      %v2600 = vunpack.c.l.b16 %v939
      %v2601 = vunpack.c.l.b16 %v940
      %v2602 = vunpack.c.l.b16 %v941
      %v2603 = vunpack.c.l.b16 %v942
      %v2604 = vunpack.c.l.b16 %v943
      %v2605 = vunpack.c.l.b16 %v944
      %v2606 = vunpack.c.l.b16 %v945
      %v2607 = vunpack.c.l.b16 %v946
      %v2608 = vunpack.c.l.b16 %v947
      %v2609 = vunpack.c.l.b16 %v948
      %v2610 = vunpack.c.l.b16 %v949
      %v2611 = vunpack.c.l.b16 %v950
      %v2612 = vunpack.c.l.b16 %v951
      %v2613 = vunpack.c.l.b16 %v952
      %v2614 = vunpack.c.l.b16 %v953
      %v2615 = vunpack.c.l.b16 %v954
      %v2616 = vunpack.c.l.b16 %v955
      %v2617 = vunpack.c.l.b16 %v956
      %v2618 = vunpack.c.l.b16 %v957
      %v2619 = vunpack.c.l.b16 %v958
      %v2620 = vunpack.c.l.b16 %v959
      %v2621 = vunpack.c.l.b16 %v960
      %v2622 = vunpack.c.l.b16 %v961
      %v2623 = vunpack.c.l.b16 %v962
      %v2624 = vunpack.c.l.b16 %v963
      %v2625 = vunpack.c.l.b16 %v964
      %v2626 = vunpack.c.l.b16 %v965
      %v2627 = vunpack.c.l.b16 %v966
      %v2628 = vunpack.c.l.b16 %v967
      %v2629 = vunpack.c.l.b16 %v968
      %v2630 = vunpack.c.l.b16 %v969
      %v2631 = vpack.c.b16 %v2584, %v2583
      %v2632 = vpack.c.b16 %v2586, %v2585
      %v2633 = vpack.c.b16 %v2588, %v2587
      %v2634 = vpack.c.b16 %v2590, %v2589
      %v2635 = vpack.c.b16 %v2592, %v2591
      %v2636 = vpack.c.b16 %v2594, %v2593
      %v2637 = vpack.c.b16 %v2596, %v2595
      %v2638 = vpack.c.b16 %v2598, %v2597
      %v2639 = vpack.c.b16 %v2600, %v2599
      %v2640 = vpack.c.b16 %v2602, %v2601
      %v2641 = vpack.c.b16 %v2604, %v2603
      %v2642 = vpack.c.b16 %v2606, %v2605
      %v2643 = vpack.c.b16 %v2608, %v2607
      %v2644 = vpack.c.b16 %v2610, %v2609
      %v2645 = vpack.c.b16 %v2612, %v2611
      %v2646 = vpack.c.b16 %v2614, %v2613
      %v2647 = vpack.c.b16 %v2616, %v2615
      %v2648 = vpack.c.b16 %v2618, %v2617
      %v2649 = vpack.c.b16 %v2620, %v2619
      %v2650 = vpack.c.b16 %v2622, %v2621
      %v2651 = vpack.c.b16 %v2624, %v2623
      %v2652 = vpack.c.b16 %v2626, %v2625
      %v2653 = vpack.c.b16 %v2628, %v2627
      %v2654 = vpack.c.b16 %v2630, %v2629
      %2679 = vmatprep.subr.bf16.mxu0 0
      %2680 = vmatpush1.bf16.msra.mxu0 %v2631
      %2681 = vmatprep.subr.bf16.mxu0 0
      %2682 = vmatpush1.bf16.msra.mxu0 %v2632
      %2683 = vmatprep.subr.bf16.mxu0 0
      %2684 = vmatpush1.bf16.msra.mxu0 %v2633
      %2685 = vmatprep.subr.bf16.mxu0 0
      %2686 = vmatpush1.bf16.msra.mxu0 %v2634
      %2687 = vmatprep.subr.bf16.mxu0 0
      %2688 = vmatpush1.bf16.msra.mxu0 %v2635
      %2689 = vmatprep.subr.bf16.mxu0 0
      %2690 = vmatpush1.bf16.msra.mxu0 %v2636
      %2691 = vmatprep.subr.bf16.mxu0 0
      %2692 = vmatpush1.bf16.msra.mxu0 %v2637
      %2693 = vmatprep.subr.bf16.mxu0 0
      %2694 = vmatpush1.bf16.msra.mxu0 %v2638
      %2695 = vmatprep.subr.bf16.mxu0 0
      %2696 = vmatpush1.bf16.msra.mxu0 %v2639
      %2697 = vmatprep.subr.bf16.mxu0 0
      %2698 = vmatpush1.bf16.msra.mxu0 %v2640
      %2699 = vmatprep.subr.bf16.mxu0 0
      %2700 = vmatpush1.bf16.msra.mxu0 %v2641
      %2701 = vmatprep.subr.bf16.mxu0 0
      %2702 = vmatpush1.bf16.msra.mxu0 %v2642
      %2703 = vmatprep.subr.bf16.mxu0 0
      %2704 = vmatpush1.bf16.msra.mxu0 %v2643
      %2705 = vmatprep.subr.bf16.mxu0 0
      %2706 = vmatpush1.bf16.msra.mxu0 %v2644
      %2707 = vmatprep.subr.bf16.mxu0 0
      %2708 = vmatpush1.bf16.msra.mxu0 %v2645
      %2709 = vmatprep.subr.bf16.mxu0 0
      %2710 = vmatpush1.bf16.msra.mxu0 %v2646
      %2711 = vmatprep.mubr.bf16.mxu0 %v2172
      %2712 = vmatmul.mubr.bf16.gmra.mrb[0].mxu0 %v2158
      %v2713 = vpop.f32.mrb[0].mxu0
      %v2714 = vadd.f32 %v1961, %v2713
      %v2715 = vpop.f32.mrb[0].mxu0
      %v2716 = vpop.f32.mrb[0].mxu0
      %v2717 = vadd.f32 %v1964, %v2716
      %v2718 = vpop.f32.mrb[0].mxu0
      %2719 = vmatprep.mubr.bf16.mxu0 %v2194
      %2720 = vmatmul.mubr.bf16.gmra.mrb[0].mxu0 %v2190
      %v2721 = vpop.f32.mrb[0].mxu0
      %v2722 = vadd.f32 %v1969, %v2721
      %v2723 = vpop.f32.mrb[0].mxu0
      %v2724 = vpop.f32.mrb[0].mxu0
      %v2725 = vadd.f32 %v1972, %v2724
      %v2726 = vpop.f32.mrb[0].mxu0
      %2727 = vmatprep.mubr.bf16.mxu0 %v2206
      %2728 = vmatmul.mubr.bf16.gmra.mrb[0].mxu0 %v2202
      %v2729 = vpop.f32.mrb[0].mxu0
      %v2730 = vadd.f32 %v1977, %v2729
      %v2731 = vpop.f32.mrb[0].mxu0
      %v2732 = vpop.f32.mrb[0].mxu0
      %v2733 = vadd.f32 %v1980, %v2732
      %v2734 = vpop.f32.mrb[0].mxu0
      %2735 = vmatprep.mubr.bf16.mxu0 %v2218
      %2736 = vmatmul.mubr.bf16.gmra.mrb[0].mxu0 %v2214
      %v2737 = vpop.f32.mrb[0].mxu0
      %v2738 = vadd.f32 %v1985, %v2737
      %v2739 = vpop.f32.mrb[0].mxu0
      %v2740 = vpop.f32.mrb[0].mxu0
      %v2741 = vadd.f32 %v1988, %v2740
      %v2742 = vpop.f32.mrb[0].mxu0
      %2743 = vmatprep.mubr.bf16.mxu0 %v2230
      %2744 = vmatmul.mubr.bf16.gmra.mrb[0].mxu0 %v2226
      %v2745 = vpop.f32.mrb[0].mxu0
      %v2746 = vadd.f32 %v1993, %v2745
      %v2747 = vpop.f32.mrb[0].mxu0
      %v2748 = vpop.f32.mrb[0].mxu0
      %v2749 = vadd.f32 %v1996, %v2748
      %v2750 = vpop.f32.mrb[0].mxu0
      %2751 = vmatprep.mubr.bf16.mxu0 %v2242
      %2752 = vmatmul.mubr.bf16.gmra.mrb[0].mxu0 %v2238
      %v2753 = vpop.f32.mrb[0].mxu0
      %v2754 = vadd.f32 %v2001, %v2753
      %v2755 = vpop.f32.mrb[0].mxu0
      %v2756 = vpop.f32.mrb[0].mxu0
      %v2757 = vadd.f32 %v2004, %v2756
      %v2758 = vpop.f32.mrb[0].mxu0
      %2759 = vmatprep.mubr.bf16.mxu0 %v2254
      %2760 = vmatmul.mubr.bf16.gmra.mrb[0].mxu0 %v2250
      %v2761 = vpop.f32.mrb[0].mxu0
      %v2762 = vadd.f32 %v2009, %v2761
      %v2763 = vpop.f32.mrb[0].mxu0
      %v2764 = vpop.f32.mrb[0].mxu0
      %v2765 = vadd.f32 %v2012, %v2764
      %v2766 = vpop.f32.mrb[0].mxu0
      %2767 = vmatprep.mubr.bf16.mxu0 %v2266
      %2768 = vmatmul.mubr.bf16.gmra.mrb[0].mxu0 %v2262
      %v2769 = vpop.f32.mrb[0].mxu0
      %v2770 = vadd.f32 %v2017, %v2769
      %v2771 = vpop.f32.mrb[0].mxu0
      %v2772 = vpop.f32.mrb[0].mxu0
      %v2773 = vadd.f32 %v2020, %v2772
      %v2774 = vpop.f32.mrb[0].mxu0
      %2775 = vmatprep.mubr.bf16.mxu0 %v2278
      %2776 = vmatmul.mubr.bf16.gmra.mrb[0].mxu0 %v2274
      %v2777 = vpop.f32.mrb[0].mxu0
      %v2778 = vadd.f32 %v2025, %v2777
      %v2779 = vpop.f32.mrb[0].mxu0
      %v2780 = vpop.f32.mrb[0].mxu0
      %v2781 = vadd.f32 %v2028, %v2780
      %v2782 = vpop.f32.mrb[0].mxu0
      %2783 = vmatprep.mubr.bf16.mxu0 %v2290
      %2784 = vmatmul.mubr.bf16.gmra.mrb[0].mxu0 %v2286
      %v2785 = vpop.f32.mrb[0].mxu0
      %v2786 = vadd.f32 %v2033, %v2785
      %v2787 = vpop.f32.mrb[0].mxu0
      %v2788 = vpop.f32.mrb[0].mxu0
      %v2789 = vadd.f32 %v2036, %v2788
      %v2790 = vpop.f32.mrb[0].mxu0
      %2791 = vmatprep.mubr.bf16.mxu0 %v2302
      %2792 = vmatmul.mubr.bf16.gmra.mrb[0].mxu0 %v2298
      %v2793 = vpop.f32.mrb[0].mxu0
      %v2794 = vadd.f32 %v2041, %v2793
      %v2795 = vpop.f32.mrb[0].mxu0
      %v2796 = vpop.f32.mrb[0].mxu0
      %v2797 = vadd.f32 %v2044, %v2796
      %v2798 = vpop.f32.mrb[0].mxu0
      %2799 = vmatprep.mubr.bf16.mxu0 %v2314
      %2800 = vmatmul.mubr.bf16.gmra.mrb[0].mxu0 %v2310
      %v2801 = vpop.f32.mrb[0].mxu0
      %v2802 = vadd.f32 %v2049, %v2801
      %v2803 = vpop.f32.mrb[0].mxu0
      %v2804 = vpop.f32.mrb[0].mxu0
      %v2805 = vadd.f32 %v2052, %v2804
      %v2806 = vpop.f32.mrb[0].mxu0
      %2807 = vmatprep.mubr.bf16.mxu0 %v2326
      %2808 = vmatmul.mubr.bf16.gmra.mrb[0].mxu0 %v2322
      %v2809 = vpop.f32.mrb[0].mxu0
      %v2810 = vadd.f32 %v2057, %v2809
      %v2811 = vpop.f32.mrb[0].mxu0
      %v2812 = vpop.f32.mrb[0].mxu0
      %v2813 = vadd.f32 %v2060, %v2812
      %v2814 = vpop.f32.mrb[0].mxu0
      %2815 = vmatprep.mubr.bf16.mxu0 %v2338
      %2816 = vmatmul.mubr.bf16.gmra.mrb[0].mxu0 %v2334
      %v2817 = vpop.f32.mrb[0].mxu0
      %v2818 = vadd.f32 %v2065, %v2817
      %v2819 = vpop.f32.mrb[0].mxu0
      %v2820 = vpop.f32.mrb[0].mxu0
      %v2821 = vadd.f32 %v2068, %v2820
      %v2822 = vpop.f32.mrb[0].mxu0
      %2823 = vmatprep.mubr.bf16.mxu0 %v2350
      %2824 = vmatmul.mubr.bf16.gmra.mrb[0].mxu0 %v2346
      %v2825 = vpop.f32.mrb[0].mxu0
      %v2826 = vadd.f32 %v2073, %v2825
      %v2827 = vpop.f32.mrb[0].mxu0
      %v2828 = vpop.f32.mrb[0].mxu0
      %v2829 = vadd.f32 %v2076, %v2828
      %v2830 = vpop.f32.mrb[0].mxu0
      %2831 = vmatprep.mubr.bf16.mxu0 %v2362
      %2832 = vmatmul.mubr.bf16.gmra.mrb[0].mxu0 %v2358
      %v2833 = vpop.f32.mrb[0].mxu0
      %v2834 = vadd.f32 %v2081, %v2833
      %v2835 = vpop.f32.mrb[0].mxu0
      %v2836 = vpop.f32.mrb[0].mxu0
      %v2837 = vadd.f32 %v2084, %v2836
      %v2838 = vpop.f32.mrb[0].mxu0
      %2839 = vmatprep.mubr.bf16.mxu0 %v2374
      %2840 = vmatmul.mubr.bf16.gmra.mrb[0].mxu0 %v2370
      %v2841 = vpop.f32.mrb[0].mxu0
      %v2842 = vadd.f32 %v2089, %v2841
      %v2843 = vpop.f32.mrb[0].mxu0
      %v2844 = vpop.f32.mrb[0].mxu0
      %v2845 = vadd.f32 %v2092, %v2844
      %v2846 = vpop.f32.mrb[0].mxu0
      %2847 = vmatprep.mubr.bf16.mxu0 %v2386
      %2848 = vmatmul.mubr.bf16.gmra.mrb[0].mxu0 %v2382
      %v2849 = vpop.f32.mrb[0].mxu0
      %v2850 = vadd.f32 %v2097, %v2849
      %v2851 = vpop.f32.mrb[0].mxu0
      %v2852 = vpop.f32.mrb[0].mxu0
      %v2853 = vadd.f32 %v2100, %v2852
      %v2854 = vpop.f32.mrb[0].mxu0
      %2855 = vmatprep.mubr.bf16.mxu0 %v2398
      %2856 = vmatmul.mubr.bf16.gmra.mrb[0].mxu0 %v2394
      %v2857 = vpop.f32.mrb[0].mxu0
      %v2858 = vadd.f32 %v2105, %v2857
      %v2859 = vpop.f32.mrb[0].mxu0
      %v2860 = vpop.f32.mrb[0].mxu0
      %v2861 = vadd.f32 %v2108, %v2860
      %v2862 = vpop.f32.mrb[0].mxu0
      %2863 = vmatprep.mubr.bf16.mxu0 %v2410
      %2864 = vmatmul.mubr.bf16.gmra.mrb[0].mxu0 %v2406
      %v2865 = vpop.f32.mrb[0].mxu0
      %v2866 = vadd.f32 %v2113, %v2865
      %v2867 = vpop.f32.mrb[0].mxu0
      %v2868 = vpop.f32.mrb[0].mxu0
      %v2869 = vadd.f32 %v2116, %v2868
      %v2870 = vpop.f32.mrb[0].mxu0
      %2871 = vmatprep.mubr.bf16.mxu0 %v2422
      %2872 = vmatmul.mubr.bf16.gmra.mrb[0].mxu0 %v2418
      %v2873 = vpop.f32.mrb[0].mxu0
      %v2874 = vadd.f32 %v2121, %v2873
      %v2875 = vpop.f32.mrb[0].mxu0
      %v2876 = vpop.f32.mrb[0].mxu0
      %v2877 = vadd.f32 %v2124, %v2876
      %v2878 = vpop.f32.mrb[0].mxu0
      %2879 = vmatprep.mubr.bf16.mxu0 %v2434
      %2880 = vmatmul.mubr.bf16.gmra.mrb[0].mxu0 %v2430
      %v2881 = vpop.f32.mrb[0].mxu0
      %v2882 = vadd.f32 %v2129, %v2881
      %v2883 = vpop.f32.mrb[0].mxu0
      %v2884 = vpop.f32.mrb[0].mxu0
      %v2885 = vadd.f32 %v2132, %v2884
      %v2886 = vpop.f32.mrb[0].mxu0
      %2887 = vmatprep.mubr.bf16.mxu0 %v2446
      %2888 = vmatmul.mubr.bf16.gmra.mrb[0].mxu0 %v2442
      %v2889 = vpop.f32.mrb[0].mxu0
      %v2890 = vadd.f32 %v2137, %v2889
      %v2891 = vpop.f32.mrb[0].mxu0
      %v2892 = vpop.f32.mrb[0].mxu0
      %v2893 = vadd.f32 %v2140, %v2892
      %v2894 = vpop.f32.mrb[0].mxu0
      %2895 = vmatprep.mubr.bf16.mxu0 %v2458
      %2896 = vmatmul.mubr.bf16.gmra.mrb[0].mxu0 %v2454
      %v2897 = vpop.f32.mrb[0].mxu0
      %v2898 = vadd.f32 %v2145, %v2897
      %v2899 = vpop.f32.mrb[0].mxu0
      %v2900 = vpop.f32.mrb[0].mxu0
      %v2901 = vadd.f32 %v2148, %v2900
      %v2902 = vpop.f32.mrb[0].mxu0
      %2903 = vdwg.mxu0
      %2904 = vmatprep.subr.bf16.mxu0 0
      %2905 = vmatpush1.bf16.msra.mxu0 %v2647
      %2906 = vmatprep.subr.bf16.mxu0 0
      %2907 = vmatpush1.bf16.msra.mxu0 %v2648
      %2908 = vmatprep.subr.bf16.mxu0 0
      %2909 = vmatpush1.bf16.msra.mxu0 %v2649
      %2910 = vmatprep.subr.bf16.mxu0 0
      %2911 = vmatpush1.bf16.msra.mxu0 %v2650
      %2912 = vmatprep.subr.bf16.mxu0 0
      %2913 = vmatpush1.bf16.msra.mxu0 %v2651
      %2914 = vmatprep.subr.bf16.mxu0 0
      %2915 = vmatpush1.bf16.msra.mxu0 %v2652
      %2916 = vmatprep.subr.bf16.mxu0 0
      %2917 = vmatpush1.bf16.msra.mxu0 %v2653
      %2918 = vmatprep.subr.bf16.mxu0 0
      %2919 = vmatpush1.bf16.msra.mxu0 %v2654
      %2920 = vmatprep.subr.bf16.mxu0 0
      %2921 = vmatpush1.bf16.msra.mxu0 0
      %2922 = vmatprep.subr.bf16.mxu0 0
      %2923 = vmatpush1.bf16.msra.mxu0 0
      %2924 = vmatprep.subr.bf16.mxu0 0
      %2925 = vmatpush1.bf16.msra.mxu0 0
      %2926 = vmatprep.subr.bf16.mxu0 0
      %2927 = vmatpush1.bf16.msra.mxu0 0
      %2928 = vmatprep.subr.bf16.mxu0 0
      %2929 = vmatpush1.bf16.msra.mxu0 0
      %2930 = vmatprep.subr.bf16.mxu0 0
      %2931 = vmatpush1.bf16.msra.mxu0 0
      %2932 = vmatprep.subr.bf16.mxu0 0
      %2933 = vmatpush1.bf16.msra.mxu0 0
      %2934 = vmatprep.subr.bf16.mxu0 0
      %2935 = vmatpush1.bf16.msra.mxu0 0
      %2936 = vmatprep.mubr.bf16.mxu0 0
      %2937 = vmatmul.mubr.bf16.gmra.mrb[0].mxu0 %v2186
      %v2938 = vpop.f32.mrb[0].mxu0
      %v2939 = vadd.f32 %v2714, %v2938
      %v2940 = vpop.f32.mrb[0].mxu0
      %v2941 = vpop.f32.mrb[0].mxu0
      %v2942 = vadd.f32 %v2717, %v2941
      %v2943 = vpop.f32.mrb[0].mxu0
      %2944 = vmatprep.mubr.bf16.mxu0 0
      %2945 = vmatmul.mubr.bf16.gmra.mrb[0].mxu0 %v2198
      %v2946 = vpop.f32.mrb[0].mxu0
      %v2947 = vadd.f32 %v2722, %v2946
      %v2948 = vpop.f32.mrb[0].mxu0
      %v2949 = vpop.f32.mrb[0].mxu0
      %v2950 = vadd.f32 %v2725, %v2949
      %v2951 = vpop.f32.mrb[0].mxu0
      %2952 = vmatprep.mubr.bf16.mxu0 0
      %2953 = vmatmul.mubr.bf16.gmra.mrb[0].mxu0 %v2210
      %v2954 = vpop.f32.mrb[0].mxu0
      %v2955 = vadd.f32 %v2730, %v2954
      %v2956 = vpop.f32.mrb[0].mxu0
      %v2957 = vpop.f32.mrb[0].mxu0
      %v2958 = vadd.f32 %v2733, %v2957
      %v2959 = vpop.f32.mrb[0].mxu0
      %2960 = vmatprep.mubr.bf16.mxu0 0
      %2961 = vmatmul.mubr.bf16.gmra.mrb[0].mxu0 %v2222
      %v2962 = vpop.f32.mrb[0].mxu0
      %v2963 = vadd.f32 %v2738, %v2962
      %v2964 = vpop.f32.mrb[0].mxu0
      %v2965 = vpop.f32.mrb[0].mxu0
      %v2966 = vadd.f32 %v2741, %v2965
      %v2967 = vpop.f32.mrb[0].mxu0
      %2968 = vmatprep.mubr.bf16.mxu0 0
      %2969 = vmatmul.mubr.bf16.gmra.mrb[0].mxu0 %v2234
      %v2970 = vpop.f32.mrb[0].mxu0
      %v2971 = vadd.f32 %v2746, %v2970
      %v2972 = vpop.f32.mrb[0].mxu0
      %v2973 = vpop.f32.mrb[0].mxu0
      %v2974 = vadd.f32 %v2749, %v2973
      %v2975 = vpop.f32.mrb[0].mxu0
      %2976 = vmatprep.mubr.bf16.mxu0 0
      %2977 = vmatmul.mubr.bf16.gmra.mrb[0].mxu0 %v2246
      %v2978 = vpop.f32.mrb[0].mxu0
      %v2979 = vadd.f32 %v2754, %v2978
      %v2980 = vpop.f32.mrb[0].mxu0
      %v2981 = vpop.f32.mrb[0].mxu0
      %v2982 = vadd.f32 %v2757, %v2981
      %v2983 = vpop.f32.mrb[0].mxu0
      %2984 = vmatprep.mubr.bf16.mxu0 0
      %2985 = vmatmul.mubr.bf16.gmra.mrb[0].mxu0 %v2258
      %v2986 = vpop.f32.mrb[0].mxu0
      %v2987 = vadd.f32 %v2762, %v2986
      %v2988 = vpop.f32.mrb[0].mxu0
      %v2989 = vpop.f32.mrb[0].mxu0
      %v2990 = vadd.f32 %v2765, %v2989
      %v2991 = vpop.f32.mrb[0].mxu0
      %2992 = vmatprep.mubr.bf16.mxu0 0
      %2993 = vmatmul.mubr.bf16.gmra.mrb[0].mxu0 %v2270
      %v2994 = vpop.f32.mrb[0].mxu0
      %v2995 = vadd.f32 %v2770, %v2994
      %v2996 = vpop.f32.mrb[0].mxu0
      %v2997 = vpop.f32.mrb[0].mxu0
      %v2998 = vadd.f32 %v2773, %v2997
      %v2999 = vpop.f32.mrb[0].mxu0
      %3000 = vmatprep.mubr.bf16.mxu0 0
      %3001 = vmatmul.mubr.bf16.gmra.mrb[0].mxu0 %v2282
      %v3002 = vpop.f32.mrb[0].mxu0
      %v3003 = vadd.f32 %v2778, %v3002
      %v3004 = vpop.f32.mrb[0].mxu0
      %v3005 = vpop.f32.mrb[0].mxu0
      %v3006 = vadd.f32 %v2781, %v3005
      %v3007 = vpop.f32.mrb[0].mxu0
      %3008 = vmatprep.mubr.bf16.mxu0 0
      %3009 = vmatmul.mubr.bf16.gmra.mrb[0].mxu0 %v2294
      %v3010 = vpop.f32.mrb[0].mxu0
      %v3011 = vadd.f32 %v2786, %v3010
      %v3012 = vpop.f32.mrb[0].mxu0
      %v3013 = vpop.f32.mrb[0].mxu0
      %v3014 = vadd.f32 %v2789, %v3013
      %v3015 = vpop.f32.mrb[0].mxu0
      %3016 = vmatprep.mubr.bf16.mxu0 0
      %3017 = vmatmul.mubr.bf16.gmra.mrb[0].mxu0 %v2306
      %v3018 = vpop.f32.mrb[0].mxu0
      %v3019 = vadd.f32 %v2794, %v3018
      %v3020 = vpop.f32.mrb[0].mxu0
      %v3021 = vpop.f32.mrb[0].mxu0
      %v3022 = vadd.f32 %v2797, %v3021
      %v3023 = vpop.f32.mrb[0].mxu0
      %3024 = vmatprep.mubr.bf16.mxu0 0
      %3025 = vmatmul.mubr.bf16.gmra.mrb[0].mxu0 %v2318
      %v3026 = vpop.f32.mrb[0].mxu0
      %v3027 = vadd.f32 %v2802, %v3026
      %v3028 = vpop.f32.mrb[0].mxu0
      %v3029 = vpop.f32.mrb[0].mxu0
      %v3030 = vadd.f32 %v2805, %v3029
      %v3031 = vpop.f32.mrb[0].mxu0
      %3032 = vmatprep.mubr.bf16.mxu0 0
      %3033 = vmatmul.mubr.bf16.gmra.mrb[0].mxu0 %v2330
      %v3034 = vpop.f32.mrb[0].mxu0
      %v3035 = vadd.f32 %v2810, %v3034
      %v3036 = vpop.f32.mrb[0].mxu0
      %v3037 = vpop.f32.mrb[0].mxu0
      %v3038 = vadd.f32 %v2813, %v3037
      %v3039 = vpop.f32.mrb[0].mxu0
      %3040 = vmatprep.mubr.bf16.mxu0 0
      %3041 = vmatmul.mubr.bf16.gmra.mrb[0].mxu0 %v2342
      %v3042 = vpop.f32.mrb[0].mxu0
      %v3043 = vadd.f32 %v2818, %v3042
      %v3044 = vpop.f32.mrb[0].mxu0
      %v3045 = vpop.f32.mrb[0].mxu0
      %v3046 = vadd.f32 %v2821, %v3045
      %v3047 = vpop.f32.mrb[0].mxu0
      %3048 = vmatprep.mubr.bf16.mxu0 0
      %3049 = vmatmul.mubr.bf16.gmra.mrb[0].mxu0 %v2354
      %v3050 = vpop.f32.mrb[0].mxu0
      %v3051 = vadd.f32 %v2826, %v3050
      %v3052 = vpop.f32.mrb[0].mxu0
      %v3053 = vpop.f32.mrb[0].mxu0
      %v3054 = vadd.f32 %v2829, %v3053
      %v3055 = vpop.f32.mrb[0].mxu0
      %3056 = vmatprep.mubr.bf16.mxu0 0
      %3057 = vmatmul.mubr.bf16.gmra.mrb[0].mxu0 %v2366
      %v3058 = vpop.f32.mrb[0].mxu0
      %v3059 = vadd.f32 %v2834, %v3058
      %v3060 = vpop.f32.mrb[0].mxu0
      %v3061 = vpop.f32.mrb[0].mxu0
      %v3062 = vadd.f32 %v2837, %v3061
      %v3063 = vpop.f32.mrb[0].mxu0
      %3064 = vmatprep.mubr.bf16.mxu0 0
      %3065 = vmatmul.mubr.bf16.gmra.mrb[0].mxu0 %v2378
      %v3066 = vpop.f32.mrb[0].mxu0
      %v3067 = vadd.f32 %v2842, %v3066
      %v3068 = vpop.f32.mrb[0].mxu0
      %v3069 = vpop.f32.mrb[0].mxu0
      %v3070 = vadd.f32 %v2845, %v3069
      %v3071 = vpop.f32.mrb[0].mxu0
      %3072 = vmatprep.mubr.bf16.mxu0 0
      %3073 = vmatmul.mubr.bf16.gmra.mrb[0].mxu0 %v2390
      %v3074 = vpop.f32.mrb[0].mxu0
      %v3075 = vadd.f32 %v2850, %v3074
      %v3076 = vpop.f32.mrb[0].mxu0
      %v3077 = vpop.f32.mrb[0].mxu0
      %v3078 = vadd.f32 %v2853, %v3077
      %v3079 = vpop.f32.mrb[0].mxu0
      %3080 = vmatprep.mubr.bf16.mxu0 0
      %3081 = vmatmul.mubr.bf16.gmra.mrb[0].mxu0 %v2402
      %v3082 = vpop.f32.mrb[0].mxu0
      %v3083 = vadd.f32 %v2858, %v3082
      %v3084 = vpop.f32.mrb[0].mxu0
      %v3085 = vpop.f32.mrb[0].mxu0
      %v3086 = vadd.f32 %v2861, %v3085
      %v3087 = vpop.f32.mrb[0].mxu0
      %3088 = vmatprep.mubr.bf16.mxu0 0
      %3089 = vmatmul.mubr.bf16.gmra.mrb[0].mxu0 %v2414
      %v3090 = vpop.f32.mrb[0].mxu0
      %v3091 = vadd.f32 %v2866, %v3090
      %v3092 = vpop.f32.mrb[0].mxu0
      %v3093 = vpop.f32.mrb[0].mxu0
      %v3094 = vadd.f32 %v2869, %v3093
      %v3095 = vpop.f32.mrb[0].mxu0
      %3096 = vmatprep.mubr.bf16.mxu0 0
      %3097 = vmatmul.mubr.bf16.gmra.mrb[0].mxu0 %v2426
      %v3098 = vpop.f32.mrb[0].mxu0
      %v3099 = vadd.f32 %v2874, %v3098
      %v3100 = vpop.f32.mrb[0].mxu0
      %v3101 = vpop.f32.mrb[0].mxu0
      %v3102 = vadd.f32 %v2877, %v3101
      %v3103 = vpop.f32.mrb[0].mxu0
      %3104 = vmatprep.mubr.bf16.mxu0 0
      %3105 = vmatmul.mubr.bf16.gmra.mrb[0].mxu0 %v2438
      %v3106 = vpop.f32.mrb[0].mxu0
      %v3107 = vadd.f32 %v2882, %v3106
      %v3108 = vpop.f32.mrb[0].mxu0
      %v3109 = vpop.f32.mrb[0].mxu0
      %v3110 = vadd.f32 %v2885, %v3109
      %v3111 = vpop.f32.mrb[0].mxu0
      %3112 = vmatprep.mubr.bf16.mxu0 0
      %3113 = vmatmul.mubr.bf16.gmra.mrb[0].mxu0 %v2450
      %v3114 = vpop.f32.mrb[0].mxu0
      %v3115 = vadd.f32 %v2890, %v3114
      %v3116 = vpop.f32.mrb[0].mxu0
      %v3117 = vpop.f32.mrb[0].mxu0
      %v3118 = vadd.f32 %v2893, %v3117
      %v3119 = vpop.f32.mrb[0].mxu0
      %3120 = vmatprep.mubr.bf16.mxu0 0
      %3121 = vmatmul.mubr.bf16.gmra.mrb[0].mxu0 %v2462
      %v3122 = vpop.f32.mrb[0].mxu0
      %v3123 = vadd.f32 %v2898, %v3122
      %v3124 = vpop.f32.mrb[0].mxu0
      %v3125 = vpop.f32.mrb[0].mxu0
      %v3126 = vadd.f32 %v2901, %v3125
      %v3127 = vpop.f32.mrb[0].mxu0
      %3128 = vdwg.mxu0
      %s3129 = scalar_lea.vmem %s3, 384
      %v3130 = vld [vmem:[%s3129] sm:$0xf]
      %v3131 = vld [vmem:[%s3129 + $0x4] sm:$0xf]
      %v3132 = vld [vmem:[%s3129 + $0x8] sm:$0xf]
      %v3133 = vld [vmem:[%s3129 + $0xc] sm:$0xf]
      %v3134 = vld [vmem:[%s3129 + $0x10] sm:$0xf]
      %v3135 = vld [vmem:[%s3129 + $0x14] sm:$0xf]
      %v3136 = vld [vmem:[%s3129 + $0x18] sm:$0xf]
      %v3137 = vld [vmem:[%s3129 + $0x1c] sm:$0xf]
      %v3138 = vld [vmem:[%s3129 + $0x20] sm:$0xf]
      %v3139 = vld [vmem:[%s3129 + $0x24] sm:$0xf]
      %v3140 = vld [vmem:[%s3129 + $0x28] sm:$0xf]
      %v3141 = vld [vmem:[%s3129 + $0x2c] sm:$0xf]
      %v3142 = vld [vmem:[%s3129 + $0x30] sm:$0xf]
      %v3143 = vld [vmem:[%s3129 + $0x34] sm:$0xf]
      %v3144 = vld [vmem:[%s3129 + $0x38] sm:$0xf]
      %v3145 = vld [vmem:[%s3129 + $0x3c] sm:$0xf]
      %v3146 = vld [vmem:[%s3129 + $0x40] sm:$0xf]
      %v3147 = vld [vmem:[%s3129 + $0x44] sm:$0xf]
      %v3148 = vld [vmem:[%s3129 + $0x48] sm:$0xf]
      %v3149 = vld [vmem:[%s3129 + $0x4c] sm:$0xf]
      %v3150 = vld [vmem:[%s3129 + $0x50] sm:$0xf]
      %v3151 = vld [vmem:[%s3129 + $0x54] sm:$0xf]
      %v3152 = vld [vmem:[%s3129 + $0x58] sm:$0xf]
      %v3153 = vld [vmem:[%s3129 + $0x5c] sm:$0xf]
      %v3154 = vld [vmem:[%s3129 + $0x60] sm:$0xf]
      %v3155 = vld [vmem:[%s3129 + $0x64] sm:$0xf]
      %v3156 = vld [vmem:[%s3129 + $0x68] sm:$0xf]
      %v3157 = vld [vmem:[%s3129 + $0x6c] sm:$0xf]
      %v3158 = vld [vmem:[%s3129 + $0x70] sm:$0xf]
      %v3159 = vld [vmem:[%s3129 + $0x74] sm:$0xf]
      %v3160 = vld [vmem:[%s3129 + $0x78] sm:$0xf]
      %v3161 = vld [vmem:[%s3129 + $0x7c] sm:$0xf]
      %v3162 = vld [vmem:[%s3129 + $0x80] sm:$0xf]
      %v3163 = vld [vmem:[%s3129 + $0x84] sm:$0xf]
      %v3164 = vld [vmem:[%s3129 + $0x88] sm:$0xf]
      %v3165 = vld [vmem:[%s3129 + $0x8c] sm:$0xf]
      %v3166 = vld [vmem:[%s3129 + $0x90] sm:$0xf]
      %v3167 = vld [vmem:[%s3129 + $0x94] sm:$0xf]
      %v3168 = vld [vmem:[%s3129 + $0x98] sm:$0xf]
      %v3169 = vld [vmem:[%s3129 + $0x9c] sm:$0xf]
      %v3170 = vld [vmem:[%s3129 + $0xa0] sm:$0xf]
      %v3171 = vld [vmem:[%s3129 + $0xa4] sm:$0xf]
      %v3172 = vld [vmem:[%s3129 + $0xa8] sm:$0xf]
      %v3173 = vld [vmem:[%s3129 + $0xac] sm:$0xf]
      %v3174 = vld [vmem:[%s3129 + $0xb0] sm:$0xf]
      %v3175 = vld [vmem:[%s3129 + $0xb4] sm:$0xf]
      %v3176 = vld [vmem:[%s3129 + $0xb8] sm:$0xf]
      %v3177 = vld [vmem:[%s3129 + $0xbc] sm:$0xf]
      %v3178 = vrot.slane %v846, 3
      %v3179 = vrot.slane %v842, 4
      %v3180 = vor.u32 %v3178, %v3179
      %v3181 = vsel %vm2151, %v2453, %v3180
      %v3182 = vrot.slane %v1470, 3
      %v3183 = vrot.slane %v1473, 4
      %v3184 = vor.u32 %v3182, %v3183
      %v3185 = vsel %vm2151, %v2457, %v3184
      %v3186 = vrot.slane %v1478, 3
      %v3187 = vrot.slane %v1481, 4
      %v3188 = vor.u32 %v3186, %v3187
      %v3189 = vsel %vm2151, %v2461, %v3188
      %v3190 = vrot.slane %v854, 3
      %v3191 = vrot.slane %v850, 4
      %v3192 = vor.u32 %v3190, %v3191
      %v3193 = vsel %vm2151, %v3180, %v3192
      %v3195 = vshrl.u32 %v860, 16
      %v3197 = vrot.slane %v3195, 3
      %v3198 = vshll.u32 %v860, 16
      %v3200 = vrot.slane %v3198, 4
      %v3201 = vor.u32 %v3197, %v3200
      %v3202 = vsel %vm2151, %v3184, %v3201
      %v3204 = vshrl.u32 %v921, 16
      %v3206 = vrot.slane %v3204, 3
      %v3207 = vshll.u32 %v921, 16
      %v3209 = vrot.slane %v3207, 4
      %v3210 = vor.u32 %v3206, %v3209
      %v3211 = vsel %vm2151, %v3188, %v3210
      %v3212 = vrot.slane %v861, 3
      %v3213 = vrot.slane %v857, 4
      %v3214 = vor.u32 %v3212, %v3213
      %v3215 = vsel %vm2151, %v3192, %v3214
      %v3217 = vshrl.u32 %v863, 16
      %v3219 = vrot.slane %v3217, 3
      %v3220 = vshll.u32 %v863, 16
      %v3222 = vrot.slane %v3220, 4
      %v3223 = vor.u32 %v3219, %v3222
      %v3224 = vsel %vm2151, %v3201, %v3223
      %v3226 = vshrl.u32 %v920, 16
      %v3228 = vrot.slane %v3226, 3
      %v3229 = vshll.u32 %v920, 16
      %v3231 = vrot.slane %v3229, 4
      %v3232 = vor.u32 %v3228, %v3231
      %v3233 = vsel %vm2151, %v3210, %v3232
      %v3291 = vunpack.c.l.b16 %v3130
      %v3292 = vunpack.c.l.b16 %v3131
      %v3293 = vunpack.c.l.b16 %v3132
      %v3294 = vunpack.c.l.b16 %v3133
      %v3295 = vunpack.c.l.b16 %v3134
      %v3296 = vunpack.c.l.b16 %v3135
      %v3297 = vunpack.c.l.b16 %v3136
      %v3298 = vunpack.c.l.b16 %v3137
      %v3299 = vunpack.c.l.b16 %v3138
      %v3300 = vunpack.c.l.b16 %v3139
      %v3301 = vunpack.c.l.b16 %v3140
      %v3302 = vunpack.c.l.b16 %v3141
      %v3303 = vunpack.c.l.b16 %v3142
      %v3304 = vunpack.c.l.b16 %v3143
      %v3305 = vunpack.c.l.b16 %v3144
      %v3306 = vunpack.c.l.b16 %v3145
      %v3307 = vunpack.c.l.b16 %v3146
      %v3308 = vunpack.c.l.b16 %v3147
      %v3309 = vunpack.c.l.b16 %v3148
      %v3310 = vunpack.c.l.b16 %v3149
      %v3311 = vunpack.c.l.b16 %v3150
      %v3312 = vunpack.c.l.b16 %v3151
      %v3313 = vunpack.c.l.b16 %v3152
      %v3314 = vunpack.c.l.b16 %v3153
      %v3315 = vunpack.c.l.b16 %v3154
      %v3316 = vunpack.c.l.b16 %v3155
      %v3317 = vunpack.c.l.b16 %v3156
      %v3318 = vunpack.c.l.b16 %v3157
      %v3319 = vunpack.c.l.b16 %v3158
      %v3320 = vunpack.c.l.b16 %v3159
      %v3321 = vunpack.c.l.b16 %v3160
      %v3322 = vunpack.c.l.b16 %v3161
      %v3323 = vunpack.c.l.b16 %v3162
      %v3324 = vunpack.c.l.b16 %v3163
      %v3325 = vunpack.c.l.b16 %v3164
      %v3326 = vunpack.c.l.b16 %v3165
      %v3327 = vunpack.c.l.b16 %v3166
      %v3328 = vunpack.c.l.b16 %v3167
      %v3329 = vunpack.c.l.b16 %v3168
      %v3330 = vunpack.c.l.b16 %v3169
      %v3331 = vunpack.c.l.b16 %v3170
      %v3332 = vunpack.c.l.b16 %v3171
      %v3333 = vunpack.c.l.b16 %v3172
      %v3334 = vunpack.c.l.b16 %v3173
      %v3335 = vunpack.c.l.b16 %v3174
      %v3336 = vunpack.c.l.b16 %v3175
      %v3337 = vunpack.c.l.b16 %v3176
      %v3338 = vunpack.c.l.b16 %v3177
      %v3339 = vpack.c.b16 %v3292, %v3291
      %v3340 = vpack.c.b16 %v3294, %v3293
      %v3341 = vpack.c.b16 %v3296, %v3295
      %v3342 = vpack.c.b16 %v3298, %v3297
      %v3343 = vpack.c.b16 %v3300, %v3299
      %v3344 = vpack.c.b16 %v3302, %v3301
      %v3345 = vpack.c.b16 %v3304, %v3303
      %v3346 = vpack.c.b16 %v3306, %v3305
      %v3347 = vpack.c.b16 %v3308, %v3307
      %v3348 = vpack.c.b16 %v3310, %v3309
      %v3349 = vpack.c.b16 %v3312, %v3311
      %v3350 = vpack.c.b16 %v3314, %v3313
      %v3351 = vpack.c.b16 %v3316, %v3315
      %v3352 = vpack.c.b16 %v3318, %v3317
      %v3353 = vpack.c.b16 %v3320, %v3319
      %v3354 = vpack.c.b16 %v3322, %v3321
      %v3355 = vpack.c.b16 %v3324, %v3323
      %v3356 = vpack.c.b16 %v3326, %v3325
      %v3357 = vpack.c.b16 %v3328, %v3327
      %v3358 = vpack.c.b16 %v3330, %v3329
      %v3359 = vpack.c.b16 %v3332, %v3331
      %v3360 = vpack.c.b16 %v3334, %v3333
      %v3361 = vpack.c.b16 %v3336, %v3335
      %v3362 = vpack.c.b16 %v3338, %v3337
      %3387 = vmatprep.subr.bf16.mxu0 0
      %3388 = vmatpush1.bf16.msra.mxu0 %v3339
      %3389 = vmatprep.subr.bf16.mxu0 0
      %3390 = vmatpush1.bf16.msra.mxu0 %v3340
      %3391 = vmatprep.subr.bf16.mxu0 0
      %3392 = vmatpush1.bf16.msra.mxu0 %v3341
      %3393 = vmatprep.subr.bf16.mxu0 0
      %3394 = vmatpush1.bf16.msra.mxu0 %v3342
      %3395 = vmatprep.subr.bf16.mxu0 0
      %3396 = vmatpush1.bf16.msra.mxu0 %v3343
      %3397 = vmatprep.subr.bf16.mxu0 0
      %3398 = vmatpush1.bf16.msra.mxu0 %v3344
      %3399 = vmatprep.subr.bf16.mxu0 0
      %3400 = vmatpush1.bf16.msra.mxu0 %v3345
      %3401 = vmatprep.subr.bf16.mxu0 0
      %3402 = vmatpush1.bf16.msra.mxu0 %v3346
      %3403 = vmatprep.subr.bf16.mxu0 0
      %3404 = vmatpush1.bf16.msra.mxu0 %v3347
      %3405 = vmatprep.subr.bf16.mxu0 0
      %3406 = vmatpush1.bf16.msra.mxu0 %v3348
      %3407 = vmatprep.subr.bf16.mxu0 0
      %3408 = vmatpush1.bf16.msra.mxu0 %v3349
      %3409 = vmatprep.subr.bf16.mxu0 0
      %3410 = vmatpush1.bf16.msra.mxu0 %v3350
      %3411 = vmatprep.subr.bf16.mxu0 0
      %3412 = vmatpush1.bf16.msra.mxu0 %v3351
      %3413 = vmatprep.subr.bf16.mxu0 0
      %3414 = vmatpush1.bf16.msra.mxu0 %v3352
      %3415 = vmatprep.subr.bf16.mxu0 0
      %3416 = vmatpush1.bf16.msra.mxu0 %v3353
      %3417 = vmatprep.subr.bf16.mxu0 0
      %3418 = vmatpush1.bf16.msra.mxu0 %v3354
      %3419 = vmatprep.mubr.bf16.mxu0 %v2218
      %3420 = vmatmul.mubr.bf16.gmra.mrb[0].mxu0 %v2214
      %v3421 = vpop.f32.mrb[0].mxu0
      %v3422 = vadd.f32 0.0, %v3421
      %v3423 = vpop.f32.mrb[0].mxu0
      %v3424 = vpop.f32.mrb[0].mxu0
      %v3425 = vadd.f32 0.0, %v3424
      %v3426 = vpop.f32.mrb[0].mxu0
      %3427 = vmatprep.mubr.bf16.mxu0 %v2230
      %3428 = vmatmul.mubr.bf16.gmra.mrb[0].mxu0 %v2226
      %v3429 = vpop.f32.mrb[0].mxu0
      %v3430 = vadd.f32 0.0, %v3429
      %v3431 = vpop.f32.mrb[0].mxu0
      %v3432 = vpop.f32.mrb[0].mxu0
      %v3433 = vadd.f32 0.0, %v3432
      %v3434 = vpop.f32.mrb[0].mxu0
      %3435 = vmatprep.mubr.bf16.mxu0 %v2242
      %3436 = vmatmul.mubr.bf16.gmra.mrb[0].mxu0 %v2238
      %v3437 = vpop.f32.mrb[0].mxu0
      %v3438 = vadd.f32 0.0, %v3437
      %v3439 = vpop.f32.mrb[0].mxu0
      %v3440 = vpop.f32.mrb[0].mxu0
      %v3441 = vadd.f32 0.0, %v3440
      %v3442 = vpop.f32.mrb[0].mxu0
      %3443 = vmatprep.mubr.bf16.mxu0 %v2254
      %3444 = vmatmul.mubr.bf16.gmra.mrb[0].mxu0 %v2250
      %v3445 = vpop.f32.mrb[0].mxu0
      %v3446 = vadd.f32 0.0, %v3445
      %v3447 = vpop.f32.mrb[0].mxu0
      %v3448 = vpop.f32.mrb[0].mxu0
      %v3449 = vadd.f32 0.0, %v3448
      %v3450 = vpop.f32.mrb[0].mxu0
      %3451 = vmatprep.mubr.bf16.mxu0 %v2266
      %3452 = vmatmul.mubr.bf16.gmra.mrb[0].mxu0 %v2262
      %v3453 = vpop.f32.mrb[0].mxu0
      %v3454 = vadd.f32 0.0, %v3453
      %v3455 = vpop.f32.mrb[0].mxu0
      %v3456 = vpop.f32.mrb[0].mxu0
      %v3457 = vadd.f32 0.0, %v3456
      %v3458 = vpop.f32.mrb[0].mxu0
      %3459 = vmatprep.mubr.bf16.mxu0 %v2278
      %3460 = vmatmul.mubr.bf16.gmra.mrb[0].mxu0 %v2274
      %v3461 = vpop.f32.mrb[0].mxu0
      %v3462 = vadd.f32 0.0, %v3461
      %v3463 = vpop.f32.mrb[0].mxu0
      %v3464 = vpop.f32.mrb[0].mxu0
      %v3465 = vadd.f32 0.0, %v3464
      %v3466 = vpop.f32.mrb[0].mxu0
      %3467 = vmatprep.mubr.bf16.mxu0 %v2290
      %3468 = vmatmul.mubr.bf16.gmra.mrb[0].mxu0 %v2286
      %v3469 = vpop.f32.mrb[0].mxu0
      %v3470 = vadd.f32 0.0, %v3469
      %v3471 = vpop.f32.mrb[0].mxu0
      %v3472 = vpop.f32.mrb[0].mxu0
      %v3473 = vadd.f32 0.0, %v3472
      %v3474 = vpop.f32.mrb[0].mxu0
      %3475 = vmatprep.mubr.bf16.mxu0 %v2302
      %3476 = vmatmul.mubr.bf16.gmra.mrb[0].mxu0 %v2298
      %v3477 = vpop.f32.mrb[0].mxu0
      %v3478 = vadd.f32 0.0, %v3477
      %v3479 = vpop.f32.mrb[0].mxu0
      %v3480 = vpop.f32.mrb[0].mxu0
      %v3481 = vadd.f32 0.0, %v3480
      %v3482 = vpop.f32.mrb[0].mxu0
      %3483 = vmatprep.mubr.bf16.mxu0 %v2314
      %3484 = vmatmul.mubr.bf16.gmra.mrb[0].mxu0 %v2310
      %v3485 = vpop.f32.mrb[0].mxu0
      %v3486 = vadd.f32 0.0, %v3485
      %v3487 = vpop.f32.mrb[0].mxu0
      %v3488 = vpop.f32.mrb[0].mxu0
      %v3489 = vadd.f32 0.0, %v3488
      %v3490 = vpop.f32.mrb[0].mxu0
      %3491 = vmatprep.mubr.bf16.mxu0 %v2326
      %3492 = vmatmul.mubr.bf16.gmra.mrb[0].mxu0 %v2322
      %v3493 = vpop.f32.mrb[0].mxu0
      %v3494 = vadd.f32 0.0, %v3493
      %v3495 = vpop.f32.mrb[0].mxu0
      %v3496 = vpop.f32.mrb[0].mxu0
      %v3497 = vadd.f32 0.0, %v3496
      %v3498 = vpop.f32.mrb[0].mxu0
      %3499 = vmatprep.mubr.bf16.mxu0 %v2338
      %3500 = vmatmul.mubr.bf16.gmra.mrb[0].mxu0 %v2334
      %v3501 = vpop.f32.mrb[0].mxu0
      %v3502 = vadd.f32 0.0, %v3501
      %v3503 = vpop.f32.mrb[0].mxu0
      %v3504 = vpop.f32.mrb[0].mxu0
      %v3505 = vadd.f32 0.0, %v3504
      %v3506 = vpop.f32.mrb[0].mxu0
      %3507 = vmatprep.mubr.bf16.mxu0 %v2350
      %3508 = vmatmul.mubr.bf16.gmra.mrb[0].mxu0 %v2346
      %v3509 = vpop.f32.mrb[0].mxu0
      %v3510 = vadd.f32 0.0, %v3509
      %v3511 = vpop.f32.mrb[0].mxu0
      %v3512 = vpop.f32.mrb[0].mxu0
      %v3513 = vadd.f32 0.0, %v3512
      %v3514 = vpop.f32.mrb[0].mxu0
      %3515 = vmatprep.mubr.bf16.mxu0 %v2362
      %3516 = vmatmul.mubr.bf16.gmra.mrb[0].mxu0 %v2358
      %v3517 = vpop.f32.mrb[0].mxu0
      %v3518 = vadd.f32 0.0, %v3517
      %v3519 = vpop.f32.mrb[0].mxu0
      %v3520 = vpop.f32.mrb[0].mxu0
      %v3521 = vadd.f32 0.0, %v3520
      %v3522 = vpop.f32.mrb[0].mxu0
      %3523 = vmatprep.mubr.bf16.mxu0 %v2374
      %3524 = vmatmul.mubr.bf16.gmra.mrb[0].mxu0 %v2370
      %v3525 = vpop.f32.mrb[0].mxu0
      %v3526 = vadd.f32 0.0, %v3525
      %v3527 = vpop.f32.mrb[0].mxu0
      %v3528 = vpop.f32.mrb[0].mxu0
      %v3529 = vadd.f32 0.0, %v3528
      %v3530 = vpop.f32.mrb[0].mxu0
      %3531 = vmatprep.mubr.bf16.mxu0 %v2386
      %3532 = vmatmul.mubr.bf16.gmra.mrb[0].mxu0 %v2382
      %v3533 = vpop.f32.mrb[0].mxu0
      %v3534 = vadd.f32 0.0, %v3533
      %v3535 = vpop.f32.mrb[0].mxu0
      %v3536 = vpop.f32.mrb[0].mxu0
      %v3537 = vadd.f32 0.0, %v3536
      %v3538 = vpop.f32.mrb[0].mxu0
      %3539 = vmatprep.mubr.bf16.mxu0 %v2398
      %3540 = vmatmul.mubr.bf16.gmra.mrb[0].mxu0 %v2394
      %v3541 = vpop.f32.mrb[0].mxu0
      %v3542 = vadd.f32 0.0, %v3541
      %v3543 = vpop.f32.mrb[0].mxu0
      %v3544 = vpop.f32.mrb[0].mxu0
      %v3545 = vadd.f32 0.0, %v3544
      %v3546 = vpop.f32.mrb[0].mxu0
      %3547 = vmatprep.mubr.bf16.mxu0 %v2410
      %3548 = vmatmul.mubr.bf16.gmra.mrb[0].mxu0 %v2406
      %v3549 = vpop.f32.mrb[0].mxu0
      %v3550 = vadd.f32 0.0, %v3549
      %v3551 = vpop.f32.mrb[0].mxu0
      %v3552 = vpop.f32.mrb[0].mxu0
      %v3553 = vadd.f32 0.0, %v3552
      %v3554 = vpop.f32.mrb[0].mxu0
      %3555 = vmatprep.mubr.bf16.mxu0 %v2422
      %3556 = vmatmul.mubr.bf16.gmra.mrb[0].mxu0 %v2418
      %v3557 = vpop.f32.mrb[0].mxu0
      %v3558 = vadd.f32 0.0, %v3557
      %v3559 = vpop.f32.mrb[0].mxu0
      %v3560 = vpop.f32.mrb[0].mxu0
      %v3561 = vadd.f32 0.0, %v3560
      %v3562 = vpop.f32.mrb[0].mxu0
      %3563 = vmatprep.mubr.bf16.mxu0 %v2434
      %3564 = vmatmul.mubr.bf16.gmra.mrb[0].mxu0 %v2430
      %v3565 = vpop.f32.mrb[0].mxu0
      %v3566 = vadd.f32 0.0, %v3565
      %v3567 = vpop.f32.mrb[0].mxu0
      %v3568 = vpop.f32.mrb[0].mxu0
      %v3569 = vadd.f32 0.0, %v3568
      %v3570 = vpop.f32.mrb[0].mxu0
      %3571 = vmatprep.mubr.bf16.mxu0 %v2446
      %3572 = vmatmul.mubr.bf16.gmra.mrb[0].mxu0 %v2442
      %v3573 = vpop.f32.mrb[0].mxu0
      %v3574 = vadd.f32 0.0, %v3573
      %v3575 = vpop.f32.mrb[0].mxu0
      %v3576 = vpop.f32.mrb[0].mxu0
      %v3577 = vadd.f32 0.0, %v3576
      %v3578 = vpop.f32.mrb[0].mxu0
      %3579 = vmatprep.mubr.bf16.mxu0 %v2458
      %3580 = vmatmul.mubr.bf16.gmra.mrb[0].mxu0 %v2454
      %v3581 = vpop.f32.mrb[0].mxu0
      %v3582 = vadd.f32 0.0, %v3581
      %v3583 = vpop.f32.mrb[0].mxu0
      %v3584 = vpop.f32.mrb[0].mxu0
      %v3585 = vadd.f32 0.0, %v3584
      %v3586 = vpop.f32.mrb[0].mxu0
      %3587 = vmatprep.mubr.bf16.mxu0 %v3185
      %3588 = vmatmul.mubr.bf16.gmra.mrb[0].mxu0 %v3181
      %v3589 = vpop.f32.mrb[0].mxu0
      %v3590 = vadd.f32 0.0, %v3589
      %v3591 = vpop.f32.mrb[0].mxu0
      %v3592 = vpop.f32.mrb[0].mxu0
      %v3593 = vadd.f32 0.0, %v3592
      %v3594 = vpop.f32.mrb[0].mxu0
      %3595 = vmatprep.mubr.bf16.mxu0 %v3202
      %3596 = vmatmul.mubr.bf16.gmra.mrb[0].mxu0 %v3193
      %v3597 = vpop.f32.mrb[0].mxu0
      %v3598 = vadd.f32 0.0, %v3597
      %v3599 = vpop.f32.mrb[0].mxu0
      %v3600 = vpop.f32.mrb[0].mxu0
      %v3601 = vadd.f32 0.0, %v3600
      %v3602 = vpop.f32.mrb[0].mxu0
      %3603 = vmatprep.mubr.bf16.mxu0 %v3224
      %3604 = vmatmul.mubr.bf16.gmra.mrb[0].mxu0 %v3215
      %v3605 = vpop.f32.mrb[0].mxu0
      %v3606 = vadd.f32 0.0, %v3605
      %v3607 = vpop.f32.mrb[0].mxu0
      %v3608 = vpop.f32.mrb[0].mxu0
      %v3609 = vadd.f32 0.0, %v3608
      %v3610 = vpop.f32.mrb[0].mxu0
      %3611 = vdwg.mxu0
      %3612 = vmatprep.subr.bf16.mxu0 0
      %3613 = vmatpush1.bf16.msra.mxu0 %v3355
      %3614 = vmatprep.subr.bf16.mxu0 0
      %3615 = vmatpush1.bf16.msra.mxu0 %v3356
      %3616 = vmatprep.subr.bf16.mxu0 0
      %3617 = vmatpush1.bf16.msra.mxu0 %v3357
      %3618 = vmatprep.subr.bf16.mxu0 0
      %3619 = vmatpush1.bf16.msra.mxu0 %v3358
      %3620 = vmatprep.subr.bf16.mxu0 0
      %3621 = vmatpush1.bf16.msra.mxu0 %v3359
      %3622 = vmatprep.subr.bf16.mxu0 0
      %3623 = vmatpush1.bf16.msra.mxu0 %v3360
      %3624 = vmatprep.subr.bf16.mxu0 0
      %3625 = vmatpush1.bf16.msra.mxu0 %v3361
      %3626 = vmatprep.subr.bf16.mxu0 0
      %3627 = vmatpush1.bf16.msra.mxu0 %v3362
      %3628 = vmatprep.subr.bf16.mxu0 0
      %3629 = vmatpush1.bf16.msra.mxu0 0
      %3630 = vmatprep.subr.bf16.mxu0 0
      %3631 = vmatpush1.bf16.msra.mxu0 0
      %3632 = vmatprep.subr.bf16.mxu0 0
      %3633 = vmatpush1.bf16.msra.mxu0 0
      %3634 = vmatprep.subr.bf16.mxu0 0
      %3635 = vmatpush1.bf16.msra.mxu0 0
      %3636 = vmatprep.subr.bf16.mxu0 0
      %3637 = vmatpush1.bf16.msra.mxu0 0
      %3638 = vmatprep.subr.bf16.mxu0 0
      %3639 = vmatpush1.bf16.msra.mxu0 0
      %3640 = vmatprep.subr.bf16.mxu0 0
      %3641 = vmatpush1.bf16.msra.mxu0 0
      %3642 = vmatprep.subr.bf16.mxu0 0
      %3643 = vmatpush1.bf16.msra.mxu0 0
      %3644 = vmatprep.mubr.bf16.mxu0 0
      %3645 = vmatmul.mubr.bf16.gmra.mrb[0].mxu0 %v2222
      %v3646 = vpop.f32.mrb[0].mxu0
      %v3647 = vadd.f32 %v3422, %v3646
      %v3648 = vpop.f32.mrb[0].mxu0
      %v3649 = vpop.f32.mrb[0].mxu0
      %v3650 = vadd.f32 %v3425, %v3649
      %v3651 = vpop.f32.mrb[0].mxu0
      %3652 = vmatprep.mubr.bf16.mxu0 0
      %3653 = vmatmul.mubr.bf16.gmra.mrb[0].mxu0 %v2234
      %v3654 = vpop.f32.mrb[0].mxu0
      %v3655 = vadd.f32 %v3430, %v3654
      %v3656 = vpop.f32.mrb[0].mxu0
      %v3657 = vpop.f32.mrb[0].mxu0
      %v3658 = vadd.f32 %v3433, %v3657
      %v3659 = vpop.f32.mrb[0].mxu0
      %3660 = vmatprep.mubr.bf16.mxu0 0
      %3661 = vmatmul.mubr.bf16.gmra.mrb[0].mxu0 %v2246
      %v3662 = vpop.f32.mrb[0].mxu0
      %v3663 = vadd.f32 %v3438, %v3662
      %v3664 = vpop.f32.mrb[0].mxu0
      %v3665 = vpop.f32.mrb[0].mxu0
      %v3666 = vadd.f32 %v3441, %v3665
      %v3667 = vpop.f32.mrb[0].mxu0
      %3668 = vmatprep.mubr.bf16.mxu0 0
      %3669 = vmatmul.mubr.bf16.gmra.mrb[0].mxu0 %v2258
      %v3670 = vpop.f32.mrb[0].mxu0
      %v3671 = vadd.f32 %v3446, %v3670
      %v3672 = vpop.f32.mrb[0].mxu0
      %v3673 = vpop.f32.mrb[0].mxu0
      %v3674 = vadd.f32 %v3449, %v3673
      %v3675 = vpop.f32.mrb[0].mxu0
      %3676 = vmatprep.mubr.bf16.mxu0 0
      %3677 = vmatmul.mubr.bf16.gmra.mrb[0].mxu0 %v2270
      %v3678 = vpop.f32.mrb[0].mxu0
      %v3679 = vadd.f32 %v3454, %v3678
      %v3680 = vpop.f32.mrb[0].mxu0
      %v3681 = vpop.f32.mrb[0].mxu0
      %v3682 = vadd.f32 %v3457, %v3681
      %v3683 = vpop.f32.mrb[0].mxu0
      %3684 = vmatprep.mubr.bf16.mxu0 0
      %3685 = vmatmul.mubr.bf16.gmra.mrb[0].mxu0 %v2282
      %v3686 = vpop.f32.mrb[0].mxu0
      %v3687 = vadd.f32 %v3462, %v3686
      %v3688 = vpop.f32.mrb[0].mxu0
      %v3689 = vpop.f32.mrb[0].mxu0
      %v3690 = vadd.f32 %v3465, %v3689
      %v3691 = vpop.f32.mrb[0].mxu0
      %3692 = vmatprep.mubr.bf16.mxu0 0
      %3693 = vmatmul.mubr.bf16.gmra.mrb[0].mxu0 %v2294
      %v3694 = vpop.f32.mrb[0].mxu0
      %v3695 = vadd.f32 %v3470, %v3694
      %v3696 = vpop.f32.mrb[0].mxu0
      %v3697 = vpop.f32.mrb[0].mxu0
      %v3698 = vadd.f32 %v3473, %v3697
      %v3699 = vpop.f32.mrb[0].mxu0
      %3700 = vmatprep.mubr.bf16.mxu0 0
      %3701 = vmatmul.mubr.bf16.gmra.mrb[0].mxu0 %v2306
      %v3702 = vpop.f32.mrb[0].mxu0
      %v3703 = vadd.f32 %v3478, %v3702
      %v3704 = vpop.f32.mrb[0].mxu0
      %v3705 = vpop.f32.mrb[0].mxu0
      %v3706 = vadd.f32 %v3481, %v3705
      %v3707 = vpop.f32.mrb[0].mxu0
      %3708 = vmatprep.mubr.bf16.mxu0 0
      %3709 = vmatmul.mubr.bf16.gmra.mrb[0].mxu0 %v2318
      %v3710 = vpop.f32.mrb[0].mxu0
      %v3711 = vadd.f32 %v3486, %v3710
      %v3712 = vpop.f32.mrb[0].mxu0
      %v3713 = vpop.f32.mrb[0].mxu0
      %v3714 = vadd.f32 %v3489, %v3713
      %v3715 = vpop.f32.mrb[0].mxu0
      %3716 = vmatprep.mubr.bf16.mxu0 0
      %3717 = vmatmul.mubr.bf16.gmra.mrb[0].mxu0 %v2330
      %v3718 = vpop.f32.mrb[0].mxu0
      %v3719 = vadd.f32 %v3494, %v3718
      %v3720 = vpop.f32.mrb[0].mxu0
      %v3721 = vpop.f32.mrb[0].mxu0
      %v3722 = vadd.f32 %v3497, %v3721
      %v3723 = vpop.f32.mrb[0].mxu0
      %3724 = vmatprep.mubr.bf16.mxu0 0
      %3725 = vmatmul.mubr.bf16.gmra.mrb[0].mxu0 %v2342
      %v3726 = vpop.f32.mrb[0].mxu0
      %v3727 = vadd.f32 %v3502, %v3726
      %v3728 = vpop.f32.mrb[0].mxu0
      %v3729 = vpop.f32.mrb[0].mxu0
      %v3730 = vadd.f32 %v3505, %v3729
      %v3731 = vpop.f32.mrb[0].mxu0
      %3732 = vmatprep.mubr.bf16.mxu0 0
      %3733 = vmatmul.mubr.bf16.gmra.mrb[0].mxu0 %v2354
      %v3734 = vpop.f32.mrb[0].mxu0
      %v3735 = vadd.f32 %v3510, %v3734
      %v3736 = vpop.f32.mrb[0].mxu0
      %v3737 = vpop.f32.mrb[0].mxu0
      %v3738 = vadd.f32 %v3513, %v3737
      %v3739 = vpop.f32.mrb[0].mxu0
      %3740 = vmatprep.mubr.bf16.mxu0 0
      %3741 = vmatmul.mubr.bf16.gmra.mrb[0].mxu0 %v2366
      %v3742 = vpop.f32.mrb[0].mxu0
      %v3743 = vadd.f32 %v3518, %v3742
      %v3744 = vpop.f32.mrb[0].mxu0
      %v3745 = vpop.f32.mrb[0].mxu0
      %v3746 = vadd.f32 %v3521, %v3745
      %v3747 = vpop.f32.mrb[0].mxu0
      %3748 = vmatprep.mubr.bf16.mxu0 0
      %3749 = vmatmul.mubr.bf16.gmra.mrb[0].mxu0 %v2378
      %v3750 = vpop.f32.mrb[0].mxu0
      %v3751 = vadd.f32 %v3526, %v3750
      %v3752 = vpop.f32.mrb[0].mxu0
      %v3753 = vpop.f32.mrb[0].mxu0
      %v3754 = vadd.f32 %v3529, %v3753
      %v3755 = vpop.f32.mrb[0].mxu0
      %3756 = vmatprep.mubr.bf16.mxu0 0
      %3757 = vmatmul.mubr.bf16.gmra.mrb[0].mxu0 %v2390
      %v3758 = vpop.f32.mrb[0].mxu0
      %v3759 = vadd.f32 %v3534, %v3758
      %v3760 = vpop.f32.mrb[0].mxu0
      %v3761 = vpop.f32.mrb[0].mxu0
      %v3762 = vadd.f32 %v3537, %v3761
      %v3763 = vpop.f32.mrb[0].mxu0
      %3764 = vmatprep.mubr.bf16.mxu0 0
      %3765 = vmatmul.mubr.bf16.gmra.mrb[0].mxu0 %v2402
      %v3766 = vpop.f32.mrb[0].mxu0
      %v3767 = vadd.f32 %v3542, %v3766
      %v3768 = vpop.f32.mrb[0].mxu0
      %v3769 = vpop.f32.mrb[0].mxu0
      %v3770 = vadd.f32 %v3545, %v3769
      %v3771 = vpop.f32.mrb[0].mxu0
      %3772 = vmatprep.mubr.bf16.mxu0 0
      %3773 = vmatmul.mubr.bf16.gmra.mrb[0].mxu0 %v2414
      %v3774 = vpop.f32.mrb[0].mxu0
      %v3775 = vadd.f32 %v3550, %v3774
      %v3776 = vpop.f32.mrb[0].mxu0
      %v3777 = vpop.f32.mrb[0].mxu0
      %v3778 = vadd.f32 %v3553, %v3777
      %v3779 = vpop.f32.mrb[0].mxu0
      %3780 = vmatprep.mubr.bf16.mxu0 0
      %3781 = vmatmul.mubr.bf16.gmra.mrb[0].mxu0 %v2426
      %v3782 = vpop.f32.mrb[0].mxu0
      %v3783 = vadd.f32 %v3558, %v3782
      %v3784 = vpop.f32.mrb[0].mxu0
      %v3785 = vpop.f32.mrb[0].mxu0
      %v3786 = vadd.f32 %v3561, %v3785
      %v3787 = vpop.f32.mrb[0].mxu0
      %3788 = vmatprep.mubr.bf16.mxu0 0
      %3789 = vmatmul.mubr.bf16.gmra.mrb[0].mxu0 %v2438
      %v3790 = vpop.f32.mrb[0].mxu0
      %v3791 = vadd.f32 %v3566, %v3790
      %v3792 = vpop.f32.mrb[0].mxu0
      %v3793 = vpop.f32.mrb[0].mxu0
      %v3794 = vadd.f32 %v3569, %v3793
      %v3795 = vpop.f32.mrb[0].mxu0
      %3796 = vmatprep.mubr.bf16.mxu0 0
      %3797 = vmatmul.mubr.bf16.gmra.mrb[0].mxu0 %v2450
      %v3798 = vpop.f32.mrb[0].mxu0
      %v3799 = vadd.f32 %v3574, %v3798
      %v3800 = vpop.f32.mrb[0].mxu0
      %v3801 = vpop.f32.mrb[0].mxu0
      %v3802 = vadd.f32 %v3577, %v3801
      %v3803 = vpop.f32.mrb[0].mxu0
      %3804 = vmatprep.mubr.bf16.mxu0 0
      %3805 = vmatmul.mubr.bf16.gmra.mrb[0].mxu0 %v2462
      %v3806 = vpop.f32.mrb[0].mxu0
      %v3807 = vadd.f32 %v3582, %v3806
      %v3808 = vpop.f32.mrb[0].mxu0
      %v3809 = vpop.f32.mrb[0].mxu0
      %v3810 = vadd.f32 %v3585, %v3809
      %v3811 = vpop.f32.mrb[0].mxu0
      %3812 = vmatprep.mubr.bf16.mxu0 0
      %3813 = vmatmul.mubr.bf16.gmra.mrb[0].mxu0 %v3189
      %v3814 = vpop.f32.mrb[0].mxu0
      %v3815 = vadd.f32 %v3590, %v3814
      %v3816 = vpop.f32.mrb[0].mxu0
      %v3817 = vpop.f32.mrb[0].mxu0
      %v3818 = vadd.f32 %v3593, %v3817
      %v3819 = vpop.f32.mrb[0].mxu0
      %3820 = vmatprep.mubr.bf16.mxu0 0
      %3821 = vmatmul.mubr.bf16.gmra.mrb[0].mxu0 %v3211
      %v3822 = vpop.f32.mrb[0].mxu0
      %v3823 = vadd.f32 %v3598, %v3822
      %v3824 = vpop.f32.mrb[0].mxu0
      %v3825 = vpop.f32.mrb[0].mxu0
      %v3826 = vadd.f32 %v3601, %v3825
      %v3827 = vpop.f32.mrb[0].mxu0
      %3828 = vmatprep.mubr.bf16.mxu0 0
      %3829 = vmatmul.mubr.bf16.gmra.mrb[0].mxu0 %v3233
      %v3830 = vpop.f32.mrb[0].mxu0
      %v3831 = vadd.f32 %v3606, %v3830
      %v3832 = vpop.f32.mrb[0].mxu0
      %v3833 = vpop.f32.mrb[0].mxu0
      %v3834 = vadd.f32 %v3609, %v3833
      %v3835 = vpop.f32.mrb[0].mxu0
      %3836 = vdwg.mxu0
      %v3837 = vadd.f32 %v2939, %v3647
      %v3838 = vadd.f32 %v2942, %v3650
      %v3839 = vadd.f32 %v2947, %v3655
      %v3840 = vadd.f32 %v2950, %v3658
      %v3841 = vadd.f32 %v2955, %v3663
      %v3842 = vadd.f32 %v2958, %v3666
      %v3843 = vadd.f32 %v2963, %v3671
      %v3844 = vadd.f32 %v2966, %v3674
      %v3845 = vadd.f32 %v2971, %v3679
      %v3846 = vadd.f32 %v2974, %v3682
      %v3847 = vadd.f32 %v2979, %v3687
      %v3848 = vadd.f32 %v2982, %v3690
      %v3849 = vadd.f32 %v2987, %v3695
      %v3850 = vadd.f32 %v2990, %v3698
      %v3851 = vadd.f32 %v2995, %v3703
      %v3852 = vadd.f32 %v2998, %v3706
      %v3853 = vadd.f32 %v3003, %v3711
      %v3854 = vadd.f32 %v3006, %v3714
      %v3855 = vadd.f32 %v3011, %v3719
      %v3856 = vadd.f32 %v3014, %v3722
      %v3857 = vadd.f32 %v3019, %v3727
      %v3858 = vadd.f32 %v3022, %v3730
      %v3859 = vadd.f32 %v3027, %v3735
      %v3860 = vadd.f32 %v3030, %v3738
      %v3861 = vadd.f32 %v3035, %v3743
      %v3862 = vadd.f32 %v3038, %v3746
      %v3863 = vadd.f32 %v3043, %v3751
      %v3864 = vadd.f32 %v3046, %v3754
      %v3865 = vadd.f32 %v3051, %v3759
      %v3866 = vadd.f32 %v3054, %v3762
      %v3867 = vadd.f32 %v3059, %v3767
      %v3868 = vadd.f32 %v3062, %v3770
      %v3869 = vadd.f32 %v3067, %v3775
      %v3870 = vadd.f32 %v3070, %v3778
      %v3871 = vadd.f32 %v3075, %v3783
      %v3872 = vadd.f32 %v3078, %v3786
      %v3873 = vadd.f32 %v3083, %v3791
      %v3874 = vadd.f32 %v3086, %v3794
      %v3875 = vadd.f32 %v3091, %v3799
      %v3876 = vadd.f32 %v3094, %v3802
      %v3877 = vadd.f32 %v3099, %v3807
      %v3878 = vadd.f32 %v3102, %v3810
      %v3879 = vadd.f32 %v3107, %v3815
      %v3880 = vadd.f32 %v3110, %v3818
      %v3881 = vadd.f32 %v3115, %v3823
      %v3882 = vadd.f32 %v3118, %v3826
      %v3883 = vadd.f32 %v3123, %v3831
      %v3884 = vadd.f32 %v3126, %v3834
      %v3885 = vmul.f32 %v3837, %v429
      %v3886 = vmul.f32 %v3838, %v430
      %v3887 = vmul.f32 %v3839, %v431
      %v3888 = vmul.f32 %v3840, %v429
      %v3889 = vmul.f32 %v3841, %v430
      %v3890 = vmul.f32 %v3842, %v431
      %v3891 = vmul.f32 %v3843, %v429
      %v3892 = vmul.f32 %v3844, %v430
      %v3893 = vmul.f32 %v3845, %v431
      %v3894 = vmul.f32 %v3846, %v429
      %v3895 = vmul.f32 %v3847, %v430
      %v3896 = vmul.f32 %v3848, %v431
      %v3897 = vmul.f32 %v3849, %v429
      %v3898 = vmul.f32 %v3850, %v430
      %v3899 = vmul.f32 %v3851, %v431
      %v3900 = vmul.f32 %v3852, %v429
      %v3901 = vmul.f32 %v3853, %v430
      %v3902 = vmul.f32 %v3854, %v431
      %v3903 = vmul.f32 %v3855, %v429
      %v3904 = vmul.f32 %v3856, %v430
      %v3905 = vmul.f32 %v3857, %v431
      %v3906 = vmul.f32 %v3858, %v429
      %v3907 = vmul.f32 %v3859, %v430
      %v3908 = vmul.f32 %v3860, %v431
      %v3909 = vmul.f32 %v3861, %v429
      %v3910 = vmul.f32 %v3862, %v430
      %v3911 = vmul.f32 %v3863, %v431
      %v3912 = vmul.f32 %v3864, %v429
      %v3913 = vmul.f32 %v3865, %v430
      %v3914 = vmul.f32 %v3866, %v431
      %v3915 = vmul.f32 %v3867, %v429
      %v3916 = vmul.f32 %v3868, %v430
      %v3917 = vmul.f32 %v3869, %v431
      %v3918 = vmul.f32 %v3870, %v429
      %v3919 = vmul.f32 %v3871, %v430
      %v3920 = vmul.f32 %v3872, %v431
      %v3921 = vmul.f32 %v3873, %v429
      %v3922 = vmul.f32 %v3874, %v430
      %v3923 = vmul.f32 %v3875, %v431
      %v3924 = vmul.f32 %v3876, %v429
      %v3925 = vmul.f32 %v3877, %v430
      %v3926 = vmul.f32 %v3878, %v431
      %v3927 = vmul.f32 %v3879, %v429
      %v3928 = vmul.f32 %v3880, %v430
      %v3929 = vmul.f32 %v3881, %v431
      %v3930 = vmul.f32 %v3882, %v429
      %v3931 = vmul.f32 %v3883, %v430
      %v3932 = vmul.f32 %v3884, %v431
      %v3933 = vadd.f32 %v3885, %v3886
      %v3934 = vadd.f32 %v3933, %v3887
      %v3935 = vadd.f32 %v3934, %v3888
      %v3936 = vadd.f32 %v3935, %v3889
      %v3937 = vadd.f32 %v3936, %v3890
      %v3938 = vadd.f32 %v3937, %v3891
      %v3939 = vadd.f32 %v3938, %v3892
      %v3940 = vadd.f32 %v3939, %v3893
      %v3941 = vadd.f32 %v3940, %v3894
      %v3942 = vadd.f32 %v3941, %v3895
      %v3943 = vadd.f32 %v3942, %v3896
      %v3944 = vadd.f32 %v3943, %v3897
      %v3945 = vadd.f32 %v3944, %v3898
      %v3946 = vadd.f32 %v3945, %v3899
      %v3947 = vadd.f32 %v3946, %v3900
      %v3948 = vadd.f32 %v3947, %v3901
      %v3949 = vadd.f32 %v3948, %v3902
      %v3950 = vadd.f32 %v3949, %v3903
      %v3951 = vadd.f32 %v3950, %v3904
      %v3952 = vadd.f32 %v3951, %v3905
      %v3953 = vadd.f32 %v3952, %v3906
      %v3954 = vadd.f32 %v3953, %v3907
      %v3955 = vadd.f32 %v3954, %v3908
      %v3956 = vadd.f32 %v3955, %v3909
      %v3957 = vadd.f32 %v3956, %v3910
      %v3958 = vadd.f32 %v3957, %v3911
      %v3959 = vadd.f32 %v3958, %v3912
      %v3960 = vadd.f32 %v3959, %v3913
      %v3961 = vadd.f32 %v3960, %v3914
      %v3962 = vadd.f32 %v3961, %v3915
      %v3963 = vadd.f32 %v3962, %v3916
      %v3964 = vadd.f32 %v3963, %v3917
      %v3965 = vadd.f32 %v3964, %v3918
      %v3966 = vadd.f32 %v3965, %v3919
      %v3967 = vadd.f32 %v3966, %v3920
      %v3968 = vadd.f32 %v3967, %v3921
      %v3969 = vadd.f32 %v3968, %v3922
      %v3970 = vadd.f32 %v3969, %v3923
      %v3971 = vadd.f32 %v3970, %v3924
      %v3972 = vadd.f32 %v3971, %v3925
      %v3973 = vadd.f32 %v3972, %v3926
      %v3974 = vadd.f32 %v3973, %v3927
      %v3975 = vadd.f32 %v3974, %v3928
      %v3976 = vadd.f32 %v3975, %v3929
      %v3977 = vadd.f32 %v3976, %v3930
      %v3978 = vadd.f32 %v3977, %v3931
      %v3979 = vadd.f32 %v3978, %v3932
      %v3980 = vrot.slane %v3979, 4
      %v3981 = vadd.f32 %v3979, %v3980
      %v3982 = vrot.slane %v3981, 2
      %v3983 = vadd.f32 %v3981, %v3982
      %v3984 = vrot.slane %v3983, 1
      %v3985 = vadd.f32 %v3983, %v3984
      %v3986 = vmul.f32 %v3885, %v3885
      %v3987 = vmul.f32 %v3886, %v3886
      %v3988 = vmul.f32 %v3887, %v3887
      %v3989 = vmul.f32 %v3888, %v3888
      %v3990 = vmul.f32 %v3889, %v3889
      %v3991 = vmul.f32 %v3890, %v3890
      %v3992 = vmul.f32 %v3891, %v3891
      %v3993 = vmul.f32 %v3892, %v3892
      %v3994 = vmul.f32 %v3893, %v3893
      %v3995 = vmul.f32 %v3894, %v3894
      %v3996 = vmul.f32 %v3895, %v3895
      %v3997 = vmul.f32 %v3896, %v3896
      %v3998 = vmul.f32 %v3897, %v3897
      %v3999 = vmul.f32 %v3898, %v3898
      %v4000 = vmul.f32 %v3899, %v3899
      %v4001 = vmul.f32 %v3900, %v3900
      %v4002 = vmul.f32 %v3901, %v3901
      %v4003 = vmul.f32 %v3902, %v3902
      %v4004 = vmul.f32 %v3903, %v3903
      %v4005 = vmul.f32 %v3904, %v3904
      %v4006 = vmul.f32 %v3905, %v3905
      %v4007 = vmul.f32 %v3906, %v3906
      %v4008 = vmul.f32 %v3907, %v3907
      %v4009 = vmul.f32 %v3908, %v3908
      %v4010 = vmul.f32 %v3909, %v3909
      %v4011 = vmul.f32 %v3910, %v3910
      %v4012 = vmul.f32 %v3911, %v3911
      %v4013 = vmul.f32 %v3912, %v3912
      %v4014 = vmul.f32 %v3913, %v3913
      %v4015 = vmul.f32 %v3914, %v3914
      %v4016 = vmul.f32 %v3915, %v3915
      %v4017 = vmul.f32 %v3916, %v3916
      %v4018 = vmul.f32 %v3917, %v3917
      %v4019 = vmul.f32 %v3918, %v3918
      %v4020 = vmul.f32 %v3919, %v3919
      %v4021 = vmul.f32 %v3920, %v3920
      %v4022 = vmul.f32 %v3921, %v3921
      %v4023 = vmul.f32 %v3922, %v3922
      %v4024 = vmul.f32 %v3923, %v3923
      %v4025 = vmul.f32 %v3924, %v3924
      %v4026 = vmul.f32 %v3925, %v3925
      %v4027 = vmul.f32 %v3926, %v3926
      %v4028 = vmul.f32 %v3927, %v3927
      %v4029 = vmul.f32 %v3928, %v3928
      %v4030 = vmul.f32 %v3929, %v3929
      %v4031 = vmul.f32 %v3930, %v3930
      %v4032 = vmul.f32 %v3931, %v3931
      %v4033 = vmul.f32 %v3932, %v3932
      %v4034 = vadd.f32 %v3986, %v3987
      %v4035 = vadd.f32 %v4034, %v3988
      %v4036 = vadd.f32 %v4035, %v3989
      %v4037 = vadd.f32 %v4036, %v3990
      %v4038 = vadd.f32 %v4037, %v3991
      %v4039 = vadd.f32 %v4038, %v3992
      %v4040 = vadd.f32 %v4039, %v3993
      %v4041 = vadd.f32 %v4040, %v3994
      %v4042 = vadd.f32 %v4041, %v3995
      %v4043 = vadd.f32 %v4042, %v3996
      %v4044 = vadd.f32 %v4043, %v3997
      %v4045 = vadd.f32 %v4044, %v3998
      %v4046 = vadd.f32 %v4045, %v3999
      %v4047 = vadd.f32 %v4046, %v4000
      %v4048 = vadd.f32 %v4047, %v4001
      %v4049 = vadd.f32 %v4048, %v4002
      %v4050 = vadd.f32 %v4049, %v4003
      %v4051 = vadd.f32 %v4050, %v4004
      %v4052 = vadd.f32 %v4051, %v4005
      %v4053 = vadd.f32 %v4052, %v4006
      %v4054 = vadd.f32 %v4053, %v4007
      %v4055 = vadd.f32 %v4054, %v4008
      %v4056 = vadd.f32 %v4055, %v4009
      %v4057 = vadd.f32 %v4056, %v4010
      %v4058 = vadd.f32 %v4057, %v4011
      %v4059 = vadd.f32 %v4058, %v4012
      %v4060 = vadd.f32 %v4059, %v4013
      %v4061 = vadd.f32 %v4060, %v4014
      %v4062 = vadd.f32 %v4061, %v4015
      %v4063 = vadd.f32 %v4062, %v4016
      %v4064 = vadd.f32 %v4063, %v4017
      %v4065 = vadd.f32 %v4064, %v4018
      %v4066 = vadd.f32 %v4065, %v4019
      %v4067 = vadd.f32 %v4066, %v4020
      %v4068 = vadd.f32 %v4067, %v4021
      %v4069 = vadd.f32 %v4068, %v4022
      %v4070 = vadd.f32 %v4069, %v4023
      %v4071 = vadd.f32 %v4070, %v4024
      %v4072 = vadd.f32 %v4071, %v4025
      %v4073 = vadd.f32 %v4072, %v4026
      %v4074 = vadd.f32 %v4073, %v4027
      %v4075 = vadd.f32 %v4074, %v4028
      %v4076 = vadd.f32 %v4075, %v4029
      %v4077 = vadd.f32 %v4076, %v4030
      %v4078 = vadd.f32 %v4077, %v4031
      %v4079 = vadd.f32 %v4078, %v4032
      %v4080 = vadd.f32 %v4079, %v4033
      %v4081 = vrot.slane %v4080, 4
      %v4082 = vadd.f32 %v4080, %v4081
      %v4083 = vrot.slane %v4082, 2
      %v4084 = vadd.f32 %v4082, %v4083
      %v4085 = vrot.slane %v4084, 1
      %v4086 = vadd.f32 %v4084, %v4085
      %vm4087 = vcmask 1040384
      %v4088 = vsel %vm4087, %v3985, %v4086
      %4089 = vst [vmem:[%s411] sm:$0x3] %v4088
      %v4090 = vpack.c.bf16 %v3886, %v3885
      %v4091 = vpack.c.bf16 %v3887, %v3887
      %v4092 = vpack.c.bf16 %v3889, %v3888
      %v4093 = vpack.c.bf16 %v3890, %v3890
      %v4094 = vpack.c.bf16 %v3892, %v3891
      %v4095 = vpack.c.bf16 %v3893, %v3893
      %v4096 = vpack.c.bf16 %v3895, %v3894
      %v4097 = vpack.c.bf16 %v3896, %v3896
      %v4098 = vpack.c.bf16 %v3898, %v3897
      %v4099 = vpack.c.bf16 %v3899, %v3899
      %v4100 = vpack.c.bf16 %v3901, %v3900
      %v4101 = vpack.c.bf16 %v3902, %v3902
      %v4102 = vpack.c.bf16 %v3904, %v3903
      %v4103 = vpack.c.bf16 %v3905, %v3905
      %v4104 = vpack.c.bf16 %v3907, %v3906
      %v4105 = vpack.c.bf16 %v3908, %v3908
      %v4106 = vpack.c.bf16 %v3910, %v3909
      %v4107 = vpack.c.bf16 %v3911, %v3911
      %v4108 = vpack.c.bf16 %v3913, %v3912
      %v4109 = vpack.c.bf16 %v3914, %v3914
      %v4110 = vpack.c.bf16 %v3916, %v3915
      %v4111 = vpack.c.bf16 %v3917, %v3917
      %v4112 = vpack.c.bf16 %v3919, %v3918
      %v4113 = vpack.c.bf16 %v3920, %v3920
      %v4114 = vpack.c.bf16 %v3922, %v3921
      %v4115 = vpack.c.bf16 %v3923, %v3923
      %v4116 = vpack.c.bf16 %v3925, %v3924
      %v4117 = vpack.c.bf16 %v3926, %v3926
      %v4118 = vpack.c.bf16 %v3928, %v3927
      %v4119 = vpack.c.bf16 %v3929, %v3929
      %v4120 = vpack.c.bf16 %v3931, %v3930
      %v4121 = vpack.c.bf16 %v3932, %v3932
      %v4154 = vunpack.c.l.b16 %v4090
      %v4155 = vunpack.c.h.b16 %v4090
      %v4156 = vunpack.c.l.b16 %v4091
      %v4157 = vunpack.c.l.b16 %v4092
      %v4158 = vunpack.c.h.b16 %v4092
      %v4159 = vunpack.c.l.b16 %v4093
      %v4160 = vunpack.c.l.b16 %v4094
      %v4161 = vunpack.c.h.b16 %v4094
      %v4162 = vunpack.c.l.b16 %v4095
      %v4163 = vunpack.c.l.b16 %v4096
      %v4164 = vunpack.c.h.b16 %v4096
      %v4165 = vunpack.c.l.b16 %v4097
      %v4166 = vunpack.c.l.b16 %v4098
      %v4167 = vunpack.c.h.b16 %v4098
      %v4168 = vunpack.c.l.b16 %v4099
      %v4169 = vunpack.c.l.b16 %v4100
      %v4170 = vunpack.c.h.b16 %v4100
      %v4171 = vunpack.c.l.b16 %v4101
      %v4172 = vunpack.c.l.b16 %v4102
      %v4173 = vunpack.c.h.b16 %v4102
      %v4174 = vunpack.c.l.b16 %v4103
      %v4175 = vunpack.c.l.b16 %v4104
      %v4176 = vunpack.c.h.b16 %v4104
      %v4177 = vunpack.c.l.b16 %v4105
      %v4178 = vunpack.c.l.b16 %v4106
      %v4179 = vunpack.c.h.b16 %v4106
      %v4180 = vunpack.c.l.b16 %v4107
      %v4181 = vunpack.c.l.b16 %v4108
      %v4182 = vunpack.c.h.b16 %v4108
      %v4183 = vunpack.c.l.b16 %v4109
      %v4184 = vunpack.c.l.b16 %v4110
      %v4185 = vunpack.c.h.b16 %v4110
      %v4186 = vunpack.c.l.b16 %v4111
      %v4187 = vunpack.c.l.b16 %v4112
      %v4188 = vunpack.c.h.b16 %v4112
      %v4189 = vunpack.c.l.b16 %v4113
      %v4190 = vunpack.c.l.b16 %v4114
      %v4191 = vunpack.c.h.b16 %v4114
      %v4192 = vunpack.c.l.b16 %v4115
      %v4193 = vunpack.c.l.b16 %v4116
      %v4194 = vunpack.c.h.b16 %v4116
      %v4195 = vunpack.c.l.b16 %v4117
      %v4196 = vunpack.c.l.b16 %v4118
      %v4197 = vunpack.c.h.b16 %v4118
      %v4198 = vunpack.c.l.b16 %v4119
      %v4199 = vunpack.c.l.b16 %v4120
      %v4200 = vunpack.c.h.b16 %v4120
      %v4201 = vunpack.c.l.b16 %v4121
      %v4202 = vpack.c.b16 %v4154, %v4154
      %v4203 = vpack.c.b16 %v4155, %v4155
      %v4204 = vpack.c.b16 %v4156, %v4156
      %v4205 = vpack.c.b16 %v4157, %v4157
      %v4206 = vpack.c.b16 %v4158, %v4158
      %v4207 = vpack.c.b16 %v4159, %v4159
      %v4208 = vpack.c.b16 %v4160, %v4160
      %v4209 = vpack.c.b16 %v4161, %v4161
      %v4210 = vpack.c.b16 %v4162, %v4162
      %v4211 = vpack.c.b16 %v4163, %v4163
      %v4212 = vpack.c.b16 %v4164, %v4164
      %v4213 = vpack.c.b16 %v4165, %v4165
      %v4214 = vpack.c.b16 %v4166, %v4166
      %v4215 = vpack.c.b16 %v4167, %v4167
      %v4216 = vpack.c.b16 %v4168, %v4168
      %v4217 = vpack.c.b16 %v4169, %v4169
      %v4218 = vpack.c.b16 %v4170, %v4170
      %v4219 = vpack.c.b16 %v4171, %v4171
      %v4220 = vpack.c.b16 %v4172, %v4172
      %v4221 = vpack.c.b16 %v4173, %v4173
      %v4222 = vpack.c.b16 %v4174, %v4174
      %v4223 = vpack.c.b16 %v4175, %v4175
      %v4224 = vpack.c.b16 %v4176, %v4176
      %v4225 = vpack.c.b16 %v4177, %v4177
      %v4226 = vpack.c.b16 %v4178, %v4178
      %v4227 = vpack.c.b16 %v4179, %v4179
      %v4228 = vpack.c.b16 %v4180, %v4180
      %v4229 = vpack.c.b16 %v4181, %v4181
      %v4230 = vpack.c.b16 %v4182, %v4182
      %v4231 = vpack.c.b16 %v4183, %v4183
      %v4232 = vpack.c.b16 %v4184, %v4184
      %v4233 = vpack.c.b16 %v4185, %v4185
      %v4234 = vpack.c.b16 %v4186, %v4186
      %v4235 = vpack.c.b16 %v4187, %v4187
      %v4236 = vpack.c.b16 %v4188, %v4188
      %v4237 = vpack.c.b16 %v4189, %v4189
      %v4238 = vpack.c.b16 %v4190, %v4190
      %v4239 = vpack.c.b16 %v4191, %v4191
      %v4240 = vpack.c.b16 %v4192, %v4192
      %v4241 = vpack.c.b16 %v4193, %v4193
      %v4242 = vpack.c.b16 %v4194, %v4194
      %v4243 = vpack.c.b16 %v4195, %v4195
      %v4244 = vpack.c.b16 %v4196, %v4196
      %v4245 = vpack.c.b16 %v4197, %v4197
      %v4246 = vpack.c.b16 %v4198, %v4198
      %v4247 = vpack.c.b16 %v4199, %v4199
      %v4248 = vpack.c.b16 %v4200, %v4200
      %v4249 = vpack.c.b16 %v4201, %v4201
      %4298 = vst [vmem:[%s403] sm:$0xf] %v4202
      %4299 = vst [vmem:[%s403 + $0x4] sm:$0xf] %v4203
      %4300 = vst [vmem:[%s403 + $0x8] sm:$0xf] %v4204
      %4301 = vst [vmem:[%s403 + $0xc] sm:$0xf] %v4205
      %4302 = vst [vmem:[%s403 + $0x10] sm:$0xf] %v4206
      %4303 = vst [vmem:[%s403 + $0x14] sm:$0xf] %v4207
      %4304 = vst [vmem:[%s403 + $0x18] sm:$0xf] %v4208
      %4305 = vst [vmem:[%s403 + $0x1c] sm:$0xf] %v4209
      %4306 = vst [vmem:[%s403 + $0x20] sm:$0xf] %v4210
      %4307 = vst [vmem:[%s403 + $0x24] sm:$0xf] %v4211
      %4308 = vst [vmem:[%s403 + $0x28] sm:$0xf] %v4212
      %4309 = vst [vmem:[%s403 + $0x2c] sm:$0xf] %v4213
      %4310 = vst [vmem:[%s403 + $0x30] sm:$0xf] %v4214
      %4311 = vst [vmem:[%s403 + $0x34] sm:$0xf] %v4215
      %4312 = vst [vmem:[%s403 + $0x38] sm:$0xf] %v4216
      %4313 = vst [vmem:[%s403 + $0x3c] sm:$0xf] %v4217
      %4314 = vst [vmem:[%s403 + $0x40] sm:$0xf] %v4218
      %4315 = vst [vmem:[%s403 + $0x44] sm:$0xf] %v4219
      %4316 = vst [vmem:[%s403 + $0x48] sm:$0xf] %v4220
      %4317 = vst [vmem:[%s403 + $0x4c] sm:$0xf] %v4221
      %4318 = vst [vmem:[%s403 + $0x50] sm:$0xf] %v4222
      %4319 = vst [vmem:[%s403 + $0x54] sm:$0xf] %v4223
      %4320 = vst [vmem:[%s403 + $0x58] sm:$0xf] %v4224
      %4321 = vst [vmem:[%s403 + $0x5c] sm:$0xf] %v4225
      %4322 = vst [vmem:[%s403 + $0x60] sm:$0xf] %v4226
      %4323 = vst [vmem:[%s403 + $0x64] sm:$0xf] %v4227
      %4324 = vst [vmem:[%s403 + $0x68] sm:$0xf] %v4228
      %4325 = vst [vmem:[%s403 + $0x6c] sm:$0xf] %v4229
      %4326 = vst [vmem:[%s403 + $0x70] sm:$0xf] %v4230
      %4327 = vst [vmem:[%s403 + $0x74] sm:$0xf] %v4231
      %4328 = vst [vmem:[%s403 + $0x78] sm:$0xf] %v4232
      %4329 = vst [vmem:[%s403 + $0x7c] sm:$0xf] %v4233
      %4330 = vst [vmem:[%s403 + $0x80] sm:$0xf] %v4234
      %4331 = vst [vmem:[%s403 + $0x84] sm:$0xf] %v4235
      %4332 = vst [vmem:[%s403 + $0x88] sm:$0xf] %v4236
      %4333 = vst [vmem:[%s403 + $0x8c] sm:$0xf] %v4237
      %4334 = vst [vmem:[%s403 + $0x90] sm:$0xf] %v4238
      %4335 = vst [vmem:[%s403 + $0x94] sm:$0xf] %v4239
      %4336 = vst [vmem:[%s403 + $0x98] sm:$0xf] %v4240
      %4337 = vst [vmem:[%s403 + $0x9c] sm:$0xf] %v4241
      %4338 = vst [vmem:[%s403 + $0xa0] sm:$0xf] %v4242
      %4339 = vst [vmem:[%s403 + $0xa4] sm:$0xf] %v4243
      %4340 = vst [vmem:[%s403 + $0xa8] sm:$0xf] %v4244
      %4341 = vst [vmem:[%s403 + $0xac] sm:$0xf] %v4245
      %4342 = vst [vmem:[%s403 + $0xb0] sm:$0xf] %v4246
      %4343 = vst [vmem:[%s403 + $0xb4] sm:$0xf] %v4247
      %4344 = vst [vmem:[%s403 + $0xb8] sm:$0xf] %v4248
      %4345 = vst [vmem:[%s403 + $0xbc] sm:$0xf] %v4249
      %s4346 = smul.u32 16, %s22
      %p4347 = scmp.lt.s32.totalorder %s21, 1
      %s4348 = scalar_select %p4347, %s21, 1
      %p4349 = scmp.lt.s32.totalorder %s4346, 15
      %s4350 = scalar_select %p4349, %s4346, 15
      %s4351 = smul.addr %s4350, 3
      %s4352 = smul.addr %s4348, 48
      %s4353 = sadd.s32 %s4351, %s4352
      %s4354 = smul.addr %s4353, 4
      %s4355 = scalar_lea.vmem %s4, %s4354
      %p4356 = scmp.lt.s32.totalorder %s21, 1
      %s4357 = scalar_select %p4356, %s21, 1
      %p4358 = scmp.lt.s32.totalorder %s22, 0
      %s4359 = scalar_select %p4358, %s22, 0
      %s4360 = sadd.s32 %s4359, %s4357
      %s4361 = smul.addr %s4360, 2
      %s4362 = scalar_lea.vmem %s5, %s4361
      // Predicated region
      $region37: #{residual_up_block_forward.4} parent=35 // pred_check
        %p4363 = pneg %p170
      $region38: #{residual_up_block_forward.4} parent=35 // pred_check_branch
        %4365 = sbr.rel (%p4363) target = $region40
      $region39: #{residual_up_block_forward.4} parent=35 // pred_region
        %s4366 = smul.u32 16, %s22
      $region40: #{residual_up_block_forward.4} parent=35 // pred_fallthru
        _
      // Predicated region
      $region41: #{residual_up_block_forward.4} parent=35 // pred_check
        %p4367 = pneg %p198
      $region42: #{residual_up_block_forward.4} parent=35 // pred_check_branch
        %4369 = sbr.rel (%p4367) target = $region44
      $region43: #{residual_up_block_forward.4} parent=35 // pred_region
        _
      $region44: #{residual_up_block_forward.4} parent=35 // pred_fallthru
        _
    $region36: #{residual_up_block_forward.4} parent=5 // pred_fallthru
      _
    %p4370 = scmp.le.s32.totalorder 2, %s12
    // Predicated region
    $region45: #{residual_up_block_forward.4} parent=5 // pred_check
      %p4371 = pneg %p4370
    $region46: #{residual_up_block_forward.4} parent=5 // pred_check_branch
      %4373 = sbr.rel (%p4371) target = $region48
    $region47: #{residual_up_block_forward.4} parent=5 // pred_region
      %s4374 = ssub.s32 %s12, 2
      // Predicated region
      $region49: #{residual_up_block_forward.4} parent=47 // pred_check
        %p4375 = pneg %p176
      $region50: #{residual_up_block_forward.4} parent=47 // pred_check_branch
        %4377 = sbr.rel (%p4375) target = $region52
      $region51: #{residual_up_block_forward.4} parent=47 // pred_region
        %s4378 = smul.u32 16, %s24
        %p4379 = scmp.lt.s32.totalorder %s23, 1
        %s4380 = scalar_select %p4379, %s23, 1
        %p4381 = scmp.lt.s32.totalorder %s4378, 15
        %s4382 = scalar_select %p4381, %s4378, 15
        %s4383 = smul.addr %s4382, 3
        %s4384 = smul.addr %s4380, 48
        %s4385 = sadd.s32 %s4383, %s4384
        %s4386 = smul.addr %s4385, 4
        %s4387 = scalar_lea.vmem %s4, %s4386
      $region52: #{residual_up_block_forward.4} parent=47 // pred_fallthru
        _
      // Predicated region
      $region53: #{residual_up_block_forward.4} parent=47 // pred_check
        %p4388 = pneg %p204
      $region54: #{residual_up_block_forward.4} parent=47 // pred_check_branch
        %4390 = sbr.rel (%p4388) target = $region56
      $region55: #{residual_up_block_forward.4} parent=47 // pred_region
        %p4391 = scmp.lt.s32.totalorder %s23, 1
        %s4392 = scalar_select %p4391, %s23, 1
        %p4393 = scmp.lt.s32.totalorder %s24, 0
        %s4394 = scalar_select %p4393, %s24, 0
        %s4395 = sadd.s32 %s4394, %s4392
        %s4396 = smul.addr %s4395, 2
        %s4397 = scalar_lea.vmem %s5, %s4396
      $region56: #{residual_up_block_forward.4} parent=47 // pred_fallthru
        _
    $region48: #{residual_up_block_forward.4} parent=5 // pred_fallthru
      _
  $region6: #{residual_up_block_forward.4} parent=0 // loop_footer
    %s16 = sadd.s32 1, %s12
  $region7: #{residual_up_block_forward.4} parent=0 // loop_footer_branch
    %11 = sbr.rel target = $region3
  $region8: #{residual_up_block_forward.4} parent=0 // loop_exit
    _

// kernel: residual_up_block_forward.5
$region0: #{residual_up_block_forward.5}
  #allocation0 [shape = 'u32[]', space=smem, size = 0x4, offset = 0x4, fixed_abs, tag = 'smem constant byte address 0x4 - core index']
  #allocation1 [shape = 'u32[144,128]{1,0:T(1,128)}', space=vmem, size = 0x12000, scoped, tag = 'internal scratch']
  %s0 = inlined_call_operand.vmem [shape: bf16[2,16,24,128], index: 0, kind: input, shape index: {}, may-alias: {0,1,2}]
  %s1 = inlined_call_operand.vmem [shape: bf16[2,16,24,128], index: 1, kind: input, shape index: {}, may-alias: {0,1,2}]
  %s2 = inlined_call_operand.vmem [shape: bf16[2,16,24,128], index: 2, kind: input, shape index: {}, may-alias: {0,1,2}]
  %s3 = inlined_call_operand.vmem [shape: bf16[3,384,128], index: 3, kind: input, shape index: {}]
  %s4 = inlined_call_operand.vmem [shape: f32[2,128], index: 4, kind: input, shape index: {}]
  %s5 = inlined_call_operand.vmem [shape: bf16[2,16,24,128], index: 5, kind: output, shape index: {0}]
  %s6 = inlined_call_operand.vmem [shape: f32[2,1,2,128], index: 6, kind: output, shape index: {1}]
  %7 = xla_tuple %s5, %s6
  %s8 = sld [smem:[#allocation0]]
  $region61: #{residual_up_block_forward.5} parent=0
    _
  %s10 = ssub.s32 1, %s8
  %s11 = scalar_select 0, %s10, %s8
  loop: start=0, step=1, limit=4
  $region2: #{residual_up_block_forward.5} parent=0 // loop_pre_header
    _
  $region3: #{residual_up_block_forward.5} parent=0 // loop_header
    %s13 = sphi 0, %s17
    %p14 = scmp.ge.s32.totalorder %s13, 4
    %s20 = sphi 0, %s32
    %s21 = sphi 0, %s28
    %s22 = sphi 0, %s20
    %s23 = sphi 0, %s21
    %s24 = sphi 0, %s22
    %s25 = sphi 0, %s23
    %s45 = sphi 0, %s47
    %s48 = sphi 0, %s45
    %s49 = sphi 0, %s48
    %s65 = sphi 0, %s49
    %s73 = sphi 0, %s75
    %s76 = sphi 0, %s73
    %s77 = sphi 0, %s76
    %s93 = sphi 0, %s77
    %s109 = sphi 0, %s111
    %s112 = sphi 0, %s109
    %s113 = sphi 0, %s112
    %s129 = sphi 0, %s113
    %s133 = sphi 0, %s133
    %s135 = sphi 0, %s133
    %s136 = sphi 0, %s135
    %s150 = sphi 0, %s136
    %s154 = sphi 0, %s154
    %s156 = sphi 0, %s154
    %s157 = sphi 0, %s156
    %s171 = sphi 0, %s157
    %s179 = sphi 0, %s181
    %s182 = sphi 0, %s179
    %s183 = sphi 0, %s182
    %s199 = sphi 0, %s183
    %s207 = sphi 0, %s209
    %s210 = sphi 0, %s207
    %s211 = sphi 0, %s210
    %s227 = sphi 0, %s211
  $region4: #{residual_up_block_forward.5} parent=0 // loop_header_branch
    %16 = sbr.rel (%p14) target = $region8
  $region5: #{residual_up_block_forward.5} parent=0 // loop_body
    %s18 = ssub.s32 %s13, 1
    %s19 = ssub.s32 %s13, 2
    %s26 = sadd.s32 1, %s21
    %p27 = scmp.ge.s32.totalorder %s26, 1
    %s28 = scalar_select %p27, 0, %s26
    %s29 = sadd.s32 1, %s20
    %s30 = scalar_select %p27, %s29, %s20
    %p31 = scmp.ge.s32.totalorder %s30, 2
    %s32 = scalar_select %p31, 0, %s30
    %s33 = smul.u32 %s21, 16
    %s34 = ssub.s32 %s33, 1
    %p35 = scmp.gt.s32.totalorder %s34, 0
    %s36 = scalar_select %p35, %s34, 0
    %s37 = smul.u32 %s28, 16
    %s38 = ssub.s32 %s37, 1
    %p39 = scmp.gt.s32.totalorder %s38, 0
    %s40 = scalar_select %p39, %s38, 0
    %s41 = ssub.s32 %s20, %s32
    %s42 = ssub.s32 %s36, %s40
    %s43 = sor.u32 %s41, %s42
    %p44 = scmp.eq.s32.totalorder %s43, 0
    %s46 = sadd.s32 %s45, 1
    %s47 = scalar_select %p44, %s45, %s46
    %p50 = pneg %p44
    %p51 = scmp.eq.s32.totalorder %s13, 1
    %p52 = por %p50, %p51
    %p53 = scmp.ne.s32.totalorder %s45, %s48
    %p54 = scmp.eq.s32.totalorder %s13, 0
    %p55 = por %p53, %p54
    %p56 = scmp.ne.s32.totalorder %s45, %s48
    %p57 = scmp.eq.s32.totalorder %s18, 1
    %p58 = por %p56, %p57
    %p59 = scmp.ne.s32.totalorder %s48, %s49
    %p60 = scmp.eq.s32.totalorder %s18, 0
    %p61 = por %p59, %p60
    %p62 = scmp.ne.s32.totalorder %s48, %s49
    %p63 = scmp.eq.s32.totalorder %s19, 1
    %p64 = por %p62, %p63
    %p66 = scmp.ne.s32.totalorder %s49, %s65
    %p67 = scmp.eq.s32.totalorder %s19, 0
    %p68 = por %p66, %p67
    %s69 = ssub.s32 %s20, %s32
    %s70 = ssub.s32 %s21, %s28
    %s71 = sor.u32 %s69, %s70
    %p72 = scmp.eq.s32.totalorder %s71, 0
    %s74 = sadd.s32 %s73, 1
    %s75 = scalar_select %p72, %s73, %s74
    %p78 = pneg %p72
    %p79 = scmp.eq.s32.totalorder %s13, 1
    %p80 = por %p78, %p79
    %p81 = scmp.ne.s32.totalorder %s73, %s76
    %p82 = scmp.eq.s32.totalorder %s13, 0
    %p83 = por %p81, %p82
    %p84 = scmp.ne.s32.totalorder %s73, %s76
    %p85 = scmp.eq.s32.totalorder %s18, 1
    %p86 = por %p84, %p85
    %p87 = scmp.ne.s32.totalorder %s76, %s77
    %p88 = scmp.eq.s32.totalorder %s18, 0
    %p89 = por %p87, %p88
    %p90 = scmp.ne.s32.totalorder %s76, %s77
    %p91 = scmp.eq.s32.totalorder %s19, 1
    %p92 = por %p90, %p91
    %p94 = scmp.ne.s32.totalorder %s77, %s93
    %p95 = scmp.eq.s32.totalorder %s19, 0
    %p96 = por %p94, %p95
    %s97 = sadd.s32 %s21, 1
    %s98 = smul.u32 %s97, 16
    %p99 = scmp.lt.s32.totalorder %s98, 15
    %s100 = scalar_select %p99, %s98, 15
    %s101 = sadd.s32 %s28, 1
    %s102 = smul.u32 %s101, 16
    %p103 = scmp.lt.s32.totalorder %s102, 15
    %s104 = scalar_select %p103, %s102, 15
    %s105 = ssub.s32 %s20, %s32
    %s106 = ssub.s32 %s100, %s104
    %s107 = sor.u32 %s105, %s106
    %p108 = scmp.eq.s32.totalorder %s107, 0
    %s110 = sadd.s32 %s109, 1
    %s111 = scalar_select %p108, %s109, %s110
    %p114 = pneg %p108
    %p115 = scmp.eq.s32.totalorder %s13, 1
    %p116 = por %p114, %p115
    %p117 = scmp.ne.s32.totalorder %s109, %s112
    %p118 = scmp.eq.s32.totalorder %s13, 0
    %p119 = por %p117, %p118
    %p120 = scmp.ne.s32.totalorder %s109, %s112
    %p121 = scmp.eq.s32.totalorder %s18, 1
    %p122 = por %p120, %p121
    %p123 = scmp.ne.s32.totalorder %s112, %s113
    %p124 = scmp.eq.s32.totalorder %s18, 0
    %p125 = por %p123, %p124
    %p126 = scmp.ne.s32.totalorder %s112, %s113
    %p127 = scmp.eq.s32.totalorder %s19, 1
    %p128 = por %p126, %p127
    %p130 = scmp.ne.s32.totalorder %s113, %s129
    %p131 = scmp.eq.s32.totalorder %s19, 0
    %p132 = por %p130, %p131
    %s134 = sadd.s32 %s133, 1
    %p137 = scmp.eq.s32.totalorder %s13, 1
    %p138 = scmp.ne.s32.totalorder %s133, %s135
    %p139 = scmp.eq.s32.totalorder %s13, 0
    %p140 = por %p138, %p139
    %p141 = scmp.ne.s32.totalorder %s133, %s135
    %p142 = scmp.eq.s32.totalorder %s18, 1
    %p143 = por %p141, %p142
    %p144 = scmp.ne.s32.totalorder %s135, %s136
    %p145 = scmp.eq.s32.totalorder %s18, 0
    %p146 = por %p144, %p145
    %p147 = scmp.ne.s32.totalorder %s135, %s136
    %p148 = scmp.eq.s32.totalorder %s19, 1
    %p149 = por %p147, %p148
    %p151 = scmp.ne.s32.totalorder %s136, %s150
    %p152 = scmp.eq.s32.totalorder %s19, 0
    %p153 = por %p151, %p152
    %s155 = sadd.s32 %s154, 1
    %p158 = scmp.eq.s32.totalorder %s13, 1
    %p159 = scmp.ne.s32.totalorder %s154, %s156
    %p160 = scmp.eq.s32.totalorder %s13, 0
    %p161 = por %p159, %p160
    %p162 = scmp.ne.s32.totalorder %s154, %s156
    %p163 = scmp.eq.s32.totalorder %s18, 1
    %p164 = por %p162, %p163
    %p165 = scmp.ne.s32.totalorder %s156, %s157
    %p166 = scmp.eq.s32.totalorder %s18, 0
    %p167 = por %p165, %p166
    %p168 = scmp.ne.s32.totalorder %s156, %s157
    %p169 = scmp.eq.s32.totalorder %s19, 1
    %p170 = por %p168, %p169
    %p172 = scmp.ne.s32.totalorder %s157, %s171
    %p173 = scmp.eq.s32.totalorder %s19, 0
    %p174 = por %p172, %p173
    %s175 = ssub.s32 %s20, %s32
    %s176 = ssub.s32 %s21, %s28
    %s177 = sor.u32 %s175, %s176
    %p178 = scmp.eq.s32.totalorder %s177, 0
    %s180 = sadd.s32 %s179, 1
    %s181 = scalar_select %p178, %s179, %s180
    %p184 = pneg %p178
    %p185 = scmp.eq.s32.totalorder %s13, 1
    %p186 = por %p184, %p185
    %p187 = scmp.ne.s32.totalorder %s179, %s182
    %p188 = scmp.eq.s32.totalorder %s13, 0
    %p189 = por %p187, %p188
    %p190 = scmp.ne.s32.totalorder %s179, %s182
    %p191 = scmp.eq.s32.totalorder %s18, 1
    %p192 = por %p190, %p191
    %p193 = scmp.ne.s32.totalorder %s182, %s183
    %p194 = scmp.eq.s32.totalorder %s18, 0
    %p195 = por %p193, %p194
    %p196 = scmp.ne.s32.totalorder %s182, %s183
    %p197 = scmp.eq.s32.totalorder %s19, 1
    %p198 = por %p196, %p197
    %p200 = scmp.ne.s32.totalorder %s183, %s199
    %p201 = scmp.eq.s32.totalorder %s19, 0
    %p202 = por %p200, %p201
    %s203 = ssub.s32 %s20, %s32
    %s204 = ssub.s32 %s21, %s28
    %s205 = sor.u32 %s203, %s204
    %p206 = scmp.eq.s32.totalorder %s205, 0
    %s208 = sadd.s32 %s207, 1
    %s209 = scalar_select %p206, %s207, %s208
    %p212 = pneg %p206
    %p213 = scmp.eq.s32.totalorder %s13, 1
    %p214 = por %p212, %p213
    %p215 = scmp.ne.s32.totalorder %s207, %s210
    %p216 = scmp.eq.s32.totalorder %s13, 0
    %p217 = por %p215, %p216
    %p218 = scmp.ne.s32.totalorder %s207, %s210
    %p219 = scmp.eq.s32.totalorder %s18, 1
    %p220 = por %p218, %p219
    %p221 = scmp.ne.s32.totalorder %s210, %s211
    %p222 = scmp.eq.s32.totalorder %s18, 0
    %p223 = por %p221, %p222
    %p224 = scmp.ne.s32.totalorder %s210, %s211
    %p225 = scmp.eq.s32.totalorder %s19, 1
    %p226 = por %p224, %p225
    %p228 = scmp.ne.s32.totalorder %s211, %s227
    %p229 = scmp.eq.s32.totalorder %s19, 0
    %p230 = por %p228, %p229
    %p231 = scmp.le.s32.totalorder 1, %s13
    %p232 = scmp.lt.s32.totalorder %s13, 3
    %p233 = pnand %p231, %p232
    %p234 = pneg %p233
    // Predicated region
    $region9: #{residual_up_block_forward.5} parent=5 // pred_check
      _
    $region10: #{residual_up_block_forward.5} parent=5 // pred_check_branch
      %236 = sbr.rel (%p233) target = $region12
    $region11: #{residual_up_block_forward.5} parent=5 // pred_region
      %s237 = ssub.s32 %s13, 1
      // Predicated region
      $region13: #{residual_up_block_forward.5} parent=11 // pred_check
        %p238 = pneg %p146
      $region14: #{residual_up_block_forward.5} parent=11 // pred_check_branch
        %240 = sbr.rel (%p238) target = $region16
      $region15: #{residual_up_block_forward.5} parent=11 // pred_region
        _
      $region16: #{residual_up_block_forward.5} parent=11 // pred_fallthru
        _
      // Predicated region
      $region17: #{residual_up_block_forward.5} parent=11 // pred_check
        %p241 = pneg %p167
      $region18: #{residual_up_block_forward.5} parent=11 // pred_check_branch
        %243 = sbr.rel (%p241) target = $region20
      $region19: #{residual_up_block_forward.5} parent=11 // pred_region
        _
      $region20: #{residual_up_block_forward.5} parent=11 // pred_fallthru
        _
    $region12: #{residual_up_block_forward.5} parent=5 // pred_fallthru
      _
    %p244 = scmp.lt.s32.totalorder %s13, 2
    // Predicated region
    $region21: #{residual_up_block_forward.5} parent=5 // pred_check
      %p245 = pneg %p244
    $region22: #{residual_up_block_forward.5} parent=5 // pred_check_branch
      %247 = sbr.rel (%p245) target = $region24
    $region23: #{residual_up_block_forward.5} parent=5 // pred_region
      // Predicated region
      $region25: #{residual_up_block_forward.5} parent=23 // pred_check
        %p248 = pneg %p55
      $region26: #{residual_up_block_forward.5} parent=23 // pred_check_branch
        %250 = sbr.rel (%p248) target = $region28
      $region27: #{residual_up_block_forward.5} parent=23 // pred_region
        %s251 = smul.u32 %s21, 16
        %s252 = ssub.s32 %s251, 1
        %p253 = scmp.gt.s32.totalorder %s252, 0
        %s254 = scalar_select %p253, %s252, 0
        %p255 = scmp.lt.s32.totalorder %s20, 1
        %s256 = scalar_select %p255, %s20, 1
        %p257 = scmp.lt.s32.totalorder %s254, 15
        %s258 = scalar_select %p257, %s254, 15
        %s259 = smul.addr %s258, 3
        %s260 = smul.addr %s256, 48
        %s261 = sadd.s32 %s259, %s260
        %s262 = smul.addr %s261, 4
        %s263 = scalar_lea.vmem %s0, %s262
        %s264 = smul.u32 %s21, 16
        %s265 = ssub.s32 %s264, 1
        %p266 = scmp.gt.s32.totalorder %s265, 0
        %s267 = scalar_select %p266, %s265, 0
      $region28: #{residual_up_block_forward.5} parent=23 // pred_fallthru
        _
      // Predicated region
      $region29: #{residual_up_block_forward.5} parent=23 // pred_check
        %p268 = pneg %p83
      $region30: #{residual_up_block_forward.5} parent=23 // pred_check_branch
        %270 = sbr.rel (%p268) target = $region32
      $region31: #{residual_up_block_forward.5} parent=23 // pred_region
        %s271 = smul.u32 16, %s21
        %p272 = scmp.lt.s32.totalorder %s20, 1
        %s273 = scalar_select %p272, %s20, 1
        %p274 = scmp.lt.s32.totalorder %s271, 15
        %s275 = scalar_select %p274, %s271, 15
        %s276 = smul.addr %s275, 3
        %s277 = smul.addr %s273, 48
        %s278 = sadd.s32 %s276, %s277
        %s279 = smul.addr %s278, 4
        %s280 = scalar_lea.vmem %s1, %s279
        %s281 = smul.u32 16, %s21
      $region32: #{residual_up_block_forward.5} parent=23 // pred_fallthru
        _
      // Predicated region
      $region33: #{residual_up_block_forward.5} parent=23 // pred_check
        %p282 = pneg %p119
      $region34: #{residual_up_block_forward.5} parent=23 // pred_check_branch
        %284 = sbr.rel (%p282) target = $region36
      $region35: #{residual_up_block_forward.5} parent=23 // pred_region
        %s285 = sadd.s32 %s21, 1
        %s286 = smul.u32 %s285, 16
        %p287 = scmp.lt.s32.totalorder %s286, 15
        %s288 = scalar_select %p287, %s286, 15
        %p289 = scmp.lt.s32.totalorder %s20, 1
        %s290 = scalar_select %p289, %s20, 1
        %p291 = scmp.lt.s32.totalorder %s288, 15
        %s292 = scalar_select %p291, %s288, 15
        %s293 = smul.addr %s292, 3
        %s294 = smul.addr %s290, 48
        %s295 = sadd.s32 %s293, %s294
        %s296 = smul.addr %s295, 4
        %s297 = scalar_lea.vmem %s2, %s296
        %s298 = sadd.s32 %s21, 1
        %s299 = smul.u32 %s298, 16
        %p300 = scmp.lt.s32.totalorder %s299, 15
        %s301 = scalar_select %p300, %s299, 15
      $region36: #{residual_up_block_forward.5} parent=23 // pred_fallthru
        _
    $region24: #{residual_up_block_forward.5} parent=5 // pred_fallthru
      _
    %p302 = scmp.le.s32.totalorder 1, %s13
    %p303 = scmp.lt.s32.totalorder %s13, 3
    %p304 = pnand %p302, %p303
    %p305 = pneg %p304
    // Predicated region
    $region37: #{residual_up_block_forward.5} parent=5 // pred_check
      _
    $region38: #{residual_up_block_forward.5} parent=5 // pred_check_branch
      %307 = sbr.rel (%p304) target = $region40
    $region39: #{residual_up_block_forward.5} parent=5 // pred_region
      %s308 = ssub.s32 %s13, 1
      %s309 = smul.u32 %s23, 16
      %s310 = ssub.s32 %s309, 1
      %p311 = scmp.gt.s32.totalorder %s310, 0
      %s312 = scalar_select %p311, %s310, 0
      %p313 = scmp.lt.s32.totalorder %s22, 1
      %s314 = scalar_select %p313, %s22, 1
      %p315 = scmp.lt.s32.totalorder %s312, 15
      %s316 = scalar_select %p315, %s312, 15
      %s317 = smul.addr %s316, 3
      %s318 = smul.addr %s314, 48
      %s319 = sadd.s32 %s317, %s318
      %s320 = smul.addr %s319, 4
      %s321 = scalar_lea.vmem %s0, %s320
      %p322 = pneg %p61
      %p323 = pneg %p58
      %s324 = smul.u32 16, %s23
      %p325 = scmp.lt.s32.totalorder %s22, 1
      %s326 = scalar_select %p325, %s22, 1
      %p327 = scmp.lt.s32.totalorder %s324, 15
      %s328 = scalar_select %p327, %s324, 15
      %s329 = smul.addr %s328, 3
      %s330 = smul.addr %s326, 48
      %s331 = sadd.s32 %s329, %s330
      %s332 = smul.addr %s331, 4
      %s333 = scalar_lea.vmem %s1, %s332
      %p334 = pneg %p89
      %p335 = pneg %p86
      %s336 = sadd.s32 %s23, 1
      %s337 = smul.u32 %s336, 16
      %p338 = scmp.lt.s32.totalorder %s337, 15
      %s339 = scalar_select %p338, %s337, 15
      %p340 = scmp.lt.s32.totalorder %s22, 1
      %s341 = scalar_select %p340, %s22, 1
      %p342 = scmp.lt.s32.totalorder %s339, 15
      %s343 = scalar_select %p342, %s339, 15
      %s344 = smul.addr %s343, 3
      %s345 = smul.addr %s341, 48
      %s346 = sadd.s32 %s344, %s345
      %s347 = smul.addr %s346, 4
      %s348 = scalar_lea.vmem %s2, %s347
      %p349 = pneg %p125
      %p350 = pneg %p122
      %p351 = pneg %p146
      %p352 = pneg %p143
      %p353 = pneg %p167
      %p354 = pneg %p164
      %p355 = pneg %p195
      %p356 = pneg %p192
      %s357 = smul.u32 16, %s23
      %p358 = scmp.lt.s32.totalorder %s22, 1
      %s359 = scalar_select %p358, %s22, 1
      %p360 = scmp.lt.s32.totalorder %s357, 15
      %s361 = scalar_select %p360, %s357, 15
      %s362 = smul.addr %s361, 3
      %s363 = smul.addr %s359, 48
      %s364 = sadd.s32 %s362, %s363
      %s365 = smul.addr %s364, 4
      %s366 = scalar_lea.vmem %s5, %s365
      %p367 = pneg %p223
      %p368 = pneg %p220
      %p369 = scmp.lt.s32.totalorder %s22, 1
      %s370 = scalar_select %p369, %s22, 1
      %p371 = scmp.lt.s32.totalorder %s23, 0
      %s372 = scalar_select %p371, %s23, 0
      %s373 = sadd.s32 %s372, %s370
      %s374 = smul.addr %s373, 2
      %s375 = scalar_lea.vmem %s6, %s374
      %s376 = smul.u32 %s23, 16
      %s377 = ssub.s32 %s376, 1
      %p378 = scmp.gt.s32.totalorder %s377, 0
      %s379 = scalar_select %p378, %s377, 0
      %p380 = scmp.lt.s32.totalorder %s22, 1
      %s381 = scalar_select %p380, %s22, 1
      %p382 = scmp.lt.s32.totalorder %s379, 15
      %s383 = scalar_select %p382, %s379, 15
      %s384 = smul.addr %s383, 3
      %s385 = smul.addr %s381, 48
      %s386 = sadd.s32 %s384, %s385
      %s387 = smul.addr %s386, 4
      %s388 = scalar_lea.vmem %s0, %s387
      %s389 = smul.u32 %s23, 16
      %s390 = ssub.s32 %s389, 1
      %p391 = scmp.gt.s32.totalorder %s390, 0
      %s392 = scalar_select %p391, %s390, 0
      %s393 = smul.u32 16, %s23
      %p394 = scmp.lt.s32.totalorder %s22, 1
      %s395 = scalar_select %p394, %s22, 1
      %p396 = scmp.lt.s32.totalorder %s393, 15
      %s397 = scalar_select %p396, %s393, 15
      %s398 = smul.addr %s397, 3
      %s399 = smul.addr %s395, 48
      %s400 = sadd.s32 %s398, %s399
      %s401 = smul.addr %s400, 4
      %s402 = scalar_lea.vmem %s1, %s401
      %s403 = smul.u32 16, %s23
      %s404 = sadd.s32 %s23, 1
      %s405 = smul.u32 %s404, 16
      %p406 = scmp.lt.s32.totalorder %s405, 15
      %s407 = scalar_select %p406, %s405, 15
      %p408 = scmp.lt.s32.totalorder %s22, 1
      %s409 = scalar_select %p408, %s22, 1
      %p410 = scmp.lt.s32.totalorder %s407, 15
      %s411 = scalar_select %p410, %s407, 15
      %s412 = smul.addr %s411, 3
      %s413 = smul.addr %s409, 48
      %s414 = sadd.s32 %s412, %s413
      %s415 = smul.addr %s414, 4
      %s416 = scalar_lea.vmem %s2, %s415
      %s417 = sadd.s32 %s23, 1
      %s418 = smul.u32 %s417, 16
      %p419 = scmp.lt.s32.totalorder %s418, 15
      %s420 = scalar_select %p419, %s418, 15
      %s421 = smul.u32 16, %s23
      %p422 = scmp.lt.s32.totalorder %s22, 1
      %s423 = scalar_select %p422, %s22, 1
      %p424 = scmp.lt.s32.totalorder %s421, 15
      %s425 = scalar_select %p424, %s421, 15
      %s426 = smul.addr %s425, 3
      %s427 = smul.addr %s423, 48
      %s428 = sadd.s32 %s426, %s427
      %s429 = smul.addr %s428, 4
      %s430 = scalar_lea.vmem %s5, %s429
      %s431 = smul.u32 16, %s23
      %p432 = scmp.lt.s32.totalorder %s22, 1
      %s433 = scalar_select %p432, %s22, 1
      %p434 = scmp.lt.s32.totalorder %s23, 0
      %s435 = scalar_select %p434, %s23, 0
      %s436 = sadd.s32 %s435, %s433
      %s437 = smul.addr %s436, 2
      %s438 = scalar_lea.vmem %s6, %s437
      %v440 = vlaneseq
      %v441 = vshrl.u32 %v440, 7
      %v442 = vadd.s32 %v441, 8
      %v443 = vadd.s32 %v441, 16
      %vm444 = vcmp.ge.s32.totalorder %v441, 1
      %vm445 = vcmp.ge.s32.totalorder %v442, 1
      %vm446 = vcmp.ge.s32.totalorder %v443, 1
      %vm447 = vcmp.le.s32.totalorder %v441, 16
      %vm448 = vcmp.le.s32.totalorder %v442, 16
      %vm449 = vcmp.le.s32.totalorder %v443, 16
      %vm450 = vmand %vm444, %vm447
      %vm451 = vmand %vm445, %vm448
      %vm452 = vmand %vm446, %vm449
      %v453 = vsel %vm450, 1, 0
      %v454 = vsel %vm451, 1, 0
      %v455 = vsel %vm452, 1, 0
      %v456 = vcvt.s32.f32 %v453
      %v457 = vcvt.s32.f32 %v454
      %v458 = vcvt.s32.f32 %v455
      %v459 = vld [vmem:[%s388] sm:$0xf]
      %v460 = vld [vmem:[%s388 + $0x4] sm:$0xf]
      %v461 = vld [vmem:[%s388 + $0x8] sm:$0xf]
      %v462 = vld [vmem:[%s4] sm:$0x1]
      %v463 = vld [vmem:[%s4 + $0x1] sm:$0x1]
      %v464 = vunpack.c.l.bf16 %v459
      %v465 = vunpack.c.l.bf16 %v460
      %v466 = vunpack.c.l.bf16 %v461
      %v467 = vlaneseq
      %v468 = vshrl.u32 %v467, 7
      %v469 = vsub.s32 0, %v468
      %v470 = vrot.slane %v462, %v469
      %v471 = vmul.f32 %v464, %v470
      %v472 = vmul.f32 %v465, %v470
      %v473 = vmul.f32 %v466, %v470
      %v474 = vlaneseq
      %v475 = vshrl.u32 %v474, 7
      %v476 = vsub.s32 0, %v475
      %v477 = vrot.slane %v463, %v476
      %v478 = vadd.f32 %v471, %v477
      %v479 = vadd.f32 %v472, %v477
      %v480 = vadd.f32 %v473, %v477
      %v481 = vmax.f32 %v478, 0.0
      %v482 = vmax.f32 %v479, 0.0
      %v483 = vmax.f32 %v480, 0.0
      %v484 = vmul.f32 %v481, %v456
      %v485 = vmul.f32 %v482, %v457
      %v486 = vmul.f32 %v483, %v458
      %v487 = vpack.c.bf16 %v485, %v484
      %v488 = vpack.c.bf16 %v486, %v486
      %v489 = vld [vmem:[%s402] sm:$0xf]
      %v490 = vld [vmem:[%s402 + $0x4] sm:$0xf]
      %v491 = vld [vmem:[%s402 + $0x8] sm:$0xf]
      %v492 = vld [vmem:[%s402 + $0xc] sm:$0xf]
      %v493 = vld [vmem:[%s402 + $0x10] sm:$0xf]
      %v494 = vld [vmem:[%s402 + $0x14] sm:$0xf]
      %v495 = vld [vmem:[%s402 + $0x18] sm:$0xf]
      %v496 = vld [vmem:[%s402 + $0x1c] sm:$0xf]
      %v497 = vld [vmem:[%s402 + $0x20] sm:$0xf]
      %v498 = vld [vmem:[%s402 + $0x24] sm:$0xf]
      %v499 = vld [vmem:[%s402 + $0x28] sm:$0xf]
      %v500 = vld [vmem:[%s402 + $0x2c] sm:$0xf]
      %v501 = vld [vmem:[%s402 + $0x30] sm:$0xf]
      %v502 = vld [vmem:[%s402 + $0x34] sm:$0xf]
      %v503 = vld [vmem:[%s402 + $0x38] sm:$0xf]
      %v504 = vld [vmem:[%s402 + $0x3c] sm:$0xf]
      %v505 = vld [vmem:[%s402 + $0x40] sm:$0xf]
      %v506 = vld [vmem:[%s402 + $0x44] sm:$0xf]
      %v507 = vld [vmem:[%s402 + $0x48] sm:$0xf]
      %v508 = vld [vmem:[%s402 + $0x4c] sm:$0xf]
      %v509 = vld [vmem:[%s402 + $0x50] sm:$0xf]
      %v510 = vld [vmem:[%s402 + $0x54] sm:$0xf]
      %v511 = vld [vmem:[%s402 + $0x58] sm:$0xf]
      %v512 = vld [vmem:[%s402 + $0x5c] sm:$0xf]
      %v513 = vld [vmem:[%s402 + $0x60] sm:$0xf]
      %v514 = vld [vmem:[%s402 + $0x64] sm:$0xf]
      %v515 = vld [vmem:[%s402 + $0x68] sm:$0xf]
      %v516 = vld [vmem:[%s402 + $0x6c] sm:$0xf]
      %v517 = vld [vmem:[%s402 + $0x70] sm:$0xf]
      %v518 = vld [vmem:[%s402 + $0x74] sm:$0xf]
      %v519 = vld [vmem:[%s402 + $0x78] sm:$0xf]
      %v520 = vld [vmem:[%s402 + $0x7c] sm:$0xf]
      %v521 = vld [vmem:[%s402 + $0x80] sm:$0xf]
      %v522 = vld [vmem:[%s402 + $0x84] sm:$0xf]
      %v523 = vld [vmem:[%s402 + $0x88] sm:$0xf]
      %v524 = vld [vmem:[%s402 + $0x8c] sm:$0xf]
      %v525 = vld [vmem:[%s402 + $0x90] sm:$0xf]
      %v526 = vld [vmem:[%s402 + $0x94] sm:$0xf]
      %v527 = vld [vmem:[%s402 + $0x98] sm:$0xf]
      %v528 = vld [vmem:[%s402 + $0x9c] sm:$0xf]
      %v529 = vld [vmem:[%s402 + $0xa0] sm:$0xf]
      %v530 = vld [vmem:[%s402 + $0xa4] sm:$0xf]
      %v531 = vld [vmem:[%s402 + $0xa8] sm:$0xf]
      %v532 = vld [vmem:[%s402 + $0xac] sm:$0xf]
      %v533 = vld [vmem:[%s402 + $0xb0] sm:$0xf]
      %v534 = vld [vmem:[%s402 + $0xb4] sm:$0xf]
      %v535 = vld [vmem:[%s402 + $0xb8] sm:$0xf]
      %v536 = vld [vmem:[%s402 + $0xbc] sm:$0xf]
      %v537 = vunpack.c.l.bf16 %v489
      %v538 = vunpack.c.l.bf16 %v490
      %v539 = vunpack.c.l.bf16 %v491
      %v540 = vunpack.c.l.bf16 %v492
      %v541 = vunpack.c.l.bf16 %v493
      %v542 = vunpack.c.l.bf16 %v494
      %v543 = vunpack.c.l.bf16 %v495
      %v544 = vunpack.c.l.bf16 %v496
      %v545 = vunpack.c.l.bf16 %v497
      %v546 = vunpack.c.l.bf16 %v498
      %v547 = vunpack.c.l.bf16 %v499
      %v548 = vunpack.c.l.bf16 %v500
      %v549 = vunpack.c.l.bf16 %v501
      %v550 = vunpack.c.l.bf16 %v502
      %v551 = vunpack.c.l.bf16 %v503
      %v552 = vunpack.c.l.bf16 %v504
      %v553 = vunpack.c.l.bf16 %v505
      %v554 = vunpack.c.l.bf16 %v506
      %v555 = vunpack.c.l.bf16 %v507
      %v556 = vunpack.c.l.bf16 %v508
      %v557 = vunpack.c.l.bf16 %v509
      %v558 = vunpack.c.l.bf16 %v510
      %v559 = vunpack.c.l.bf16 %v511
      %v560 = vunpack.c.l.bf16 %v512
      %v561 = vunpack.c.l.bf16 %v513
      %v562 = vunpack.c.l.bf16 %v514
      %v563 = vunpack.c.l.bf16 %v515
      %v564 = vunpack.c.l.bf16 %v516
      %v565 = vunpack.c.l.bf16 %v517
      %v566 = vunpack.c.l.bf16 %v518
      %v567 = vunpack.c.l.bf16 %v519
      %v568 = vunpack.c.l.bf16 %v520
      %v569 = vunpack.c.l.bf16 %v521
      %v570 = vunpack.c.l.bf16 %v522
      %v571 = vunpack.c.l.bf16 %v523
      %v572 = vunpack.c.l.bf16 %v524
      %v573 = vunpack.c.l.bf16 %v525
      %v574 = vunpack.c.l.bf16 %v526
      %v575 = vunpack.c.l.bf16 %v527
      %v576 = vunpack.c.l.bf16 %v528
      %v577 = vunpack.c.l.bf16 %v529
      %v578 = vunpack.c.l.bf16 %v530
      %v579 = vunpack.c.l.bf16 %v531
      %v580 = vunpack.c.l.bf16 %v532
      %v581 = vunpack.c.l.bf16 %v533
      %v582 = vunpack.c.l.bf16 %v534
      %v583 = vunpack.c.l.bf16 %v535
      %v584 = vunpack.c.l.bf16 %v536
      %v585 = vmul.f32 %v537, %v470
      %v586 = vmul.f32 %v538, %v470
      %v587 = vmul.f32 %v539, %v470
      %v588 = vmul.f32 %v540, %v470
      %v589 = vmul.f32 %v541, %v470
      %v590 = vmul.f32 %v542, %v470
      %v591 = vmul.f32 %v543, %v470
      %v592 = vmul.f32 %v544, %v470
      %v593 = vmul.f32 %v545, %v470
      %v594 = vmul.f32 %v546, %v470
      %v595 = vmul.f32 %v547, %v470
      %v596 = vmul.f32 %v548, %v470
      %v597 = vmul.f32 %v549, %v470
      %v598 = vmul.f32 %v550, %v470
      %v599 = vmul.f32 %v551, %v470
      %v600 = vmul.f32 %v552, %v470
      %v601 = vmul.f32 %v553, %v470
      %v602 = vmul.f32 %v554, %v470
      %v603 = vmul.f32 %v555, %v470
      %v604 = vmul.f32 %v556, %v470
      %v605 = vmul.f32 %v557, %v470
      %v606 = vmul.f32 %v558, %v470
      %v607 = vmul.f32 %v559, %v470
      %v608 = vmul.f32 %v560, %v470
      %v609 = vmul.f32 %v561, %v470
      %v610 = vmul.f32 %v562, %v470
      %v611 = vmul.f32 %v563, %v470
      %v612 = vmul.f32 %v564, %v470
      %v613 = vmul.f32 %v565, %v470
      %v614 = vmul.f32 %v566, %v470
      %v615 = vmul.f32 %v567, %v470
      %v616 = vmul.f32 %v568, %v470
      %v617 = vmul.f32 %v569, %v470
      %v618 = vmul.f32 %v570, %v470
      %v619 = vmul.f32 %v571, %v470
      %v620 = vmul.f32 %v572, %v470
      %v621 = vmul.f32 %v573, %v470
      %v622 = vmul.f32 %v574, %v470
      %v623 = vmul.f32 %v575, %v470
      %v624 = vmul.f32 %v576, %v470
      %v625 = vmul.f32 %v577, %v470
      %v626 = vmul.f32 %v578, %v470
      %v627 = vmul.f32 %v579, %v470
      %v628 = vmul.f32 %v580, %v470
      %v629 = vmul.f32 %v581, %v470
      %v630 = vmul.f32 %v582, %v470
      %v631 = vmul.f32 %v583, %v470
      %v632 = vmul.f32 %v584, %v470
      %v633 = vadd.f32 %v585, %v477
      %v634 = vadd.f32 %v586, %v477
      %v635 = vadd.f32 %v587, %v477
      %v636 = vadd.f32 %v588, %v477
      %v637 = vadd.f32 %v589, %v477
      %v638 = vadd.f32 %v590, %v477
      %v639 = vadd.f32 %v591, %v477
      %v640 = vadd.f32 %v592, %v477
      %v641 = vadd.f32 %v593, %v477
      %v642 = vadd.f32 %v594, %v477
      %v643 = vadd.f32 %v595, %v477
      %v644 = vadd.f32 %v596, %v477
      %v645 = vadd.f32 %v597, %v477
      %v646 = vadd.f32 %v598, %v477
      %v647 = vadd.f32 %v599, %v477
      %v648 = vadd.f32 %v600, %v477
      %v649 = vadd.f32 %v601, %v477
      %v650 = vadd.f32 %v602, %v477
      %v651 = vadd.f32 %v603, %v477
      %v652 = vadd.f32 %v604, %v477
      %v653 = vadd.f32 %v605, %v477
      %v654 = vadd.f32 %v606, %v477
      %v655 = vadd.f32 %v607, %v477
      %v656 = vadd.f32 %v608, %v477
      %v657 = vadd.f32 %v609, %v477
      %v658 = vadd.f32 %v610, %v477
      %v659 = vadd.f32 %v611, %v477
      %v660 = vadd.f32 %v612, %v477
      %v661 = vadd.f32 %v613, %v477
      %v662 = vadd.f32 %v614, %v477
      %v663 = vadd.f32 %v615, %v477
      %v664 = vadd.f32 %v616, %v477
      %v665 = vadd.f32 %v617, %v477
      %v666 = vadd.f32 %v618, %v477
      %v667 = vadd.f32 %v619, %v477
      %v668 = vadd.f32 %v620, %v477
      %v669 = vadd.f32 %v621, %v477
      %v670 = vadd.f32 %v622, %v477
      %v671 = vadd.f32 %v623, %v477
      %v672 = vadd.f32 %v624, %v477
      %v673 = vadd.f32 %v625, %v477
      %v674 = vadd.f32 %v626, %v477
      %v675 = vadd.f32 %v627, %v477
      %v676 = vadd.f32 %v628, %v477
      %v677 = vadd.f32 %v629, %v477
      %v678 = vadd.f32 %v630, %v477
      %v679 = vadd.f32 %v631, %v477
      %v680 = vadd.f32 %v632, %v477
      %v681 = vmax.f32 %v633, 0.0
      %v682 = vmax.f32 %v634, 0.0
      %v683 = vmax.f32 %v635, 0.0
      %v684 = vmax.f32 %v636, 0.0
      %v685 = vmax.f32 %v637, 0.0
      %v686 = vmax.f32 %v638, 0.0
      %v687 = vmax.f32 %v639, 0.0
      %v688 = vmax.f32 %v640, 0.0
      %v689 = vmax.f32 %v641, 0.0
      %v690 = vmax.f32 %v642, 0.0
      %v691 = vmax.f32 %v643, 0.0
      %v692 = vmax.f32 %v644, 0.0
      %v693 = vmax.f32 %v645, 0.0
      %v694 = vmax.f32 %v646, 0.0
      %v695 = vmax.f32 %v647, 0.0
      %v696 = vmax.f32 %v648, 0.0
      %v697 = vmax.f32 %v649, 0.0
      %v698 = vmax.f32 %v650, 0.0
      %v699 = vmax.f32 %v651, 0.0
      %v700 = vmax.f32 %v652, 0.0
      %v701 = vmax.f32 %v653, 0.0
      %v702 = vmax.f32 %v654, 0.0
      %v703 = vmax.f32 %v655, 0.0
      %v704 = vmax.f32 %v656, 0.0
      %v705 = vmax.f32 %v657, 0.0
      %v706 = vmax.f32 %v658, 0.0
      %v707 = vmax.f32 %v659, 0.0
      %v708 = vmax.f32 %v660, 0.0
      %v709 = vmax.f32 %v661, 0.0
      %v710 = vmax.f32 %v662, 0.0
      %v711 = vmax.f32 %v663, 0.0
      %v712 = vmax.f32 %v664, 0.0
      %v713 = vmax.f32 %v665, 0.0
      %v714 = vmax.f32 %v666, 0.0
      %v715 = vmax.f32 %v667, 0.0
      %v716 = vmax.f32 %v668, 0.0
      %v717 = vmax.f32 %v669, 0.0
      %v718 = vmax.f32 %v670, 0.0
      %v719 = vmax.f32 %v671, 0.0
      %v720 = vmax.f32 %v672, 0.0
      %v721 = vmax.f32 %v673, 0.0
      %v722 = vmax.f32 %v674, 0.0
      %v723 = vmax.f32 %v675, 0.0
      %v724 = vmax.f32 %v676, 0.0
      %v725 = vmax.f32 %v677, 0.0
      %v726 = vmax.f32 %v678, 0.0
      %v727 = vmax.f32 %v679, 0.0
      %v728 = vmax.f32 %v680, 0.0
      %v729 = vmul.f32 %v681, %v456
      %v730 = vmul.f32 %v682, %v457
      %v731 = vmul.f32 %v683, %v458
      %v732 = vmul.f32 %v684, %v456
      %v733 = vmul.f32 %v685, %v457
      %v734 = vmul.f32 %v686, %v458
      %v735 = vmul.f32 %v687, %v456
      %v736 = vmul.f32 %v688, %v457
      %v737 = vmul.f32 %v689, %v458
      %v738 = vmul.f32 %v690, %v456
      %v739 = vmul.f32 %v691, %v457
      %v740 = vmul.f32 %v692, %v458
      %v741 = vmul.f32 %v693, %v456
      %v742 = vmul.f32 %v694, %v457
      %v743 = vmul.f32 %v695, %v458
      %v744 = vmul.f32 %v696, %v456
      %v745 = vmul.f32 %v697, %v457
      %v746 = vmul.f32 %v698, %v458
      %v747 = vmul.f32 %v699, %v456
      %v748 = vmul.f32 %v700, %v457
      %v749 = vmul.f32 %v701, %v458
      %v750 = vmul.f32 %v702, %v456
      %v751 = vmul.f32 %v703, %v457
      %v752 = vmul.f32 %v704, %v458
      %v753 = vmul.f32 %v705, %v456
      %v754 = vmul.f32 %v706, %v457
      %v755 = vmul.f32 %v707, %v458
      %v756 = vmul.f32 %v708, %v456
      %v757 = vmul.f32 %v709, %v457
      %v758 = vmul.f32 %v710, %v458
      %v759 = vmul.f32 %v711, %v456
      %v760 = vmul.f32 %v712, %v457
      %v761 = vmul.f32 %v713, %v458
      %v762 = vmul.f32 %v714, %v456
      %v763 = vmul.f32 %v715, %v457
      %v764 = vmul.f32 %v716, %v458
      %v765 = vmul.f32 %v717, %v456
      %v766 = vmul.f32 %v718, %v457
      %v767 = vmul.f32 %v719, %v458
      %v768 = vmul.f32 %v720, %v456
      %v769 = vmul.f32 %v721, %v457
      %v770 = vmul.f32 %v722, %v458
      %v771 = vmul.f32 %v723, %v456
      %v772 = vmul.f32 %v724, %v457
      %v773 = vmul.f32 %v725, %v458
      %v774 = vmul.f32 %v726, %v456
      %v775 = vmul.f32 %v727, %v457
      %v776 = vmul.f32 %v728, %v458
      %v777 = vpack.c.bf16 %v730, %v729
      %v778 = vpack.c.bf16 %v731, %v731
      %v779 = vpack.c.bf16 %v733, %v732
      %v780 = vpack.c.bf16 %v734, %v734
      %v781 = vpack.c.bf16 %v736, %v735
      %v782 = vpack.c.bf16 %v737, %v737
      %v783 = vpack.c.bf16 %v739, %v738
      %v784 = vpack.c.bf16 %v740, %v740
      %v785 = vpack.c.bf16 %v742, %v741
      %v786 = vpack.c.bf16 %v743, %v743
      %v787 = vpack.c.bf16 %v745, %v744
      %v788 = vpack.c.bf16 %v746, %v746
      %v789 = vpack.c.bf16 %v748, %v747
      %v790 = vpack.c.bf16 %v749, %v749
      %v791 = vpack.c.bf16 %v751, %v750
      %v792 = vpack.c.bf16 %v752, %v752
      %v793 = vpack.c.bf16 %v754, %v753
      %v794 = vpack.c.bf16 %v755, %v755
      %v795 = vpack.c.bf16 %v757, %v756
      %v796 = vpack.c.bf16 %v758, %v758
      %v797 = vpack.c.bf16 %v760, %v759
      %v798 = vpack.c.bf16 %v761, %v761
      %v799 = vpack.c.bf16 %v763, %v762
      %v800 = vpack.c.bf16 %v764, %v764
      %v801 = vpack.c.bf16 %v766, %v765
      %v802 = vpack.c.bf16 %v767, %v767
      %v803 = vpack.c.bf16 %v769, %v768
      %v804 = vpack.c.bf16 %v770, %v770
      %v805 = vpack.c.bf16 %v772, %v771
      %v806 = vpack.c.bf16 %v773, %v773
      %v807 = vpack.c.bf16 %v775, %v774
      %v808 = vpack.c.bf16 %v776, %v776
      %v809 = vld [vmem:[%s416] sm:$0xf]
      %v810 = vld [vmem:[%s416 + $0x4] sm:$0xf]
      %v811 = vld [vmem:[%s416 + $0x8] sm:$0xf]
      %v812 = vunpack.c.l.bf16 %v809
      %v813 = vunpack.c.l.bf16 %v810
      %v814 = vunpack.c.l.bf16 %v811
      %v815 = vmul.f32 %v812, %v470
      %v816 = vmul.f32 %v813, %v470
      %v817 = vmul.f32 %v814, %v470
      %v818 = vadd.f32 %v815, %v477
      %v819 = vadd.f32 %v816, %v477
      %v820 = vadd.f32 %v817, %v477
      %v821 = vmax.f32 %v818, 0.0
      %v822 = vmax.f32 %v819, 0.0
      %v823 = vmax.f32 %v820, 0.0
      %v824 = vmul.f32 %v821, %v456
      %v825 = vmul.f32 %v822, %v457
      %v826 = vmul.f32 %v823, %v458
      %v827 = vpack.c.bf16 %v825, %v824
      %v828 = vpack.c.bf16 %v826, %v826
      %p829 = scmp.gt.s32.totalorder %s23, 0
      %s830 = scalar_select %p829, 1, 0
      %v831 = vstv %s830
      %vm832 = vcmp.eq.s32.totalorder %v831, 1
      %v833 = vsel %vm832, %v487, 0
      %v834 = vsel %vm832, %v488, 0
      %p835 = scmp.lt.s32.totalorder %s23, 0
      %s836 = scalar_select %p835, 1, 0
      %v837 = vstv %s836
      %vm838 = vcmp.eq.s32.totalorder %v837, 1
      %v839 = vsel %vm838, %v827, 0
      %v840 = vsel %vm838, %v828, 0
      %v873 = vunpack.c.l.b16 %v777
      %v874 = vunpack.c.h.b16 %v777
      %v875 = vunpack.c.l.b16 %v778
      %v876 = vunpack.c.l.b16 %v779
      %v877 = vunpack.c.h.b16 %v779
      %v878 = vunpack.c.l.b16 %v780
      %v879 = vunpack.c.l.b16 %v781
      %v880 = vunpack.c.h.b16 %v781
      %v881 = vunpack.c.l.b16 %v782
      %v882 = vunpack.c.l.b16 %v783
      %v883 = vunpack.c.h.b16 %v783
      %v884 = vunpack.c.l.b16 %v784
      %v885 = vunpack.c.l.b16 %v785
      %v886 = vunpack.c.h.b16 %v785
      %v887 = vunpack.c.l.b16 %v786
      %v888 = vunpack.c.l.b16 %v787
      %v889 = vunpack.c.h.b16 %v787
      %v890 = vunpack.c.l.b16 %v788
      %v891 = vunpack.c.l.b16 %v789
      %v892 = vunpack.c.h.b16 %v789
      %v893 = vunpack.c.l.b16 %v790
      %v894 = vunpack.c.l.b16 %v791
      %v895 = vunpack.c.h.b16 %v791
      %v896 = vunpack.c.l.b16 %v792
      %v897 = vunpack.c.l.b16 %v793
      %v898 = vunpack.c.h.b16 %v793
      %v899 = vunpack.c.l.b16 %v794
      %v900 = vunpack.c.l.b16 %v795
      %v901 = vunpack.c.h.b16 %v795
      %v902 = vunpack.c.l.b16 %v796
      %v903 = vunpack.c.l.b16 %v797
      %v904 = vunpack.c.h.b16 %v797
      %v905 = vunpack.c.l.b16 %v798
      %v906 = vunpack.c.l.b16 %v799
      %v907 = vunpack.c.h.b16 %v799
      %v908 = vunpack.c.l.b16 %v800
      %v909 = vunpack.c.l.b16 %v801
      %v910 = vunpack.c.h.b16 %v801
      %v911 = vunpack.c.l.b16 %v802
      %v912 = vunpack.c.l.b16 %v803
      %v913 = vunpack.c.h.b16 %v803
      %v914 = vunpack.c.l.b16 %v804
      %v915 = vunpack.c.l.b16 %v805
      %v916 = vunpack.c.h.b16 %v805
      %v917 = vunpack.c.l.b16 %v806
      %v918 = vunpack.c.l.b16 %v807
      %v919 = vunpack.c.h.b16 %v807
      %v920 = vunpack.c.l.b16 %v808
      %vm923 = vcmask 1043456
      %v924 = vrot.slane %v833, 4
      %v925 = vrot.slane %v834, 4
      %v926 = vsel %vm923, %v924, %v925
      %v927 = vpack.c.b16 %v874, %v873
      %v928 = vpack.c.b16 %v876, %v875
      %v929 = vpack.c.b16 %v878, %v877
      %v930 = vpack.c.b16 %v880, %v879
      %v931 = vpack.c.b16 %v882, %v881
      %v932 = vpack.c.b16 %v884, %v883
      %v933 = vpack.c.b16 %v886, %v885
      %v934 = vpack.c.b16 %v888, %v887
      %v935 = vpack.c.b16 %v890, %v889
      %v936 = vpack.c.b16 %v892, %v891
      %v937 = vpack.c.b16 %v894, %v893
      %v938 = vpack.c.b16 %v896, %v895
      %v939 = vpack.c.b16 %v898, %v897
      %v940 = vpack.c.b16 %v900, %v899
      %v941 = vpack.c.b16 %v902, %v901
      %v942 = vpack.c.b16 %v904, %v903
      %v943 = vpack.c.b16 %v906, %v905
      %v944 = vpack.c.b16 %v908, %v907
      %v945 = vpack.c.b16 %v910, %v909
      %v946 = vpack.c.b16 %v912, %v911
      %v947 = vpack.c.b16 %v914, %v913
      %v948 = vpack.c.b16 %v916, %v915
      %v949 = vpack.c.b16 %v918, %v917
      %v950 = vpack.c.b16 %v920, %v919
      %vm951 = vcmask 1043456
      %v954 = vsel %vm951, 0, %v924
      %v956 = vsel %vm951, %v840, 0
      %vm957 = vsmask.f32 7424
      %v958 = vshrl.u32 %v954, 16
      %v960 = vshll.u32 %v954, 16
      %v962 = vrot.slane %v960, 1
      %v963 = vor.u32 %v958, %v962
      %v965 = vshll.u32 %v926, 16
      %v967 = vrot.slane %v965, 1
      %v968 = vsel %vm957, %v963, %v967
      %v969 = vshrl.u32 %v926, 16
      %v971 = vor.u32 %v969, %v967
      %v973 = vshll.u32 %v927, 16
      %v975 = vrot.slane %v973, 1
      %v976 = vsel %vm957, %v971, %v975
      %v977 = vshrl.u32 %v927, 16
      %v979 = vor.u32 %v977, %v975
      %v981 = vshll.u32 %v928, 16
      %v983 = vrot.slane %v981, 1
      %v984 = vsel %vm957, %v979, %v983
      %v985 = vshrl.u32 %v928, 16
      %v987 = vor.u32 %v985, %v983
      %v989 = vshll.u32 %v929, 16
      %v991 = vrot.slane %v989, 1
      %v992 = vsel %vm957, %v987, %v991
      %v993 = vshrl.u32 %v929, 16
      %v995 = vor.u32 %v993, %v991
      %v997 = vshll.u32 %v930, 16
      %v999 = vrot.slane %v997, 1
      %v1000 = vsel %vm957, %v995, %v999
      %v1001 = vshrl.u32 %v930, 16
      %v1003 = vor.u32 %v1001, %v999
      %v1005 = vshll.u32 %v931, 16
      %v1007 = vrot.slane %v1005, 1
      %v1008 = vsel %vm957, %v1003, %v1007
      %v1009 = vshrl.u32 %v931, 16
      %v1011 = vor.u32 %v1009, %v1007
      %v1013 = vshll.u32 %v932, 16
      %v1015 = vrot.slane %v1013, 1
      %v1016 = vsel %vm957, %v1011, %v1015
      %v1017 = vshrl.u32 %v932, 16
      %v1019 = vor.u32 %v1017, %v1015
      %v1021 = vshll.u32 %v933, 16
      %v1023 = vrot.slane %v1021, 1
      %v1024 = vsel %vm957, %v1019, %v1023
      %v1025 = vshrl.u32 %v933, 16
      %v1027 = vor.u32 %v1025, %v1023
      %v1029 = vshll.u32 %v934, 16
      %v1031 = vrot.slane %v1029, 1
      %v1032 = vsel %vm957, %v1027, %v1031
      %v1033 = vshrl.u32 %v934, 16
      %v1035 = vor.u32 %v1033, %v1031
      %v1037 = vshll.u32 %v935, 16
      %v1039 = vrot.slane %v1037, 1
      %v1040 = vsel %vm957, %v1035, %v1039
      %v1041 = vshrl.u32 %v935, 16
      %v1043 = vor.u32 %v1041, %v1039
      %v1045 = vshll.u32 %v936, 16
      %v1047 = vrot.slane %v1045, 1
      %v1048 = vsel %vm957, %v1043, %v1047
      %v1049 = vshrl.u32 %v936, 16
      %v1051 = vor.u32 %v1049, %v1047
      %v1053 = vshll.u32 %v937, 16
      %v1055 = vrot.slane %v1053, 1
      %v1056 = vsel %vm957, %v1051, %v1055
      %v1057 = vshrl.u32 %v937, 16
      %v1059 = vor.u32 %v1057, %v1055
      %v1061 = vshll.u32 %v938, 16
      %v1063 = vrot.slane %v1061, 1
      %v1064 = vsel %vm957, %v1059, %v1063
      %v1065 = vshrl.u32 %v938, 16
      %v1067 = vor.u32 %v1065, %v1063
      %v1069 = vshll.u32 %v939, 16
      %v1071 = vrot.slane %v1069, 1
      %v1072 = vsel %vm957, %v1067, %v1071
      %v1073 = vshrl.u32 %v939, 16
      %v1075 = vor.u32 %v1073, %v1071
      %v1077 = vshll.u32 %v940, 16
      %v1079 = vrot.slane %v1077, 1
      %v1080 = vsel %vm957, %v1075, %v1079
      %v1081 = vshrl.u32 %v940, 16
      %v1083 = vor.u32 %v1081, %v1079
      %v1085 = vshll.u32 %v941, 16
      %v1087 = vrot.slane %v1085, 1
      %v1088 = vsel %vm957, %v1083, %v1087
      %v1089 = vshrl.u32 %v941, 16
      %v1091 = vor.u32 %v1089, %v1087
      %v1093 = vshll.u32 %v942, 16
      %v1095 = vrot.slane %v1093, 1
      %v1096 = vsel %vm957, %v1091, %v1095
      %v1097 = vshrl.u32 %v942, 16
      %v1099 = vor.u32 %v1097, %v1095
      %v1101 = vshll.u32 %v943, 16
      %v1103 = vrot.slane %v1101, 1
      %v1104 = vsel %vm957, %v1099, %v1103
      %v1105 = vshrl.u32 %v943, 16
      %v1107 = vor.u32 %v1105, %v1103
      %v1109 = vshll.u32 %v944, 16
      %v1111 = vrot.slane %v1109, 1
      %v1112 = vsel %vm957, %v1107, %v1111
      %v1113 = vshrl.u32 %v944, 16
      %v1115 = vor.u32 %v1113, %v1111
      %v1117 = vshll.u32 %v945, 16
      %v1119 = vrot.slane %v1117, 1
      %v1120 = vsel %vm957, %v1115, %v1119
      %v1121 = vshrl.u32 %v945, 16
      %v1123 = vor.u32 %v1121, %v1119
      %v1125 = vshll.u32 %v946, 16
      %v1127 = vrot.slane %v1125, 1
      %v1128 = vsel %vm957, %v1123, %v1127
      %v1129 = vshrl.u32 %v946, 16
      %v1131 = vor.u32 %v1129, %v1127
      %v1133 = vshll.u32 %v947, 16
      %v1135 = vrot.slane %v1133, 1
      %v1136 = vsel %vm957, %v1131, %v1135
      %v1137 = vshrl.u32 %v947, 16
      %v1139 = vor.u32 %v1137, %v1135
      %v1141 = vshll.u32 %v948, 16
      %v1143 = vrot.slane %v1141, 1
      %v1144 = vsel %vm957, %v1139, %v1143
      %v1145 = vshrl.u32 %v948, 16
      %v1147 = vor.u32 %v1145, %v1143
      %v1149 = vshll.u32 %v949, 16
      %v1151 = vrot.slane %v1149, 1
      %v1152 = vsel %vm957, %v1147, %v1151
      %v1153 = vshrl.u32 %v949, 16
      %v1155 = vor.u32 %v1153, %v1151
      %v1157 = vshll.u32 %v950, 16
      %v1159 = vrot.slane %v1157, 1
      %v1160 = vsel %vm957, %v1155, %v1159
      %v1161 = vshrl.u32 %v950, 16
      %v1163 = vor.u32 %v1161, %v1159
      %v1165 = vshll.u32 %v839, 16
      %v1167 = vrot.slane %v1165, 1
      %v1168 = vsel %vm957, %v1163, %v1167
      %v1169 = vshrl.u32 %v839, 16
      %v1171 = vor.u32 %v1169, %v1167
      %v1172 = vshll.u32 %v956, 16
      %v1174 = vrot.slane %v1172, 1
      %v1175 = vsel %vm957, %v1171, %v1174
      %v1176 = vshrl.u32 %v956, 16
      %v1178 = vor.u32 %v1176, %v1174
      %vm1182 = vcmask 1046528
      %v1183 = vrot.slane %v954, 1
      %v1184 = vrot.slane %v926, 1
      %v1185 = vsel %vm1182, %v1183, %v1184
      %v1186 = vrot.slane %v927, 1
      %v1187 = vsel %vm1182, %v1184, %v1186
      %v1188 = vrot.slane %v928, 1
      %v1189 = vsel %vm1182, %v1186, %v1188
      %v1190 = vrot.slane %v929, 1
      %v1191 = vsel %vm1182, %v1188, %v1190
      %v1192 = vrot.slane %v930, 1
      %v1193 = vsel %vm1182, %v1190, %v1192
      %v1194 = vrot.slane %v931, 1
      %v1195 = vsel %vm1182, %v1192, %v1194
      %v1196 = vrot.slane %v932, 1
      %v1197 = vsel %vm1182, %v1194, %v1196
      %v1198 = vrot.slane %v933, 1
      %v1199 = vsel %vm1182, %v1196, %v1198
      %v1200 = vrot.slane %v934, 1
      %v1201 = vsel %vm1182, %v1198, %v1200
      %v1202 = vrot.slane %v935, 1
      %v1203 = vsel %vm1182, %v1200, %v1202
      %v1204 = vrot.slane %v936, 1
      %v1205 = vsel %vm1182, %v1202, %v1204
      %v1206 = vrot.slane %v937, 1
      %v1207 = vsel %vm1182, %v1204, %v1206
      %v1208 = vrot.slane %v938, 1
      %v1209 = vsel %vm1182, %v1206, %v1208
      %v1210 = vrot.slane %v939, 1
      %v1211 = vsel %vm1182, %v1208, %v1210
      %v1212 = vrot.slane %v940, 1
      %v1213 = vsel %vm1182, %v1210, %v1212
      %v1214 = vrot.slane %v941, 1
      %v1215 = vsel %vm1182, %v1212, %v1214
      %v1216 = vrot.slane %v942, 1
      %v1217 = vsel %vm1182, %v1214, %v1216
      %v1218 = vrot.slane %v943, 1
      %v1219 = vsel %vm1182, %v1216, %v1218
      %v1220 = vrot.slane %v944, 1
      %v1221 = vsel %vm1182, %v1218, %v1220
      %v1222 = vrot.slane %v945, 1
      %v1223 = vsel %vm1182, %v1220, %v1222
      %v1224 = vrot.slane %v946, 1
      %v1225 = vsel %vm1182, %v1222, %v1224
      %v1226 = vrot.slane %v947, 1
      %v1227 = vsel %vm1182, %v1224, %v1226
      %v1228 = vrot.slane %v948, 1
      %v1229 = vsel %vm1182, %v1226, %v1228
      %v1230 = vrot.slane %v949, 1
      %v1231 = vsel %vm1182, %v1228, %v1230
      %v1232 = vrot.slane %v950, 1
      %v1233 = vsel %vm1182, %v1230, %v1232
      %v1234 = vrot.slane %v839, 1
      %v1235 = vsel %vm1182, %v1232, %v1234
      %v1236 = vrot.slane %v956, 1
      %v1237 = vsel %vm1182, %v1234, %v1236
      %v1238 = vld [vmem:[%s3] sm:$0xf]
      %v1239 = vld [vmem:[%s3 + $0x4] sm:$0xf]
      %v1240 = vld [vmem:[%s3 + $0x8] sm:$0xf]
      %v1241 = vld [vmem:[%s3 + $0xc] sm:$0xf]
      %v1242 = vld [vmem:[%s3 + $0x10] sm:$0xf]
      %v1243 = vld [vmem:[%s3 + $0x14] sm:$0xf]
      %v1244 = vld [vmem:[%s3 + $0x18] sm:$0xf]
      %v1245 = vld [vmem:[%s3 + $0x1c] sm:$0xf]
      %v1246 = vld [vmem:[%s3 + $0x20] sm:$0xf]
      %v1247 = vld [vmem:[%s3 + $0x24] sm:$0xf]
      %v1248 = vld [vmem:[%s3 + $0x28] sm:$0xf]
      %v1249 = vld [vmem:[%s3 + $0x2c] sm:$0xf]
      %v1250 = vld [vmem:[%s3 + $0x30] sm:$0xf]
      %v1251 = vld [vmem:[%s3 + $0x34] sm:$0xf]
      %v1252 = vld [vmem:[%s3 + $0x38] sm:$0xf]
      %v1253 = vld [vmem:[%s3 + $0x3c] sm:$0xf]
      %v1254 = vld [vmem:[%s3 + $0x40] sm:$0xf]
      %v1255 = vld [vmem:[%s3 + $0x44] sm:$0xf]
      %v1256 = vld [vmem:[%s3 + $0x48] sm:$0xf]
      %v1257 = vld [vmem:[%s3 + $0x4c] sm:$0xf]
      %v1258 = vld [vmem:[%s3 + $0x50] sm:$0xf]
      %v1259 = vld [vmem:[%s3 + $0x54] sm:$0xf]
      %v1260 = vld [vmem:[%s3 + $0x58] sm:$0xf]
      %v1261 = vld [vmem:[%s3 + $0x5c] sm:$0xf]
      %v1262 = vld [vmem:[%s3 + $0x60] sm:$0xf]
      %v1263 = vld [vmem:[%s3 + $0x64] sm:$0xf]
      %v1264 = vld [vmem:[%s3 + $0x68] sm:$0xf]
      %v1265 = vld [vmem:[%s3 + $0x6c] sm:$0xf]
      %v1266 = vld [vmem:[%s3 + $0x70] sm:$0xf]
      %v1267 = vld [vmem:[%s3 + $0x74] sm:$0xf]
      %v1268 = vld [vmem:[%s3 + $0x78] sm:$0xf]
      %v1269 = vld [vmem:[%s3 + $0x7c] sm:$0xf]
      %v1270 = vld [vmem:[%s3 + $0x80] sm:$0xf]
      %v1271 = vld [vmem:[%s3 + $0x84] sm:$0xf]
      %v1272 = vld [vmem:[%s3 + $0x88] sm:$0xf]
      %v1273 = vld [vmem:[%s3 + $0x8c] sm:$0xf]
      %v1274 = vld [vmem:[%s3 + $0x90] sm:$0xf]
      %v1275 = vld [vmem:[%s3 + $0x94] sm:$0xf]
      %v1276 = vld [vmem:[%s3 + $0x98] sm:$0xf]
      %v1277 = vld [vmem:[%s3 + $0x9c] sm:$0xf]
      %v1278 = vld [vmem:[%s3 + $0xa0] sm:$0xf]
      %v1279 = vld [vmem:[%s3 + $0xa4] sm:$0xf]
      %v1280 = vld [vmem:[%s3 + $0xa8] sm:$0xf]
      %v1281 = vld [vmem:[%s3 + $0xac] sm:$0xf]
      %v1282 = vld [vmem:[%s3 + $0xb0] sm:$0xf]
      %v1283 = vld [vmem:[%s3 + $0xb4] sm:$0xf]
      %v1284 = vld [vmem:[%s3 + $0xb8] sm:$0xf]
      %v1285 = vld [vmem:[%s3 + $0xbc] sm:$0xf]
      %s1286 = scalar_lea.vmem %s3, 192
      %v1287 = vld [vmem:[%s1286] sm:$0xf]
      %v1288 = vld [vmem:[%s1286 + $0x4] sm:$0xf]
      %v1289 = vld [vmem:[%s1286 + $0x8] sm:$0xf]
      %v1290 = vld [vmem:[%s1286 + $0xc] sm:$0xf]
      %v1291 = vld [vmem:[%s1286 + $0x10] sm:$0xf]
      %v1292 = vld [vmem:[%s1286 + $0x14] sm:$0xf]
      %v1293 = vld [vmem:[%s1286 + $0x18] sm:$0xf]
      %v1294 = vld [vmem:[%s1286 + $0x1c] sm:$0xf]
      %v1295 = vld [vmem:[%s1286 + $0x20] sm:$0xf]
      %v1296 = vld [vmem:[%s1286 + $0x24] sm:$0xf]
      %v1297 = vld [vmem:[%s1286 + $0x28] sm:$0xf]
      %v1298 = vld [vmem:[%s1286 + $0x2c] sm:$0xf]
      %v1299 = vld [vmem:[%s1286 + $0x30] sm:$0xf]
      %v1300 = vld [vmem:[%s1286 + $0x34] sm:$0xf]
      %v1301 = vld [vmem:[%s1286 + $0x38] sm:$0xf]
      %v1302 = vld [vmem:[%s1286 + $0x3c] sm:$0xf]
      %v1303 = vld [vmem:[%s1286 + $0x40] sm:$0xf]
      %v1304 = vld [vmem:[%s1286 + $0x44] sm:$0xf]
      %v1305 = vld [vmem:[%s1286 + $0x48] sm:$0xf]
      %v1306 = vld [vmem:[%s1286 + $0x4c] sm:$0xf]
      %v1307 = vld [vmem:[%s1286 + $0x50] sm:$0xf]
      %v1308 = vld [vmem:[%s1286 + $0x54] sm:$0xf]
      %v1309 = vld [vmem:[%s1286 + $0x58] sm:$0xf]
      %v1310 = vld [vmem:[%s1286 + $0x5c] sm:$0xf]
      %v1311 = vld [vmem:[%s1286 + $0x60] sm:$0xf]
      %v1312 = vld [vmem:[%s1286 + $0x64] sm:$0xf]
      %v1313 = vld [vmem:[%s1286 + $0x68] sm:$0xf]
      %v1314 = vld [vmem:[%s1286 + $0x6c] sm:$0xf]
      %v1315 = vld [vmem:[%s1286 + $0x70] sm:$0xf]
      %v1316 = vld [vmem:[%s1286 + $0x74] sm:$0xf]
      %v1317 = vld [vmem:[%s1286 + $0x78] sm:$0xf]
      %v1318 = vld [vmem:[%s1286 + $0x7c] sm:$0xf]
      %v1319 = vld [vmem:[%s1286 + $0x80] sm:$0xf]
      %v1320 = vld [vmem:[%s1286 + $0x84] sm:$0xf]
      %v1321 = vld [vmem:[%s1286 + $0x88] sm:$0xf]
      %v1322 = vld [vmem:[%s1286 + $0x8c] sm:$0xf]
      %v1323 = vld [vmem:[%s1286 + $0x90] sm:$0xf]
      %v1324 = vld [vmem:[%s1286 + $0x94] sm:$0xf]
      %v1325 = vld [vmem:[%s1286 + $0x98] sm:$0xf]
      %v1326 = vld [vmem:[%s1286 + $0x9c] sm:$0xf]
      %v1327 = vld [vmem:[%s1286 + $0xa0] sm:$0xf]
      %v1328 = vld [vmem:[%s1286 + $0xa4] sm:$0xf]
      %v1329 = vld [vmem:[%s1286 + $0xa8] sm:$0xf]
      %v1330 = vld [vmem:[%s1286 + $0xac] sm:$0xf]
      %v1331 = vld [vmem:[%s1286 + $0xb0] sm:$0xf]
      %v1332 = vld [vmem:[%s1286 + $0xb4] sm:$0xf]
      %v1333 = vld [vmem:[%s1286 + $0xb8] sm:$0xf]
      %v1334 = vld [vmem:[%s1286 + $0xbc] sm:$0xf]
      %vm1335 = vsmask.f32 256
      %v1336 = vrot.slane %v969, 7
      %v1337 = vrot.slane %v977, 7
      %v1338 = vor.u32 %v1337, %v973
      %v1339 = vsel %vm1335, %v1336, %v1338
      %v1341 = vshrl.u32 %v976, 16
      %v1343 = vrot.slane %v1341, 7
      %v1345 = vshrl.u32 %v984, 16
      %v1347 = vrot.slane %v1345, 7
      %v1348 = vshll.u32 %v984, 16
      %v1350 = vor.u32 %v1347, %v1348
      %v1351 = vsel %vm1335, %v1343, %v1350
      %v1353 = vshrl.u32 %v1187, 16
      %v1355 = vrot.slane %v1353, 7
      %v1357 = vshrl.u32 %v1189, 16
      %v1359 = vrot.slane %v1357, 7
      %v1360 = vshll.u32 %v1189, 16
      %v1362 = vor.u32 %v1359, %v1360
      %v1363 = vsel %vm1335, %v1355, %v1362
      %v1364 = vrot.slane %v985, 7
      %v1365 = vor.u32 %v1364, %v981
      %v1366 = vsel %vm1335, %v1337, %v1365
      %v1368 = vshrl.u32 %v992, 16
      %v1370 = vrot.slane %v1368, 7
      %v1371 = vshll.u32 %v992, 16
      %v1373 = vor.u32 %v1370, %v1371
      %v1374 = vsel %vm1335, %v1347, %v1373
      %v1376 = vshrl.u32 %v1191, 16
      %v1378 = vrot.slane %v1376, 7
      %v1379 = vshll.u32 %v1191, 16
      %v1381 = vor.u32 %v1378, %v1379
      %v1382 = vsel %vm1335, %v1359, %v1381
      %v1383 = vrot.slane %v993, 7
      %v1384 = vor.u32 %v1383, %v989
      %v1385 = vsel %vm1335, %v1364, %v1384
      %v1387 = vshrl.u32 %v1000, 16
      %v1389 = vrot.slane %v1387, 7
      %v1390 = vshll.u32 %v1000, 16
      %v1392 = vor.u32 %v1389, %v1390
      %v1393 = vsel %vm1335, %v1370, %v1392
      %v1395 = vshrl.u32 %v1193, 16
      %v1397 = vrot.slane %v1395, 7
      %v1398 = vshll.u32 %v1193, 16
      %v1400 = vor.u32 %v1397, %v1398
      %v1401 = vsel %vm1335, %v1378, %v1400
      %v1402 = vrot.slane %v1001, 7
      %v1403 = vor.u32 %v1402, %v997
      %v1404 = vsel %vm1335, %v1383, %v1403
      %v1406 = vshrl.u32 %v1008, 16
      %v1408 = vrot.slane %v1406, 7
      %v1409 = vshll.u32 %v1008, 16
      %v1411 = vor.u32 %v1408, %v1409
      %v1412 = vsel %vm1335, %v1389, %v1411
      %v1414 = vshrl.u32 %v1195, 16
      %v1416 = vrot.slane %v1414, 7
      %v1417 = vshll.u32 %v1195, 16
      %v1419 = vor.u32 %v1416, %v1417
      %v1420 = vsel %vm1335, %v1397, %v1419
      %v1421 = vrot.slane %v1009, 7
      %v1422 = vor.u32 %v1421, %v1005
      %v1423 = vsel %vm1335, %v1402, %v1422
      %v1425 = vshrl.u32 %v1016, 16
      %v1427 = vrot.slane %v1425, 7
      %v1428 = vshll.u32 %v1016, 16
      %v1430 = vor.u32 %v1427, %v1428
      %v1431 = vsel %vm1335, %v1408, %v1430
      %v1433 = vshrl.u32 %v1197, 16
      %v1435 = vrot.slane %v1433, 7
      %v1436 = vshll.u32 %v1197, 16
      %v1438 = vor.u32 %v1435, %v1436
      %v1439 = vsel %vm1335, %v1416, %v1438
      %v1440 = vrot.slane %v1017, 7
      %v1441 = vor.u32 %v1440, %v1013
      %v1442 = vsel %vm1335, %v1421, %v1441
      %v1444 = vshrl.u32 %v1024, 16
      %v1446 = vrot.slane %v1444, 7
      %v1447 = vshll.u32 %v1024, 16
      %v1449 = vor.u32 %v1446, %v1447
      %v1450 = vsel %vm1335, %v1427, %v1449
      %v1452 = vshrl.u32 %v1199, 16
      %v1454 = vrot.slane %v1452, 7
      %v1455 = vshll.u32 %v1199, 16
      %v1457 = vor.u32 %v1454, %v1455
      %v1458 = vsel %vm1335, %v1435, %v1457
      %v1459 = vrot.slane %v1025, 7
      %v1460 = vor.u32 %v1459, %v1021
      %v1461 = vsel %vm1335, %v1440, %v1460
      %v1463 = vshrl.u32 %v1032, 16
      %v1465 = vrot.slane %v1463, 7
      %v1466 = vshll.u32 %v1032, 16
      %v1468 = vor.u32 %v1465, %v1466
      %v1469 = vsel %vm1335, %v1446, %v1468
      %v1471 = vshrl.u32 %v1201, 16
      %v1473 = vrot.slane %v1471, 7
      %v1474 = vshll.u32 %v1201, 16
      %v1476 = vor.u32 %v1473, %v1474
      %v1477 = vsel %vm1335, %v1454, %v1476
      %v1478 = vrot.slane %v1033, 7
      %v1479 = vor.u32 %v1478, %v1029
      %v1480 = vsel %vm1335, %v1459, %v1479
      %v1482 = vshrl.u32 %v1040, 16
      %v1484 = vrot.slane %v1482, 7
      %v1485 = vshll.u32 %v1040, 16
      %v1487 = vor.u32 %v1484, %v1485
      %v1488 = vsel %vm1335, %v1465, %v1487
      %v1490 = vshrl.u32 %v1203, 16
      %v1492 = vrot.slane %v1490, 7
      %v1493 = vshll.u32 %v1203, 16
      %v1495 = vor.u32 %v1492, %v1493
      %v1496 = vsel %vm1335, %v1473, %v1495
      %v1497 = vrot.slane %v1041, 7
      %v1498 = vor.u32 %v1497, %v1037
      %v1499 = vsel %vm1335, %v1478, %v1498
      %v1501 = vshrl.u32 %v1048, 16
      %v1503 = vrot.slane %v1501, 7
      %v1504 = vshll.u32 %v1048, 16
      %v1506 = vor.u32 %v1503, %v1504
      %v1507 = vsel %vm1335, %v1484, %v1506
      %v1509 = vshrl.u32 %v1205, 16
      %v1511 = vrot.slane %v1509, 7
      %v1512 = vshll.u32 %v1205, 16
      %v1514 = vor.u32 %v1511, %v1512
      %v1515 = vsel %vm1335, %v1492, %v1514
      %v1516 = vrot.slane %v1049, 7
      %v1517 = vor.u32 %v1516, %v1045
      %v1518 = vsel %vm1335, %v1497, %v1517
      %v1520 = vshrl.u32 %v1056, 16
      %v1522 = vrot.slane %v1520, 7
      %v1523 = vshll.u32 %v1056, 16
      %v1525 = vor.u32 %v1522, %v1523
      %v1526 = vsel %vm1335, %v1503, %v1525
      %v1528 = vshrl.u32 %v1207, 16
      %v1530 = vrot.slane %v1528, 7
      %v1531 = vshll.u32 %v1207, 16
      %v1533 = vor.u32 %v1530, %v1531
      %v1534 = vsel %vm1335, %v1511, %v1533
      %v1535 = vrot.slane %v1057, 7
      %v1536 = vor.u32 %v1535, %v1053
      %v1537 = vsel %vm1335, %v1516, %v1536
      %v1539 = vshrl.u32 %v1064, 16
      %v1541 = vrot.slane %v1539, 7
      %v1542 = vshll.u32 %v1064, 16
      %v1544 = vor.u32 %v1541, %v1542
      %v1545 = vsel %vm1335, %v1522, %v1544
      %v1547 = vshrl.u32 %v1209, 16
      %v1549 = vrot.slane %v1547, 7
      %v1550 = vshll.u32 %v1209, 16
      %v1552 = vor.u32 %v1549, %v1550
      %v1553 = vsel %vm1335, %v1530, %v1552
      %v1554 = vrot.slane %v1065, 7
      %v1555 = vor.u32 %v1554, %v1061
      %v1556 = vsel %vm1335, %v1535, %v1555
      %v1558 = vshrl.u32 %v1072, 16
      %v1560 = vrot.slane %v1558, 7
      %v1561 = vshll.u32 %v1072, 16
      %v1563 = vor.u32 %v1560, %v1561
      %v1564 = vsel %vm1335, %v1541, %v1563
      %v1566 = vshrl.u32 %v1211, 16
      %v1568 = vrot.slane %v1566, 7
      %v1569 = vshll.u32 %v1211, 16
      %v1571 = vor.u32 %v1568, %v1569
      %v1572 = vsel %vm1335, %v1549, %v1571
      %v1573 = vrot.slane %v1073, 7
      %v1574 = vor.u32 %v1573, %v1069
      %v1575 = vsel %vm1335, %v1554, %v1574
      %v1577 = vshrl.u32 %v1080, 16
      %v1579 = vrot.slane %v1577, 7
      %v1580 = vshll.u32 %v1080, 16
      %v1582 = vor.u32 %v1579, %v1580
      %v1583 = vsel %vm1335, %v1560, %v1582
      %v1585 = vshrl.u32 %v1213, 16
      %v1587 = vrot.slane %v1585, 7
      %v1588 = vshll.u32 %v1213, 16
      %v1590 = vor.u32 %v1587, %v1588
      %v1591 = vsel %vm1335, %v1568, %v1590
      %v1592 = vrot.slane %v1081, 7
      %v1593 = vor.u32 %v1592, %v1077
      %v1594 = vsel %vm1335, %v1573, %v1593
      %v1596 = vshrl.u32 %v1088, 16
      %v1598 = vrot.slane %v1596, 7
      %v1599 = vshll.u32 %v1088, 16
      %v1601 = vor.u32 %v1598, %v1599
      %v1602 = vsel %vm1335, %v1579, %v1601
      %v1604 = vshrl.u32 %v1215, 16
      %v1606 = vrot.slane %v1604, 7
      %v1607 = vshll.u32 %v1215, 16
      %v1609 = vor.u32 %v1606, %v1607
      %v1610 = vsel %vm1335, %v1587, %v1609
      %v1611 = vrot.slane %v1089, 7
      %v1612 = vor.u32 %v1611, %v1085
      %v1613 = vsel %vm1335, %v1592, %v1612
      %v1615 = vshrl.u32 %v1096, 16
      %v1617 = vrot.slane %v1615, 7
      %v1618 = vshll.u32 %v1096, 16
      %v1620 = vor.u32 %v1617, %v1618
      %v1621 = vsel %vm1335, %v1598, %v1620
      %v1623 = vshrl.u32 %v1217, 16
      %v1625 = vrot.slane %v1623, 7
      %v1626 = vshll.u32 %v1217, 16
      %v1628 = vor.u32 %v1625, %v1626
      %v1629 = vsel %vm1335, %v1606, %v1628
      %v1630 = vrot.slane %v1097, 7
      %v1631 = vor.u32 %v1630, %v1093
      %v1632 = vsel %vm1335, %v1611, %v1631
      %v1634 = vshrl.u32 %v1104, 16
      %v1636 = vrot.slane %v1634, 7
      %v1637 = vshll.u32 %v1104, 16
      %v1639 = vor.u32 %v1636, %v1637
      %v1640 = vsel %vm1335, %v1617, %v1639
      %v1642 = vshrl.u32 %v1219, 16
      %v1644 = vrot.slane %v1642, 7
      %v1645 = vshll.u32 %v1219, 16
      %v1647 = vor.u32 %v1644, %v1645
      %v1648 = vsel %vm1335, %v1625, %v1647
      %v1649 = vrot.slane %v1105, 7
      %v1650 = vor.u32 %v1649, %v1101
      %v1651 = vsel %vm1335, %v1630, %v1650
      %v1653 = vshrl.u32 %v1112, 16
      %v1655 = vrot.slane %v1653, 7
      %v1656 = vshll.u32 %v1112, 16
      %v1658 = vor.u32 %v1655, %v1656
      %v1659 = vsel %vm1335, %v1636, %v1658
      %v1661 = vshrl.u32 %v1221, 16
      %v1663 = vrot.slane %v1661, 7
      %v1664 = vshll.u32 %v1221, 16
      %v1666 = vor.u32 %v1663, %v1664
      %v1667 = vsel %vm1335, %v1644, %v1666
      %v1668 = vrot.slane %v1113, 7
      %v1669 = vor.u32 %v1668, %v1109
      %v1670 = vsel %vm1335, %v1649, %v1669
      %v1672 = vshrl.u32 %v1120, 16
      %v1674 = vrot.slane %v1672, 7
      %v1675 = vshll.u32 %v1120, 16
      %v1677 = vor.u32 %v1674, %v1675
      %v1678 = vsel %vm1335, %v1655, %v1677
      %v1680 = vshrl.u32 %v1223, 16
      %v1682 = vrot.slane %v1680, 7
      %v1683 = vshll.u32 %v1223, 16
      %v1685 = vor.u32 %v1682, %v1683
      %v1686 = vsel %vm1335, %v1663, %v1685
      %v1687 = vrot.slane %v1121, 7
      %v1688 = vor.u32 %v1687, %v1117
      %v1689 = vsel %vm1335, %v1668, %v1688
      %v1691 = vshrl.u32 %v1128, 16
      %v1693 = vrot.slane %v1691, 7
      %v1694 = vshll.u32 %v1128, 16
      %v1696 = vor.u32 %v1693, %v1694
      %v1697 = vsel %vm1335, %v1674, %v1696
      %v1699 = vshrl.u32 %v1225, 16
      %v1701 = vrot.slane %v1699, 7
      %v1702 = vshll.u32 %v1225, 16
      %v1704 = vor.u32 %v1701, %v1702
      %v1705 = vsel %vm1335, %v1682, %v1704
      %v1706 = vrot.slane %v1129, 7
      %v1707 = vor.u32 %v1706, %v1125
      %v1708 = vsel %vm1335, %v1687, %v1707
      %v1710 = vshrl.u32 %v1136, 16
      %v1712 = vrot.slane %v1710, 7
      %v1713 = vshll.u32 %v1136, 16
      %v1715 = vor.u32 %v1712, %v1713
      %v1716 = vsel %vm1335, %v1693, %v1715
      %v1718 = vshrl.u32 %v1227, 16
      %v1720 = vrot.slane %v1718, 7
      %v1721 = vshll.u32 %v1227, 16
      %v1723 = vor.u32 %v1720, %v1721
      %v1724 = vsel %vm1335, %v1701, %v1723
      %v1725 = vrot.slane %v1137, 7
      %v1726 = vor.u32 %v1725, %v1133
      %v1727 = vsel %vm1335, %v1706, %v1726
      %v1729 = vshrl.u32 %v1144, 16
      %v1731 = vrot.slane %v1729, 7
      %v1732 = vshll.u32 %v1144, 16
      %v1734 = vor.u32 %v1731, %v1732
      %v1735 = vsel %vm1335, %v1712, %v1734
      %v1737 = vshrl.u32 %v1229, 16
      %v1739 = vrot.slane %v1737, 7
      %v1740 = vshll.u32 %v1229, 16
      %v1742 = vor.u32 %v1739, %v1740
      %v1743 = vsel %vm1335, %v1720, %v1742
      %v1744 = vrot.slane %v1145, 7
      %v1745 = vor.u32 %v1744, %v1141
      %v1746 = vsel %vm1335, %v1725, %v1745
      %v1748 = vshrl.u32 %v1152, 16
      %v1750 = vrot.slane %v1748, 7
      %v1751 = vshll.u32 %v1152, 16
      %v1753 = vor.u32 %v1750, %v1751
      %v1754 = vsel %vm1335, %v1731, %v1753
      %v1756 = vshrl.u32 %v1231, 16
      %v1758 = vrot.slane %v1756, 7
      %v1759 = vshll.u32 %v1231, 16
      %v1761 = vor.u32 %v1758, %v1759
      %v1762 = vsel %vm1335, %v1739, %v1761
      %v1763 = vrot.slane %v1153, 7
      %v1764 = vor.u32 %v1763, %v1149
      %v1765 = vsel %vm1335, %v1744, %v1764
      %v1767 = vshrl.u32 %v1160, 16
      %v1769 = vrot.slane %v1767, 7
      %v1770 = vshll.u32 %v1160, 16
      %v1772 = vor.u32 %v1769, %v1770
      %v1773 = vsel %vm1335, %v1750, %v1772
      %v1775 = vshrl.u32 %v1233, 16
      %v1777 = vrot.slane %v1775, 7
      %v1778 = vshll.u32 %v1233, 16
      %v1780 = vor.u32 %v1777, %v1778
      %v1781 = vsel %vm1335, %v1758, %v1780
      %v1782 = vrot.slane %v1161, 7
      %v1783 = vor.u32 %v1782, %v1157
      %v1784 = vsel %vm1335, %v1763, %v1783
      %v1786 = vshrl.u32 %v1168, 16
      %v1788 = vrot.slane %v1786, 7
      %v1789 = vshll.u32 %v1168, 16
      %v1791 = vor.u32 %v1788, %v1789
      %v1792 = vsel %vm1335, %v1769, %v1791
      %v1794 = vshrl.u32 %v1235, 16
      %v1796 = vrot.slane %v1794, 7
      %v1797 = vshll.u32 %v1235, 16
      %v1799 = vor.u32 %v1796, %v1797
      %v1800 = vsel %vm1335, %v1777, %v1799
      %v1921 = vunpack.c.l.b16 %v1287
      %v1922 = vunpack.c.l.b16 %v1288
      %v1923 = vunpack.c.l.b16 %v1289
      %v1924 = vunpack.c.l.b16 %v1290
      %v1925 = vunpack.c.l.b16 %v1291
      %v1926 = vunpack.c.l.b16 %v1292
      %v1927 = vunpack.c.l.b16 %v1293
      %v1928 = vunpack.c.l.b16 %v1294
      %v1929 = vunpack.c.l.b16 %v1295
      %v1930 = vunpack.c.l.b16 %v1296
      %v1931 = vunpack.c.l.b16 %v1297
      %v1932 = vunpack.c.l.b16 %v1298
      %v1933 = vunpack.c.l.b16 %v1299
      %v1934 = vunpack.c.l.b16 %v1300
      %v1935 = vunpack.c.l.b16 %v1301
      %v1936 = vunpack.c.l.b16 %v1302
      %v1937 = vunpack.c.l.b16 %v1303
      %v1938 = vunpack.c.l.b16 %v1304
      %v1939 = vunpack.c.l.b16 %v1305
      %v1940 = vunpack.c.l.b16 %v1306
      %v1941 = vunpack.c.l.b16 %v1307
      %v1942 = vunpack.c.l.b16 %v1308
      %v1943 = vunpack.c.l.b16 %v1309
      %v1944 = vunpack.c.l.b16 %v1310
      %v1945 = vunpack.c.l.b16 %v1311
      %v1946 = vunpack.c.l.b16 %v1312
      %v1947 = vunpack.c.l.b16 %v1313
      %v1948 = vunpack.c.l.b16 %v1314
      %v1949 = vunpack.c.l.b16 %v1315
      %v1950 = vunpack.c.l.b16 %v1316
      %v1951 = vunpack.c.l.b16 %v1317
      %v1952 = vunpack.c.l.b16 %v1318
      %v1953 = vunpack.c.l.b16 %v1319
      %v1954 = vunpack.c.l.b16 %v1320
      %v1955 = vunpack.c.l.b16 %v1321
      %v1956 = vunpack.c.l.b16 %v1322
      %v1957 = vunpack.c.l.b16 %v1323
      %v1958 = vunpack.c.l.b16 %v1324
      %v1959 = vunpack.c.l.b16 %v1325
      %v1960 = vunpack.c.l.b16 %v1326
      %v1961 = vunpack.c.l.b16 %v1327
      %v1962 = vunpack.c.l.b16 %v1328
      %v1963 = vunpack.c.l.b16 %v1329
      %v1964 = vunpack.c.l.b16 %v1330
      %v1965 = vunpack.c.l.b16 %v1331
      %v1966 = vunpack.c.l.b16 %v1332
      %v1967 = vunpack.c.l.b16 %v1333
      %v1968 = vunpack.c.l.b16 %v1334
      %v1969 = vpack.c.b16 %v1922, %v1921
      %v1970 = vpack.c.b16 %v1924, %v1923
      %v1971 = vpack.c.b16 %v1926, %v1925
      %v1972 = vpack.c.b16 %v1928, %v1927
      %v1973 = vpack.c.b16 %v1930, %v1929
      %v1974 = vpack.c.b16 %v1932, %v1931
      %v1975 = vpack.c.b16 %v1934, %v1933
      %v1976 = vpack.c.b16 %v1936, %v1935
      %v1977 = vpack.c.b16 %v1938, %v1937
      %v1978 = vpack.c.b16 %v1940, %v1939
      %v1979 = vpack.c.b16 %v1942, %v1941
      %v1980 = vpack.c.b16 %v1944, %v1943
      %v1981 = vpack.c.b16 %v1946, %v1945
      %v1982 = vpack.c.b16 %v1948, %v1947
      %v1983 = vpack.c.b16 %v1950, %v1949
      %v1984 = vpack.c.b16 %v1952, %v1951
      %v1985 = vpack.c.b16 %v1954, %v1953
      %v1986 = vpack.c.b16 %v1956, %v1955
      %v1987 = vpack.c.b16 %v1958, %v1957
      %v1988 = vpack.c.b16 %v1960, %v1959
      %v1989 = vpack.c.b16 %v1962, %v1961
      %v1990 = vpack.c.b16 %v1964, %v1963
      %v1991 = vpack.c.b16 %v1966, %v1965
      %v1992 = vpack.c.b16 %v1968, %v1967
      %2017 = vmatprep.subr.bf16.mxu0 0
      %2018 = vmatpush1.bf16.msra.mxu0 %v1969
      %2019 = vmatprep.subr.bf16.mxu0 0
      %2020 = vmatpush1.bf16.msra.mxu0 %v1970
      %2021 = vmatprep.subr.bf16.mxu0 0
      %2022 = vmatpush1.bf16.msra.mxu0 %v1971
      %2023 = vmatprep.subr.bf16.mxu0 0
      %2024 = vmatpush1.bf16.msra.mxu0 %v1972
      %2025 = vmatprep.subr.bf16.mxu0 0
      %2026 = vmatpush1.bf16.msra.mxu0 %v1973
      %2027 = vmatprep.subr.bf16.mxu0 0
      %2028 = vmatpush1.bf16.msra.mxu0 %v1974
      %2029 = vmatprep.subr.bf16.mxu0 0
      %2030 = vmatpush1.bf16.msra.mxu0 %v1975
      %2031 = vmatprep.subr.bf16.mxu0 0
      %2032 = vmatpush1.bf16.msra.mxu0 %v1976
      %2033 = vmatprep.subr.bf16.mxu0 0
      %2034 = vmatpush1.bf16.msra.mxu0 %v1977
      %2035 = vmatprep.subr.bf16.mxu0 0
      %2036 = vmatpush1.bf16.msra.mxu0 %v1978
      %2037 = vmatprep.subr.bf16.mxu0 0
      %2038 = vmatpush1.bf16.msra.mxu0 %v1979
      %2039 = vmatprep.subr.bf16.mxu0 0
      %2040 = vmatpush1.bf16.msra.mxu0 %v1980
      %2041 = vmatprep.subr.bf16.mxu0 0
      %2042 = vmatpush1.bf16.msra.mxu0 %v1981
      %2043 = vmatprep.subr.bf16.mxu0 0
      %2044 = vmatpush1.bf16.msra.mxu0 %v1982
      %2045 = vmatprep.subr.bf16.mxu0 0
      %2046 = vmatpush1.bf16.msra.mxu0 %v1983
      %2047 = vmatprep.subr.bf16.mxu0 0
      %2048 = vmatpush1.bf16.msra.mxu0 %v1984
      %2049 = vmatprep.mubr.bf16.mxu0 %v1351
      %2050 = vmatmul.mubr.bf16.gmra.mrb[0].mxu0 %v1339
      %v2051 = vpop.f32.mrb[0].mxu0
      %v2052 = vadd.f32 0.0, %v2051
      %v2053 = vpop.f32.mrb[0].mxu0
      %v2054 = vpop.f32.mrb[0].mxu0
      %v2055 = vadd.f32 0.0, %v2054
      %v2056 = vpop.f32.mrb[0].mxu0
      %2057 = vmatprep.mubr.bf16.mxu0 %v1374
      %2058 = vmatmul.mubr.bf16.gmra.mrb[0].mxu0 %v1366
      %v2059 = vpop.f32.mrb[0].mxu0
      %v2060 = vadd.f32 0.0, %v2059
      %v2061 = vpop.f32.mrb[0].mxu0
      %v2062 = vpop.f32.mrb[0].mxu0
      %v2063 = vadd.f32 0.0, %v2062
      %v2064 = vpop.f32.mrb[0].mxu0
      %2065 = vmatprep.mubr.bf16.mxu0 %v1393
      %2066 = vmatmul.mubr.bf16.gmra.mrb[0].mxu0 %v1385
      %v2067 = vpop.f32.mrb[0].mxu0
      %v2068 = vadd.f32 0.0, %v2067
      %v2069 = vpop.f32.mrb[0].mxu0
      %v2070 = vpop.f32.mrb[0].mxu0
      %v2071 = vadd.f32 0.0, %v2070
      %v2072 = vpop.f32.mrb[0].mxu0
      %2073 = vmatprep.mubr.bf16.mxu0 %v1412
      %2074 = vmatmul.mubr.bf16.gmra.mrb[0].mxu0 %v1404
      %v2075 = vpop.f32.mrb[0].mxu0
      %v2076 = vadd.f32 0.0, %v2075
      %v2077 = vpop.f32.mrb[0].mxu0
      %v2078 = vpop.f32.mrb[0].mxu0
      %v2079 = vadd.f32 0.0, %v2078
      %v2080 = vpop.f32.mrb[0].mxu0
      %2081 = vmatprep.mubr.bf16.mxu0 %v1431
      %2082 = vmatmul.mubr.bf16.gmra.mrb[0].mxu0 %v1423
      %v2083 = vpop.f32.mrb[0].mxu0
      %v2084 = vadd.f32 0.0, %v2083
      %v2085 = vpop.f32.mrb[0].mxu0
      %v2086 = vpop.f32.mrb[0].mxu0
      %v2087 = vadd.f32 0.0, %v2086
      %v2088 = vpop.f32.mrb[0].mxu0
      %2089 = vmatprep.mubr.bf16.mxu0 %v1450
      %2090 = vmatmul.mubr.bf16.gmra.mrb[0].mxu0 %v1442
      %v2091 = vpop.f32.mrb[0].mxu0
      %v2092 = vadd.f32 0.0, %v2091
      %v2093 = vpop.f32.mrb[0].mxu0
      %v2094 = vpop.f32.mrb[0].mxu0
      %v2095 = vadd.f32 0.0, %v2094
      %v2096 = vpop.f32.mrb[0].mxu0
      %2097 = vmatprep.mubr.bf16.mxu0 %v1469
      %2098 = vmatmul.mubr.bf16.gmra.mrb[0].mxu0 %v1461
      %v2099 = vpop.f32.mrb[0].mxu0
      %v2100 = vadd.f32 0.0, %v2099
      %v2101 = vpop.f32.mrb[0].mxu0
      %v2102 = vpop.f32.mrb[0].mxu0
      %v2103 = vadd.f32 0.0, %v2102
      %v2104 = vpop.f32.mrb[0].mxu0
      %2105 = vmatprep.mubr.bf16.mxu0 %v1488
      %2106 = vmatmul.mubr.bf16.gmra.mrb[0].mxu0 %v1480
      %v2107 = vpop.f32.mrb[0].mxu0
      %v2108 = vadd.f32 0.0, %v2107
      %v2109 = vpop.f32.mrb[0].mxu0
      %v2110 = vpop.f32.mrb[0].mxu0
      %v2111 = vadd.f32 0.0, %v2110
      %v2112 = vpop.f32.mrb[0].mxu0
      %2113 = vmatprep.mubr.bf16.mxu0 %v1507
      %2114 = vmatmul.mubr.bf16.gmra.mrb[0].mxu0 %v1499
      %v2115 = vpop.f32.mrb[0].mxu0
      %v2116 = vadd.f32 0.0, %v2115
      %v2117 = vpop.f32.mrb[0].mxu0
      %v2118 = vpop.f32.mrb[0].mxu0
      %v2119 = vadd.f32 0.0, %v2118
      %v2120 = vpop.f32.mrb[0].mxu0
      %2121 = vmatprep.mubr.bf16.mxu0 %v1526
      %2122 = vmatmul.mubr.bf16.gmra.mrb[0].mxu0 %v1518
      %v2123 = vpop.f32.mrb[0].mxu0
      %v2124 = vadd.f32 0.0, %v2123
      %v2125 = vpop.f32.mrb[0].mxu0
      %v2126 = vpop.f32.mrb[0].mxu0
      %v2127 = vadd.f32 0.0, %v2126
      %v2128 = vpop.f32.mrb[0].mxu0
      %2129 = vmatprep.mubr.bf16.mxu0 %v1545
      %2130 = vmatmul.mubr.bf16.gmra.mrb[0].mxu0 %v1537
      %v2131 = vpop.f32.mrb[0].mxu0
      %v2132 = vadd.f32 0.0, %v2131
      %v2133 = vpop.f32.mrb[0].mxu0
      %v2134 = vpop.f32.mrb[0].mxu0
      %v2135 = vadd.f32 0.0, %v2134
      %v2136 = vpop.f32.mrb[0].mxu0
      %2137 = vmatprep.mubr.bf16.mxu0 %v1564
      %2138 = vmatmul.mubr.bf16.gmra.mrb[0].mxu0 %v1556
      %v2139 = vpop.f32.mrb[0].mxu0
      %v2140 = vadd.f32 0.0, %v2139
      %v2141 = vpop.f32.mrb[0].mxu0
      %v2142 = vpop.f32.mrb[0].mxu0
      %v2143 = vadd.f32 0.0, %v2142
      %v2144 = vpop.f32.mrb[0].mxu0
      %2145 = vmatprep.mubr.bf16.mxu0 %v1583
      %2146 = vmatmul.mubr.bf16.gmra.mrb[0].mxu0 %v1575
      %v2147 = vpop.f32.mrb[0].mxu0
      %v2148 = vadd.f32 0.0, %v2147
      %v2149 = vpop.f32.mrb[0].mxu0
      %v2150 = vpop.f32.mrb[0].mxu0
      %v2151 = vadd.f32 0.0, %v2150
      %v2152 = vpop.f32.mrb[0].mxu0
      %2153 = vmatprep.mubr.bf16.mxu0 %v1602
      %2154 = vmatmul.mubr.bf16.gmra.mrb[0].mxu0 %v1594
      %v2155 = vpop.f32.mrb[0].mxu0
      %v2156 = vadd.f32 0.0, %v2155
      %v2157 = vpop.f32.mrb[0].mxu0
      %v2158 = vpop.f32.mrb[0].mxu0
      %v2159 = vadd.f32 0.0, %v2158
      %v2160 = vpop.f32.mrb[0].mxu0
      %2161 = vmatprep.mubr.bf16.mxu0 %v1621
      %2162 = vmatmul.mubr.bf16.gmra.mrb[0].mxu0 %v1613
      %v2163 = vpop.f32.mrb[0].mxu0
      %v2164 = vadd.f32 0.0, %v2163
      %v2165 = vpop.f32.mrb[0].mxu0
      %v2166 = vpop.f32.mrb[0].mxu0
      %v2167 = vadd.f32 0.0, %v2166
      %v2168 = vpop.f32.mrb[0].mxu0
      %2169 = vmatprep.mubr.bf16.mxu0 %v1640
      %2170 = vmatmul.mubr.bf16.gmra.mrb[0].mxu0 %v1632
      %v2171 = vpop.f32.mrb[0].mxu0
      %v2172 = vadd.f32 0.0, %v2171
      %v2173 = vpop.f32.mrb[0].mxu0
      %v2174 = vpop.f32.mrb[0].mxu0
      %v2175 = vadd.f32 0.0, %v2174
      %v2176 = vpop.f32.mrb[0].mxu0
      %2177 = vmatprep.mubr.bf16.mxu0 %v1659
      %2178 = vmatmul.mubr.bf16.gmra.mrb[0].mxu0 %v1651
      %v2179 = vpop.f32.mrb[0].mxu0
      %v2180 = vadd.f32 0.0, %v2179
      %v2181 = vpop.f32.mrb[0].mxu0
      %v2182 = vpop.f32.mrb[0].mxu0
      %v2183 = vadd.f32 0.0, %v2182
      %v2184 = vpop.f32.mrb[0].mxu0
      %2185 = vmatprep.mubr.bf16.mxu0 %v1678
      %2186 = vmatmul.mubr.bf16.gmra.mrb[0].mxu0 %v1670
      %v2187 = vpop.f32.mrb[0].mxu0
      %v2188 = vadd.f32 0.0, %v2187
      %v2189 = vpop.f32.mrb[0].mxu0
      %v2190 = vpop.f32.mrb[0].mxu0
      %v2191 = vadd.f32 0.0, %v2190
      %v2192 = vpop.f32.mrb[0].mxu0
      %2193 = vmatprep.mubr.bf16.mxu0 %v1697
      %2194 = vmatmul.mubr.bf16.gmra.mrb[0].mxu0 %v1689
      %v2195 = vpop.f32.mrb[0].mxu0
      %v2196 = vadd.f32 0.0, %v2195
      %v2197 = vpop.f32.mrb[0].mxu0
      %v2198 = vpop.f32.mrb[0].mxu0
      %v2199 = vadd.f32 0.0, %v2198
      %v2200 = vpop.f32.mrb[0].mxu0
      %2201 = vmatprep.mubr.bf16.mxu0 %v1716
      %2202 = vmatmul.mubr.bf16.gmra.mrb[0].mxu0 %v1708
      %v2203 = vpop.f32.mrb[0].mxu0
      %v2204 = vadd.f32 0.0, %v2203
      %v2205 = vpop.f32.mrb[0].mxu0
      %v2206 = vpop.f32.mrb[0].mxu0
      %v2207 = vadd.f32 0.0, %v2206
      %v2208 = vpop.f32.mrb[0].mxu0
      %2209 = vmatprep.mubr.bf16.mxu0 %v1735
      %2210 = vmatmul.mubr.bf16.gmra.mrb[0].mxu0 %v1727
      %v2211 = vpop.f32.mrb[0].mxu0
      %v2212 = vadd.f32 0.0, %v2211
      %v2213 = vpop.f32.mrb[0].mxu0
      %v2214 = vpop.f32.mrb[0].mxu0
      %v2215 = vadd.f32 0.0, %v2214
      %v2216 = vpop.f32.mrb[0].mxu0
      %2217 = vmatprep.mubr.bf16.mxu0 %v1754
      %2218 = vmatmul.mubr.bf16.gmra.mrb[0].mxu0 %v1746
      %v2219 = vpop.f32.mrb[0].mxu0
      %v2220 = vadd.f32 0.0, %v2219
      %v2221 = vpop.f32.mrb[0].mxu0
      %v2222 = vpop.f32.mrb[0].mxu0
      %v2223 = vadd.f32 0.0, %v2222
      %v2224 = vpop.f32.mrb[0].mxu0
      %2225 = vmatprep.mubr.bf16.mxu0 %v1773
      %2226 = vmatmul.mubr.bf16.gmra.mrb[0].mxu0 %v1765
      %v2227 = vpop.f32.mrb[0].mxu0
      %v2228 = vadd.f32 0.0, %v2227
      %v2229 = vpop.f32.mrb[0].mxu0
      %v2230 = vpop.f32.mrb[0].mxu0
      %v2231 = vadd.f32 0.0, %v2230
      %v2232 = vpop.f32.mrb[0].mxu0
      %2233 = vmatprep.mubr.bf16.mxu0 %v1792
      %2234 = vmatmul.mubr.bf16.gmra.mrb[0].mxu0 %v1784
      %v2235 = vpop.f32.mrb[0].mxu0
      %v2236 = vadd.f32 0.0, %v2235
      %v2237 = vpop.f32.mrb[0].mxu0
      %v2238 = vpop.f32.mrb[0].mxu0
      %v2239 = vadd.f32 0.0, %v2238
      %v2240 = vpop.f32.mrb[0].mxu0
      %2241 = vdwg.mxu0
      %2242 = vmatprep.subr.bf16.mxu0 0
      %2243 = vmatpush1.bf16.msra.mxu0 %v1985
      %2244 = vmatprep.subr.bf16.mxu0 0
      %2245 = vmatpush1.bf16.msra.mxu0 %v1986
      %2246 = vmatprep.subr.bf16.mxu0 0
      %2247 = vmatpush1.bf16.msra.mxu0 %v1987
      %2248 = vmatprep.subr.bf16.mxu0 0
      %2249 = vmatpush1.bf16.msra.mxu0 %v1988
      %2250 = vmatprep.subr.bf16.mxu0 0
      %2251 = vmatpush1.bf16.msra.mxu0 %v1989
      %2252 = vmatprep.subr.bf16.mxu0 0
      %2253 = vmatpush1.bf16.msra.mxu0 %v1990
      %2254 = vmatprep.subr.bf16.mxu0 0
      %2255 = vmatpush1.bf16.msra.mxu0 %v1991
      %2256 = vmatprep.subr.bf16.mxu0 0
      %2257 = vmatpush1.bf16.msra.mxu0 %v1992
      %2258 = vmatprep.subr.bf16.mxu0 0
      %2259 = vmatpush1.bf16.msra.mxu0 0
      %2260 = vmatprep.subr.bf16.mxu0 0
      %2261 = vmatpush1.bf16.msra.mxu0 0
      %2262 = vmatprep.subr.bf16.mxu0 0
      %2263 = vmatpush1.bf16.msra.mxu0 0
      %2264 = vmatprep.subr.bf16.mxu0 0
      %2265 = vmatpush1.bf16.msra.mxu0 0
      %2266 = vmatprep.subr.bf16.mxu0 0
      %2267 = vmatpush1.bf16.msra.mxu0 0
      %2268 = vmatprep.subr.bf16.mxu0 0
      %2269 = vmatpush1.bf16.msra.mxu0 0
      %2270 = vmatprep.subr.bf16.mxu0 0
      %2271 = vmatpush1.bf16.msra.mxu0 0
      %2272 = vmatprep.subr.bf16.mxu0 0
      %2273 = vmatpush1.bf16.msra.mxu0 0
      %2274 = vmatprep.mubr.bf16.mxu0 0
      %2275 = vmatmul.mubr.bf16.gmra.mrb[0].mxu0 %v1363
      %v2276 = vpop.f32.mrb[0].mxu0
      %v2277 = vadd.f32 %v2052, %v2276
      %v2278 = vpop.f32.mrb[0].mxu0
      %v2279 = vpop.f32.mrb[0].mxu0
      %v2280 = vadd.f32 %v2055, %v2279
      %v2281 = vpop.f32.mrb[0].mxu0
      %2282 = vmatprep.mubr.bf16.mxu0 0
      %2283 = vmatmul.mubr.bf16.gmra.mrb[0].mxu0 %v1382
      %v2284 = vpop.f32.mrb[0].mxu0
      %v2285 = vadd.f32 %v2060, %v2284
      %v2286 = vpop.f32.mrb[0].mxu0
      %v2287 = vpop.f32.mrb[0].mxu0
      %v2288 = vadd.f32 %v2063, %v2287
      %v2289 = vpop.f32.mrb[0].mxu0
      %2290 = vmatprep.mubr.bf16.mxu0 0
      %2291 = vmatmul.mubr.bf16.gmra.mrb[0].mxu0 %v1401
      %v2292 = vpop.f32.mrb[0].mxu0
      %v2293 = vadd.f32 %v2068, %v2292
      %v2294 = vpop.f32.mrb[0].mxu0
      %v2295 = vpop.f32.mrb[0].mxu0
      %v2296 = vadd.f32 %v2071, %v2295
      %v2297 = vpop.f32.mrb[0].mxu0
      %2298 = vmatprep.mubr.bf16.mxu0 0
      %2299 = vmatmul.mubr.bf16.gmra.mrb[0].mxu0 %v1420
      %v2300 = vpop.f32.mrb[0].mxu0
      %v2301 = vadd.f32 %v2076, %v2300
      %v2302 = vpop.f32.mrb[0].mxu0
      %v2303 = vpop.f32.mrb[0].mxu0
      %v2304 = vadd.f32 %v2079, %v2303
      %v2305 = vpop.f32.mrb[0].mxu0
      %2306 = vmatprep.mubr.bf16.mxu0 0
      %2307 = vmatmul.mubr.bf16.gmra.mrb[0].mxu0 %v1439
      %v2308 = vpop.f32.mrb[0].mxu0
      %v2309 = vadd.f32 %v2084, %v2308
      %v2310 = vpop.f32.mrb[0].mxu0
      %v2311 = vpop.f32.mrb[0].mxu0
      %v2312 = vadd.f32 %v2087, %v2311
      %v2313 = vpop.f32.mrb[0].mxu0
      %2314 = vmatprep.mubr.bf16.mxu0 0
      %2315 = vmatmul.mubr.bf16.gmra.mrb[0].mxu0 %v1458
      %v2316 = vpop.f32.mrb[0].mxu0
      %v2317 = vadd.f32 %v2092, %v2316
      %v2318 = vpop.f32.mrb[0].mxu0
      %v2319 = vpop.f32.mrb[0].mxu0
      %v2320 = vadd.f32 %v2095, %v2319
      %v2321 = vpop.f32.mrb[0].mxu0
      %2322 = vmatprep.mubr.bf16.mxu0 0
      %2323 = vmatmul.mubr.bf16.gmra.mrb[0].mxu0 %v1477
      %v2324 = vpop.f32.mrb[0].mxu0
      %v2325 = vadd.f32 %v2100, %v2324
      %v2326 = vpop.f32.mrb[0].mxu0
      %v2327 = vpop.f32.mrb[0].mxu0
      %v2328 = vadd.f32 %v2103, %v2327
      %v2329 = vpop.f32.mrb[0].mxu0
      %2330 = vmatprep.mubr.bf16.mxu0 0
      %2331 = vmatmul.mubr.bf16.gmra.mrb[0].mxu0 %v1496
      %v2332 = vpop.f32.mrb[0].mxu0
      %v2333 = vadd.f32 %v2108, %v2332
      %v2334 = vpop.f32.mrb[0].mxu0
      %v2335 = vpop.f32.mrb[0].mxu0
      %v2336 = vadd.f32 %v2111, %v2335
      %v2337 = vpop.f32.mrb[0].mxu0
      %2338 = vmatprep.mubr.bf16.mxu0 0
      %2339 = vmatmul.mubr.bf16.gmra.mrb[0].mxu0 %v1515
      %v2340 = vpop.f32.mrb[0].mxu0
      %v2341 = vadd.f32 %v2116, %v2340
      %v2342 = vpop.f32.mrb[0].mxu0
      %v2343 = vpop.f32.mrb[0].mxu0
      %v2344 = vadd.f32 %v2119, %v2343
      %v2345 = vpop.f32.mrb[0].mxu0
      %2346 = vmatprep.mubr.bf16.mxu0 0
      %2347 = vmatmul.mubr.bf16.gmra.mrb[0].mxu0 %v1534
      %v2348 = vpop.f32.mrb[0].mxu0
      %v2349 = vadd.f32 %v2124, %v2348
      %v2350 = vpop.f32.mrb[0].mxu0
      %v2351 = vpop.f32.mrb[0].mxu0
      %v2352 = vadd.f32 %v2127, %v2351
      %v2353 = vpop.f32.mrb[0].mxu0
      %2354 = vmatprep.mubr.bf16.mxu0 0
      %2355 = vmatmul.mubr.bf16.gmra.mrb[0].mxu0 %v1553
      %v2356 = vpop.f32.mrb[0].mxu0
      %v2357 = vadd.f32 %v2132, %v2356
      %v2358 = vpop.f32.mrb[0].mxu0
      %v2359 = vpop.f32.mrb[0].mxu0
      %v2360 = vadd.f32 %v2135, %v2359
      %v2361 = vpop.f32.mrb[0].mxu0
      %2362 = vmatprep.mubr.bf16.mxu0 0
      %2363 = vmatmul.mubr.bf16.gmra.mrb[0].mxu0 %v1572
      %v2364 = vpop.f32.mrb[0].mxu0
      %v2365 = vadd.f32 %v2140, %v2364
      %v2366 = vpop.f32.mrb[0].mxu0
      %v2367 = vpop.f32.mrb[0].mxu0
      %v2368 = vadd.f32 %v2143, %v2367
      %v2369 = vpop.f32.mrb[0].mxu0
      %2370 = vmatprep.mubr.bf16.mxu0 0
      %2371 = vmatmul.mubr.bf16.gmra.mrb[0].mxu0 %v1591
      %v2372 = vpop.f32.mrb[0].mxu0
      %v2373 = vadd.f32 %v2148, %v2372
      %v2374 = vpop.f32.mrb[0].mxu0
      %v2375 = vpop.f32.mrb[0].mxu0
      %v2376 = vadd.f32 %v2151, %v2375
      %v2377 = vpop.f32.mrb[0].mxu0
      %2378 = vmatprep.mubr.bf16.mxu0 0
      %2379 = vmatmul.mubr.bf16.gmra.mrb[0].mxu0 %v1610
      %v2380 = vpop.f32.mrb[0].mxu0
      %v2381 = vadd.f32 %v2156, %v2380
      %v2382 = vpop.f32.mrb[0].mxu0
      %v2383 = vpop.f32.mrb[0].mxu0
      %v2384 = vadd.f32 %v2159, %v2383
      %v2385 = vpop.f32.mrb[0].mxu0
      %2386 = vmatprep.mubr.bf16.mxu0 0
      %2387 = vmatmul.mubr.bf16.gmra.mrb[0].mxu0 %v1629
      %v2388 = vpop.f32.mrb[0].mxu0
      %v2389 = vadd.f32 %v2164, %v2388
      %v2390 = vpop.f32.mrb[0].mxu0
      %v2391 = vpop.f32.mrb[0].mxu0
      %v2392 = vadd.f32 %v2167, %v2391
      %v2393 = vpop.f32.mrb[0].mxu0
      %2394 = vmatprep.mubr.bf16.mxu0 0
      %2395 = vmatmul.mubr.bf16.gmra.mrb[0].mxu0 %v1648
      %v2396 = vpop.f32.mrb[0].mxu0
      %v2397 = vadd.f32 %v2172, %v2396
      %v2398 = vpop.f32.mrb[0].mxu0
      %v2399 = vpop.f32.mrb[0].mxu0
      %v2400 = vadd.f32 %v2175, %v2399
      %v2401 = vpop.f32.mrb[0].mxu0
      %2402 = vmatprep.mubr.bf16.mxu0 0
      %2403 = vmatmul.mubr.bf16.gmra.mrb[0].mxu0 %v1667
      %v2404 = vpop.f32.mrb[0].mxu0
      %v2405 = vadd.f32 %v2180, %v2404
      %v2406 = vpop.f32.mrb[0].mxu0
      %v2407 = vpop.f32.mrb[0].mxu0
      %v2408 = vadd.f32 %v2183, %v2407
      %v2409 = vpop.f32.mrb[0].mxu0
      %2410 = vmatprep.mubr.bf16.mxu0 0
      %2411 = vmatmul.mubr.bf16.gmra.mrb[0].mxu0 %v1686
      %v2412 = vpop.f32.mrb[0].mxu0
      %v2413 = vadd.f32 %v2188, %v2412
      %v2414 = vpop.f32.mrb[0].mxu0
      %v2415 = vpop.f32.mrb[0].mxu0
      %v2416 = vadd.f32 %v2191, %v2415
      %v2417 = vpop.f32.mrb[0].mxu0
      %2418 = vmatprep.mubr.bf16.mxu0 0
      %2419 = vmatmul.mubr.bf16.gmra.mrb[0].mxu0 %v1705
      %v2420 = vpop.f32.mrb[0].mxu0
      %v2421 = vadd.f32 %v2196, %v2420
      %v2422 = vpop.f32.mrb[0].mxu0
      %v2423 = vpop.f32.mrb[0].mxu0
      %v2424 = vadd.f32 %v2199, %v2423
      %v2425 = vpop.f32.mrb[0].mxu0
      %2426 = vmatprep.mubr.bf16.mxu0 0
      %2427 = vmatmul.mubr.bf16.gmra.mrb[0].mxu0 %v1724
      %v2428 = vpop.f32.mrb[0].mxu0
      %v2429 = vadd.f32 %v2204, %v2428
      %v2430 = vpop.f32.mrb[0].mxu0
      %v2431 = vpop.f32.mrb[0].mxu0
      %v2432 = vadd.f32 %v2207, %v2431
      %v2433 = vpop.f32.mrb[0].mxu0
      %2434 = vmatprep.mubr.bf16.mxu0 0
      %2435 = vmatmul.mubr.bf16.gmra.mrb[0].mxu0 %v1743
      %v2436 = vpop.f32.mrb[0].mxu0
      %v2437 = vadd.f32 %v2212, %v2436
      %v2438 = vpop.f32.mrb[0].mxu0
      %v2439 = vpop.f32.mrb[0].mxu0
      %v2440 = vadd.f32 %v2215, %v2439
      %v2441 = vpop.f32.mrb[0].mxu0
      %2442 = vmatprep.mubr.bf16.mxu0 0
      %2443 = vmatmul.mubr.bf16.gmra.mrb[0].mxu0 %v1762
      %v2444 = vpop.f32.mrb[0].mxu0
      %v2445 = vadd.f32 %v2220, %v2444
      %v2446 = vpop.f32.mrb[0].mxu0
      %v2447 = vpop.f32.mrb[0].mxu0
      %v2448 = vadd.f32 %v2223, %v2447
      %v2449 = vpop.f32.mrb[0].mxu0
      %2450 = vmatprep.mubr.bf16.mxu0 0
      %2451 = vmatmul.mubr.bf16.gmra.mrb[0].mxu0 %v1781
      %v2452 = vpop.f32.mrb[0].mxu0
      %v2453 = vadd.f32 %v2228, %v2452
      %v2454 = vpop.f32.mrb[0].mxu0
      %v2455 = vpop.f32.mrb[0].mxu0
      %v2456 = vadd.f32 %v2231, %v2455
      %v2457 = vpop.f32.mrb[0].mxu0
      %2458 = vmatprep.mubr.bf16.mxu0 0
      %2459 = vmatmul.mubr.bf16.gmra.mrb[0].mxu0 %v1800
      %v2460 = vpop.f32.mrb[0].mxu0
      %v2461 = vadd.f32 %v2236, %v2460
      %v2462 = vpop.f32.mrb[0].mxu0
      %v2463 = vpop.f32.mrb[0].mxu0
      %v2464 = vadd.f32 %v2239, %v2463
      %v2465 = vpop.f32.mrb[0].mxu0
      %2466 = vdwg.mxu0
      %vm2467 = vsmask.f32 4352
      %v2468 = vrot.slane %v958, 3
      %v2469 = vrot.slane %v960, 4
      %v2470 = vor.u32 %v2468, %v2469
      %v2471 = vrot.slane %v969, 3
      %v2472 = vrot.slane %v965, 4
      %v2473 = vor.u32 %v2471, %v2472
      %v2474 = vsel %vm2467, %v2470, %v2473
      %v2476 = vshrl.u32 %v968, 16
      %v2478 = vrot.slane %v2476, 3
      %v2479 = vshll.u32 %v968, 16
      %v2481 = vrot.slane %v2479, 4
      %v2482 = vor.u32 %v2478, %v2481
      %v2483 = vrot.slane %v1341, 3
      %v2484 = vshll.u32 %v976, 16
      %v2486 = vrot.slane %v2484, 4
      %v2487 = vor.u32 %v2483, %v2486
      %v2488 = vsel %vm2467, %v2482, %v2487
      %v2490 = vshrl.u32 %v1185, 16
      %v2492 = vrot.slane %v2490, 3
      %v2493 = vshll.u32 %v1185, 16
      %v2495 = vrot.slane %v2493, 4
      %v2496 = vor.u32 %v2492, %v2495
      %v2497 = vrot.slane %v1353, 3
      %v2498 = vshll.u32 %v1187, 16
      %v2500 = vrot.slane %v2498, 4
      %v2501 = vor.u32 %v2497, %v2500
      %v2502 = vsel %vm2467, %v2496, %v2501
      %v2503 = vrot.slane %v977, 3
      %v2504 = vrot.slane %v973, 4
      %v2505 = vor.u32 %v2503, %v2504
      %v2506 = vsel %vm2467, %v2473, %v2505
      %v2507 = vrot.slane %v1345, 3
      %v2508 = vrot.slane %v1348, 4
      %v2509 = vor.u32 %v2507, %v2508
      %v2510 = vsel %vm2467, %v2487, %v2509
      %v2511 = vrot.slane %v1357, 3
      %v2512 = vrot.slane %v1360, 4
      %v2513 = vor.u32 %v2511, %v2512
      %v2514 = vsel %vm2467, %v2501, %v2513
      %v2515 = vrot.slane %v985, 3
      %v2516 = vrot.slane %v981, 4
      %v2517 = vor.u32 %v2515, %v2516
      %v2518 = vsel %vm2467, %v2505, %v2517
      %v2519 = vrot.slane %v1368, 3
      %v2520 = vrot.slane %v1371, 4
      %v2521 = vor.u32 %v2519, %v2520
      %v2522 = vsel %vm2467, %v2509, %v2521
      %v2523 = vrot.slane %v1376, 3
      %v2524 = vrot.slane %v1379, 4
      %v2525 = vor.u32 %v2523, %v2524
      %v2526 = vsel %vm2467, %v2513, %v2525
      %v2527 = vrot.slane %v993, 3
      %v2528 = vrot.slane %v989, 4
      %v2529 = vor.u32 %v2527, %v2528
      %v2530 = vsel %vm2467, %v2517, %v2529
      %v2531 = vrot.slane %v1387, 3
      %v2532 = vrot.slane %v1390, 4
      %v2533 = vor.u32 %v2531, %v2532
      %v2534 = vsel %vm2467, %v2521, %v2533
      %v2535 = vrot.slane %v1395, 3
      %v2536 = vrot.slane %v1398, 4
      %v2537 = vor.u32 %v2535, %v2536
      %v2538 = vsel %vm2467, %v2525, %v2537
      %v2539 = vrot.slane %v1001, 3
      %v2540 = vrot.slane %v997, 4
      %v2541 = vor.u32 %v2539, %v2540
      %v2542 = vsel %vm2467, %v2529, %v2541
      %v2543 = vrot.slane %v1406, 3
      %v2544 = vrot.slane %v1409, 4
      %v2545 = vor.u32 %v2543, %v2544
      %v2546 = vsel %vm2467, %v2533, %v2545
      %v2547 = vrot.slane %v1414, 3
      %v2548 = vrot.slane %v1417, 4
      %v2549 = vor.u32 %v2547, %v2548
      %v2550 = vsel %vm2467, %v2537, %v2549
      %v2551 = vrot.slane %v1009, 3
      %v2552 = vrot.slane %v1005, 4
      %v2553 = vor.u32 %v2551, %v2552
      %v2554 = vsel %vm2467, %v2541, %v2553
      %v2555 = vrot.slane %v1425, 3
      %v2556 = vrot.slane %v1428, 4
      %v2557 = vor.u32 %v2555, %v2556
      %v2558 = vsel %vm2467, %v2545, %v2557
      %v2559 = vrot.slane %v1433, 3
      %v2560 = vrot.slane %v1436, 4
      %v2561 = vor.u32 %v2559, %v2560
      %v2562 = vsel %vm2467, %v2549, %v2561
      %v2563 = vrot.slane %v1017, 3
      %v2564 = vrot.slane %v1013, 4
      %v2565 = vor.u32 %v2563, %v2564
      %v2566 = vsel %vm2467, %v2553, %v2565
      %v2567 = vrot.slane %v1444, 3
      %v2568 = vrot.slane %v1447, 4
      %v2569 = vor.u32 %v2567, %v2568
      %v2570 = vsel %vm2467, %v2557, %v2569
      %v2571 = vrot.slane %v1452, 3
      %v2572 = vrot.slane %v1455, 4
      %v2573 = vor.u32 %v2571, %v2572
      %v2574 = vsel %vm2467, %v2561, %v2573
      %v2575 = vrot.slane %v1025, 3
      %v2576 = vrot.slane %v1021, 4
      %v2577 = vor.u32 %v2575, %v2576
      %v2578 = vsel %vm2467, %v2565, %v2577
      %v2579 = vrot.slane %v1463, 3
      %v2580 = vrot.slane %v1466, 4
      %v2581 = vor.u32 %v2579, %v2580
      %v2582 = vsel %vm2467, %v2569, %v2581
      %v2583 = vrot.slane %v1471, 3
      %v2584 = vrot.slane %v1474, 4
      %v2585 = vor.u32 %v2583, %v2584
      %v2586 = vsel %vm2467, %v2573, %v2585
      %v2587 = vrot.slane %v1033, 3
      %v2588 = vrot.slane %v1029, 4
      %v2589 = vor.u32 %v2587, %v2588
      %v2590 = vsel %vm2467, %v2577, %v2589
      %v2591 = vrot.slane %v1482, 3
      %v2592 = vrot.slane %v1485, 4
      %v2593 = vor.u32 %v2591, %v2592
      %v2594 = vsel %vm2467, %v2581, %v2593
      %v2595 = vrot.slane %v1490, 3
      %v2596 = vrot.slane %v1493, 4
      %v2597 = vor.u32 %v2595, %v2596
      %v2598 = vsel %vm2467, %v2585, %v2597
      %v2599 = vrot.slane %v1041, 3
      %v2600 = vrot.slane %v1037, 4
      %v2601 = vor.u32 %v2599, %v2600
      %v2602 = vsel %vm2467, %v2589, %v2601
      %v2603 = vrot.slane %v1501, 3
      %v2604 = vrot.slane %v1504, 4
      %v2605 = vor.u32 %v2603, %v2604
      %v2606 = vsel %vm2467, %v2593, %v2605
      %v2607 = vrot.slane %v1509, 3
      %v2608 = vrot.slane %v1512, 4
      %v2609 = vor.u32 %v2607, %v2608
      %v2610 = vsel %vm2467, %v2597, %v2609
      %v2611 = vrot.slane %v1049, 3
      %v2612 = vrot.slane %v1045, 4
      %v2613 = vor.u32 %v2611, %v2612
      %v2614 = vsel %vm2467, %v2601, %v2613
      %v2615 = vrot.slane %v1520, 3
      %v2616 = vrot.slane %v1523, 4
      %v2617 = vor.u32 %v2615, %v2616
      %v2618 = vsel %vm2467, %v2605, %v2617
      %v2619 = vrot.slane %v1528, 3
      %v2620 = vrot.slane %v1531, 4
      %v2621 = vor.u32 %v2619, %v2620
      %v2622 = vsel %vm2467, %v2609, %v2621
      %v2623 = vrot.slane %v1057, 3
      %v2624 = vrot.slane %v1053, 4
      %v2625 = vor.u32 %v2623, %v2624
      %v2626 = vsel %vm2467, %v2613, %v2625
      %v2627 = vrot.slane %v1539, 3
      %v2628 = vrot.slane %v1542, 4
      %v2629 = vor.u32 %v2627, %v2628
      %v2630 = vsel %vm2467, %v2617, %v2629
      %v2631 = vrot.slane %v1547, 3
      %v2632 = vrot.slane %v1550, 4
      %v2633 = vor.u32 %v2631, %v2632
      %v2634 = vsel %vm2467, %v2621, %v2633
      %v2635 = vrot.slane %v1065, 3
      %v2636 = vrot.slane %v1061, 4
      %v2637 = vor.u32 %v2635, %v2636
      %v2638 = vsel %vm2467, %v2625, %v2637
      %v2639 = vrot.slane %v1558, 3
      %v2640 = vrot.slane %v1561, 4
      %v2641 = vor.u32 %v2639, %v2640
      %v2642 = vsel %vm2467, %v2629, %v2641
      %v2643 = vrot.slane %v1566, 3
      %v2644 = vrot.slane %v1569, 4
      %v2645 = vor.u32 %v2643, %v2644
      %v2646 = vsel %vm2467, %v2633, %v2645
      %v2647 = vrot.slane %v1073, 3
      %v2648 = vrot.slane %v1069, 4
      %v2649 = vor.u32 %v2647, %v2648
      %v2650 = vsel %vm2467, %v2637, %v2649
      %v2651 = vrot.slane %v1577, 3
      %v2652 = vrot.slane %v1580, 4
      %v2653 = vor.u32 %v2651, %v2652
      %v2654 = vsel %vm2467, %v2641, %v2653
      %v2655 = vrot.slane %v1585, 3
      %v2656 = vrot.slane %v1588, 4
      %v2657 = vor.u32 %v2655, %v2656
      %v2658 = vsel %vm2467, %v2645, %v2657
      %v2659 = vrot.slane %v1081, 3
      %v2660 = vrot.slane %v1077, 4
      %v2661 = vor.u32 %v2659, %v2660
      %v2662 = vsel %vm2467, %v2649, %v2661
      %v2663 = vrot.slane %v1596, 3
      %v2664 = vrot.slane %v1599, 4
      %v2665 = vor.u32 %v2663, %v2664
      %v2666 = vsel %vm2467, %v2653, %v2665
      %v2667 = vrot.slane %v1604, 3
      %v2668 = vrot.slane %v1607, 4
      %v2669 = vor.u32 %v2667, %v2668
      %v2670 = vsel %vm2467, %v2657, %v2669
      %v2671 = vrot.slane %v1089, 3
      %v2672 = vrot.slane %v1085, 4
      %v2673 = vor.u32 %v2671, %v2672
      %v2674 = vsel %vm2467, %v2661, %v2673
      %v2675 = vrot.slane %v1615, 3
      %v2676 = vrot.slane %v1618, 4
      %v2677 = vor.u32 %v2675, %v2676
      %v2678 = vsel %vm2467, %v2665, %v2677
      %v2679 = vrot.slane %v1623, 3
      %v2680 = vrot.slane %v1626, 4
      %v2681 = vor.u32 %v2679, %v2680
      %v2682 = vsel %vm2467, %v2669, %v2681
      %v2683 = vrot.slane %v1097, 3
      %v2684 = vrot.slane %v1093, 4
      %v2685 = vor.u32 %v2683, %v2684
      %v2686 = vsel %vm2467, %v2673, %v2685
      %v2687 = vrot.slane %v1634, 3
      %v2688 = vrot.slane %v1637, 4
      %v2689 = vor.u32 %v2687, %v2688
      %v2690 = vsel %vm2467, %v2677, %v2689
      %v2691 = vrot.slane %v1642, 3
      %v2692 = vrot.slane %v1645, 4
      %v2693 = vor.u32 %v2691, %v2692
      %v2694 = vsel %vm2467, %v2681, %v2693
      %v2695 = vrot.slane %v1105, 3
      %v2696 = vrot.slane %v1101, 4
      %v2697 = vor.u32 %v2695, %v2696
      %v2698 = vsel %vm2467, %v2685, %v2697
      %v2699 = vrot.slane %v1653, 3
      %v2700 = vrot.slane %v1656, 4
      %v2701 = vor.u32 %v2699, %v2700
      %v2702 = vsel %vm2467, %v2689, %v2701
      %v2703 = vrot.slane %v1661, 3
      %v2704 = vrot.slane %v1664, 4
      %v2705 = vor.u32 %v2703, %v2704
      %v2706 = vsel %vm2467, %v2693, %v2705
      %v2707 = vrot.slane %v1113, 3
      %v2708 = vrot.slane %v1109, 4
      %v2709 = vor.u32 %v2707, %v2708
      %v2710 = vsel %vm2467, %v2697, %v2709
      %v2711 = vrot.slane %v1672, 3
      %v2712 = vrot.slane %v1675, 4
      %v2713 = vor.u32 %v2711, %v2712
      %v2714 = vsel %vm2467, %v2701, %v2713
      %v2715 = vrot.slane %v1680, 3
      %v2716 = vrot.slane %v1683, 4
      %v2717 = vor.u32 %v2715, %v2716
      %v2718 = vsel %vm2467, %v2705, %v2717
      %v2719 = vrot.slane %v1121, 3
      %v2720 = vrot.slane %v1117, 4
      %v2721 = vor.u32 %v2719, %v2720
      %v2722 = vsel %vm2467, %v2709, %v2721
      %v2723 = vrot.slane %v1691, 3
      %v2724 = vrot.slane %v1694, 4
      %v2725 = vor.u32 %v2723, %v2724
      %v2726 = vsel %vm2467, %v2713, %v2725
      %v2727 = vrot.slane %v1699, 3
      %v2728 = vrot.slane %v1702, 4
      %v2729 = vor.u32 %v2727, %v2728
      %v2730 = vsel %vm2467, %v2717, %v2729
      %v2731 = vrot.slane %v1129, 3
      %v2732 = vrot.slane %v1125, 4
      %v2733 = vor.u32 %v2731, %v2732
      %v2734 = vsel %vm2467, %v2721, %v2733
      %v2735 = vrot.slane %v1710, 3
      %v2736 = vrot.slane %v1713, 4
      %v2737 = vor.u32 %v2735, %v2736
      %v2738 = vsel %vm2467, %v2725, %v2737
      %v2739 = vrot.slane %v1718, 3
      %v2740 = vrot.slane %v1721, 4
      %v2741 = vor.u32 %v2739, %v2740
      %v2742 = vsel %vm2467, %v2729, %v2741
      %v2743 = vrot.slane %v1137, 3
      %v2744 = vrot.slane %v1133, 4
      %v2745 = vor.u32 %v2743, %v2744
      %v2746 = vsel %vm2467, %v2733, %v2745
      %v2747 = vrot.slane %v1729, 3
      %v2748 = vrot.slane %v1732, 4
      %v2749 = vor.u32 %v2747, %v2748
      %v2750 = vsel %vm2467, %v2737, %v2749
      %v2751 = vrot.slane %v1737, 3
      %v2752 = vrot.slane %v1740, 4
      %v2753 = vor.u32 %v2751, %v2752
      %v2754 = vsel %vm2467, %v2741, %v2753
      %v2755 = vrot.slane %v1145, 3
      %v2756 = vrot.slane %v1141, 4
      %v2757 = vor.u32 %v2755, %v2756
      %v2758 = vsel %vm2467, %v2745, %v2757
      %v2759 = vrot.slane %v1748, 3
      %v2760 = vrot.slane %v1751, 4
      %v2761 = vor.u32 %v2759, %v2760
      %v2762 = vsel %vm2467, %v2749, %v2761
      %v2763 = vrot.slane %v1756, 3
      %v2764 = vrot.slane %v1759, 4
      %v2765 = vor.u32 %v2763, %v2764
      %v2766 = vsel %vm2467, %v2753, %v2765
      %v2767 = vrot.slane %v1153, 3
      %v2768 = vrot.slane %v1149, 4
      %v2769 = vor.u32 %v2767, %v2768
      %v2770 = vsel %vm2467, %v2757, %v2769
      %v2771 = vrot.slane %v1767, 3
      %v2772 = vrot.slane %v1770, 4
      %v2773 = vor.u32 %v2771, %v2772
      %v2774 = vsel %vm2467, %v2761, %v2773
      %v2775 = vrot.slane %v1775, 3
      %v2776 = vrot.slane %v1778, 4
      %v2777 = vor.u32 %v2775, %v2776
      %v2778 = vsel %vm2467, %v2765, %v2777
      %v2899 = vunpack.c.l.b16 %v1238
      %v2900 = vunpack.c.l.b16 %v1239
      %v2901 = vunpack.c.l.b16 %v1240
      %v2902 = vunpack.c.l.b16 %v1241
      %v2903 = vunpack.c.l.b16 %v1242
      %v2904 = vunpack.c.l.b16 %v1243
      %v2905 = vunpack.c.l.b16 %v1244
      %v2906 = vunpack.c.l.b16 %v1245
      %v2907 = vunpack.c.l.b16 %v1246
      %v2908 = vunpack.c.l.b16 %v1247
      %v2909 = vunpack.c.l.b16 %v1248
      %v2910 = vunpack.c.l.b16 %v1249
      %v2911 = vunpack.c.l.b16 %v1250
      %v2912 = vunpack.c.l.b16 %v1251
      %v2913 = vunpack.c.l.b16 %v1252
      %v2914 = vunpack.c.l.b16 %v1253
      %v2915 = vunpack.c.l.b16 %v1254
      %v2916 = vunpack.c.l.b16 %v1255
      %v2917 = vunpack.c.l.b16 %v1256
      %v2918 = vunpack.c.l.b16 %v1257
      %v2919 = vunpack.c.l.b16 %v1258
      %v2920 = vunpack.c.l.b16 %v1259
      %v2921 = vunpack.c.l.b16 %v1260
      %v2922 = vunpack.c.l.b16 %v1261
      %v2923 = vunpack.c.l.b16 %v1262
      %v2924 = vunpack.c.l.b16 %v1263
      %v2925 = vunpack.c.l.b16 %v1264
      %v2926 = vunpack.c.l.b16 %v1265
      %v2927 = vunpack.c.l.b16 %v1266
      %v2928 = vunpack.c.l.b16 %v1267
      %v2929 = vunpack.c.l.b16 %v1268
      %v2930 = vunpack.c.l.b16 %v1269
      %v2931 = vunpack.c.l.b16 %v1270
      %v2932 = vunpack.c.l.b16 %v1271
      %v2933 = vunpack.c.l.b16 %v1272
      %v2934 = vunpack.c.l.b16 %v1273
      %v2935 = vunpack.c.l.b16 %v1274
      %v2936 = vunpack.c.l.b16 %v1275
      %v2937 = vunpack.c.l.b16 %v1276
      %v2938 = vunpack.c.l.b16 %v1277
      %v2939 = vunpack.c.l.b16 %v1278
      %v2940 = vunpack.c.l.b16 %v1279
      %v2941 = vunpack.c.l.b16 %v1280
      %v2942 = vunpack.c.l.b16 %v1281
      %v2943 = vunpack.c.l.b16 %v1282
      %v2944 = vunpack.c.l.b16 %v1283
      %v2945 = vunpack.c.l.b16 %v1284
      %v2946 = vunpack.c.l.b16 %v1285
      %v2947 = vpack.c.b16 %v2900, %v2899
      %v2948 = vpack.c.b16 %v2902, %v2901
      %v2949 = vpack.c.b16 %v2904, %v2903
      %v2950 = vpack.c.b16 %v2906, %v2905
      %v2951 = vpack.c.b16 %v2908, %v2907
      %v2952 = vpack.c.b16 %v2910, %v2909
      %v2953 = vpack.c.b16 %v2912, %v2911
      %v2954 = vpack.c.b16 %v2914, %v2913
      %v2955 = vpack.c.b16 %v2916, %v2915
      %v2956 = vpack.c.b16 %v2918, %v2917
      %v2957 = vpack.c.b16 %v2920, %v2919
      %v2958 = vpack.c.b16 %v2922, %v2921
      %v2959 = vpack.c.b16 %v2924, %v2923
      %v2960 = vpack.c.b16 %v2926, %v2925
      %v2961 = vpack.c.b16 %v2928, %v2927
      %v2962 = vpack.c.b16 %v2930, %v2929
      %v2963 = vpack.c.b16 %v2932, %v2931
      %v2964 = vpack.c.b16 %v2934, %v2933
      %v2965 = vpack.c.b16 %v2936, %v2935
      %v2966 = vpack.c.b16 %v2938, %v2937
      %v2967 = vpack.c.b16 %v2940, %v2939
      %v2968 = vpack.c.b16 %v2942, %v2941
      %v2969 = vpack.c.b16 %v2944, %v2943
      %v2970 = vpack.c.b16 %v2946, %v2945
      %2995 = vmatprep.subr.bf16.mxu0 0
      %2996 = vmatpush1.bf16.msra.mxu0 %v2947
      %2997 = vmatprep.subr.bf16.mxu0 0
      %2998 = vmatpush1.bf16.msra.mxu0 %v2948
      %2999 = vmatprep.subr.bf16.mxu0 0
      %3000 = vmatpush1.bf16.msra.mxu0 %v2949
      %3001 = vmatprep.subr.bf16.mxu0 0
      %3002 = vmatpush1.bf16.msra.mxu0 %v2950
      %3003 = vmatprep.subr.bf16.mxu0 0
      %3004 = vmatpush1.bf16.msra.mxu0 %v2951
      %3005 = vmatprep.subr.bf16.mxu0 0
      %3006 = vmatpush1.bf16.msra.mxu0 %v2952
      %3007 = vmatprep.subr.bf16.mxu0 0
      %3008 = vmatpush1.bf16.msra.mxu0 %v2953
      %3009 = vmatprep.subr.bf16.mxu0 0
      %3010 = vmatpush1.bf16.msra.mxu0 %v2954
      %3011 = vmatprep.subr.bf16.mxu0 0
      %3012 = vmatpush1.bf16.msra.mxu0 %v2955
      %3013 = vmatprep.subr.bf16.mxu0 0
      %3014 = vmatpush1.bf16.msra.mxu0 %v2956
      %3015 = vmatprep.subr.bf16.mxu0 0
      %3016 = vmatpush1.bf16.msra.mxu0 %v2957
      %3017 = vmatprep.subr.bf16.mxu0 0
      %3018 = vmatpush1.bf16.msra.mxu0 %v2958
      %3019 = vmatprep.subr.bf16.mxu0 0
      %3020 = vmatpush1.bf16.msra.mxu0 %v2959
      %3021 = vmatprep.subr.bf16.mxu0 0
      %3022 = vmatpush1.bf16.msra.mxu0 %v2960
      %3023 = vmatprep.subr.bf16.mxu0 0
      %3024 = vmatpush1.bf16.msra.mxu0 %v2961
      %3025 = vmatprep.subr.bf16.mxu0 0
      %3026 = vmatpush1.bf16.msra.mxu0 %v2962
      %3027 = vmatprep.mubr.bf16.mxu0 %v2488
      %3028 = vmatmul.mubr.bf16.gmra.mrb[0].mxu0 %v2474
      %v3029 = vpop.f32.mrb[0].mxu0
      %v3030 = vadd.f32 %v2277, %v3029
      %v3031 = vpop.f32.mrb[0].mxu0
      %v3032 = vpop.f32.mrb[0].mxu0
      %v3033 = vadd.f32 %v2280, %v3032
      %v3034 = vpop.f32.mrb[0].mxu0
      %3035 = vmatprep.mubr.bf16.mxu0 %v2510
      %3036 = vmatmul.mubr.bf16.gmra.mrb[0].mxu0 %v2506
      %v3037 = vpop.f32.mrb[0].mxu0
      %v3038 = vadd.f32 %v2285, %v3037
      %v3039 = vpop.f32.mrb[0].mxu0
      %v3040 = vpop.f32.mrb[0].mxu0
      %v3041 = vadd.f32 %v2288, %v3040
      %v3042 = vpop.f32.mrb[0].mxu0
      %3043 = vmatprep.mubr.bf16.mxu0 %v2522
      %3044 = vmatmul.mubr.bf16.gmra.mrb[0].mxu0 %v2518
      %v3045 = vpop.f32.mrb[0].mxu0
      %v3046 = vadd.f32 %v2293, %v3045
      %v3047 = vpop.f32.mrb[0].mxu0
      %v3048 = vpop.f32.mrb[0].mxu0
      %v3049 = vadd.f32 %v2296, %v3048
      %v3050 = vpop.f32.mrb[0].mxu0
      %3051 = vmatprep.mubr.bf16.mxu0 %v2534
      %3052 = vmatmul.mubr.bf16.gmra.mrb[0].mxu0 %v2530
      %v3053 = vpop.f32.mrb[0].mxu0
      %v3054 = vadd.f32 %v2301, %v3053
      %v3055 = vpop.f32.mrb[0].mxu0
      %v3056 = vpop.f32.mrb[0].mxu0
      %v3057 = vadd.f32 %v2304, %v3056
      %v3058 = vpop.f32.mrb[0].mxu0
      %3059 = vmatprep.mubr.bf16.mxu0 %v2546
      %3060 = vmatmul.mubr.bf16.gmra.mrb[0].mxu0 %v2542
      %v3061 = vpop.f32.mrb[0].mxu0
      %v3062 = vadd.f32 %v2309, %v3061
      %v3063 = vpop.f32.mrb[0].mxu0
      %v3064 = vpop.f32.mrb[0].mxu0
      %v3065 = vadd.f32 %v2312, %v3064
      %v3066 = vpop.f32.mrb[0].mxu0
      %3067 = vmatprep.mubr.bf16.mxu0 %v2558
      %3068 = vmatmul.mubr.bf16.gmra.mrb[0].mxu0 %v2554
      %v3069 = vpop.f32.mrb[0].mxu0
      %v3070 = vadd.f32 %v2317, %v3069
      %v3071 = vpop.f32.mrb[0].mxu0
      %v3072 = vpop.f32.mrb[0].mxu0
      %v3073 = vadd.f32 %v2320, %v3072
      %v3074 = vpop.f32.mrb[0].mxu0
      %3075 = vmatprep.mubr.bf16.mxu0 %v2570
      %3076 = vmatmul.mubr.bf16.gmra.mrb[0].mxu0 %v2566
      %v3077 = vpop.f32.mrb[0].mxu0
      %v3078 = vadd.f32 %v2325, %v3077
      %v3079 = vpop.f32.mrb[0].mxu0
      %v3080 = vpop.f32.mrb[0].mxu0
      %v3081 = vadd.f32 %v2328, %v3080
      %v3082 = vpop.f32.mrb[0].mxu0
      %3083 = vmatprep.mubr.bf16.mxu0 %v2582
      %3084 = vmatmul.mubr.bf16.gmra.mrb[0].mxu0 %v2578
      %v3085 = vpop.f32.mrb[0].mxu0
      %v3086 = vadd.f32 %v2333, %v3085
      %v3087 = vpop.f32.mrb[0].mxu0
      %v3088 = vpop.f32.mrb[0].mxu0
      %v3089 = vadd.f32 %v2336, %v3088
      %v3090 = vpop.f32.mrb[0].mxu0
      %3091 = vmatprep.mubr.bf16.mxu0 %v2594
      %3092 = vmatmul.mubr.bf16.gmra.mrb[0].mxu0 %v2590
      %v3093 = vpop.f32.mrb[0].mxu0
      %v3094 = vadd.f32 %v2341, %v3093
      %v3095 = vpop.f32.mrb[0].mxu0
      %v3096 = vpop.f32.mrb[0].mxu0
      %v3097 = vadd.f32 %v2344, %v3096
      %v3098 = vpop.f32.mrb[0].mxu0
      %3099 = vmatprep.mubr.bf16.mxu0 %v2606
      %3100 = vmatmul.mubr.bf16.gmra.mrb[0].mxu0 %v2602
      %v3101 = vpop.f32.mrb[0].mxu0
      %v3102 = vadd.f32 %v2349, %v3101
      %v3103 = vpop.f32.mrb[0].mxu0
      %v3104 = vpop.f32.mrb[0].mxu0
      %v3105 = vadd.f32 %v2352, %v3104
      %v3106 = vpop.f32.mrb[0].mxu0
      %3107 = vmatprep.mubr.bf16.mxu0 %v2618
      %3108 = vmatmul.mubr.bf16.gmra.mrb[0].mxu0 %v2614
      %v3109 = vpop.f32.mrb[0].mxu0
      %v3110 = vadd.f32 %v2357, %v3109
      %v3111 = vpop.f32.mrb[0].mxu0
      %v3112 = vpop.f32.mrb[0].mxu0
      %v3113 = vadd.f32 %v2360, %v3112
      %v3114 = vpop.f32.mrb[0].mxu0
      %3115 = vmatprep.mubr.bf16.mxu0 %v2630
      %3116 = vmatmul.mubr.bf16.gmra.mrb[0].mxu0 %v2626
      %v3117 = vpop.f32.mrb[0].mxu0
      %v3118 = vadd.f32 %v2365, %v3117
      %v3119 = vpop.f32.mrb[0].mxu0
      %v3120 = vpop.f32.mrb[0].mxu0
      %v3121 = vadd.f32 %v2368, %v3120
      %v3122 = vpop.f32.mrb[0].mxu0
      %3123 = vmatprep.mubr.bf16.mxu0 %v2642
      %3124 = vmatmul.mubr.bf16.gmra.mrb[0].mxu0 %v2638
      %v3125 = vpop.f32.mrb[0].mxu0
      %v3126 = vadd.f32 %v2373, %v3125
      %v3127 = vpop.f32.mrb[0].mxu0
      %v3128 = vpop.f32.mrb[0].mxu0
      %v3129 = vadd.f32 %v2376, %v3128
      %v3130 = vpop.f32.mrb[0].mxu0
      %3131 = vmatprep.mubr.bf16.mxu0 %v2654
      %3132 = vmatmul.mubr.bf16.gmra.mrb[0].mxu0 %v2650
      %v3133 = vpop.f32.mrb[0].mxu0
      %v3134 = vadd.f32 %v2381, %v3133
      %v3135 = vpop.f32.mrb[0].mxu0
      %v3136 = vpop.f32.mrb[0].mxu0
      %v3137 = vadd.f32 %v2384, %v3136
      %v3138 = vpop.f32.mrb[0].mxu0
      %3139 = vmatprep.mubr.bf16.mxu0 %v2666
      %3140 = vmatmul.mubr.bf16.gmra.mrb[0].mxu0 %v2662
      %v3141 = vpop.f32.mrb[0].mxu0
      %v3142 = vadd.f32 %v2389, %v3141
      %v3143 = vpop.f32.mrb[0].mxu0
      %v3144 = vpop.f32.mrb[0].mxu0
      %v3145 = vadd.f32 %v2392, %v3144
      %v3146 = vpop.f32.mrb[0].mxu0
      %3147 = vmatprep.mubr.bf16.mxu0 %v2678
      %3148 = vmatmul.mubr.bf16.gmra.mrb[0].mxu0 %v2674
      %v3149 = vpop.f32.mrb[0].mxu0
      %v3150 = vadd.f32 %v2397, %v3149
      %v3151 = vpop.f32.mrb[0].mxu0
      %v3152 = vpop.f32.mrb[0].mxu0
      %v3153 = vadd.f32 %v2400, %v3152
      %v3154 = vpop.f32.mrb[0].mxu0
      %3155 = vmatprep.mubr.bf16.mxu0 %v2690
      %3156 = vmatmul.mubr.bf16.gmra.mrb[0].mxu0 %v2686
      %v3157 = vpop.f32.mrb[0].mxu0
      %v3158 = vadd.f32 %v2405, %v3157
      %v3159 = vpop.f32.mrb[0].mxu0
      %v3160 = vpop.f32.mrb[0].mxu0
      %v3161 = vadd.f32 %v2408, %v3160
      %v3162 = vpop.f32.mrb[0].mxu0
      %3163 = vmatprep.mubr.bf16.mxu0 %v2702
      %3164 = vmatmul.mubr.bf16.gmra.mrb[0].mxu0 %v2698
      %v3165 = vpop.f32.mrb[0].mxu0
      %v3166 = vadd.f32 %v2413, %v3165
      %v3167 = vpop.f32.mrb[0].mxu0
      %v3168 = vpop.f32.mrb[0].mxu0
      %v3169 = vadd.f32 %v2416, %v3168
      %v3170 = vpop.f32.mrb[0].mxu0
      %3171 = vmatprep.mubr.bf16.mxu0 %v2714
      %3172 = vmatmul.mubr.bf16.gmra.mrb[0].mxu0 %v2710
      %v3173 = vpop.f32.mrb[0].mxu0
      %v3174 = vadd.f32 %v2421, %v3173
      %v3175 = vpop.f32.mrb[0].mxu0
      %v3176 = vpop.f32.mrb[0].mxu0
      %v3177 = vadd.f32 %v2424, %v3176
      %v3178 = vpop.f32.mrb[0].mxu0
      %3179 = vmatprep.mubr.bf16.mxu0 %v2726
      %3180 = vmatmul.mubr.bf16.gmra.mrb[0].mxu0 %v2722
      %v3181 = vpop.f32.mrb[0].mxu0
      %v3182 = vadd.f32 %v2429, %v3181
      %v3183 = vpop.f32.mrb[0].mxu0
      %v3184 = vpop.f32.mrb[0].mxu0
      %v3185 = vadd.f32 %v2432, %v3184
      %v3186 = vpop.f32.mrb[0].mxu0
      %3187 = vmatprep.mubr.bf16.mxu0 %v2738
      %3188 = vmatmul.mubr.bf16.gmra.mrb[0].mxu0 %v2734
      %v3189 = vpop.f32.mrb[0].mxu0
      %v3190 = vadd.f32 %v2437, %v3189
      %v3191 = vpop.f32.mrb[0].mxu0
      %v3192 = vpop.f32.mrb[0].mxu0
      %v3193 = vadd.f32 %v2440, %v3192
      %v3194 = vpop.f32.mrb[0].mxu0
      %3195 = vmatprep.mubr.bf16.mxu0 %v2750
      %3196 = vmatmul.mubr.bf16.gmra.mrb[0].mxu0 %v2746
      %v3197 = vpop.f32.mrb[0].mxu0
      %v3198 = vadd.f32 %v2445, %v3197
      %v3199 = vpop.f32.mrb[0].mxu0
      %v3200 = vpop.f32.mrb[0].mxu0
      %v3201 = vadd.f32 %v2448, %v3200
      %v3202 = vpop.f32.mrb[0].mxu0
      %3203 = vmatprep.mubr.bf16.mxu0 %v2762
      %3204 = vmatmul.mubr.bf16.gmra.mrb[0].mxu0 %v2758
      %v3205 = vpop.f32.mrb[0].mxu0
      %v3206 = vadd.f32 %v2453, %v3205
      %v3207 = vpop.f32.mrb[0].mxu0
      %v3208 = vpop.f32.mrb[0].mxu0
      %v3209 = vadd.f32 %v2456, %v3208
      %v3210 = vpop.f32.mrb[0].mxu0
      %3211 = vmatprep.mubr.bf16.mxu0 %v2774
      %3212 = vmatmul.mubr.bf16.gmra.mrb[0].mxu0 %v2770
      %v3213 = vpop.f32.mrb[0].mxu0
      %v3214 = vadd.f32 %v2461, %v3213
      %v3215 = vpop.f32.mrb[0].mxu0
      %v3216 = vpop.f32.mrb[0].mxu0
      %v3217 = vadd.f32 %v2464, %v3216
      %v3218 = vpop.f32.mrb[0].mxu0
      %3219 = vdwg.mxu0
      %3220 = vmatprep.subr.bf16.mxu0 0
      %3221 = vmatpush1.bf16.msra.mxu0 %v2963
      %3222 = vmatprep.subr.bf16.mxu0 0
      %3223 = vmatpush1.bf16.msra.mxu0 %v2964
      %3224 = vmatprep.subr.bf16.mxu0 0
      %3225 = vmatpush1.bf16.msra.mxu0 %v2965
      %3226 = vmatprep.subr.bf16.mxu0 0
      %3227 = vmatpush1.bf16.msra.mxu0 %v2966
      %3228 = vmatprep.subr.bf16.mxu0 0
      %3229 = vmatpush1.bf16.msra.mxu0 %v2967
      %3230 = vmatprep.subr.bf16.mxu0 0
      %3231 = vmatpush1.bf16.msra.mxu0 %v2968
      %3232 = vmatprep.subr.bf16.mxu0 0
      %3233 = vmatpush1.bf16.msra.mxu0 %v2969
      %3234 = vmatprep.subr.bf16.mxu0 0
      %3235 = vmatpush1.bf16.msra.mxu0 %v2970
      %3236 = vmatprep.subr.bf16.mxu0 0
      %3237 = vmatpush1.bf16.msra.mxu0 0
      %3238 = vmatprep.subr.bf16.mxu0 0
      %3239 = vmatpush1.bf16.msra.mxu0 0
      %3240 = vmatprep.subr.bf16.mxu0 0
      %3241 = vmatpush1.bf16.msra.mxu0 0
      %3242 = vmatprep.subr.bf16.mxu0 0
      %3243 = vmatpush1.bf16.msra.mxu0 0
      %3244 = vmatprep.subr.bf16.mxu0 0
      %3245 = vmatpush1.bf16.msra.mxu0 0
      %3246 = vmatprep.subr.bf16.mxu0 0
      %3247 = vmatpush1.bf16.msra.mxu0 0
      %3248 = vmatprep.subr.bf16.mxu0 0
      %3249 = vmatpush1.bf16.msra.mxu0 0
      %3250 = vmatprep.subr.bf16.mxu0 0
      %3251 = vmatpush1.bf16.msra.mxu0 0
      %3252 = vmatprep.mubr.bf16.mxu0 0
      %3253 = vmatmul.mubr.bf16.gmra.mrb[0].mxu0 %v2502
      %v3254 = vpop.f32.mrb[0].mxu0
      %v3255 = vadd.f32 %v3030, %v3254
      %v3256 = vpop.f32.mrb[0].mxu0
      %v3257 = vpop.f32.mrb[0].mxu0
      %v3258 = vadd.f32 %v3033, %v3257
      %v3259 = vpop.f32.mrb[0].mxu0
      %3260 = vmatprep.mubr.bf16.mxu0 0
      %3261 = vmatmul.mubr.bf16.gmra.mrb[0].mxu0 %v2514
      %v3262 = vpop.f32.mrb[0].mxu0
      %v3263 = vadd.f32 %v3038, %v3262
      %v3264 = vpop.f32.mrb[0].mxu0
      %v3265 = vpop.f32.mrb[0].mxu0
      %v3266 = vadd.f32 %v3041, %v3265
      %v3267 = vpop.f32.mrb[0].mxu0
      %3268 = vmatprep.mubr.bf16.mxu0 0
      %3269 = vmatmul.mubr.bf16.gmra.mrb[0].mxu0 %v2526
      %v3270 = vpop.f32.mrb[0].mxu0
      %v3271 = vadd.f32 %v3046, %v3270
      %v3272 = vpop.f32.mrb[0].mxu0
      %v3273 = vpop.f32.mrb[0].mxu0
      %v3274 = vadd.f32 %v3049, %v3273
      %v3275 = vpop.f32.mrb[0].mxu0
      %3276 = vmatprep.mubr.bf16.mxu0 0
      %3277 = vmatmul.mubr.bf16.gmra.mrb[0].mxu0 %v2538
      %v3278 = vpop.f32.mrb[0].mxu0
      %v3279 = vadd.f32 %v3054, %v3278
      %v3280 = vpop.f32.mrb[0].mxu0
      %v3281 = vpop.f32.mrb[0].mxu0
      %v3282 = vadd.f32 %v3057, %v3281
      %v3283 = vpop.f32.mrb[0].mxu0
      %3284 = vmatprep.mubr.bf16.mxu0 0
      %3285 = vmatmul.mubr.bf16.gmra.mrb[0].mxu0 %v2550
      %v3286 = vpop.f32.mrb[0].mxu0
      %v3287 = vadd.f32 %v3062, %v3286
      %v3288 = vpop.f32.mrb[0].mxu0
      %v3289 = vpop.f32.mrb[0].mxu0
      %v3290 = vadd.f32 %v3065, %v3289
      %v3291 = vpop.f32.mrb[0].mxu0
      %3292 = vmatprep.mubr.bf16.mxu0 0
      %3293 = vmatmul.mubr.bf16.gmra.mrb[0].mxu0 %v2562
      %v3294 = vpop.f32.mrb[0].mxu0
      %v3295 = vadd.f32 %v3070, %v3294
      %v3296 = vpop.f32.mrb[0].mxu0
      %v3297 = vpop.f32.mrb[0].mxu0
      %v3298 = vadd.f32 %v3073, %v3297
      %v3299 = vpop.f32.mrb[0].mxu0
      %3300 = vmatprep.mubr.bf16.mxu0 0
      %3301 = vmatmul.mubr.bf16.gmra.mrb[0].mxu0 %v2574
      %v3302 = vpop.f32.mrb[0].mxu0
      %v3303 = vadd.f32 %v3078, %v3302
      %v3304 = vpop.f32.mrb[0].mxu0
      %v3305 = vpop.f32.mrb[0].mxu0
      %v3306 = vadd.f32 %v3081, %v3305
      %v3307 = vpop.f32.mrb[0].mxu0
      %3308 = vmatprep.mubr.bf16.mxu0 0
      %3309 = vmatmul.mubr.bf16.gmra.mrb[0].mxu0 %v2586
      %v3310 = vpop.f32.mrb[0].mxu0
      %v3311 = vadd.f32 %v3086, %v3310
      %v3312 = vpop.f32.mrb[0].mxu0
      %v3313 = vpop.f32.mrb[0].mxu0
      %v3314 = vadd.f32 %v3089, %v3313
      %v3315 = vpop.f32.mrb[0].mxu0
      %3316 = vmatprep.mubr.bf16.mxu0 0
      %3317 = vmatmul.mubr.bf16.gmra.mrb[0].mxu0 %v2598
      %v3318 = vpop.f32.mrb[0].mxu0
      %v3319 = vadd.f32 %v3094, %v3318
      %v3320 = vpop.f32.mrb[0].mxu0
      %v3321 = vpop.f32.mrb[0].mxu0
      %v3322 = vadd.f32 %v3097, %v3321
      %v3323 = vpop.f32.mrb[0].mxu0
      %3324 = vmatprep.mubr.bf16.mxu0 0
      %3325 = vmatmul.mubr.bf16.gmra.mrb[0].mxu0 %v2610
      %v3326 = vpop.f32.mrb[0].mxu0
      %v3327 = vadd.f32 %v3102, %v3326
      %v3328 = vpop.f32.mrb[0].mxu0
      %v3329 = vpop.f32.mrb[0].mxu0
      %v3330 = vadd.f32 %v3105, %v3329
      %v3331 = vpop.f32.mrb[0].mxu0
      %3332 = vmatprep.mubr.bf16.mxu0 0
      %3333 = vmatmul.mubr.bf16.gmra.mrb[0].mxu0 %v2622
      %v3334 = vpop.f32.mrb[0].mxu0
      %v3335 = vadd.f32 %v3110, %v3334
      %v3336 = vpop.f32.mrb[0].mxu0
      %v3337 = vpop.f32.mrb[0].mxu0
      %v3338 = vadd.f32 %v3113, %v3337
      %v3339 = vpop.f32.mrb[0].mxu0
      %3340 = vmatprep.mubr.bf16.mxu0 0
      %3341 = vmatmul.mubr.bf16.gmra.mrb[0].mxu0 %v2634
      %v3342 = vpop.f32.mrb[0].mxu0
      %v3343 = vadd.f32 %v3118, %v3342
      %v3344 = vpop.f32.mrb[0].mxu0
      %v3345 = vpop.f32.mrb[0].mxu0
      %v3346 = vadd.f32 %v3121, %v3345
      %v3347 = vpop.f32.mrb[0].mxu0
      %3348 = vmatprep.mubr.bf16.mxu0 0
      %3349 = vmatmul.mubr.bf16.gmra.mrb[0].mxu0 %v2646
      %v3350 = vpop.f32.mrb[0].mxu0
      %v3351 = vadd.f32 %v3126, %v3350
      %v3352 = vpop.f32.mrb[0].mxu0
      %v3353 = vpop.f32.mrb[0].mxu0
      %v3354 = vadd.f32 %v3129, %v3353
      %v3355 = vpop.f32.mrb[0].mxu0
      %3356 = vmatprep.mubr.bf16.mxu0 0
      %3357 = vmatmul.mubr.bf16.gmra.mrb[0].mxu0 %v2658
      %v3358 = vpop.f32.mrb[0].mxu0
      %v3359 = vadd.f32 %v3134, %v3358
      %v3360 = vpop.f32.mrb[0].mxu0
      %v3361 = vpop.f32.mrb[0].mxu0
      %v3362 = vadd.f32 %v3137, %v3361
      %v3363 = vpop.f32.mrb[0].mxu0
      %3364 = vmatprep.mubr.bf16.mxu0 0
      %3365 = vmatmul.mubr.bf16.gmra.mrb[0].mxu0 %v2670
      %v3366 = vpop.f32.mrb[0].mxu0
      %v3367 = vadd.f32 %v3142, %v3366
      %v3368 = vpop.f32.mrb[0].mxu0
      %v3369 = vpop.f32.mrb[0].mxu0
      %v3370 = vadd.f32 %v3145, %v3369
      %v3371 = vpop.f32.mrb[0].mxu0
      %3372 = vmatprep.mubr.bf16.mxu0 0
      %3373 = vmatmul.mubr.bf16.gmra.mrb[0].mxu0 %v2682
      %v3374 = vpop.f32.mrb[0].mxu0
      %v3375 = vadd.f32 %v3150, %v3374
      %v3376 = vpop.f32.mrb[0].mxu0
      %v3377 = vpop.f32.mrb[0].mxu0
      %v3378 = vadd.f32 %v3153, %v3377
      %v3379 = vpop.f32.mrb[0].mxu0
      %3380 = vmatprep.mubr.bf16.mxu0 0
      %3381 = vmatmul.mubr.bf16.gmra.mrb[0].mxu0 %v2694
      %v3382 = vpop.f32.mrb[0].mxu0
      %v3383 = vadd.f32 %v3158, %v3382
      %v3384 = vpop.f32.mrb[0].mxu0
      %v3385 = vpop.f32.mrb[0].mxu0
      %v3386 = vadd.f32 %v3161, %v3385
      %v3387 = vpop.f32.mrb[0].mxu0
      %3388 = vmatprep.mubr.bf16.mxu0 0
      %3389 = vmatmul.mubr.bf16.gmra.mrb[0].mxu0 %v2706
      %v3390 = vpop.f32.mrb[0].mxu0
      %v3391 = vadd.f32 %v3166, %v3390
      %v3392 = vpop.f32.mrb[0].mxu0
      %v3393 = vpop.f32.mrb[0].mxu0
      %v3394 = vadd.f32 %v3169, %v3393
      %v3395 = vpop.f32.mrb[0].mxu0
      %3396 = vmatprep.mubr.bf16.mxu0 0
      %3397 = vmatmul.mubr.bf16.gmra.mrb[0].mxu0 %v2718
      %v3398 = vpop.f32.mrb[0].mxu0
      %v3399 = vadd.f32 %v3174, %v3398
      %v3400 = vpop.f32.mrb[0].mxu0
      %v3401 = vpop.f32.mrb[0].mxu0
      %v3402 = vadd.f32 %v3177, %v3401
      %v3403 = vpop.f32.mrb[0].mxu0
      %3404 = vmatprep.mubr.bf16.mxu0 0
      %3405 = vmatmul.mubr.bf16.gmra.mrb[0].mxu0 %v2730
      %v3406 = vpop.f32.mrb[0].mxu0
      %v3407 = vadd.f32 %v3182, %v3406
      %v3408 = vpop.f32.mrb[0].mxu0
      %v3409 = vpop.f32.mrb[0].mxu0
      %v3410 = vadd.f32 %v3185, %v3409
      %v3411 = vpop.f32.mrb[0].mxu0
      %3412 = vmatprep.mubr.bf16.mxu0 0
      %3413 = vmatmul.mubr.bf16.gmra.mrb[0].mxu0 %v2742
      %v3414 = vpop.f32.mrb[0].mxu0
      %v3415 = vadd.f32 %v3190, %v3414
      %v3416 = vpop.f32.mrb[0].mxu0
      %v3417 = vpop.f32.mrb[0].mxu0
      %v3418 = vadd.f32 %v3193, %v3417
      %v3419 = vpop.f32.mrb[0].mxu0
      %3420 = vmatprep.mubr.bf16.mxu0 0
      %3421 = vmatmul.mubr.bf16.gmra.mrb[0].mxu0 %v2754
      %v3422 = vpop.f32.mrb[0].mxu0
      %v3423 = vadd.f32 %v3198, %v3422
      %v3424 = vpop.f32.mrb[0].mxu0
      %v3425 = vpop.f32.mrb[0].mxu0
      %v3426 = vadd.f32 %v3201, %v3425
      %v3427 = vpop.f32.mrb[0].mxu0
      %3428 = vmatprep.mubr.bf16.mxu0 0
      %3429 = vmatmul.mubr.bf16.gmra.mrb[0].mxu0 %v2766
      %v3430 = vpop.f32.mrb[0].mxu0
      %v3431 = vadd.f32 %v3206, %v3430
      %v3432 = vpop.f32.mrb[0].mxu0
      %v3433 = vpop.f32.mrb[0].mxu0
      %v3434 = vadd.f32 %v3209, %v3433
      %v3435 = vpop.f32.mrb[0].mxu0
      %3436 = vmatprep.mubr.bf16.mxu0 0
      %3437 = vmatmul.mubr.bf16.gmra.mrb[0].mxu0 %v2778
      %v3438 = vpop.f32.mrb[0].mxu0
      %v3439 = vadd.f32 %v3214, %v3438
      %v3440 = vpop.f32.mrb[0].mxu0
      %v3441 = vpop.f32.mrb[0].mxu0
      %v3442 = vadd.f32 %v3217, %v3441
      %v3443 = vpop.f32.mrb[0].mxu0
      %3444 = vdwg.mxu0
      %s3445 = scalar_lea.vmem %s3, 384
      %v3446 = vld [vmem:[%s3445] sm:$0xf]
      %v3447 = vld [vmem:[%s3445 + $0x4] sm:$0xf]
      %v3448 = vld [vmem:[%s3445 + $0x8] sm:$0xf]
      %v3449 = vld [vmem:[%s3445 + $0xc] sm:$0xf]
      %v3450 = vld [vmem:[%s3445 + $0x10] sm:$0xf]
      %v3451 = vld [vmem:[%s3445 + $0x14] sm:$0xf]
      %v3452 = vld [vmem:[%s3445 + $0x18] sm:$0xf]
      %v3453 = vld [vmem:[%s3445 + $0x1c] sm:$0xf]
      %v3454 = vld [vmem:[%s3445 + $0x20] sm:$0xf]
      %v3455 = vld [vmem:[%s3445 + $0x24] sm:$0xf]
      %v3456 = vld [vmem:[%s3445 + $0x28] sm:$0xf]
      %v3457 = vld [vmem:[%s3445 + $0x2c] sm:$0xf]
      %v3458 = vld [vmem:[%s3445 + $0x30] sm:$0xf]
      %v3459 = vld [vmem:[%s3445 + $0x34] sm:$0xf]
      %v3460 = vld [vmem:[%s3445 + $0x38] sm:$0xf]
      %v3461 = vld [vmem:[%s3445 + $0x3c] sm:$0xf]
      %v3462 = vld [vmem:[%s3445 + $0x40] sm:$0xf]
      %v3463 = vld [vmem:[%s3445 + $0x44] sm:$0xf]
      %v3464 = vld [vmem:[%s3445 + $0x48] sm:$0xf]
      %v3465 = vld [vmem:[%s3445 + $0x4c] sm:$0xf]
      %v3466 = vld [vmem:[%s3445 + $0x50] sm:$0xf]
      %v3467 = vld [vmem:[%s3445 + $0x54] sm:$0xf]
      %v3468 = vld [vmem:[%s3445 + $0x58] sm:$0xf]
      %v3469 = vld [vmem:[%s3445 + $0x5c] sm:$0xf]
      %v3470 = vld [vmem:[%s3445 + $0x60] sm:$0xf]
      %v3471 = vld [vmem:[%s3445 + $0x64] sm:$0xf]
      %v3472 = vld [vmem:[%s3445 + $0x68] sm:$0xf]
      %v3473 = vld [vmem:[%s3445 + $0x6c] sm:$0xf]
      %v3474 = vld [vmem:[%s3445 + $0x70] sm:$0xf]
      %v3475 = vld [vmem:[%s3445 + $0x74] sm:$0xf]
      %v3476 = vld [vmem:[%s3445 + $0x78] sm:$0xf]
      %v3477 = vld [vmem:[%s3445 + $0x7c] sm:$0xf]
      %v3478 = vld [vmem:[%s3445 + $0x80] sm:$0xf]
      %v3479 = vld [vmem:[%s3445 + $0x84] sm:$0xf]
      %v3480 = vld [vmem:[%s3445 + $0x88] sm:$0xf]
      %v3481 = vld [vmem:[%s3445 + $0x8c] sm:$0xf]
      %v3482 = vld [vmem:[%s3445 + $0x90] sm:$0xf]
      %v3483 = vld [vmem:[%s3445 + $0x94] sm:$0xf]
      %v3484 = vld [vmem:[%s3445 + $0x98] sm:$0xf]
      %v3485 = vld [vmem:[%s3445 + $0x9c] sm:$0xf]
      %v3486 = vld [vmem:[%s3445 + $0xa0] sm:$0xf]
      %v3487 = vld [vmem:[%s3445 + $0xa4] sm:$0xf]
      %v3488 = vld [vmem:[%s3445 + $0xa8] sm:$0xf]
      %v3489 = vld [vmem:[%s3445 + $0xac] sm:$0xf]
      %v3490 = vld [vmem:[%s3445 + $0xb0] sm:$0xf]
      %v3491 = vld [vmem:[%s3445 + $0xb4] sm:$0xf]
      %v3492 = vld [vmem:[%s3445 + $0xb8] sm:$0xf]
      %v3493 = vld [vmem:[%s3445 + $0xbc] sm:$0xf]
      %v3494 = vrot.slane %v1161, 3
      %v3495 = vrot.slane %v1157, 4
      %v3496 = vor.u32 %v3494, %v3495
      %v3497 = vsel %vm2467, %v2769, %v3496
      %v3498 = vrot.slane %v1786, 3
      %v3499 = vrot.slane %v1789, 4
      %v3500 = vor.u32 %v3498, %v3499
      %v3501 = vsel %vm2467, %v2773, %v3500
      %v3502 = vrot.slane %v1794, 3
      %v3503 = vrot.slane %v1797, 4
      %v3504 = vor.u32 %v3502, %v3503
      %v3505 = vsel %vm2467, %v2777, %v3504
      %v3506 = vrot.slane %v1169, 3
      %v3507 = vrot.slane %v1165, 4
      %v3508 = vor.u32 %v3506, %v3507
      %v3509 = vsel %vm2467, %v3496, %v3508
      %v3511 = vshrl.u32 %v1175, 16
      %v3513 = vrot.slane %v3511, 3
      %v3514 = vshll.u32 %v1175, 16
      %v3516 = vrot.slane %v3514, 4
      %v3517 = vor.u32 %v3513, %v3516
      %v3518 = vsel %vm2467, %v3500, %v3517
      %v3520 = vshrl.u32 %v1237, 16
      %v3522 = vrot.slane %v3520, 3
      %v3523 = vshll.u32 %v1237, 16
      %v3525 = vrot.slane %v3523, 4
      %v3526 = vor.u32 %v3522, %v3525
      %v3527 = vsel %vm2467, %v3504, %v3526
      %v3528 = vrot.slane %v1176, 3
      %v3529 = vrot.slane %v1172, 4
      %v3530 = vor.u32 %v3528, %v3529
      %v3531 = vsel %vm2467, %v3508, %v3530
      %v3533 = vshrl.u32 %v1178, 16
      %v3535 = vrot.slane %v3533, 3
      %v3536 = vshll.u32 %v1178, 16
      %v3538 = vrot.slane %v3536, 4
      %v3539 = vor.u32 %v3535, %v3538
      %v3540 = vsel %vm2467, %v3517, %v3539
      %v3542 = vshrl.u32 %v1236, 16
      %v3544 = vrot.slane %v3542, 3
      %v3545 = vshll.u32 %v1236, 16
      %v3547 = vrot.slane %v3545, 4
      %v3548 = vor.u32 %v3544, %v3547
      %v3549 = vsel %vm2467, %v3526, %v3548
      %v3607 = vunpack.c.l.b16 %v3446
      %v3608 = vunpack.c.l.b16 %v3447
      %v3609 = vunpack.c.l.b16 %v3448
      %v3610 = vunpack.c.l.b16 %v3449
      %v3611 = vunpack.c.l.b16 %v3450
      %v3612 = vunpack.c.l.b16 %v3451
      %v3613 = vunpack.c.l.b16 %v3452
      %v3614 = vunpack.c.l.b16 %v3453
      %v3615 = vunpack.c.l.b16 %v3454
      %v3616 = vunpack.c.l.b16 %v3455
      %v3617 = vunpack.c.l.b16 %v3456
      %v3618 = vunpack.c.l.b16 %v3457
      %v3619 = vunpack.c.l.b16 %v3458
      %v3620 = vunpack.c.l.b16 %v3459
      %v3621 = vunpack.c.l.b16 %v3460
      %v3622 = vunpack.c.l.b16 %v3461
      %v3623 = vunpack.c.l.b16 %v3462
      %v3624 = vunpack.c.l.b16 %v3463
      %v3625 = vunpack.c.l.b16 %v3464
      %v3626 = vunpack.c.l.b16 %v3465
      %v3627 = vunpack.c.l.b16 %v3466
      %v3628 = vunpack.c.l.b16 %v3467
      %v3629 = vunpack.c.l.b16 %v3468
      %v3630 = vunpack.c.l.b16 %v3469
      %v3631 = vunpack.c.l.b16 %v3470
      %v3632 = vunpack.c.l.b16 %v3471
      %v3633 = vunpack.c.l.b16 %v3472
      %v3634 = vunpack.c.l.b16 %v3473
      %v3635 = vunpack.c.l.b16 %v3474
      %v3636 = vunpack.c.l.b16 %v3475
      %v3637 = vunpack.c.l.b16 %v3476
      %v3638 = vunpack.c.l.b16 %v3477
      %v3639 = vunpack.c.l.b16 %v3478
      %v3640 = vunpack.c.l.b16 %v3479
      %v3641 = vunpack.c.l.b16 %v3480
      %v3642 = vunpack.c.l.b16 %v3481
      %v3643 = vunpack.c.l.b16 %v3482
      %v3644 = vunpack.c.l.b16 %v3483
      %v3645 = vunpack.c.l.b16 %v3484
      %v3646 = vunpack.c.l.b16 %v3485
      %v3647 = vunpack.c.l.b16 %v3486
      %v3648 = vunpack.c.l.b16 %v3487
      %v3649 = vunpack.c.l.b16 %v3488
      %v3650 = vunpack.c.l.b16 %v3489
      %v3651 = vunpack.c.l.b16 %v3490
      %v3652 = vunpack.c.l.b16 %v3491
      %v3653 = vunpack.c.l.b16 %v3492
      %v3654 = vunpack.c.l.b16 %v3493
      %v3655 = vpack.c.b16 %v3608, %v3607
      %v3656 = vpack.c.b16 %v3610, %v3609
      %v3657 = vpack.c.b16 %v3612, %v3611
      %v3658 = vpack.c.b16 %v3614, %v3613
      %v3659 = vpack.c.b16 %v3616, %v3615
      %v3660 = vpack.c.b16 %v3618, %v3617
      %v3661 = vpack.c.b16 %v3620, %v3619
      %v3662 = vpack.c.b16 %v3622, %v3621
      %v3663 = vpack.c.b16 %v3624, %v3623
      %v3664 = vpack.c.b16 %v3626, %v3625
      %v3665 = vpack.c.b16 %v3628, %v3627
      %v3666 = vpack.c.b16 %v3630, %v3629
      %v3667 = vpack.c.b16 %v3632, %v3631
      %v3668 = vpack.c.b16 %v3634, %v3633
      %v3669 = vpack.c.b16 %v3636, %v3635
      %v3670 = vpack.c.b16 %v3638, %v3637
      %v3671 = vpack.c.b16 %v3640, %v3639
      %v3672 = vpack.c.b16 %v3642, %v3641
      %v3673 = vpack.c.b16 %v3644, %v3643
      %v3674 = vpack.c.b16 %v3646, %v3645
      %v3675 = vpack.c.b16 %v3648, %v3647
      %v3676 = vpack.c.b16 %v3650, %v3649
      %v3677 = vpack.c.b16 %v3652, %v3651
      %v3678 = vpack.c.b16 %v3654, %v3653
      %3703 = vmatprep.subr.bf16.mxu0 0
      %3704 = vmatpush1.bf16.msra.mxu0 %v3655
      %3705 = vmatprep.subr.bf16.mxu0 0
      %3706 = vmatpush1.bf16.msra.mxu0 %v3656
      %3707 = vmatprep.subr.bf16.mxu0 0
      %3708 = vmatpush1.bf16.msra.mxu0 %v3657
      %3709 = vmatprep.subr.bf16.mxu0 0
      %3710 = vmatpush1.bf16.msra.mxu0 %v3658
      %3711 = vmatprep.subr.bf16.mxu0 0
      %3712 = vmatpush1.bf16.msra.mxu0 %v3659
      %3713 = vmatprep.subr.bf16.mxu0 0
      %3714 = vmatpush1.bf16.msra.mxu0 %v3660
      %3715 = vmatprep.subr.bf16.mxu0 0
      %3716 = vmatpush1.bf16.msra.mxu0 %v3661
      %3717 = vmatprep.subr.bf16.mxu0 0
      %3718 = vmatpush1.bf16.msra.mxu0 %v3662
      %3719 = vmatprep.subr.bf16.mxu0 0
      %3720 = vmatpush1.bf16.msra.mxu0 %v3663
      %3721 = vmatprep.subr.bf16.mxu0 0
      %3722 = vmatpush1.bf16.msra.mxu0 %v3664
      %3723 = vmatprep.subr.bf16.mxu0 0
      %3724 = vmatpush1.bf16.msra.mxu0 %v3665
      %3725 = vmatprep.subr.bf16.mxu0 0
      %3726 = vmatpush1.bf16.msra.mxu0 %v3666
      %3727 = vmatprep.subr.bf16.mxu0 0
      %3728 = vmatpush1.bf16.msra.mxu0 %v3667
      %3729 = vmatprep.subr.bf16.mxu0 0
      %3730 = vmatpush1.bf16.msra.mxu0 %v3668
      %3731 = vmatprep.subr.bf16.mxu0 0
      %3732 = vmatpush1.bf16.msra.mxu0 %v3669
      %3733 = vmatprep.subr.bf16.mxu0 0
      %3734 = vmatpush1.bf16.msra.mxu0 %v3670
      %3735 = vmatprep.mubr.bf16.mxu0 %v2534
      %3736 = vmatmul.mubr.bf16.gmra.mrb[0].mxu0 %v2530
      %v3737 = vpop.f32.mrb[0].mxu0
      %v3738 = vadd.f32 0.0, %v3737
      %v3739 = vpop.f32.mrb[0].mxu0
      %v3740 = vpop.f32.mrb[0].mxu0
      %v3741 = vadd.f32 0.0, %v3740
      %v3742 = vpop.f32.mrb[0].mxu0
      %3743 = vmatprep.mubr.bf16.mxu0 %v2546
      %3744 = vmatmul.mubr.bf16.gmra.mrb[0].mxu0 %v2542
      %v3745 = vpop.f32.mrb[0].mxu0
      %v3746 = vadd.f32 0.0, %v3745
      %v3747 = vpop.f32.mrb[0].mxu0
      %v3748 = vpop.f32.mrb[0].mxu0
      %v3749 = vadd.f32 0.0, %v3748
      %v3750 = vpop.f32.mrb[0].mxu0
      %3751 = vmatprep.mubr.bf16.mxu0 %v2558
      %3752 = vmatmul.mubr.bf16.gmra.mrb[0].mxu0 %v2554
      %v3753 = vpop.f32.mrb[0].mxu0
      %v3754 = vadd.f32 0.0, %v3753
      %v3755 = vpop.f32.mrb[0].mxu0
      %v3756 = vpop.f32.mrb[0].mxu0
      %v3757 = vadd.f32 0.0, %v3756
      %v3758 = vpop.f32.mrb[0].mxu0
      %3759 = vmatprep.mubr.bf16.mxu0 %v2570
      %3760 = vmatmul.mubr.bf16.gmra.mrb[0].mxu0 %v2566
      %v3761 = vpop.f32.mrb[0].mxu0
      %v3762 = vadd.f32 0.0, %v3761
      %v3763 = vpop.f32.mrb[0].mxu0
      %v3764 = vpop.f32.mrb[0].mxu0
      %v3765 = vadd.f32 0.0, %v3764
      %v3766 = vpop.f32.mrb[0].mxu0
      %3767 = vmatprep.mubr.bf16.mxu0 %v2582
      %3768 = vmatmul.mubr.bf16.gmra.mrb[0].mxu0 %v2578
      %v3769 = vpop.f32.mrb[0].mxu0
      %v3770 = vadd.f32 0.0, %v3769
      %v3771 = vpop.f32.mrb[0].mxu0
      %v3772 = vpop.f32.mrb[0].mxu0
      %v3773 = vadd.f32 0.0, %v3772
      %v3774 = vpop.f32.mrb[0].mxu0
      %3775 = vmatprep.mubr.bf16.mxu0 %v2594
      %3776 = vmatmul.mubr.bf16.gmra.mrb[0].mxu0 %v2590
      %v3777 = vpop.f32.mrb[0].mxu0
      %v3778 = vadd.f32 0.0, %v3777
      %v3779 = vpop.f32.mrb[0].mxu0
      %v3780 = vpop.f32.mrb[0].mxu0
      %v3781 = vadd.f32 0.0, %v3780
      %v3782 = vpop.f32.mrb[0].mxu0
      %3783 = vmatprep.mubr.bf16.mxu0 %v2606
      %3784 = vmatmul.mubr.bf16.gmra.mrb[0].mxu0 %v2602
      %v3785 = vpop.f32.mrb[0].mxu0
      %v3786 = vadd.f32 0.0, %v3785
      %v3787 = vpop.f32.mrb[0].mxu0
      %v3788 = vpop.f32.mrb[0].mxu0
      %v3789 = vadd.f32 0.0, %v3788
      %v3790 = vpop.f32.mrb[0].mxu0
      %3791 = vmatprep.mubr.bf16.mxu0 %v2618
      %3792 = vmatmul.mubr.bf16.gmra.mrb[0].mxu0 %v2614
      %v3793 = vpop.f32.mrb[0].mxu0
      %v3794 = vadd.f32 0.0, %v3793
      %v3795 = vpop.f32.mrb[0].mxu0
      %v3796 = vpop.f32.mrb[0].mxu0
      %v3797 = vadd.f32 0.0, %v3796
      %v3798 = vpop.f32.mrb[0].mxu0
      %3799 = vmatprep.mubr.bf16.mxu0 %v2630
      %3800 = vmatmul.mubr.bf16.gmra.mrb[0].mxu0 %v2626
      %v3801 = vpop.f32.mrb[0].mxu0
      %v3802 = vadd.f32 0.0, %v3801
      %v3803 = vpop.f32.mrb[0].mxu0
      %v3804 = vpop.f32.mrb[0].mxu0
      %v3805 = vadd.f32 0.0, %v3804
      %v3806 = vpop.f32.mrb[0].mxu0
      %3807 = vmatprep.mubr.bf16.mxu0 %v2642
      %3808 = vmatmul.mubr.bf16.gmra.mrb[0].mxu0 %v2638
      %v3809 = vpop.f32.mrb[0].mxu0
      %v3810 = vadd.f32 0.0, %v3809
      %v3811 = vpop.f32.mrb[0].mxu0
      %v3812 = vpop.f32.mrb[0].mxu0
      %v3813 = vadd.f32 0.0, %v3812
      %v3814 = vpop.f32.mrb[0].mxu0
      %3815 = vmatprep.mubr.bf16.mxu0 %v2654
      %3816 = vmatmul.mubr.bf16.gmra.mrb[0].mxu0 %v2650
      %v3817 = vpop.f32.mrb[0].mxu0
      %v3818 = vadd.f32 0.0, %v3817
      %v3819 = vpop.f32.mrb[0].mxu0
      %v3820 = vpop.f32.mrb[0].mxu0
      %v3821 = vadd.f32 0.0, %v3820
      %v3822 = vpop.f32.mrb[0].mxu0
      %3823 = vmatprep.mubr.bf16.mxu0 %v2666
      %3824 = vmatmul.mubr.bf16.gmra.mrb[0].mxu0 %v2662
      %v3825 = vpop.f32.mrb[0].mxu0
      %v3826 = vadd.f32 0.0, %v3825
      %v3827 = vpop.f32.mrb[0].mxu0
      %v3828 = vpop.f32.mrb[0].mxu0
      %v3829 = vadd.f32 0.0, %v3828
      %v3830 = vpop.f32.mrb[0].mxu0
      %3831 = vmatprep.mubr.bf16.mxu0 %v2678
      %3832 = vmatmul.mubr.bf16.gmra.mrb[0].mxu0 %v2674
      %v3833 = vpop.f32.mrb[0].mxu0
      %v3834 = vadd.f32 0.0, %v3833
      %v3835 = vpop.f32.mrb[0].mxu0
      %v3836 = vpop.f32.mrb[0].mxu0
      %v3837 = vadd.f32 0.0, %v3836
      %v3838 = vpop.f32.mrb[0].mxu0
      %3839 = vmatprep.mubr.bf16.mxu0 %v2690
      %3840 = vmatmul.mubr.bf16.gmra.mrb[0].mxu0 %v2686
      %v3841 = vpop.f32.mrb[0].mxu0
      %v3842 = vadd.f32 0.0, %v3841
      %v3843 = vpop.f32.mrb[0].mxu0
      %v3844 = vpop.f32.mrb[0].mxu0
      %v3845 = vadd.f32 0.0, %v3844
      %v3846 = vpop.f32.mrb[0].mxu0
      %3847 = vmatprep.mubr.bf16.mxu0 %v2702
      %3848 = vmatmul.mubr.bf16.gmra.mrb[0].mxu0 %v2698
      %v3849 = vpop.f32.mrb[0].mxu0
      %v3850 = vadd.f32 0.0, %v3849
      %v3851 = vpop.f32.mrb[0].mxu0
      %v3852 = vpop.f32.mrb[0].mxu0
      %v3853 = vadd.f32 0.0, %v3852
      %v3854 = vpop.f32.mrb[0].mxu0
      %3855 = vmatprep.mubr.bf16.mxu0 %v2714
      %3856 = vmatmul.mubr.bf16.gmra.mrb[0].mxu0 %v2710
      %v3857 = vpop.f32.mrb[0].mxu0
      %v3858 = vadd.f32 0.0, %v3857
      %v3859 = vpop.f32.mrb[0].mxu0
      %v3860 = vpop.f32.mrb[0].mxu0
      %v3861 = vadd.f32 0.0, %v3860
      %v3862 = vpop.f32.mrb[0].mxu0
      %3863 = vmatprep.mubr.bf16.mxu0 %v2726
      %3864 = vmatmul.mubr.bf16.gmra.mrb[0].mxu0 %v2722
      %v3865 = vpop.f32.mrb[0].mxu0
      %v3866 = vadd.f32 0.0, %v3865
      %v3867 = vpop.f32.mrb[0].mxu0
      %v3868 = vpop.f32.mrb[0].mxu0
      %v3869 = vadd.f32 0.0, %v3868
      %v3870 = vpop.f32.mrb[0].mxu0
      %3871 = vmatprep.mubr.bf16.mxu0 %v2738
      %3872 = vmatmul.mubr.bf16.gmra.mrb[0].mxu0 %v2734
      %v3873 = vpop.f32.mrb[0].mxu0
      %v3874 = vadd.f32 0.0, %v3873
      %v3875 = vpop.f32.mrb[0].mxu0
      %v3876 = vpop.f32.mrb[0].mxu0
      %v3877 = vadd.f32 0.0, %v3876
      %v3878 = vpop.f32.mrb[0].mxu0
      %3879 = vmatprep.mubr.bf16.mxu0 %v2750
      %3880 = vmatmul.mubr.bf16.gmra.mrb[0].mxu0 %v2746
      %v3881 = vpop.f32.mrb[0].mxu0
      %v3882 = vadd.f32 0.0, %v3881
      %v3883 = vpop.f32.mrb[0].mxu0
      %v3884 = vpop.f32.mrb[0].mxu0
      %v3885 = vadd.f32 0.0, %v3884
      %v3886 = vpop.f32.mrb[0].mxu0
      %3887 = vmatprep.mubr.bf16.mxu0 %v2762
      %3888 = vmatmul.mubr.bf16.gmra.mrb[0].mxu0 %v2758
      %v3889 = vpop.f32.mrb[0].mxu0
      %v3890 = vadd.f32 0.0, %v3889
      %v3891 = vpop.f32.mrb[0].mxu0
      %v3892 = vpop.f32.mrb[0].mxu0
      %v3893 = vadd.f32 0.0, %v3892
      %v3894 = vpop.f32.mrb[0].mxu0
      %3895 = vmatprep.mubr.bf16.mxu0 %v2774
      %3896 = vmatmul.mubr.bf16.gmra.mrb[0].mxu0 %v2770
      %v3897 = vpop.f32.mrb[0].mxu0
      %v3898 = vadd.f32 0.0, %v3897
      %v3899 = vpop.f32.mrb[0].mxu0
      %v3900 = vpop.f32.mrb[0].mxu0
      %v3901 = vadd.f32 0.0, %v3900
      %v3902 = vpop.f32.mrb[0].mxu0
      %3903 = vmatprep.mubr.bf16.mxu0 %v3501
      %3904 = vmatmul.mubr.bf16.gmra.mrb[0].mxu0 %v3497
      %v3905 = vpop.f32.mrb[0].mxu0
      %v3906 = vadd.f32 0.0, %v3905
      %v3907 = vpop.f32.mrb[0].mxu0
      %v3908 = vpop.f32.mrb[0].mxu0
      %v3909 = vadd.f32 0.0, %v3908
      %v3910 = vpop.f32.mrb[0].mxu0
      %3911 = vmatprep.mubr.bf16.mxu0 %v3518
      %3912 = vmatmul.mubr.bf16.gmra.mrb[0].mxu0 %v3509
      %v3913 = vpop.f32.mrb[0].mxu0
      %v3914 = vadd.f32 0.0, %v3913
      %v3915 = vpop.f32.mrb[0].mxu0
      %v3916 = vpop.f32.mrb[0].mxu0
      %v3917 = vadd.f32 0.0, %v3916
      %v3918 = vpop.f32.mrb[0].mxu0
      %3919 = vmatprep.mubr.bf16.mxu0 %v3540
      %3920 = vmatmul.mubr.bf16.gmra.mrb[0].mxu0 %v3531
      %v3921 = vpop.f32.mrb[0].mxu0
      %v3922 = vadd.f32 0.0, %v3921
      %v3923 = vpop.f32.mrb[0].mxu0
      %v3924 = vpop.f32.mrb[0].mxu0
      %v3925 = vadd.f32 0.0, %v3924
      %v3926 = vpop.f32.mrb[0].mxu0
      %3927 = vdwg.mxu0
      %3928 = vmatprep.subr.bf16.mxu0 0
      %3929 = vmatpush1.bf16.msra.mxu0 %v3671
      %3930 = vmatprep.subr.bf16.mxu0 0
      %3931 = vmatpush1.bf16.msra.mxu0 %v3672
      %3932 = vmatprep.subr.bf16.mxu0 0
      %3933 = vmatpush1.bf16.msra.mxu0 %v3673
      %3934 = vmatprep.subr.bf16.mxu0 0
      %3935 = vmatpush1.bf16.msra.mxu0 %v3674
      %3936 = vmatprep.subr.bf16.mxu0 0
      %3937 = vmatpush1.bf16.msra.mxu0 %v3675
      %3938 = vmatprep.subr.bf16.mxu0 0
      %3939 = vmatpush1.bf16.msra.mxu0 %v3676
      %3940 = vmatprep.subr.bf16.mxu0 0
      %3941 = vmatpush1.bf16.msra.mxu0 %v3677
      %3942 = vmatprep.subr.bf16.mxu0 0
      %3943 = vmatpush1.bf16.msra.mxu0 %v3678
      %3944 = vmatprep.subr.bf16.mxu0 0
      %3945 = vmatpush1.bf16.msra.mxu0 0
      %3946 = vmatprep.subr.bf16.mxu0 0
      %3947 = vmatpush1.bf16.msra.mxu0 0
      %3948 = vmatprep.subr.bf16.mxu0 0
      %3949 = vmatpush1.bf16.msra.mxu0 0
      %3950 = vmatprep.subr.bf16.mxu0 0
      %3951 = vmatpush1.bf16.msra.mxu0 0
      %3952 = vmatprep.subr.bf16.mxu0 0
      %3953 = vmatpush1.bf16.msra.mxu0 0
      %3954 = vmatprep.subr.bf16.mxu0 0
      %3955 = vmatpush1.bf16.msra.mxu0 0
      %3956 = vmatprep.subr.bf16.mxu0 0
      %3957 = vmatpush1.bf16.msra.mxu0 0
      %3958 = vmatprep.subr.bf16.mxu0 0
      %3959 = vmatpush1.bf16.msra.mxu0 0
      %3960 = vmatprep.mubr.bf16.mxu0 0
      %3961 = vmatmul.mubr.bf16.gmra.mrb[0].mxu0 %v2538
      %v3962 = vpop.f32.mrb[0].mxu0
      %v3963 = vadd.f32 %v3738, %v3962
      %v3964 = vpop.f32.mrb[0].mxu0
      %v3965 = vpop.f32.mrb[0].mxu0
      %v3966 = vadd.f32 %v3741, %v3965
      %v3967 = vpop.f32.mrb[0].mxu0
      %3968 = vmatprep.mubr.bf16.mxu0 0
      %3969 = vmatmul.mubr.bf16.gmra.mrb[0].mxu0 %v2550
      %v3970 = vpop.f32.mrb[0].mxu0
      %v3971 = vadd.f32 %v3746, %v3970
      %v3972 = vpop.f32.mrb[0].mxu0
      %v3973 = vpop.f32.mrb[0].mxu0
      %v3974 = vadd.f32 %v3749, %v3973
      %v3975 = vpop.f32.mrb[0].mxu0
      %3976 = vmatprep.mubr.bf16.mxu0 0
      %3977 = vmatmul.mubr.bf16.gmra.mrb[0].mxu0 %v2562
      %v3978 = vpop.f32.mrb[0].mxu0
      %v3979 = vadd.f32 %v3754, %v3978
      %v3980 = vpop.f32.mrb[0].mxu0
      %v3981 = vpop.f32.mrb[0].mxu0
      %v3982 = vadd.f32 %v3757, %v3981
      %v3983 = vpop.f32.mrb[0].mxu0
      %3984 = vmatprep.mubr.bf16.mxu0 0
      %3985 = vmatmul.mubr.bf16.gmra.mrb[0].mxu0 %v2574
      %v3986 = vpop.f32.mrb[0].mxu0
      %v3987 = vadd.f32 %v3762, %v3986
      %v3988 = vpop.f32.mrb[0].mxu0
      %v3989 = vpop.f32.mrb[0].mxu0
      %v3990 = vadd.f32 %v3765, %v3989
      %v3991 = vpop.f32.mrb[0].mxu0
      %3992 = vmatprep.mubr.bf16.mxu0 0
      %3993 = vmatmul.mubr.bf16.gmra.mrb[0].mxu0 %v2586
      %v3994 = vpop.f32.mrb[0].mxu0
      %v3995 = vadd.f32 %v3770, %v3994
      %v3996 = vpop.f32.mrb[0].mxu0
      %v3997 = vpop.f32.mrb[0].mxu0
      %v3998 = vadd.f32 %v3773, %v3997
      %v3999 = vpop.f32.mrb[0].mxu0
      %4000 = vmatprep.mubr.bf16.mxu0 0
      %4001 = vmatmul.mubr.bf16.gmra.mrb[0].mxu0 %v2598
      %v4002 = vpop.f32.mrb[0].mxu0
      %v4003 = vadd.f32 %v3778, %v4002
      %v4004 = vpop.f32.mrb[0].mxu0
      %v4005 = vpop.f32.mrb[0].mxu0
      %v4006 = vadd.f32 %v3781, %v4005
      %v4007 = vpop.f32.mrb[0].mxu0
      %4008 = vmatprep.mubr.bf16.mxu0 0
      %4009 = vmatmul.mubr.bf16.gmra.mrb[0].mxu0 %v2610
      %v4010 = vpop.f32.mrb[0].mxu0
      %v4011 = vadd.f32 %v3786, %v4010
      %v4012 = vpop.f32.mrb[0].mxu0
      %v4013 = vpop.f32.mrb[0].mxu0
      %v4014 = vadd.f32 %v3789, %v4013
      %v4015 = vpop.f32.mrb[0].mxu0
      %4016 = vmatprep.mubr.bf16.mxu0 0
      %4017 = vmatmul.mubr.bf16.gmra.mrb[0].mxu0 %v2622
      %v4018 = vpop.f32.mrb[0].mxu0
      %v4019 = vadd.f32 %v3794, %v4018
      %v4020 = vpop.f32.mrb[0].mxu0
      %v4021 = vpop.f32.mrb[0].mxu0
      %v4022 = vadd.f32 %v3797, %v4021
      %v4023 = vpop.f32.mrb[0].mxu0
      %4024 = vmatprep.mubr.bf16.mxu0 0
      %4025 = vmatmul.mubr.bf16.gmra.mrb[0].mxu0 %v2634
      %v4026 = vpop.f32.mrb[0].mxu0
      %v4027 = vadd.f32 %v3802, %v4026
      %v4028 = vpop.f32.mrb[0].mxu0
      %v4029 = vpop.f32.mrb[0].mxu0
      %v4030 = vadd.f32 %v3805, %v4029
      %v4031 = vpop.f32.mrb[0].mxu0
      %4032 = vmatprep.mubr.bf16.mxu0 0
      %4033 = vmatmul.mubr.bf16.gmra.mrb[0].mxu0 %v2646
      %v4034 = vpop.f32.mrb[0].mxu0
      %v4035 = vadd.f32 %v3810, %v4034
      %v4036 = vpop.f32.mrb[0].mxu0
      %v4037 = vpop.f32.mrb[0].mxu0
      %v4038 = vadd.f32 %v3813, %v4037
      %v4039 = vpop.f32.mrb[0].mxu0
      %4040 = vmatprep.mubr.bf16.mxu0 0
      %4041 = vmatmul.mubr.bf16.gmra.mrb[0].mxu0 %v2658
      %v4042 = vpop.f32.mrb[0].mxu0
      %v4043 = vadd.f32 %v3818, %v4042
      %v4044 = vpop.f32.mrb[0].mxu0
      %v4045 = vpop.f32.mrb[0].mxu0
      %v4046 = vadd.f32 %v3821, %v4045
      %v4047 = vpop.f32.mrb[0].mxu0
      %4048 = vmatprep.mubr.bf16.mxu0 0
      %4049 = vmatmul.mubr.bf16.gmra.mrb[0].mxu0 %v2670
      %v4050 = vpop.f32.mrb[0].mxu0
      %v4051 = vadd.f32 %v3826, %v4050
      %v4052 = vpop.f32.mrb[0].mxu0
      %v4053 = vpop.f32.mrb[0].mxu0
      %v4054 = vadd.f32 %v3829, %v4053
      %v4055 = vpop.f32.mrb[0].mxu0
      %4056 = vmatprep.mubr.bf16.mxu0 0
      %4057 = vmatmul.mubr.bf16.gmra.mrb[0].mxu0 %v2682
      %v4058 = vpop.f32.mrb[0].mxu0
      %v4059 = vadd.f32 %v3834, %v4058
      %v4060 = vpop.f32.mrb[0].mxu0
      %v4061 = vpop.f32.mrb[0].mxu0
      %v4062 = vadd.f32 %v3837, %v4061
      %v4063 = vpop.f32.mrb[0].mxu0
      %4064 = vmatprep.mubr.bf16.mxu0 0
      %4065 = vmatmul.mubr.bf16.gmra.mrb[0].mxu0 %v2694
      %v4066 = vpop.f32.mrb[0].mxu0
      %v4067 = vadd.f32 %v3842, %v4066
      %v4068 = vpop.f32.mrb[0].mxu0
      %v4069 = vpop.f32.mrb[0].mxu0
      %v4070 = vadd.f32 %v3845, %v4069
      %v4071 = vpop.f32.mrb[0].mxu0
      %4072 = vmatprep.mubr.bf16.mxu0 0
      %4073 = vmatmul.mubr.bf16.gmra.mrb[0].mxu0 %v2706
      %v4074 = vpop.f32.mrb[0].mxu0
      %v4075 = vadd.f32 %v3850, %v4074
      %v4076 = vpop.f32.mrb[0].mxu0
      %v4077 = vpop.f32.mrb[0].mxu0
      %v4078 = vadd.f32 %v3853, %v4077
      %v4079 = vpop.f32.mrb[0].mxu0
      %4080 = vmatprep.mubr.bf16.mxu0 0
      %4081 = vmatmul.mubr.bf16.gmra.mrb[0].mxu0 %v2718
      %v4082 = vpop.f32.mrb[0].mxu0
      %v4083 = vadd.f32 %v3858, %v4082
      %v4084 = vpop.f32.mrb[0].mxu0
      %v4085 = vpop.f32.mrb[0].mxu0
      %v4086 = vadd.f32 %v3861, %v4085
      %v4087 = vpop.f32.mrb[0].mxu0
      %4088 = vmatprep.mubr.bf16.mxu0 0
      %4089 = vmatmul.mubr.bf16.gmra.mrb[0].mxu0 %v2730
      %v4090 = vpop.f32.mrb[0].mxu0
      %v4091 = vadd.f32 %v3866, %v4090
      %v4092 = vpop.f32.mrb[0].mxu0
      %v4093 = vpop.f32.mrb[0].mxu0
      %v4094 = vadd.f32 %v3869, %v4093
      %v4095 = vpop.f32.mrb[0].mxu0
      %4096 = vmatprep.mubr.bf16.mxu0 0
      %4097 = vmatmul.mubr.bf16.gmra.mrb[0].mxu0 %v2742
      %v4098 = vpop.f32.mrb[0].mxu0
      %v4099 = vadd.f32 %v3874, %v4098
      %v4100 = vpop.f32.mrb[0].mxu0
      %v4101 = vpop.f32.mrb[0].mxu0
      %v4102 = vadd.f32 %v3877, %v4101
      %v4103 = vpop.f32.mrb[0].mxu0
      %4104 = vmatprep.mubr.bf16.mxu0 0
      %4105 = vmatmul.mubr.bf16.gmra.mrb[0].mxu0 %v2754
      %v4106 = vpop.f32.mrb[0].mxu0
      %v4107 = vadd.f32 %v3882, %v4106
      %v4108 = vpop.f32.mrb[0].mxu0
      %v4109 = vpop.f32.mrb[0].mxu0
      %v4110 = vadd.f32 %v3885, %v4109
      %v4111 = vpop.f32.mrb[0].mxu0
      %4112 = vmatprep.mubr.bf16.mxu0 0
      %4113 = vmatmul.mubr.bf16.gmra.mrb[0].mxu0 %v2766
      %v4114 = vpop.f32.mrb[0].mxu0
      %v4115 = vadd.f32 %v3890, %v4114
      %v4116 = vpop.f32.mrb[0].mxu0
      %v4117 = vpop.f32.mrb[0].mxu0
      %v4118 = vadd.f32 %v3893, %v4117
      %v4119 = vpop.f32.mrb[0].mxu0
      %4120 = vmatprep.mubr.bf16.mxu0 0
      %4121 = vmatmul.mubr.bf16.gmra.mrb[0].mxu0 %v2778
      %v4122 = vpop.f32.mrb[0].mxu0
      %v4123 = vadd.f32 %v3898, %v4122
      %v4124 = vpop.f32.mrb[0].mxu0
      %v4125 = vpop.f32.mrb[0].mxu0
      %v4126 = vadd.f32 %v3901, %v4125
      %v4127 = vpop.f32.mrb[0].mxu0
      %4128 = vmatprep.mubr.bf16.mxu0 0
      %4129 = vmatmul.mubr.bf16.gmra.mrb[0].mxu0 %v3505
      %v4130 = vpop.f32.mrb[0].mxu0
      %v4131 = vadd.f32 %v3906, %v4130
      %v4132 = vpop.f32.mrb[0].mxu0
      %v4133 = vpop.f32.mrb[0].mxu0
      %v4134 = vadd.f32 %v3909, %v4133
      %v4135 = vpop.f32.mrb[0].mxu0
      %4136 = vmatprep.mubr.bf16.mxu0 0
      %4137 = vmatmul.mubr.bf16.gmra.mrb[0].mxu0 %v3527
      %v4138 = vpop.f32.mrb[0].mxu0
      %v4139 = vadd.f32 %v3914, %v4138
      %v4140 = vpop.f32.mrb[0].mxu0
      %v4141 = vpop.f32.mrb[0].mxu0
      %v4142 = vadd.f32 %v3917, %v4141
      %v4143 = vpop.f32.mrb[0].mxu0
      %4144 = vmatprep.mubr.bf16.mxu0 0
      %4145 = vmatmul.mubr.bf16.gmra.mrb[0].mxu0 %v3549
      %v4146 = vpop.f32.mrb[0].mxu0
      %v4147 = vadd.f32 %v3922, %v4146
      %v4148 = vpop.f32.mrb[0].mxu0
      %v4149 = vpop.f32.mrb[0].mxu0
      %v4150 = vadd.f32 %v3925, %v4149
      %v4151 = vpop.f32.mrb[0].mxu0
      %4152 = vdwg.mxu0
      %v4153 = vadd.f32 %v3255, %v3963
      %v4154 = vadd.f32 %v3258, %v3966
      %v4155 = vadd.f32 %v3263, %v3971
      %v4156 = vadd.f32 %v3266, %v3974
      %v4157 = vadd.f32 %v3271, %v3979
      %v4158 = vadd.f32 %v3274, %v3982
      %v4159 = vadd.f32 %v3279, %v3987
      %v4160 = vadd.f32 %v3282, %v3990
      %v4161 = vadd.f32 %v3287, %v3995
      %v4162 = vadd.f32 %v3290, %v3998
      %v4163 = vadd.f32 %v3295, %v4003
      %v4164 = vadd.f32 %v3298, %v4006
      %v4165 = vadd.f32 %v3303, %v4011
      %v4166 = vadd.f32 %v3306, %v4014
      %v4167 = vadd.f32 %v3311, %v4019
      %v4168 = vadd.f32 %v3314, %v4022
      %v4169 = vadd.f32 %v3319, %v4027
      %v4170 = vadd.f32 %v3322, %v4030
      %v4171 = vadd.f32 %v3327, %v4035
      %v4172 = vadd.f32 %v3330, %v4038
      %v4173 = vadd.f32 %v3335, %v4043
      %v4174 = vadd.f32 %v3338, %v4046
      %v4175 = vadd.f32 %v3343, %v4051
      %v4176 = vadd.f32 %v3346, %v4054
      %v4177 = vadd.f32 %v3351, %v4059
      %v4178 = vadd.f32 %v3354, %v4062
      %v4179 = vadd.f32 %v3359, %v4067
      %v4180 = vadd.f32 %v3362, %v4070
      %v4181 = vadd.f32 %v3367, %v4075
      %v4182 = vadd.f32 %v3370, %v4078
      %v4183 = vadd.f32 %v3375, %v4083
      %v4184 = vadd.f32 %v3378, %v4086
      %v4185 = vadd.f32 %v3383, %v4091
      %v4186 = vadd.f32 %v3386, %v4094
      %v4187 = vadd.f32 %v3391, %v4099
      %v4188 = vadd.f32 %v3394, %v4102
      %v4189 = vadd.f32 %v3399, %v4107
      %v4190 = vadd.f32 %v3402, %v4110
      %v4191 = vadd.f32 %v3407, %v4115
      %v4192 = vadd.f32 %v3410, %v4118
      %v4193 = vadd.f32 %v3415, %v4123
      %v4194 = vadd.f32 %v3418, %v4126
      %v4195 = vadd.f32 %v3423, %v4131
      %v4196 = vadd.f32 %v3426, %v4134
      %v4197 = vadd.f32 %v3431, %v4139
      %v4198 = vadd.f32 %v3434, %v4142
      %v4199 = vadd.f32 %v3439, %v4147
      %v4200 = vadd.f32 %v3442, %v4150
      %v4201 = vmul.f32 %v4153, %v456
      %v4202 = vmul.f32 %v4154, %v457
      %v4203 = vmul.f32 %v4155, %v458
      %v4204 = vmul.f32 %v4156, %v456
      %v4205 = vmul.f32 %v4157, %v457
      %v4206 = vmul.f32 %v4158, %v458
      %v4207 = vmul.f32 %v4159, %v456
      %v4208 = vmul.f32 %v4160, %v457
      %v4209 = vmul.f32 %v4161, %v458
      %v4210 = vmul.f32 %v4162, %v456
      %v4211 = vmul.f32 %v4163, %v457
      %v4212 = vmul.f32 %v4164, %v458
      %v4213 = vmul.f32 %v4165, %v456
      %v4214 = vmul.f32 %v4166, %v457
      %v4215 = vmul.f32 %v4167, %v458
      %v4216 = vmul.f32 %v4168, %v456
      %v4217 = vmul.f32 %v4169, %v457
      %v4218 = vmul.f32 %v4170, %v458
      %v4219 = vmul.f32 %v4171, %v456
      %v4220 = vmul.f32 %v4172, %v457
      %v4221 = vmul.f32 %v4173, %v458
      %v4222 = vmul.f32 %v4174, %v456
      %v4223 = vmul.f32 %v4175, %v457
      %v4224 = vmul.f32 %v4176, %v458
      %v4225 = vmul.f32 %v4177, %v456
      %v4226 = vmul.f32 %v4178, %v457
      %v4227 = vmul.f32 %v4179, %v458
      %v4228 = vmul.f32 %v4180, %v456
      %v4229 = vmul.f32 %v4181, %v457
      %v4230 = vmul.f32 %v4182, %v458
      %v4231 = vmul.f32 %v4183, %v456
      %v4232 = vmul.f32 %v4184, %v457
      %v4233 = vmul.f32 %v4185, %v458
      %v4234 = vmul.f32 %v4186, %v456
      %v4235 = vmul.f32 %v4187, %v457
      %v4236 = vmul.f32 %v4188, %v458
      %v4237 = vmul.f32 %v4189, %v456
      %v4238 = vmul.f32 %v4190, %v457
      %v4239 = vmul.f32 %v4191, %v458
      %v4240 = vmul.f32 %v4192, %v456
      %v4241 = vmul.f32 %v4193, %v457
      %v4242 = vmul.f32 %v4194, %v458
      %v4243 = vmul.f32 %v4195, %v456
      %v4244 = vmul.f32 %v4196, %v457
      %v4245 = vmul.f32 %v4197, %v458
      %v4246 = vmul.f32 %v4198, %v456
      %v4247 = vmul.f32 %v4199, %v457
      %v4248 = vmul.f32 %v4200, %v458
      %v4249 = vadd.f32 %v4201, %v4202
      %v4250 = vadd.f32 %v4249, %v4203
      %v4251 = vadd.f32 %v4250, %v4204
      %v4252 = vadd.f32 %v4251, %v4205
      %v4253 = vadd.f32 %v4252, %v4206
      %v4254 = vadd.f32 %v4253, %v4207
      %v4255 = vadd.f32 %v4254, %v4208
      %v4256 = vadd.f32 %v4255, %v4209
      %v4257 = vadd.f32 %v4256, %v4210
      %v4258 = vadd.f32 %v4257, %v4211
      %v4259 = vadd.f32 %v4258, %v4212
      %v4260 = vadd.f32 %v4259, %v4213
      %v4261 = vadd.f32 %v4260, %v4214
      %v4262 = vadd.f32 %v4261, %v4215
      %v4263 = vadd.f32 %v4262, %v4216
      %v4264 = vadd.f32 %v4263, %v4217
      %v4265 = vadd.f32 %v4264, %v4218
      %v4266 = vadd.f32 %v4265, %v4219
      %v4267 = vadd.f32 %v4266, %v4220
      %v4268 = vadd.f32 %v4267, %v4221
      %v4269 = vadd.f32 %v4268, %v4222
      %v4270 = vadd.f32 %v4269, %v4223
      %v4271 = vadd.f32 %v4270, %v4224
      %v4272 = vadd.f32 %v4271, %v4225
      %v4273 = vadd.f32 %v4272, %v4226
      %v4274 = vadd.f32 %v4273, %v4227
      %v4275 = vadd.f32 %v4274, %v4228
      %v4276 = vadd.f32 %v4275, %v4229
      %v4277 = vadd.f32 %v4276, %v4230
      %v4278 = vadd.f32 %v4277, %v4231
      %v4279 = vadd.f32 %v4278, %v4232
      %v4280 = vadd.f32 %v4279, %v4233
      %v4281 = vadd.f32 %v4280, %v4234
      %v4282 = vadd.f32 %v4281, %v4235
      %v4283 = vadd.f32 %v4282, %v4236
      %v4284 = vadd.f32 %v4283, %v4237
      %v4285 = vadd.f32 %v4284, %v4238
      %v4286 = vadd.f32 %v4285, %v4239
      %v4287 = vadd.f32 %v4286, %v4240
      %v4288 = vadd.f32 %v4287, %v4241
      %v4289 = vadd.f32 %v4288, %v4242
      %v4290 = vadd.f32 %v4289, %v4243
      %v4291 = vadd.f32 %v4290, %v4244
      %v4292 = vadd.f32 %v4291, %v4245
      %v4293 = vadd.f32 %v4292, %v4246
      %v4294 = vadd.f32 %v4293, %v4247
      %v4295 = vadd.f32 %v4294, %v4248
      %v4296 = vrot.slane %v4295, 4
      %v4297 = vadd.f32 %v4295, %v4296
      %v4298 = vrot.slane %v4297, 2
      %v4299 = vadd.f32 %v4297, %v4298
      %v4300 = vrot.slane %v4299, 1
      %v4301 = vadd.f32 %v4299, %v4300
      %v4302 = vmul.f32 %v4201, %v4201
      %v4303 = vmul.f32 %v4202, %v4202
      %v4304 = vmul.f32 %v4203, %v4203
      %v4305 = vmul.f32 %v4204, %v4204
      %v4306 = vmul.f32 %v4205, %v4205
      %v4307 = vmul.f32 %v4206, %v4206
      %v4308 = vmul.f32 %v4207, %v4207
      %v4309 = vmul.f32 %v4208, %v4208
      %v4310 = vmul.f32 %v4209, %v4209
      %v4311 = vmul.f32 %v4210, %v4210
      %v4312 = vmul.f32 %v4211, %v4211
      %v4313 = vmul.f32 %v4212, %v4212
      %v4314 = vmul.f32 %v4213, %v4213
      %v4315 = vmul.f32 %v4214, %v4214
      %v4316 = vmul.f32 %v4215, %v4215
      %v4317 = vmul.f32 %v4216, %v4216
      %v4318 = vmul.f32 %v4217, %v4217
      %v4319 = vmul.f32 %v4218, %v4218
      %v4320 = vmul.f32 %v4219, %v4219
      %v4321 = vmul.f32 %v4220, %v4220
      %v4322 = vmul.f32 %v4221, %v4221
      %v4323 = vmul.f32 %v4222, %v4222
      %v4324 = vmul.f32 %v4223, %v4223
      %v4325 = vmul.f32 %v4224, %v4224
      %v4326 = vmul.f32 %v4225, %v4225
      %v4327 = vmul.f32 %v4226, %v4226
      %v4328 = vmul.f32 %v4227, %v4227
      %v4329 = vmul.f32 %v4228, %v4228
      %v4330 = vmul.f32 %v4229, %v4229
      %v4331 = vmul.f32 %v4230, %v4230
      %v4332 = vmul.f32 %v4231, %v4231
      %v4333 = vmul.f32 %v4232, %v4232
      %v4334 = vmul.f32 %v4233, %v4233
      %v4335 = vmul.f32 %v4234, %v4234
      %v4336 = vmul.f32 %v4235, %v4235
      %v4337 = vmul.f32 %v4236, %v4236
      %v4338 = vmul.f32 %v4237, %v4237
      %v4339 = vmul.f32 %v4238, %v4238
      %v4340 = vmul.f32 %v4239, %v4239
      %v4341 = vmul.f32 %v4240, %v4240
      %v4342 = vmul.f32 %v4241, %v4241
      %v4343 = vmul.f32 %v4242, %v4242
      %v4344 = vmul.f32 %v4243, %v4243
      %v4345 = vmul.f32 %v4244, %v4244
      %v4346 = vmul.f32 %v4245, %v4245
      %v4347 = vmul.f32 %v4246, %v4246
      %v4348 = vmul.f32 %v4247, %v4247
      %v4349 = vmul.f32 %v4248, %v4248
      %v4350 = vadd.f32 %v4302, %v4303
      %v4351 = vadd.f32 %v4350, %v4304
      %v4352 = vadd.f32 %v4351, %v4305
      %v4353 = vadd.f32 %v4352, %v4306
      %v4354 = vadd.f32 %v4353, %v4307
      %v4355 = vadd.f32 %v4354, %v4308
      %v4356 = vadd.f32 %v4355, %v4309
      %v4357 = vadd.f32 %v4356, %v4310
      %v4358 = vadd.f32 %v4357, %v4311
      %v4359 = vadd.f32 %v4358, %v4312
      %v4360 = vadd.f32 %v4359, %v4313
      %v4361 = vadd.f32 %v4360, %v4314
      %v4362 = vadd.f32 %v4361, %v4315
      %v4363 = vadd.f32 %v4362, %v4316
      %v4364 = vadd.f32 %v4363, %v4317
      %v4365 = vadd.f32 %v4364, %v4318
      %v4366 = vadd.f32 %v4365, %v4319
      %v4367 = vadd.f32 %v4366, %v4320
      %v4368 = vadd.f32 %v4367, %v4321
      %v4369 = vadd.f32 %v4368, %v4322
      %v4370 = vadd.f32 %v4369, %v4323
      %v4371 = vadd.f32 %v4370, %v4324
      %v4372 = vadd.f32 %v4371, %v4325
      %v4373 = vadd.f32 %v4372, %v4326
      %v4374 = vadd.f32 %v4373, %v4327
      %v4375 = vadd.f32 %v4374, %v4328
      %v4376 = vadd.f32 %v4375, %v4329
      %v4377 = vadd.f32 %v4376, %v4330
      %v4378 = vadd.f32 %v4377, %v4331
      %v4379 = vadd.f32 %v4378, %v4332
      %v4380 = vadd.f32 %v4379, %v4333
      %v4381 = vadd.f32 %v4380, %v4334
      %v4382 = vadd.f32 %v4381, %v4335
      %v4383 = vadd.f32 %v4382, %v4336
      %v4384 = vadd.f32 %v4383, %v4337
      %v4385 = vadd.f32 %v4384, %v4338
      %v4386 = vadd.f32 %v4385, %v4339
      %v4387 = vadd.f32 %v4386, %v4340
      %v4388 = vadd.f32 %v4387, %v4341
      %v4389 = vadd.f32 %v4388, %v4342
      %v4390 = vadd.f32 %v4389, %v4343
      %v4391 = vadd.f32 %v4390, %v4344
      %v4392 = vadd.f32 %v4391, %v4345
      %v4393 = vadd.f32 %v4392, %v4346
      %v4394 = vadd.f32 %v4393, %v4347
      %v4395 = vadd.f32 %v4394, %v4348
      %v4396 = vadd.f32 %v4395, %v4349
      %v4397 = vrot.slane %v4396, 4
      %v4398 = vadd.f32 %v4396, %v4397
      %v4399 = vrot.slane %v4398, 2
      %v4400 = vadd.f32 %v4398, %v4399
      %v4401 = vrot.slane %v4400, 1
      %v4402 = vadd.f32 %v4400, %v4401
      %vm4403 = vcmask 1040384
      %v4404 = vsel %vm4403, %v4301, %v4402
      %4405 = vst [vmem:[%s438] sm:$0x3] %v4404
      %v4406 = vpack.c.bf16 %v4202, %v4201
      %v4407 = vpack.c.bf16 %v4203, %v4203
      %v4408 = vpack.c.bf16 %v4205, %v4204
      %v4409 = vpack.c.bf16 %v4206, %v4206
      %v4410 = vpack.c.bf16 %v4208, %v4207
      %v4411 = vpack.c.bf16 %v4209, %v4209
      %v4412 = vpack.c.bf16 %v4211, %v4210
      %v4413 = vpack.c.bf16 %v4212, %v4212
      %v4414 = vpack.c.bf16 %v4214, %v4213
      %v4415 = vpack.c.bf16 %v4215, %v4215
      %v4416 = vpack.c.bf16 %v4217, %v4216
      %v4417 = vpack.c.bf16 %v4218, %v4218
      %v4418 = vpack.c.bf16 %v4220, %v4219
      %v4419 = vpack.c.bf16 %v4221, %v4221
      %v4420 = vpack.c.bf16 %v4223, %v4222
      %v4421 = vpack.c.bf16 %v4224, %v4224
      %v4422 = vpack.c.bf16 %v4226, %v4225
      %v4423 = vpack.c.bf16 %v4227, %v4227
      %v4424 = vpack.c.bf16 %v4229, %v4228
      %v4425 = vpack.c.bf16 %v4230, %v4230
      %v4426 = vpack.c.bf16 %v4232, %v4231
      %v4427 = vpack.c.bf16 %v4233, %v4233
      %v4428 = vpack.c.bf16 %v4235, %v4234
      %v4429 = vpack.c.bf16 %v4236, %v4236
      %v4430 = vpack.c.bf16 %v4238, %v4237
      %v4431 = vpack.c.bf16 %v4239, %v4239
      %v4432 = vpack.c.bf16 %v4241, %v4240
      %v4433 = vpack.c.bf16 %v4242, %v4242
      %v4434 = vpack.c.bf16 %v4244, %v4243
      %v4435 = vpack.c.bf16 %v4245, %v4245
      %v4436 = vpack.c.bf16 %v4247, %v4246
      %v4437 = vpack.c.bf16 %v4248, %v4248
      %v4470 = vunpack.c.l.b16 %v4406
      %v4471 = vunpack.c.h.b16 %v4406
      %v4472 = vunpack.c.l.b16 %v4407
      %v4473 = vunpack.c.l.b16 %v4408
      %v4474 = vunpack.c.h.b16 %v4408
      %v4475 = vunpack.c.l.b16 %v4409
      %v4476 = vunpack.c.l.b16 %v4410
      %v4477 = vunpack.c.h.b16 %v4410
      %v4478 = vunpack.c.l.b16 %v4411
      %v4479 = vunpack.c.l.b16 %v4412
      %v4480 = vunpack.c.h.b16 %v4412
      %v4481 = vunpack.c.l.b16 %v4413
      %v4482 = vunpack.c.l.b16 %v4414
      %v4483 = vunpack.c.h.b16 %v4414
      %v4484 = vunpack.c.l.b16 %v4415
      %v4485 = vunpack.c.l.b16 %v4416
      %v4486 = vunpack.c.h.b16 %v4416
      %v4487 = vunpack.c.l.b16 %v4417
      %v4488 = vunpack.c.l.b16 %v4418
      %v4489 = vunpack.c.h.b16 %v4418
      %v4490 = vunpack.c.l.b16 %v4419
      %v4491 = vunpack.c.l.b16 %v4420
      %v4492 = vunpack.c.h.b16 %v4420
      %v4493 = vunpack.c.l.b16 %v4421
      %v4494 = vunpack.c.l.b16 %v4422
      %v4495 = vunpack.c.h.b16 %v4422
      %v4496 = vunpack.c.l.b16 %v4423
      %v4497 = vunpack.c.l.b16 %v4424
      %v4498 = vunpack.c.h.b16 %v4424
      %v4499 = vunpack.c.l.b16 %v4425
      %v4500 = vunpack.c.l.b16 %v4426
      %v4501 = vunpack.c.h.b16 %v4426
      %v4502 = vunpack.c.l.b16 %v4427
      %v4503 = vunpack.c.l.b16 %v4428
      %v4504 = vunpack.c.h.b16 %v4428
      %v4505 = vunpack.c.l.b16 %v4429
      %v4506 = vunpack.c.l.b16 %v4430
      %v4507 = vunpack.c.h.b16 %v4430
      %v4508 = vunpack.c.l.b16 %v4431
      %v4509 = vunpack.c.l.b16 %v4432
      %v4510 = vunpack.c.h.b16 %v4432
      %v4511 = vunpack.c.l.b16 %v4433
      %v4512 = vunpack.c.l.b16 %v4434
      %v4513 = vunpack.c.h.b16 %v4434
      %v4514 = vunpack.c.l.b16 %v4435
      %v4515 = vunpack.c.l.b16 %v4436
      %v4516 = vunpack.c.h.b16 %v4436
      %v4517 = vunpack.c.l.b16 %v4437
      %v4518 = vpack.c.b16 %v4470, %v4470
      %v4519 = vpack.c.b16 %v4471, %v4471
      %v4520 = vpack.c.b16 %v4472, %v4472
      %v4521 = vpack.c.b16 %v4473, %v4473
      %v4522 = vpack.c.b16 %v4474, %v4474
      %v4523 = vpack.c.b16 %v4475, %v4475
      %v4524 = vpack.c.b16 %v4476, %v4476
      %v4525 = vpack.c.b16 %v4477, %v4477
      %v4526 = vpack.c.b16 %v4478, %v4478
      %v4527 = vpack.c.b16 %v4479, %v4479
      %v4528 = vpack.c.b16 %v4480, %v4480
      %v4529 = vpack.c.b16 %v4481, %v4481
      %v4530 = vpack.c.b16 %v4482, %v4482
      %v4531 = vpack.c.b16 %v4483, %v4483
      %v4532 = vpack.c.b16 %v4484, %v4484
      %v4533 = vpack.c.b16 %v4485, %v4485
      %v4534 = vpack.c.b16 %v4486, %v4486
      %v4535 = vpack.c.b16 %v4487, %v4487
      %v4536 = vpack.c.b16 %v4488, %v4488
      %v4537 = vpack.c.b16 %v4489, %v4489
      %v4538 = vpack.c.b16 %v4490, %v4490
      %v4539 = vpack.c.b16 %v4491, %v4491
      %v4540 = vpack.c.b16 %v4492, %v4492
      %v4541 = vpack.c.b16 %v4493, %v4493
      %v4542 = vpack.c.b16 %v4494, %v4494
      %v4543 = vpack.c.b16 %v4495, %v4495
      %v4544 = vpack.c.b16 %v4496, %v4496
      %v4545 = vpack.c.b16 %v4497, %v4497
      %v4546 = vpack.c.b16 %v4498, %v4498
      %v4547 = vpack.c.b16 %v4499, %v4499
      %v4548 = vpack.c.b16 %v4500, %v4500
      %v4549 = vpack.c.b16 %v4501, %v4501
      %v4550 = vpack.c.b16 %v4502, %v4502
      %v4551 = vpack.c.b16 %v4503, %v4503
      %v4552 = vpack.c.b16 %v4504, %v4504
      %v4553 = vpack.c.b16 %v4505, %v4505
      %v4554 = vpack.c.b16 %v4506, %v4506
      %v4555 = vpack.c.b16 %v4507, %v4507
      %v4556 = vpack.c.b16 %v4508, %v4508
      %v4557 = vpack.c.b16 %v4509, %v4509
      %v4558 = vpack.c.b16 %v4510, %v4510
      %v4559 = vpack.c.b16 %v4511, %v4511
      %v4560 = vpack.c.b16 %v4512, %v4512
      %v4561 = vpack.c.b16 %v4513, %v4513
      %v4562 = vpack.c.b16 %v4514, %v4514
      %v4563 = vpack.c.b16 %v4515, %v4515
      %v4564 = vpack.c.b16 %v4516, %v4516
      %v4565 = vpack.c.b16 %v4517, %v4517
      %4614 = vst [vmem:[%s430] sm:$0xf] %v4518
      %4615 = vst [vmem:[%s430 + $0x4] sm:$0xf] %v4519
      %4616 = vst [vmem:[%s430 + $0x8] sm:$0xf] %v4520
      %4617 = vst [vmem:[%s430 + $0xc] sm:$0xf] %v4521
      %4618 = vst [vmem:[%s430 + $0x10] sm:$0xf] %v4522
      %4619 = vst [vmem:[%s430 + $0x14] sm:$0xf] %v4523
      %4620 = vst [vmem:[%s430 + $0x18] sm:$0xf] %v4524
      %4621 = vst [vmem:[%s430 + $0x1c] sm:$0xf] %v4525
      %4622 = vst [vmem:[%s430 + $0x20] sm:$0xf] %v4526
      %4623 = vst [vmem:[%s430 + $0x24] sm:$0xf] %v4527
      %4624 = vst [vmem:[%s430 + $0x28] sm:$0xf] %v4528
      %4625 = vst [vmem:[%s430 + $0x2c] sm:$0xf] %v4529
      %4626 = vst [vmem:[%s430 + $0x30] sm:$0xf] %v4530
      %4627 = vst [vmem:[%s430 + $0x34] sm:$0xf] %v4531
      %4628 = vst [vmem:[%s430 + $0x38] sm:$0xf] %v4532
      %4629 = vst [vmem:[%s430 + $0x3c] sm:$0xf] %v4533
      %4630 = vst [vmem:[%s430 + $0x40] sm:$0xf] %v4534
      %4631 = vst [vmem:[%s430 + $0x44] sm:$0xf] %v4535
      %4632 = vst [vmem:[%s430 + $0x48] sm:$0xf] %v4536
      %4633 = vst [vmem:[%s430 + $0x4c] sm:$0xf] %v4537
      %4634 = vst [vmem:[%s430 + $0x50] sm:$0xf] %v4538
      %4635 = vst [vmem:[%s430 + $0x54] sm:$0xf] %v4539
      %4636 = vst [vmem:[%s430 + $0x58] sm:$0xf] %v4540
      %4637 = vst [vmem:[%s430 + $0x5c] sm:$0xf] %v4541
      %4638 = vst [vmem:[%s430 + $0x60] sm:$0xf] %v4542
      %4639 = vst [vmem:[%s430 + $0x64] sm:$0xf] %v4543
      %4640 = vst [vmem:[%s430 + $0x68] sm:$0xf] %v4544
      %4641 = vst [vmem:[%s430 + $0x6c] sm:$0xf] %v4545
      %4642 = vst [vmem:[%s430 + $0x70] sm:$0xf] %v4546
      %4643 = vst [vmem:[%s430 + $0x74] sm:$0xf] %v4547
      %4644 = vst [vmem:[%s430 + $0x78] sm:$0xf] %v4548
      %4645 = vst [vmem:[%s430 + $0x7c] sm:$0xf] %v4549
      %4646 = vst [vmem:[%s430 + $0x80] sm:$0xf] %v4550
      %4647 = vst [vmem:[%s430 + $0x84] sm:$0xf] %v4551
      %4648 = vst [vmem:[%s430 + $0x88] sm:$0xf] %v4552
      %4649 = vst [vmem:[%s430 + $0x8c] sm:$0xf] %v4553
      %4650 = vst [vmem:[%s430 + $0x90] sm:$0xf] %v4554
      %4651 = vst [vmem:[%s430 + $0x94] sm:$0xf] %v4555
      %4652 = vst [vmem:[%s430 + $0x98] sm:$0xf] %v4556
      %4653 = vst [vmem:[%s430 + $0x9c] sm:$0xf] %v4557
      %4654 = vst [vmem:[%s430 + $0xa0] sm:$0xf] %v4558
      %4655 = vst [vmem:[%s430 + $0xa4] sm:$0xf] %v4559
      %4656 = vst [vmem:[%s430 + $0xa8] sm:$0xf] %v4560
      %4657 = vst [vmem:[%s430 + $0xac] sm:$0xf] %v4561
      %4658 = vst [vmem:[%s430 + $0xb0] sm:$0xf] %v4562
      %4659 = vst [vmem:[%s430 + $0xb4] sm:$0xf] %v4563
      %4660 = vst [vmem:[%s430 + $0xb8] sm:$0xf] %v4564
      %4661 = vst [vmem:[%s430 + $0xbc] sm:$0xf] %v4565
      %s4662 = smul.u32 16, %s23
      %p4663 = scmp.lt.s32.totalorder %s22, 1
      %s4664 = scalar_select %p4663, %s22, 1
      %p4665 = scmp.lt.s32.totalorder %s4662, 15
      %s4666 = scalar_select %p4665, %s4662, 15
      %s4667 = smul.addr %s4666, 3
      %s4668 = smul.addr %s4664, 48
      %s4669 = sadd.s32 %s4667, %s4668
      %s4670 = smul.addr %s4669, 4
      %s4671 = scalar_lea.vmem %s5, %s4670
      %p4672 = scmp.lt.s32.totalorder %s22, 1
      %s4673 = scalar_select %p4672, %s22, 1
      %p4674 = scmp.lt.s32.totalorder %s23, 0
      %s4675 = scalar_select %p4674, %s23, 0
      %s4676 = sadd.s32 %s4675, %s4673
      %s4677 = smul.addr %s4676, 2
      %s4678 = scalar_lea.vmem %s6, %s4677
      // Predicated region
      $region41: #{residual_up_block_forward.5} parent=39 // pred_check
        %p4679 = pneg %p192
      $region42: #{residual_up_block_forward.5} parent=39 // pred_check_branch
        %4681 = sbr.rel (%p4679) target = $region44
      $region43: #{residual_up_block_forward.5} parent=39 // pred_region
        %s4682 = smul.u32 16, %s23
      $region44: #{residual_up_block_forward.5} parent=39 // pred_fallthru
        _
      // Predicated region
      $region45: #{residual_up_block_forward.5} parent=39 // pred_check
        %p4683 = pneg %p220
      $region46: #{residual_up_block_forward.5} parent=39 // pred_check_branch
        %4685 = sbr.rel (%p4683) target = $region48
      $region47: #{residual_up_block_forward.5} parent=39 // pred_region
        _
      $region48: #{residual_up_block_forward.5} parent=39 // pred_fallthru
        _
    $region40: #{residual_up_block_forward.5} parent=5 // pred_fallthru
      _
    %p4686 = scmp.le.s32.totalorder 2, %s13
    // Predicated region
    $region49: #{residual_up_block_forward.5} parent=5 // pred_check
      %p4687 = pneg %p4686
    $region50: #{residual_up_block_forward.5} parent=5 // pred_check_branch
      %4689 = sbr.rel (%p4687) target = $region52
    $region51: #{residual_up_block_forward.5} parent=5 // pred_region
      %s4690 = ssub.s32 %s13, 2
      // Predicated region
      $region53: #{residual_up_block_forward.5} parent=51 // pred_check
        %p4691 = pneg %p198
      $region54: #{residual_up_block_forward.5} parent=51 // pred_check_branch
        %4693 = sbr.rel (%p4691) target = $region56
      $region55: #{residual_up_block_forward.5} parent=51 // pred_region
        %s4694 = smul.u32 16, %s25
        %p4695 = scmp.lt.s32.totalorder %s24, 1
        %s4696 = scalar_select %p4695, %s24, 1
        %p4697 = scmp.lt.s32.totalorder %s4694, 15
        %s4698 = scalar_select %p4697, %s4694, 15
        %s4699 = smul.addr %s4698, 3
        %s4700 = smul.addr %s4696, 48
        %s4701 = sadd.s32 %s4699, %s4700
        %s4702 = smul.addr %s4701, 4
        %s4703 = scalar_lea.vmem %s5, %s4702
      $region56: #{residual_up_block_forward.5} parent=51 // pred_fallthru
        _
      // Predicated region
      $region57: #{residual_up_block_forward.5} parent=51 // pred_check
        %p4704 = pneg %p226
      $region58: #{residual_up_block_forward.5} parent=51 // pred_check_branch
        %4706 = sbr.rel (%p4704) target = $region60
      $region59: #{residual_up_block_forward.5} parent=51 // pred_region
        %p4707 = scmp.lt.s32.totalorder %s24, 1
        %s4708 = scalar_select %p4707, %s24, 1
        %p4709 = scmp.lt.s32.totalorder %s25, 0
        %s4710 = scalar_select %p4709, %s25, 0
        %s4711 = sadd.s32 %s4710, %s4708
        %s4712 = smul.addr %s4711, 2
        %s4713 = scalar_lea.vmem %s6, %s4712
      $region60: #{residual_up_block_forward.5} parent=51 // pred_fallthru
        _
    $region52: #{residual_up_block_forward.5} parent=5 // pred_fallthru
      _
  $region6: #{residual_up_block_forward.5} parent=0 // loop_footer
    %s17 = sadd.s32 1, %s13
  $region7: #{residual_up_block_forward.5} parent=0 // loop_footer_branch
    %12 = sbr.rel target = $region3
  $region8: #{residual_up_block_forward.5} parent=0 // loop_exit
    _

</llo_original>
